<compile_context>
chip_gen: v7x
topology: tpu7x:2x2x1
jax: 0.10.0
libtpu: 0.0.40
codegen_flags: <defaults>
</compile_context>

<pallas_src>
import math

import jax
import jax.numpy as jnp
from jax.experimental import pallas as pl
from jax.experimental.pallas import tpu as pltpu


# ----------------------------------------------------------------------------
# Fused Pallas GEMM kernel: matmul + bias + (BatchNorm) + (residual) +
# (ReLU | tanh), f32 accumulation, configurable output dtype.
# ----------------------------------------------------------------------------
def _fused_gemm(a, b, bias, *, gamma=None, beta=None, gmix=None, residual=None,
                relu=False, tanh=False, groups=1, out_dtype=jnp.bfloat16,
                eps=1e-5):
    """a: (M, K) bf16, b: (K, N) bf16, bias/gamma/beta: (1, N) f32,
    gmix: (N, N) f32 phase-group mixing matrix (only when groups > 1),
    residual: (M, N) bf16.  Returns (M, N) out_dtype."""
    M, K = a.shape
    Kb, N = b.shape
    assert Kb == K and bias.shape == (1, N)

    use_bn = gamma is not None
    use_gmix = use_bn and groups > 1
    use_res = residual is not None
    cnt = float(M * groups)

    def kernel(*refs):
        it = iter(refs)
        a_ref = next(it)
        b_ref = next(it)
        bias_ref = next(it)
        gamma_ref = next(it) if use_bn else None
        beta_ref = next(it) if use_bn else None
        gmix_ref = next(it) if use_gmix else None
        res_ref = next(it) if use_res else None
        o_ref = next(it)

        acc = jnp.dot(a_ref[...], b_ref[...], preferred_element_type=jnp.float32)
        y = acc + bias_ref[...]                       # (M, N) f32

        if use_bn:
            # Batch statistics over the M axis (= N*H*W samples).  For the
            # fused ConvTranspose the 4 phase column-blocks are additionally
            # combined per channel with a tiny precomputed mixing matmul so the
            # statistics cover all N*2H*2W output positions.
            ys = jnp.dot(y, gmix_ref[...],
                         preferred_element_type=jnp.float32) if use_gmix else y
            mean = jnp.sum(ys, axis=0, keepdims=True) * (1.0 / cnt)   # (1, N)
            d = y - mean
            dd = d * d
            dds = jnp.dot(dd, gmix_ref[...],
                          preferred_element_type=jnp.float32) if use_gmix else dd
            var = jnp.sum(dds, axis=0, keepdims=True) * (1.0 / cnt)
            inv = jax.lax.rsqrt(var + eps)
            y = gamma_ref[...] * d * inv + beta_ref[...]

        if use_res:
            y = y + res_ref[...].astype(jnp.float32)
        if relu:
            y = jnp.maximum(y, 0.0)
        if tanh:
            y = jnp.tanh(y)
        o_ref[...] = y.astype(o_ref.dtype)

    inputs = [a, b, bias]
    in_specs = [pl.BlockSpec((M, K), lambda i: (0, 0)),
                pl.BlockSpec((K, N), lambda i: (0, 0)),
                pl.BlockSpec((1, N), lambda i: (0, 0))]
    if use_bn:
        inputs += [gamma, beta]
        in_specs += [pl.BlockSpec((1, N), lambda i: (0, 0)),
                     pl.BlockSpec((1, N), lambda i: (0, 0))]
    if use_gmix:
        inputs.append(gmix)
        in_specs.append(pl.BlockSpec((N, N), lambda i: (0, 0)))
    if use_res:
        inputs.append(residual)
        in_specs.append(pl.BlockSpec((M, N), lambda i: (0, 0)))

    bytes_out = M * N * jnp.dtype(out_dtype).itemsize
    cost = pl.CostEstimate(
        flops=2 * M * N * K + (2 * M * N * N if use_gmix else 0),
        transcendentals=(M * N if tanh else 0) + (N if use_bn else 0),
        bytes_accessed=int(M * K * 2 + K * N * 2 + bytes_out + 6 * N * 4
                           + (M * N * 2 if use_res else 0)))

    return pl.pallas_call(
        kernel,
        out_shape=jax.ShapeDtypeStruct((M, N), out_dtype),
        grid_spec=pltpu.PrefetchScalarGridSpec(
            num_scalar_prefetch=0,
            grid=(1,),
            in_specs=in_specs,
            out_specs=pl.BlockSpec((M, N), lambda i: (0, 0))),
        compiler_params=pltpu.CompilerParams(
            dimension_semantics=("arbitrary",)),
        cost_estimate=cost,
    )(*inputs)


# ----------------------------------------------------------------------------
# im2col + layer wrappers
# ----------------------------------------------------------------------------
def _im2col(x, kh, kw, stride):
    """x: (N, H, W, C) bf16, already padded -> (N*Ho*Wo, kh*kw*C), (N, Ho, Wo)."""
    n, h, w, c = x.shape
    ho = (h - kh) // stride + 1
    wo = (w - kw) // stride + 1
    cols = []
    for i in range(kh):
        for j in range(kw):
            cols.append(x[:, i:i + stride * (ho - 1) + 1:stride,
                             j:j + stride * (wo - 1) + 1:stride, :])
    patches = jnp.stack(cols, axis=3).reshape(n * ho * wo, kh * kw * c)
    return patches, (n, ho, wo)


def conv_bn_act(x, p, *, stride=1, padding=0, pad_mode="zero", bn=None,
                relu=False, tanh=False, residual=None,
                out_dtype=jnp.bfloat16):
    """Conv2d (+BN +ReLU/tanh +residual) in one fused Pallas GEMM."""
    w_mat, bias = p["w_mat"], p["b"]
    cin = x.shape[-1]
    k = int(round(math.sqrt(w_mat.shape[0] // cin)))
    x = x.astype(jnp.bfloat16)
    if padding > 0:
        mode = "reflect" if pad_mode == "reflect" else "constant"
        x = jnp.pad(x, ((0, 0), (padding, padding), (padding, padding), (0, 0)),
                    mode=mode)
    patches, (n, ho, wo) = _im2col(x, k, k, stride)
    res_flat = None
    if residual is not None:
        res_flat = residual.astype(jnp.bfloat16).reshape(n * ho * wo, -1)
    gamma = beta = None
    if bn is not None:
        gamma, beta = bn["gamma"], bn["beta"]
    y = _fused_gemm(patches, w_mat, bias, gamma=gamma, beta=beta,
                    residual=res_flat, relu=relu, tanh=tanh, groups=1,
                    out_dtype=out_dtype)
    return y.reshape(n, ho, wo, -1)


def conv_transpose_bn_relu(x, p, bn, out_dtype=jnp.bfloat16):
    """ConvTranspose2d(k=5, s=2, p=2, op=1) + BN + ReLU: single wide-N fused
    GEMM over all 4 sub-pixel phases, then spatial interleave."""
    n, h, w, cin = x.shape
    x = x.astype(jnp.bfloat16)
    xp = jnp.pad(x, ((0, 0), (1, 1), (1, 1), (0, 0)))
    patches, _ = _im2col(xp, 3, 3, 1)                  # (n*h*w, 9*cin)
    y = _fused_gemm(patches, p["w_mat"], p["b"], gamma=bn["gamma"],
                    beta=bn["beta"], gmix=p["gmix"], relu=True, groups=4,
                    out_dtype=out_dtype)               # (n*h*w, 4*cout)
    cout = y.shape[-1] // 4
    y = y.reshape(n, h, w, 2, 2, cout)                 # (..., py, px, cout)
    y = jnp.transpose(y, (0, 1, 3, 2, 4, 5)).reshape(n, 2 * h, 2 * w, cout)
    return y


# ----------------------------------------------------------------------------
# Parameters (PyTorch-layout random init, pre-folded into GEMM-ready matrices)
# ----------------------------------------------------------------------------
_PHASES = ((0, 0), (0, 1), (1, 0), (1, 1))


def _conv_params(key, cout, cin, k):
    k1, k2 = jax.random.split(key)
    w = 0.02 * jax.random.normal(k1, (cout, cin, k, k), jnp.float32)
    b = 0.01 * jax.random.normal(k2, (cout,), jnp.float32)
    w_mat = jnp.transpose(w, (2, 3, 1, 0)).reshape(k * k * cin, cout)
    return {"w_mat": w_mat.astype(jnp.bfloat16), "b": b.reshape(1, cout)}


def _convT_params(key, cin, cout, k=5):
    """ConvTranspose2d(k=5,s=2,p=2,op=1) packed as one (9*cin, 4*cout) GEMM
    matrix.  Output y[2q+py, 2r+px] = sum_{dy,dx} x[q-1+dy, r-1+dx] *
    W[ci, co, py+4-2dy, px+4-2dx] (zero where the kernel index is out of [0,4]
    or the input index is out of range)."""
    assert k == 5
    k1, k2 = jax.random.split(key)
    w = 0.02 * jax.random.normal(k1, (cin, cout, k, k), jnp.float32)  # (Cin,Cout,kh,kw)
    b = 0.01 * jax.random.normal(k2, (cout,), jnp.float32)
    zeros = jnp.zeros((cin, cout), jnp.float32)
    blocks = []
    for dy in range(3):
        for dx in range(3):
            phase_cols = []
            for py, px in _PHASES:
                ky = py + 4 - 2 * dy
                kx = px + 4 - 2 * dx
                if 0 <= ky <= 4 and 0 <= kx <= 4:
                    phase_cols.append(w[:, :, ky, kx])
                else:
                    phase_cols.append(zeros)
            blocks.append(jnp.concatenate(phase_cols, axis=1))   # (cin, 4*cout)
    w_big = jnp.stack(blocks, axis=0).reshape(9 * cin, 4 * cout)
    n4 = 4 * cout
    ch = jnp.arange(n4) % cout
    gmix = (ch[:, None] == ch[None, :]).astype(jnp.float32)      # phase-group sum
    return {"w_mat": w_big.astype(jnp.bfloat16),
            "b": jnp.tile(b, 4).reshape(1, n4),
            "gmix": gmix}


def _bn_params(c, tile=1):
    return {"gamma": jnp.ones((1, c * tile), jnp.float32),
            "beta": jnp.zeros((1, c * tile), jnp.float32)}


def init_global_generator(key, input_nc, output_nc, ngf=8,
                          n_downsampling=2, n_blocks=3):
    assert n_blocks >= 0
    keys = iter(jax.random.split(key, 4 + n_downsampling * 2 + n_blocks * 2))
    P = {}
    P["head"] = {"conv": _conv_params(next(keys), ngf, input_nc, 7),
                 "bn": _bn_params(ngf)}
    P["down"] = []
    for i in range(n_downsampling):
        mult = 2 ** i
        P["down"].append({"conv": _conv_params(next(keys), ngf * mult * 2,
                                               ngf * mult, 5),
                          "bn": _bn_params(ngf * mult * 2)})
    mult = 2 ** n_downsampling
    P["res"] = []
    for _ in range(n_blocks):
        P["res"].append({"conv1": _conv_params(next(keys), ngf * mult, ngf * mult, 3),
                         "bn1": _bn_params(ngf * mult),
                         "conv2": _conv_params(next(keys), ngf * mult, ngf * mult, 3),
                         "bn2": _bn_params(ngf * mult)})
    P["up"] = []
    for i in range(n_downsampling):
        m = 2 ** (n_downsampling - i)
        P["up"].append({"convT": _convT_params(next(keys), ngf * m, ngf * m // 2, 5),
                        "bn": _bn_params(ngf * m // 2, tile=4)})
    P["tail"] = {"conv": _conv_params(next(keys), output_nc, ngf, 7)}
    return P


# ----------------------------------------------------------------------------
# Forward pass
# ----------------------------------------------------------------------------
def global_generator_forward(params, x):
    """x: (N, H, W, input_nc) NHWC float32."""
    # ReflectionPad2d(3) + Conv2d(k=7) + BN + ReLU (fused epilogue)
    h = conv_bn_act(x, params["head"]["conv"], stride=1, padding=3,
                    pad_mode="reflect", bn=params["head"]["bn"], relu=True)

    # Downsampling: Conv2d(k=5, s=2, p=2) + BN + ReLU (fused epilogue)
    for layer in params["down"]:
        h = conv_bn_act(h, layer["conv"], stride=2, padding=2, pad_mode="zero",
                        bn=layer["bn"], relu=True)

    # ResnetBlocks: conv1+BN+ReLU fused; conv2+BN+residual-add fused.
    for blk in params["res"]:
        r = conv_bn_act(h, blk["conv1"], stride=1, padding=1,
                        pad_mode="reflect", bn=blk["bn1"], relu=True)
        h = conv_bn_act(r, blk["conv2"], stride=1, padding=1,
                        pad_mode="reflect", bn=blk["bn2"], relu=False,
                        residual=h)

    # Upsampling: ConvTranspose2d(k=5,s=2,p=2,op=1) + BN + ReLU, one wide GEMM.
    for layer in params["up"]:
        h = conv_transpose_bn_relu(h, layer["convT"], layer["bn"])

    # ReflectionPad2d(3) + Conv2d(k=7) + Tanh (tanh fused in epilogue)
    h = conv_bn_act(h, params["tail"]["conv"], stride=1, padding=3,
                    pad_mode="reflect", bn=None, relu=False, tanh=True,
                    out_dtype=jnp.float32)
    return h


# ----------------------------------------------------------------------------
# Main
# ----------------------------------------------------------------------------
if __name__ == "__main__":
    key = jax.random.PRNGKey(0)
    k_param, k_in = jax.random.split(key)

    # Small config consistent with the module: GlobalGenerator(4, 3, ngf=8,
    # n_downsampling=2, n_blocks=3), input (N=2, C=4, H=16, W=16) in NCHW.
    input_nc, output_nc, ngf, n_down, n_blocks = 4, 3, 8, 2, 3
    params = init_global_generator(k_param, input_nc, output_nc, ngf,
                                   n_down, n_blocks)

    x_nchw = jax.random.normal(k_in, (2, input_nc, 16, 16), jnp.float32)
    x_nhwc = jnp.transpose(x_nchw, (0, 2, 3, 1))       # compute in NHWC

    fwd = jax.jit(global_generator_forward)
    out_nhwc = fwd(params, x_nhwc)
    out_nchw = jnp.transpose(out_nhwc, (0, 3, 1, 2))   # back to PyTorch NCHW
    jax.block_until_ready(out_nchw)

    assert out_nchw.shape == (2, output_nc, 16, 16), out_nchw.shape
    assert bool(jnp.all(jnp.isfinite(out_nchw)))
    print("KERNEL_OK")
</pallas_src>

<mosaic_0001>
module attributes {stable_mosaic.version = 11 : i64} {
  func.func @kernel(%arg0: i32, %arg1: memref<512x196xbf16, #tpu.memory_space<vmem>>, %arg2: memref<196x8xbf16, #tpu.memory_space<vmem>>, %arg3: memref<1x8xf32, #tpu.memory_space<vmem>>, %arg4: memref<1x8xf32, #tpu.memory_space<vmem>>, %arg5: memref<1x8xf32, #tpu.memory_space<vmem>>, %arg6: memref<512x8xbf16, #tpu.memory_space<vmem>>) attributes {dimension_semantics = [#tpu.dimension_semantics<arbitrary>], iteration_bounds = array<i64: 1>, scalar_prefetch = 0 : i64, scratch_operands = 0 : i64, tpu.core_type = #tpu.core_type<tc>, window_params = [{pipeline_mode = #tpu.pipeline_mode<synchronous>, transform_indices = @transform_0, window_bounds = array<i64: 512, 196>}, {pipeline_mode = #tpu.pipeline_mode<synchronous>, transform_indices = @transform_1, window_bounds = array<i64: 196, 8>}, {pipeline_mode = #tpu.pipeline_mode<synchronous>, transform_indices = @transform_2, window_bounds = array<i64: 1, 8>}, {pipeline_mode = #tpu.pipeline_mode<synchronous>, transform_indices = @transform_3, window_bounds = array<i64: 1, 8>}, {pipeline_mode = #tpu.pipeline_mode<synchronous>, transform_indices = @transform_4, window_bounds = array<i64: 1, 8>}, {pipeline_mode = #tpu.pipeline_mode<synchronous>, transform_indices = @transform_5, window_bounds = array<i64: 512, 8>}]} {
    %c0 = arith.constant 0 : index
    %c0_0 = arith.constant 0 : index
    %0 = vector.load %arg1[%c0, %c0_0] : memref<512x196xbf16, #tpu.memory_space<vmem>>, vector<512x196xbf16>
    %c0_1 = arith.constant 0 : index
    %c0_2 = arith.constant 0 : index
    %1 = vector.load %arg2[%c0_1, %c0_2] : memref<196x8xbf16, #tpu.memory_space<vmem>>, vector<196x8xbf16>
    %cst = arith.constant dense<0.000000e+00> : vector<512x8xf32>
    %2 = tpu.matmul %0, %1, %cst {dimension_numbers = #tpu.dot_dimension_numbers<[1], [0], [0], [1], [0, 0, 1, 1], [], []>} : vector<512x196xbf16>, vector<196x8xbf16>, vector<512x8xf32> -> vector<512x8xf32>
    %c0_3 = arith.constant 0 : index
    %c0_4 = arith.constant 0 : index
    %3 = vector.load %arg3[%c0_3, %c0_4] : memref<1x8xf32, #tpu.memory_space<vmem>>, vector<1x8xf32>
    %4 = vector.broadcast %3 : vector<1x8xf32> to vector<512x8xf32>
    %5 = arith.addf %2, %4 : vector<512x8xf32>
    %cst_5 = arith.constant dense<0.000000e+00> : vector<8xf32>
    %6 = vector.multi_reduction <add>, %5, %cst_5 [0] : vector<512x8xf32> to vector<8xf32>
    %7 = vector.shape_cast %6 : vector<8xf32> to vector<1x8xf32>
    %cst_6 = arith.constant 0.001953125 : f32
    %8 = vector.broadcast %cst_6 : f32 to vector<1x8xf32>
    %9 = arith.mulf %7, %8 : vector<1x8xf32>
    %10 = vector.broadcast %9 : vector<1x8xf32> to vector<512x8xf32>
    %11 = arith.subf %5, %10 : vector<512x8xf32>
    %12 = arith.mulf %11, %11 : vector<512x8xf32>
    %cst_7 = arith.constant dense<0.000000e+00> : vector<8xf32>
    %13 = vector.multi_reduction <add>, %12, %cst_7 [0] : vector<512x8xf32> to vector<8xf32>
    %14 = vector.shape_cast %13 : vector<8xf32> to vector<1x8xf32>
    %cst_8 = arith.constant 0.001953125 : f32
    %15 = vector.broadcast %cst_8 : f32 to vector<1x8xf32>
    %16 = arith.mulf %14, %15 : vector<1x8xf32>
    %cst_9 = arith.constant 9.99999974E-6 : f32
    %17 = vector.broadcast %cst_9 : f32 to vector<1x8xf32>
    %18 = arith.addf %16, %17 : vector<1x8xf32>
    %19 = math.rsqrt %18 : vector<1x8xf32>
    %c0_10 = arith.constant 0 : index
    %c0_11 = arith.constant 0 : index
    %20 = vector.load %arg4[%c0_10, %c0_11] : memref<1x8xf32, #tpu.memory_space<vmem>>, vector<1x8xf32>
    %21 = vector.broadcast %20 : vector<1x8xf32> to vector<512x8xf32>
    %22 = arith.mulf %21, %11 : vector<512x8xf32>
    %23 = vector.broadcast %19 : vector<1x8xf32> to vector<512x8xf32>
    %24 = arith.mulf %22, %23 : vector<512x8xf32>
    %c0_12 = arith.constant 0 : index
    %c0_13 = arith.constant 0 : index
    %25 = vector.load %arg5[%c0_12, %c0_13] : memref<1x8xf32, #tpu.memory_space<vmem>>, vector<1x8xf32>
    %26 = vector.broadcast %25 : vector<1x8xf32> to vector<512x8xf32>
    %27 = arith.addf %24, %26 : vector<512x8xf32>
    %cst_14 = arith.constant 0.000000e+00 : f32
    %28 = vector.broadcast %cst_14 : f32 to vector<512x8xf32>
    %29 = arith.maximumf %27, %28 : vector<512x8xf32>
    %30 = arith.truncf %29 : vector<512x8xf32> to vector<512x8xbf16>
    %c0_15 = arith.constant 0 : index
    %c0_16 = arith.constant 0 : index
    %31 = vector.load %arg6[%c0_15, %c0_16] : memref<512x8xbf16, #tpu.memory_space<vmem>>, vector<512x8xbf16>
    tpu.vector_store %arg6[%c0_15, %c0_16], %30 {strides = array<i32>} : memref<512x8xbf16, #tpu.memory_space<vmem>>, vector<512x8xbf16>,
    return
  }
  func.func @transform_0(%arg0: i32) -> (i32, i32) {
    %c0_i32 = arith.constant 0 : i32
    %c0_i32_0 = arith.constant 0 : i32
    %c0_i32_1 = arith.constant 0 : i32
    return %c0_i32, %c0_i32_0 : i32, i32
  }
  func.func @transform_1(%arg0: i32) -> (i32, i32) {
    %c0_i32 = arith.constant 0 : i32
    %c0_i32_0 = arith.constant 0 : i32
    %c0_i32_1 = arith.constant 0 : i32
    return %c0_i32, %c0_i32_0 : i32, i32
  }
  func.func @transform_2(%arg0: i32) -> (i32, i32) {
    %c0_i32 = arith.constant 0 : i32
    %c0_i32_0 = arith.constant 0 : i32
    %c0_i32_1 = arith.constant 0 : i32
    return %c0_i32, %c0_i32_0 : i32, i32
  }
  func.func @transform_3(%arg0: i32) -> (i32, i32) {
    %c0_i32 = arith.constant 0 : i32
    %c0_i32_0 = arith.constant 0 : i32
    %c0_i32_1 = arith.constant 0 : i32
    return %c0_i32, %c0_i32_0 : i32, i32
  }
  func.func @transform_4(%arg0: i32) -> (i32, i32) {
    %c0_i32 = arith.constant 0 : i32
    %c0_i32_0 = arith.constant 0 : i32
    %c0_i32_1 = arith.constant 0 : i32
    return %c0_i32, %c0_i32_0 : i32, i32
  }
  func.func @transform_5(%arg0: i32) -> (i32, i32) {
    %c0_i32 = arith.constant 0 : i32
    %c0_i32_0 = arith.constant 0 : i32
    %c0_i32_1 = arith.constant 0 : i32
    return %c0_i32, %c0_i32_0 : i32, i32
  }
}

module attributes {stable_mosaic.version = 11 : i64} {
  func.func @kernel(%arg0: i32, %arg1: memref<128x200xbf16, #tpu.memory_space<vmem>>, %arg2: memref<200x16xbf16, #tpu.memory_space<vmem>>, %arg3: memref<1x16xf32, #tpu.memory_space<vmem>>, %arg4: memref<1x16xf32, #tpu.memory_space<vmem>>, %arg5: memref<1x16xf32, #tpu.memory_space<vmem>>, %arg6: memref<128x16xbf16, #tpu.memory_space<vmem>>) attributes {dimension_semantics = [#tpu.dimension_semantics<arbitrary>], iteration_bounds = array<i64: 1>, scalar_prefetch = 0 : i64, scratch_operands = 0 : i64, tpu.core_type = #tpu.core_type<tc>, window_params = [{pipeline_mode = #tpu.pipeline_mode<synchronous>, transform_indices = @transform_0, window_bounds = array<i64: 128, 200>}, {pipeline_mode = #tpu.pipeline_mode<synchronous>, transform_indices = @transform_1, window_bounds = array<i64: 200, 16>}, {pipeline_mode = #tpu.pipeline_mode<synchronous>, transform_indices = @transform_2, window_bounds = array<i64: 1, 16>}, {pipeline_mode = #tpu.pipeline_mode<synchronous>, transform_indices = @transform_3, window_bounds = array<i64: 1, 16>}, {pipeline_mode = #tpu.pipeline_mode<synchronous>, transform_indices = @transform_4, window_bounds = array<i64: 1, 16>}, {pipeline_mode = #tpu.pipeline_mode<synchronous>, transform_indices = @transform_5, window_bounds = array<i64: 128, 16>}]} {
    %c0 = arith.constant 0 : index
    %c0_0 = arith.constant 0 : index
    %0 = vector.load %arg1[%c0, %c0_0] : memref<128x200xbf16, #tpu.memory_space<vmem>>, vector<128x200xbf16>
    %c0_1 = arith.constant 0 : index
    %c0_2 = arith.constant 0 : index
    %1 = vector.load %arg2[%c0_1, %c0_2] : memref<200x16xbf16, #tpu.memory_space<vmem>>, vector<200x16xbf16>
    %cst = arith.constant dense<0.000000e+00> : vector<128x16xf32>
    %2 = tpu.matmul %0, %1, %cst {dimension_numbers = #tpu.dot_dimension_numbers<[1], [0], [0], [1], [0, 0, 1, 1], [], []>} : vector<128x200xbf16>, vector<200x16xbf16>, vector<128x16xf32> -> vector<128x16xf32>
    %c0_3 = arith.constant 0 : index
    %c0_4 = arith.constant 0 : index
    %3 = vector.load %arg3[%c0_3, %c0_4] : memref<1x16xf32, #tpu.memory_space<vmem>>, vector<1x16xf32>
    %4 = vector.broadcast %3 : vector<1x16xf32> to vector<128x16xf32>
    %5 = arith.addf %2, %4 : vector<128x16xf32>
    %cst_5 = arith.constant dense<0.000000e+00> : vector<16xf32>
    %6 = vector.multi_reduction <add>, %5, %cst_5 [0] : vector<128x16xf32> to vector<16xf32>
    %7 = vector.shape_cast %6 : vector<16xf32> to vector<1x16xf32>
    %cst_6 = arith.constant 7.812500e-03 : f32
    %8 = vector.broadcast %cst_6 : f32 to vector<1x16xf32>
    %9 = arith.mulf %7, %8 : vector<1x16xf32>
    %10 = vector.broadcast %9 : vector<1x16xf32> to vector<128x16xf32>
    %11 = arith.subf %5, %10 : vector<128x16xf32>
    %12 = arith.mulf %11, %11 : vector<128x16xf32>
    %cst_7 = arith.constant dense<0.000000e+00> : vector<16xf32>
    %13 = vector.multi_reduction <add>, %12, %cst_7 [0] : vector<128x16xf32> to vector<16xf32>
    %14 = vector.shape_cast %13 : vector<16xf32> to vector<1x16xf32>
    %cst_8 = arith.constant 7.812500e-03 : f32
    %15 = vector.broadcast %cst_8 : f32 to vector<1x16xf32>
    %16 = arith.mulf %14, %15 : vector<1x16xf32>
    %cst_9 = arith.constant 9.99999974E-6 : f32
    %17 = vector.broadcast %cst_9 : f32 to vector<1x16xf32>
    %18 = arith.addf %16, %17 : vector<1x16xf32>
    %19 = math.rsqrt %18 : vector<1x16xf32>
    %c0_10 = arith.constant 0 : index
    %c0_11 = arith.constant 0 : index
    %20 = vector.load %arg4[%c0_10, %c0_11] : memref<1x16xf32, #tpu.memory_space<vmem>>, vector<1x16xf32>
    %21 = vector.broadcast %20 : vector<1x16xf32> to vector<128x16xf32>
    %22 = arith.mulf %21, %11 : vector<128x16xf32>
    %23 = vector.broadcast %19 : vector<1x16xf32> to vector<128x16xf32>
    %24 = arith.mulf %22, %23 : vector<128x16xf32>
    %c0_12 = arith.constant 0 : index
    %c0_13 = arith.constant 0 : index
    %25 = vector.load %arg5[%c0_12, %c0_13] : memref<1x16xf32, #tpu.memory_space<vmem>>, vector<1x16xf32>
    %26 = vector.broadcast %25 : vector<1x16xf32> to vector<128x16xf32>
    %27 = arith.addf %24, %26 : vector<128x16xf32>
    %cst_14 = arith.constant 0.000000e+00 : f32
    %28 = vector.broadcast %cst_14 : f32 to vector<128x16xf32>
    %29 = arith.maximumf %27, %28 : vector<128x16xf32>
    %30 = arith.truncf %29 : vector<128x16xf32> to vector<128x16xbf16>
    %c0_15 = arith.constant 0 : index
    %c0_16 = arith.constant 0 : index
    %31 = vector.load %arg6[%c0_15, %c0_16] : memref<128x16xbf16, #tpu.memory_space<vmem>>, vector<128x16xbf16>
    tpu.vector_store %arg6[%c0_15, %c0_16], %30 {strides = array<i32>} : memref<128x16xbf16, #tpu.memory_space<vmem>>, vector<128x16xbf16>,
    return
  }
  func.func @transform_0(%arg0: i32) -> (i32, i32) {
    %c0_i32 = arith.constant 0 : i32
    %c0_i32_0 = arith.constant 0 : i32
    %c0_i32_1 = arith.constant 0 : i32
    return %c0_i32, %c0_i32_0 : i32, i32
  }
  func.func @transform_1(%arg0: i32) -> (i32, i32) {
    %c0_i32 = arith.constant 0 : i32
    %c0_i32_0 = arith.constant 0 : i32
    %c0_i32_1 = arith.constant 0 : i32
    return %c0_i32, %c0_i32_0 : i32, i32
  }
  func.func @transform_2(%arg0: i32) -> (i32, i32) {
    %c0_i32 = arith.constant 0 : i32
    %c0_i32_0 = arith.constant 0 : i32
    %c0_i32_1 = arith.constant 0 : i32
    return %c0_i32, %c0_i32_0 : i32, i32
  }
  func.func @transform_3(%arg0: i32) -> (i32, i32) {
    %c0_i32 = arith.constant 0 : i32
    %c0_i32_0 = arith.constant 0 : i32
    %c0_i32_1 = arith.constant 0 : i32
    return %c0_i32, %c0_i32_0 : i32, i32
  }
  func.func @transform_4(%arg0: i32) -> (i32, i32) {
    %c0_i32 = arith.constant 0 : i32
    %c0_i32_0 = arith.constant 0 : i32
    %c0_i32_1 = arith.constant 0 : i32
    return %c0_i32, %c0_i32_0 : i32, i32
  }
  func.func @transform_5(%arg0: i32) -> (i32, i32) {
    %c0_i32 = arith.constant 0 : i32
    %c0_i32_0 = arith.constant 0 : i32
    %c0_i32_1 = arith.constant 0 : i32
    return %c0_i32, %c0_i32_0 : i32, i32
  }
}

module attributes {stable_mosaic.version = 11 : i64} {
  func.func @kernel(%arg0: i32, %arg1: memref<32x400xbf16, #tpu.memory_space<vmem>>, %arg2: memref<400x32xbf16, #tpu.memory_space<vmem>>, %arg3: memref<1x32xf32, #tpu.memory_space<vmem>>, %arg4: memref<1x32xf32, #tpu.memory_space<vmem>>, %arg5: memref<1x32xf32, #tpu.memory_space<vmem>>, %arg6: memref<32x32xbf16, #tpu.memory_space<vmem>>) attributes {dimension_semantics = [#tpu.dimension_semantics<arbitrary>], iteration_bounds = array<i64: 1>, scalar_prefetch = 0 : i64, scratch_operands = 0 : i64, tpu.core_type = #tpu.core_type<tc>, window_params = [{pipeline_mode = #tpu.pipeline_mode<synchronous>, transform_indices = @transform_0, window_bounds = array<i64: 32, 400>}, {pipeline_mode = #tpu.pipeline_mode<synchronous>, transform_indices = @transform_1, window_bounds = array<i64: 400, 32>}, {pipeline_mode = #tpu.pipeline_mode<synchronous>, transform_indices = @transform_2, window_bounds = array<i64: 1, 32>}, {pipeline_mode = #tpu.pipeline_mode<synchronous>, transform_indices = @transform_3, window_bounds = array<i64: 1, 32>}, {pipeline_mode = #tpu.pipeline_mode<synchronous>, transform_indices = @transform_4, window_bounds = array<i64: 1, 32>}, {pipeline_mode = #tpu.pipeline_mode<synchronous>, transform_indices = @transform_5, window_bounds = array<i64: 32, 32>}]} {
    %c0 = arith.constant 0 : index
    %c0_0 = arith.constant 0 : index
    %0 = vector.load %arg1[%c0, %c0_0] : memref<32x400xbf16, #tpu.memory_space<vmem>>, vector<32x400xbf16>
    %c0_1 = arith.constant 0 : index
    %c0_2 = arith.constant 0 : index
    %1 = vector.load %arg2[%c0_1, %c0_2] : memref<400x32xbf16, #tpu.memory_space<vmem>>, vector<400x32xbf16>
    %cst = arith.constant dense<0.000000e+00> : vector<32x32xf32>
    %2 = tpu.matmul %0, %1, %cst {dimension_numbers = #tpu.dot_dimension_numbers<[1], [0], [0], [1], [0, 0, 1, 1], [], []>} : vector<32x400xbf16>, vector<400x32xbf16>, vector<32x32xf32> -> vector<32x32xf32>
    %c0_3 = arith.constant 0 : index
    %c0_4 = arith.constant 0 : index
    %3 = vector.load %arg3[%c0_3, %c0_4] : memref<1x32xf32, #tpu.memory_space<vmem>>, vector<1x32xf32>
    %4 = vector.broadcast %3 : vector<1x32xf32> to vector<32x32xf32>
    %5 = arith.addf %2, %4 : vector<32x32xf32>
    %cst_5 = arith.constant dense<0.000000e+00> : vector<32xf32>
    %6 = vector.multi_reduction <add>, %5, %cst_5 [0] : vector<32x32xf32> to vector<32xf32>
    %7 = vector.shape_cast %6 : vector<32xf32> to vector<1x32xf32>
    %cst_6 = arith.constant 3.125000e-02 : f32
    %8 = vector.broadcast %cst_6 : f32 to vector<1x32xf32>
    %9 = arith.mulf %7, %8 : vector<1x32xf32>
    %10 = vector.broadcast %9 : vector<1x32xf32> to vector<32x32xf32>
    %11 = arith.subf %5, %10 : vector<32x32xf32>
    %12 = arith.mulf %11, %11 : vector<32x32xf32>
    %cst_7 = arith.constant dense<0.000000e+00> : vector<32xf32>
    %13 = vector.multi_reduction <add>, %12, %cst_7 [0] : vector<32x32xf32> to vector<32xf32>
    %14 = vector.shape_cast %13 : vector<32xf32> to vector<1x32xf32>
    %cst_8 = arith.constant 3.125000e-02 : f32
    %15 = vector.broadcast %cst_8 : f32 to vector<1x32xf32>
    %16 = arith.mulf %14, %15 : vector<1x32xf32>
    %cst_9 = arith.constant 9.99999974E-6 : f32
    %17 = vector.broadcast %cst_9 : f32 to vector<1x32xf32>
    %18 = arith.addf %16, %17 : vector<1x32xf32>
    %19 = math.rsqrt %18 : vector<1x32xf32>
    %c0_10 = arith.constant 0 : index
    %c0_11 = arith.constant 0 : index
    %20 = vector.load %arg4[%c0_10, %c0_11] : memref<1x32xf32, #tpu.memory_space<vmem>>, vector<1x32xf32>
    %21 = vector.broadcast %20 : vector<1x32xf32> to vector<32x32xf32>
    %22 = arith.mulf %21, %11 : vector<32x32xf32>
    %23 = vector.broadcast %19 : vector<1x32xf32> to vector<32x32xf32>
    %24 = arith.mulf %22, %23 : vector<32x32xf32>
    %c0_12 = arith.constant 0 : index
    %c0_13 = arith.constant 0 : index
    %25 = vector.load %arg5[%c0_12, %c0_13] : memref<1x32xf32, #tpu.memory_space<vmem>>, vector<1x32xf32>
    %26 = vector.broadcast %25 : vector<1x32xf32> to vector<32x32xf32>
    %27 = arith.addf %24, %26 : vector<32x32xf32>
    %cst_14 = arith.constant 0.000000e+00 : f32
    %28 = vector.broadcast %cst_14 : f32 to vector<32x32xf32>
    %29 = arith.maximumf %27, %28 : vector<32x32xf32>
    %30 = arith.truncf %29 : vector<32x32xf32> to vector<32x32xbf16>
    %c0_15 = arith.constant 0 : index
    %c0_16 = arith.constant 0 : index
    %31 = vector.load %arg6[%c0_15, %c0_16] : memref<32x32xbf16, #tpu.memory_space<vmem>>, vector<32x32xbf16>
    tpu.vector_store %arg6[%c0_15, %c0_16], %30 {strides = array<i32>} : memref<32x32xbf16, #tpu.memory_space<vmem>>, vector<32x32xbf16>,
    return
  }
  func.func @transform_0(%arg0: i32) -> (i32, i32) {
    %c0_i32 = arith.constant 0 : i32
    %c0_i32_0 = arith.constant 0 : i32
    %c0_i32_1 = arith.constant 0 : i32
    return %c0_i32, %c0_i32_0 : i32, i32
  }
  func.func @transform_1(%arg0: i32) -> (i32, i32) {
    %c0_i32 = arith.constant 0 : i32
    %c0_i32_0 = arith.constant 0 : i32
    %c0_i32_1 = arith.constant 0 : i32
    return %c0_i32, %c0_i32_0 : i32, i32
  }
  func.func @transform_2(%arg0: i32) -> (i32, i32) {
    %c0_i32 = arith.constant 0 : i32
    %c0_i32_0 = arith.constant 0 : i32
    %c0_i32_1 = arith.constant 0 : i32
    return %c0_i32, %c0_i32_0 : i32, i32
  }
  func.func @transform_3(%arg0: i32) -> (i32, i32) {
    %c0_i32 = arith.constant 0 : i32
    %c0_i32_0 = arith.constant 0 : i32
    %c0_i32_1 = arith.constant 0 : i32
    return %c0_i32, %c0_i32_0 : i32, i32
  }
  func.func @transform_4(%arg0: i32) -> (i32, i32) {
    %c0_i32 = arith.constant 0 : i32
    %c0_i32_0 = arith.constant 0 : i32
    %c0_i32_1 = arith.constant 0 : i32
    return %c0_i32, %c0_i32_0 : i32, i32
  }
  func.func @transform_5(%arg0: i32) -> (i32, i32) {
    %c0_i32 = arith.constant 0 : i32
    %c0_i32_0 = arith.constant 0 : i32
    %c0_i32_1 = arith.constant 0 : i32
    return %c0_i32, %c0_i32_0 : i32, i32
  }
}

module attributes {stable_mosaic.version = 11 : i64} {
  func.func @kernel(%arg0: i32, %arg1: memref<32x288xbf16, #tpu.memory_space<vmem>>, %arg2: memref<288x32xbf16, #tpu.memory_space<vmem>>, %arg3: memref<1x32xf32, #tpu.memory_space<vmem>>, %arg4: memref<1x32xf32, #tpu.memory_space<vmem>>, %arg5: memref<1x32xf32, #tpu.memory_space<vmem>>, %arg6: memref<32x32xbf16, #tpu.memory_space<vmem>>) attributes {dimension_semantics = [#tpu.dimension_semantics<arbitrary>], iteration_bounds = array<i64: 1>, scalar_prefetch = 0 : i64, scratch_operands = 0 : i64, tpu.core_type = #tpu.core_type<tc>, window_params = [{pipeline_mode = #tpu.pipeline_mode<synchronous>, transform_indices = @transform_0, window_bounds = array<i64: 32, 288>}, {pipeline_mode = #tpu.pipeline_mode<synchronous>, transform_indices = @transform_1, window_bounds = array<i64: 288, 32>}, {pipeline_mode = #tpu.pipeline_mode<synchronous>, transform_indices = @transform_2, window_bounds = array<i64: 1, 32>}, {pipeline_mode = #tpu.pipeline_mode<synchronous>, transform_indices = @transform_3, window_bounds = array<i64: 1, 32>}, {pipeline_mode = #tpu.pipeline_mode<synchronous>, transform_indices = @transform_4, window_bounds = array<i64: 1, 32>}, {pipeline_mode = #tpu.pipeline_mode<synchronous>, transform_indices = @transform_5, window_bounds = array<i64: 32, 32>}]} {
    %c0 = arith.constant 0 : index
    %c0_0 = arith.constant 0 : index
    %0 = vector.load %arg1[%c0, %c0_0] : memref<32x288xbf16, #tpu.memory_space<vmem>>, vector<32x288xbf16>
    %c0_1 = arith.constant 0 : index
    %c0_2 = arith.constant 0 : index
    %1 = vector.load %arg2[%c0_1, %c0_2] : memref<288x32xbf16, #tpu.memory_space<vmem>>, vector<288x32xbf16>
    %cst = arith.constant dense<0.000000e+00> : vector<32x32xf32>
    %2 = tpu.matmul %0, %1, %cst {dimension_numbers = #tpu.dot_dimension_numbers<[1], [0], [0], [1], [0, 0, 1, 1], [], []>} : vector<32x288xbf16>, vector<288x32xbf16>, vector<32x32xf32> -> vector<32x32xf32>
    %c0_3 = arith.constant 0 : index
    %c0_4 = arith.constant 0 : index
    %3 = vector.load %arg3[%c0_3, %c0_4] : memref<1x32xf32, #tpu.memory_space<vmem>>, vector<1x32xf32>
    %4 = vector.broadcast %3 : vector<1x32xf32> to vector<32x32xf32>
    %5 = arith.addf %2, %4 : vector<32x32xf32>
    %cst_5 = arith.constant dense<0.000000e+00> : vector<32xf32>
    %6 = vector.multi_reduction <add>, %5, %cst_5 [0] : vector<32x32xf32> to vector<32xf32>
    %7 = vector.shape_cast %6 : vector<32xf32> to vector<1x32xf32>
    %cst_6 = arith.constant 3.125000e-02 : f32
    %8 = vector.broadcast %cst_6 : f32 to vector<1x32xf32>
    %9 = arith.mulf %7, %8 : vector<1x32xf32>
    %10 = vector.broadcast %9 : vector<1x32xf32> to vector<32x32xf32>
    %11 = arith.subf %5, %10 : vector<32x32xf32>
    %12 = arith.mulf %11, %11 : vector<32x32xf32>
    %cst_7 = arith.constant dense<0.000000e+00> : vector<32xf32>
    %13 = vector.multi_reduction <add>, %12, %cst_7 [0] : vector<32x32xf32> to vector<32xf32>
    %14 = vector.shape_cast %13 : vector<32xf32> to vector<1x32xf32>
    %cst_8 = arith.constant 3.125000e-02 : f32
    %15 = vector.broadcast %cst_8 : f32 to vector<1x32xf32>
    %16 = arith.mulf %14, %15 : vector<1x32xf32>
    %cst_9 = arith.constant 9.99999974E-6 : f32
    %17 = vector.broadcast %cst_9 : f32 to vector<1x32xf32>
    %18 = arith.addf %16, %17 : vector<1x32xf32>
    %19 = math.rsqrt %18 : vector<1x32xf32>
    %c0_10 = arith.constant 0 : index
    %c0_11 = arith.constant 0 : index
    %20 = vector.load %arg4[%c0_10, %c0_11] : memref<1x32xf32, #tpu.memory_space<vmem>>, vector<1x32xf32>
    %21 = vector.broadcast %20 : vector<1x32xf32> to vector<32x32xf32>
    %22 = arith.mulf %21, %11 : vector<32x32xf32>
    %23 = vector.broadcast %19 : vector<1x32xf32> to vector<32x32xf32>
    %24 = arith.mulf %22, %23 : vector<32x32xf32>
    %c0_12 = arith.constant 0 : index
    %c0_13 = arith.constant 0 : index
    %25 = vector.load %arg5[%c0_12, %c0_13] : memref<1x32xf32, #tpu.memory_space<vmem>>, vector<1x32xf32>
    %26 = vector.broadcast %25 : vector<1x32xf32> to vector<32x32xf32>
    %27 = arith.addf %24, %26 : vector<32x32xf32>
    %cst_14 = arith.constant 0.000000e+00 : f32
    %28 = vector.broadcast %cst_14 : f32 to vector<32x32xf32>
    %29 = arith.maximumf %27, %28 : vector<32x32xf32>
    %30 = arith.truncf %29 : vector<32x32xf32> to vector<32x32xbf16>
    %c0_15 = arith.constant 0 : index
    %c0_16 = arith.constant 0 : index
    %31 = vector.load %arg6[%c0_15, %c0_16] : memref<32x32xbf16, #tpu.memory_space<vmem>>, vector<32x32xbf16>
    tpu.vector_store %arg6[%c0_15, %c0_16], %30 {strides = array<i32>} : memref<32x32xbf16, #tpu.memory_space<vmem>>, vector<32x32xbf16>,
    return
  }
  func.func @transform_0(%arg0: i32) -> (i32, i32) {
    %c0_i32 = arith.constant 0 : i32
    %c0_i32_0 = arith.constant 0 : i32
    %c0_i32_1 = arith.constant 0 : i32
    return %c0_i32, %c0_i32_0 : i32, i32
  }
  func.func @transform_1(%arg0: i32) -> (i32, i32) {
    %c0_i32 = arith.constant 0 : i32
    %c0_i32_0 = arith.constant 0 : i32
    %c0_i32_1 = arith.constant 0 : i32
    return %c0_i32, %c0_i32_0 : i32, i32
  }
  func.func @transform_2(%arg0: i32) -> (i32, i32) {
    %c0_i32 = arith.constant 0 : i32
    %c0_i32_0 = arith.constant 0 : i32
    %c0_i32_1 = arith.constant 0 : i32
    return %c0_i32, %c0_i32_0 : i32, i32
  }
  func.func @transform_3(%arg0: i32) -> (i32, i32) {
    %c0_i32 = arith.constant 0 : i32
    %c0_i32_0 = arith.constant 0 : i32
    %c0_i32_1 = arith.constant 0 : i32
    return %c0_i32, %c0_i32_0 : i32, i32
  }
  func.func @transform_4(%arg0: i32) -> (i32, i32) {
    %c0_i32 = arith.constant 0 : i32
    %c0_i32_0 = arith.constant 0 : i32
    %c0_i32_1 = arith.constant 0 : i32
    return %c0_i32, %c0_i32_0 : i32, i32
  }
  func.func @transform_5(%arg0: i32) -> (i32, i32) {
    %c0_i32 = arith.constant 0 : i32
    %c0_i32_0 = arith.constant 0 : i32
    %c0_i32_1 = arith.constant 0 : i32
    return %c0_i32, %c0_i32_0 : i32, i32
  }
}

module attributes {stable_mosaic.version = 11 : i64} {
  func.func @kernel(%arg0: i32, %arg1: memref<32x288xbf16, #tpu.memory_space<vmem>>, %arg2: memref<288x32xbf16, #tpu.memory_space<vmem>>, %arg3: memref<1x32xf32, #tpu.memory_space<vmem>>, %arg4: memref<1x32xf32, #tpu.memory_space<vmem>>, %arg5: memref<1x32xf32, #tpu.memory_space<vmem>>, %arg6: memref<32x32xbf16, #tpu.memory_space<vmem>>, %arg7: memref<32x32xbf16, #tpu.memory_space<vmem>>) attributes {dimension_semantics = [#tpu.dimension_semantics<arbitrary>], iteration_bounds = array<i64: 1>, scalar_prefetch = 0 : i64, scratch_operands = 0 : i64, tpu.core_type = #tpu.core_type<tc>, window_params = [{pipeline_mode = #tpu.pipeline_mode<synchronous>, transform_indices = @transform_0, window_bounds = array<i64: 32, 288>}, {pipeline_mode = #tpu.pipeline_mode<synchronous>, transform_indices = @transform_1, window_bounds = array<i64: 288, 32>}, {pipeline_mode = #tpu.pipeline_mode<synchronous>, transform_indices = @transform_2, window_bounds = array<i64: 1, 32>}, {pipeline_mode = #tpu.pipeline_mode<synchronous>, transform_indices = @transform_3, window_bounds = array<i64: 1, 32>}, {pipeline_mode = #tpu.pipeline_mode<synchronous>, transform_indices = @transform_4, window_bounds = array<i64: 1, 32>}, {pipeline_mode = #tpu.pipeline_mode<synchronous>, transform_indices = @transform_5, window_bounds = array<i64: 32, 32>}, {pipeline_mode = #tpu.pipeline_mode<synchronous>, transform_indices = @transform_6, window_bounds = array<i64: 32, 32>}]} {
    %c0 = arith.constant 0 : index
    %c0_0 = arith.constant 0 : index
    %0 = vector.load %arg1[%c0, %c0_0] : memref<32x288xbf16, #tpu.memory_space<vmem>>, vector<32x288xbf16>
    %c0_1 = arith.constant 0 : index
    %c0_2 = arith.constant 0 : index
    %1 = vector.load %arg2[%c0_1, %c0_2] : memref<288x32xbf16, #tpu.memory_space<vmem>>, vector<288x32xbf16>
    %cst = arith.constant dense<0.000000e+00> : vector<32x32xf32>
    %2 = tpu.matmul %0, %1, %cst {dimension_numbers = #tpu.dot_dimension_numbers<[1], [0], [0], [1], [0, 0, 1, 1], [], []>} : vector<32x288xbf16>, vector<288x32xbf16>, vector<32x32xf32> -> vector<32x32xf32>
    %c0_3 = arith.constant 0 : index
    %c0_4 = arith.constant 0 : index
    %3 = vector.load %arg3[%c0_3, %c0_4] : memref<1x32xf32, #tpu.memory_space<vmem>>, vector<1x32xf32>
    %4 = vector.broadcast %3 : vector<1x32xf32> to vector<32x32xf32>
    %5 = arith.addf %2, %4 : vector<32x32xf32>
    %cst_5 = arith.constant dense<0.000000e+00> : vector<32xf32>
    %6 = vector.multi_reduction <add>, %5, %cst_5 [0] : vector<32x32xf32> to vector<32xf32>
    %7 = vector.shape_cast %6 : vector<32xf32> to vector<1x32xf32>
    %cst_6 = arith.constant 3.125000e-02 : f32
    %8 = vector.broadcast %cst_6 : f32 to vector<1x32xf32>
    %9 = arith.mulf %7, %8 : vector<1x32xf32>
    %10 = vector.broadcast %9 : vector<1x32xf32> to vector<32x32xf32>
    %11 = arith.subf %5, %10 : vector<32x32xf32>
    %12 = arith.mulf %11, %11 : vector<32x32xf32>
    %cst_7 = arith.constant dense<0.000000e+00> : vector<32xf32>
    %13 = vector.multi_reduction <add>, %12, %cst_7 [0] : vector<32x32xf32> to vector<32xf32>
    %14 = vector.shape_cast %13 : vector<32xf32> to vector<1x32xf32>
    %cst_8 = arith.constant 3.125000e-02 : f32
    %15 = vector.broadcast %cst_8 : f32 to vector<1x32xf32>
    %16 = arith.mulf %14, %15 : vector<1x32xf32>
    %cst_9 = arith.constant 9.99999974E-6 : f32
    %17 = vector.broadcast %cst_9 : f32 to vector<1x32xf32>
    %18 = arith.addf %16, %17 : vector<1x32xf32>
    %19 = math.rsqrt %18 : vector<1x32xf32>
    %c0_10 = arith.constant 0 : index
    %c0_11 = arith.constant 0 : index
    %20 = vector.load %arg4[%c0_10, %c0_11] : memref<1x32xf32, #tpu.memory_space<vmem>>, vector<1x32xf32>
    %21 = vector.broadcast %20 : vector<1x32xf32> to vector<32x32xf32>
    %22 = arith.mulf %21, %11 : vector<32x32xf32>
    %23 = vector.broadcast %19 : vector<1x32xf32> to vector<32x32xf32>
    %24 = arith.mulf %22, %23 : vector<32x32xf32>
    %c0_12 = arith.constant 0 : index
    %c0_13 = arith.constant 0 : index
    %25 = vector.load %arg5[%c0_12, %c0_13] : memref<1x32xf32, #tpu.memory_space<vmem>>, vector<1x32xf32>
    %26 = vector.broadcast %25 : vector<1x32xf32> to vector<32x32xf32>
    %27 = arith.addf %24, %26 : vector<32x32xf32>
    %c0_14 = arith.constant 0 : index
    %c0_15 = arith.constant 0 : index
    %28 = vector.load %arg6[%c0_14, %c0_15] : memref<32x32xbf16, #tpu.memory_space<vmem>>, vector<32x32xbf16>
    %29 = arith.extf %28 : vector<32x32xbf16> to vector<32x32xf32>
    %30 = arith.addf %27, %29 : vector<32x32xf32>
    %31 = arith.truncf %30 : vector<32x32xf32> to vector<32x32xbf16>
    %c0_16 = arith.constant 0 : index
    %c0_17 = arith.constant 0 : index
    %32 = vector.load %arg7[%c0_16, %c0_17] : memref<32x32xbf16, #tpu.memory_space<vmem>>, vector<32x32xbf16>
    tpu.vector_store %arg7[%c0_16, %c0_17], %31 {strides = array<i32>} : memref<32x32xbf16, #tpu.memory_space<vmem>>, vector<32x32xbf16>,
    return
  }
  func.func @transform_0(%arg0: i32) -> (i32, i32) {
    %c0_i32 = arith.constant 0 : i32
    %c0_i32_0 = arith.constant 0 : i32
    %c0_i32_1 = arith.constant 0 : i32
    return %c0_i32, %c0_i32_0 : i32, i32
  }
  func.func @transform_1(%arg0: i32) -> (i32, i32) {
    %c0_i32 = arith.constant 0 : i32
    %c0_i32_0 = arith.constant 0 : i32
    %c0_i32_1 = arith.constant 0 : i32
    return %c0_i32, %c0_i32_0 : i32, i32
  }
  func.func @transform_2(%arg0: i32) -> (i32, i32) {
    %c0_i32 = arith.constant 0 : i32
    %c0_i32_0 = arith.constant 0 : i32
    %c0_i32_1 = arith.constant 0 : i32
    return %c0_i32, %c0_i32_0 : i32, i32
  }
  func.func @transform_3(%arg0: i32) -> (i32, i32) {
    %c0_i32 = arith.constant 0 : i32
    %c0_i32_0 = arith.constant 0 : i32
    %c0_i32_1 = arith.constant 0 : i32
    return %c0_i32, %c0_i32_0 : i32, i32
  }
  func.func @transform_4(%arg0: i32) -> (i32, i32) {
    %c0_i32 = arith.constant 0 : i32
    %c0_i32_0 = arith.constant 0 : i32
    %c0_i32_1 = arith.constant 0 : i32
    return %c0_i32, %c0_i32_0 : i32, i32
  }
  func.func @transform_5(%arg0: i32) -> (i32, i32) {
    %c0_i32 = arith.constant 0 : i32
    %c0_i32_0 = arith.constant 0 : i32
    %c0_i32_1 = arith.constant 0 : i32
    return %c0_i32, %c0_i32_0 : i32, i32
  }
  func.func @transform_6(%arg0: i32) -> (i32, i32) {
    %c0_i32 = arith.constant 0 : i32
    %c0_i32_0 = arith.constant 0 : i32
    %c0_i32_1 = arith.constant 0 : i32
    return %c0_i32, %c0_i32_0 : i32, i32
  }
}

module attributes {stable_mosaic.version = 11 : i64} {
  func.func @kernel(%arg0: i32, %arg1: memref<32x288xbf16, #tpu.memory_space<vmem>>, %arg2: memref<288x64xbf16, #tpu.memory_space<vmem>>, %arg3: memref<1x64xf32, #tpu.memory_space<vmem>>, %arg4: memref<1x64xf32, #tpu.memory_space<vmem>>, %arg5: memref<1x64xf32, #tpu.memory_space<vmem>>, %arg6: memref<64x64xf32, #tpu.memory_space<vmem>>, %arg7: memref<32x64xbf16, #tpu.memory_space<vmem>>) attributes {dimension_semantics = [#tpu.dimension_semantics<arbitrary>], iteration_bounds = array<i64: 1>, scalar_prefetch = 0 : i64, scratch_operands = 0 : i64, tpu.core_type = #tpu.core_type<tc>, window_params = [{pipeline_mode = #tpu.pipeline_mode<synchronous>, transform_indices = @transform_0, window_bounds = array<i64: 32, 288>}, {pipeline_mode = #tpu.pipeline_mode<synchronous>, transform_indices = @transform_1, window_bounds = array<i64: 288, 64>}, {pipeline_mode = #tpu.pipeline_mode<synchronous>, transform_indices = @transform_2, window_bounds = array<i64: 1, 64>}, {pipeline_mode = #tpu.pipeline_mode<synchronous>, transform_indices = @transform_3, window_bounds = array<i64: 1, 64>}, {pipeline_mode = #tpu.pipeline_mode<synchronous>, transform_indices = @transform_4, window_bounds = array<i64: 1, 64>}, {pipeline_mode = #tpu.pipeline_mode<synchronous>, transform_indices = @transform_5, window_bounds = array<i64: 64, 64>}, {pipeline_mode = #tpu.pipeline_mode<synchronous>, transform_indices = @transform_6, window_bounds = array<i64: 32, 64>}]} {
    %c0 = arith.constant 0 : index
    %c0_0 = arith.constant 0 : index
    %0 = vector.load %arg1[%c0, %c0_0] : memref<32x288xbf16, #tpu.memory_space<vmem>>, vector<32x288xbf16>
    %c0_1 = arith.constant 0 : index
    %c0_2 = arith.constant 0 : index
    %1 = vector.load %arg2[%c0_1, %c0_2] : memref<288x64xbf16, #tpu.memory_space<vmem>>, vector<288x64xbf16>
    %cst = arith.constant dense<0.000000e+00> : vector<32x64xf32>
    %2 = tpu.matmul %0, %1, %cst {dimension_numbers = #tpu.dot_dimension_numbers<[1], [0], [0], [1], [0, 0, 1, 1], [], []>} : vector<32x288xbf16>, vector<288x64xbf16>, vector<32x64xf32> -> vector<32x64xf32>
    %c0_3 = arith.constant 0 : index
    %c0_4 = arith.constant 0 : index
    %3 = vector.load %arg3[%c0_3, %c0_4] : memref<1x64xf32, #tpu.memory_space<vmem>>, vector<1x64xf32>
    %4 = vector.broadcast %3 : vector<1x64xf32> to vector<32x64xf32>
    %5 = arith.addf %2, %4 : vector<32x64xf32>
    %c0_5 = arith.constant 0 : index
    %c0_6 = arith.constant 0 : index
    %6 = vector.load %arg6[%c0_5, %c0_6] : memref<64x64xf32, #tpu.memory_space<vmem>>, vector<64x64xf32>
    %cst_7 = arith.constant dense<0.000000e+00> : vector<32x64xf32>
    %7 = tpu.matmul %5, %6, %cst_7 {dimension_numbers = #tpu.dot_dimension_numbers<[1], [0], [0], [1], [0, 0, 1, 1], [], []>} : vector<32x64xf32>, vector<64x64xf32>, vector<32x64xf32> -> vector<32x64xf32>
    %cst_8 = arith.constant dense<0.000000e+00> : vector<64xf32>
    %8 = vector.multi_reduction <add>, %7, %cst_8 [0] : vector<32x64xf32> to vector<64xf32>
    %9 = vector.shape_cast %8 : vector<64xf32> to vector<1x64xf32>
    %cst_9 = arith.constant 7.812500e-03 : f32
    %10 = vector.broadcast %cst_9 : f32 to vector<1x64xf32>
    %11 = arith.mulf %9, %10 : vector<1x64xf32>
    %12 = vector.broadcast %11 : vector<1x64xf32> to vector<32x64xf32>
    %13 = arith.subf %5, %12 : vector<32x64xf32>
    %14 = arith.mulf %13, %13 : vector<32x64xf32>
    %c0_10 = arith.constant 0 : index
    %c0_11 = arith.constant 0 : index
    %15 = vector.load %arg6[%c0_10, %c0_11] : memref<64x64xf32, #tpu.memory_space<vmem>>, vector<64x64xf32>
    %cst_12 = arith.constant dense<0.000000e+00> : vector<32x64xf32>
    %16 = tpu.matmul %14, %15, %cst_12 {dimension_numbers = #tpu.dot_dimension_numbers<[1], [0], [0], [1], [0, 0, 1, 1], [], []>} : vector<32x64xf32>, vector<64x64xf32>, vector<32x64xf32> -> vector<32x64xf32>
    %cst_13 = arith.constant dense<0.000000e+00> : vector<64xf32>
    %17 = vector.multi_reduction <add>, %16, %cst_13 [0] : vector<32x64xf32> to vector<64xf32>
    %18 = vector.shape_cast %17 : vector<64xf32> to vector<1x64xf32>
    %cst_14 = arith.constant 7.812500e-03 : f32
    %19 = vector.broadcast %cst_14 : f32 to vector<1x64xf32>
    %20 = arith.mulf %18, %19 : vector<1x64xf32>
    %cst_15 = arith.constant 9.99999974E-6 : f32
    %21 = vector.broadcast %cst_15 : f32 to vector<1x64xf32>
    %22 = arith.addf %20, %21 : vector<1x64xf32>
    %23 = math.rsqrt %22 : vector<1x64xf32>
    %c0_16 = arith.constant 0 : index
    %c0_17 = arith.constant 0 : index
    %24 = vector.load %arg4[%c0_16, %c0_17] : memref<1x64xf32, #tpu.memory_space<vmem>>, vector<1x64xf32>
    %25 = vector.broadcast %24 : vector<1x64xf32> to vector<32x64xf32>
    %26 = arith.mulf %25, %13 : vector<32x64xf32>
    %27 = vector.broadcast %23 : vector<1x64xf32> to vector<32x64xf32>
    %28 = arith.mulf %26, %27 : vector<32x64xf32>
    %c0_18 = arith.constant 0 : index
    %c0_19 = arith.constant 0 : index
    %29 = vector.load %arg5[%c0_18, %c0_19] : memref<1x64xf32, #tpu.memory_space<vmem>>, vector<1x64xf32>
    %30 = vector.broadcast %29 : vector<1x64xf32> to vector<32x64xf32>
    %31 = arith.addf %28, %30 : vector<32x64xf32>
    %cst_20 = arith.constant 0.000000e+00 : f32
    %32 = vector.broadcast %cst_20 : f32 to vector<32x64xf32>
    %33 = arith.maximumf %31, %32 : vector<32x64xf32>
    %34 = arith.truncf %33 : vector<32x64xf32> to vector<32x64xbf16>
    %c0_21 = arith.constant 0 : index
    %c0_22 = arith.constant 0 : index
    %35 = vector.load %arg7[%c0_21, %c0_22] : memref<32x64xbf16, #tpu.memory_space<vmem>>, vector<32x64xbf16>
    tpu.vector_store %arg7[%c0_21, %c0_22], %34 {strides = array<i32>} : memref<32x64xbf16, #tpu.memory_space<vmem>>, vector<32x64xbf16>,
    return
  }
  func.func @transform_0(%arg0: i32) -> (i32, i32) {
    %c0_i32 = arith.constant 0 : i32
    %c0_i32_0 = arith.constant 0 : i32
    %c0_i32_1 = arith.constant 0 : i32
    return %c0_i32, %c0_i32_0 : i32, i32
  }
  func.func @transform_1(%arg0: i32) -> (i32, i32) {
    %c0_i32 = arith.constant 0 : i32
    %c0_i32_0 = arith.constant 0 : i32
    %c0_i32_1 = arith.constant 0 : i32
    return %c0_i32, %c0_i32_0 : i32, i32
  }
  func.func @transform_2(%arg0: i32) -> (i32, i32) {
    %c0_i32 = arith.constant 0 : i32
    %c0_i32_0 = arith.constant 0 : i32
    %c0_i32_1 = arith.constant 0 : i32
    return %c0_i32, %c0_i32_0 : i32, i32
  }
  func.func @transform_3(%arg0: i32) -> (i32, i32) {
    %c0_i32 = arith.constant 0 : i32
    %c0_i32_0 = arith.constant 0 : i32
    %c0_i32_1 = arith.constant 0 : i32
    return %c0_i32, %c0_i32_0 : i32, i32
  }
  func.func @transform_4(%arg0: i32) -> (i32, i32) {
    %c0_i32 = arith.constant 0 : i32
    %c0_i32_0 = arith.constant 0 : i32
    %c0_i32_1 = arith.constant 0 : i32
    return %c0_i32, %c0_i32_0 : i32, i32
  }
  func.func @transform_5(%arg0: i32) -> (i32, i32) {
    %c0_i32 = arith.constant 0 : i32
    %c0_i32_0 = arith.constant 0 : i32
    %c0_i32_1 = arith.constant 0 : i32
    return %c0_i32, %c0_i32_0 : i32, i32
  }
  func.func @transform_6(%arg0: i32) -> (i32, i32) {
    %c0_i32 = arith.constant 0 : i32
    %c0_i32_0 = arith.constant 0 : i32
    %c0_i32_1 = arith.constant 0 : i32
    return %c0_i32, %c0_i32_0 : i32, i32
  }
}

module attributes {stable_mosaic.version = 11 : i64} {
  func.func @kernel(%arg0: i32, %arg1: memref<128x144xbf16, #tpu.memory_space<vmem>>, %arg2: memref<144x32xbf16, #tpu.memory_space<vmem>>, %arg3: memref<1x32xf32, #tpu.memory_space<vmem>>, %arg4: memref<1x32xf32, #tpu.memory_space<vmem>>, %arg5: memref<1x32xf32, #tpu.memory_space<vmem>>, %arg6: memref<32x32xf32, #tpu.memory_space<vmem>>, %arg7: memref<128x32xbf16, #tpu.memory_space<vmem>>) attributes {dimension_semantics = [#tpu.dimension_semantics<arbitrary>], iteration_bounds = array<i64: 1>, scalar_prefetch = 0 : i64, scratch_operands = 0 : i64, tpu.core_type = #tpu.core_type<tc>, window_params = [{pipeline_mode = #tpu.pipeline_mode<synchronous>, transform_indices = @transform_0, window_bounds = array<i64: 128, 144>}, {pipeline_mode = #tpu.pipeline_mode<synchronous>, transform_indices = @transform_1, window_bounds = array<i64: 144, 32>}, {pipeline_mode = #tpu.pipeline_mode<synchronous>, transform_indices = @transform_2, window_bounds = array<i64: 1, 32>}, {pipeline_mode = #tpu.pipeline_mode<synchronous>, transform_indices = @transform_3, window_bounds = array<i64: 1, 32>}, {pipeline_mode = #tpu.pipeline_mode<synchronous>, transform_indices = @transform_4, window_bounds = array<i64: 1, 32>}, {pipeline_mode = #tpu.pipeline_mode<synchronous>, transform_indices = @transform_5, window_bounds = array<i64: 32, 32>}, {pipeline_mode = #tpu.pipeline_mode<synchronous>, transform_indices = @transform_6, window_bounds = array<i64: 128, 32>}]} {
    %c0 = arith.constant 0 : index
    %c0_0 = arith.constant 0 : index
    %0 = vector.load %arg1[%c0, %c0_0] : memref<128x144xbf16, #tpu.memory_space<vmem>>, vector<128x144xbf16>
    %c0_1 = arith.constant 0 : index
    %c0_2 = arith.constant 0 : index
    %1 = vector.load %arg2[%c0_1, %c0_2] : memref<144x32xbf16, #tpu.memory_space<vmem>>, vector<144x32xbf16>
    %cst = arith.constant dense<0.000000e+00> : vector<128x32xf32>
    %2 = tpu.matmul %0, %1, %cst {dimension_numbers = #tpu.dot_dimension_numbers<[1], [0], [0], [1], [0, 0, 1, 1], [], []>} : vector<128x144xbf16>, vector<144x32xbf16>, vector<128x32xf32> -> vector<128x32xf32>
    %c0_3 = arith.constant 0 : index
    %c0_4 = arith.constant 0 : index
    %3 = vector.load %arg3[%c0_3, %c0_4] : memref<1x32xf32, #tpu.memory_space<vmem>>, vector<1x32xf32>
    %4 = vector.broadcast %3 : vector<1x32xf32> to vector<128x32xf32>
    %5 = arith.addf %2, %4 : vector<128x32xf32>
    %c0_5 = arith.constant 0 : index
    %c0_6 = arith.constant 0 : index
    %6 = vector.load %arg6[%c0_5, %c0_6] : memref<32x32xf32, #tpu.memory_space<vmem>>, vector<32x32xf32>
    %cst_7 = arith.constant dense<0.000000e+00> : vector<128x32xf32>
    %7 = tpu.matmul %5, %6, %cst_7 {dimension_numbers = #tpu.dot_dimension_numbers<[1], [0], [0], [1], [0, 0, 1, 1], [], []>} : vector<128x32xf32>, vector<32x32xf32>, vector<128x32xf32> -> vector<128x32xf32>
    %cst_8 = arith.constant dense<0.000000e+00> : vector<32xf32>
    %8 = vector.multi_reduction <add>, %7, %cst_8 [0] : vector<128x32xf32> to vector<32xf32>
    %9 = vector.shape_cast %8 : vector<32xf32> to vector<1x32xf32>
    %cst_9 = arith.constant 0.001953125 : f32
    %10 = vector.broadcast %cst_9 : f32 to vector<1x32xf32>
    %11 = arith.mulf %9, %10 : vector<1x32xf32>
    %12 = vector.broadcast %11 : vector<1x32xf32> to vector<128x32xf32>
    %13 = arith.subf %5, %12 : vector<128x32xf32>
    %14 = arith.mulf %13, %13 : vector<128x32xf32>
    %c0_10 = arith.constant 0 : index
    %c0_11 = arith.constant 0 : index
    %15 = vector.load %arg6[%c0_10, %c0_11] : memref<32x32xf32, #tpu.memory_space<vmem>>, vector<32x32xf32>
    %cst_12 = arith.constant dense<0.000000e+00> : vector<128x32xf32>
    %16 = tpu.matmul %14, %15, %cst_12 {dimension_numbers = #tpu.dot_dimension_numbers<[1], [0], [0], [1], [0, 0, 1, 1], [], []>} : vector<128x32xf32>, vector<32x32xf32>, vector<128x32xf32> -> vector<128x32xf32>
    %cst_13 = arith.constant dense<0.000000e+00> : vector<32xf32>
    %17 = vector.multi_reduction <add>, %16, %cst_13 [0] : vector<128x32xf32> to vector<32xf32>
    %18 = vector.shape_cast %17 : vector<32xf32> to vector<1x32xf32>
    %cst_14 = arith.constant 0.001953125 : f32
    %19 = vector.broadcast %cst_14 : f32 to vector<1x32xf32>
    %20 = arith.mulf %18, %19 : vector<1x32xf32>
    %cst_15 = arith.constant 9.99999974E-6 : f32
    %21 = vector.broadcast %cst_15 : f32 to vector<1x32xf32>
    %22 = arith.addf %20, %21 : vector<1x32xf32>
    %23 = math.rsqrt %22 : vector<1x32xf32>
    %c0_16 = arith.constant 0 : index
    %c0_17 = arith.constant 0 : index
    %24 = vector.load %arg4[%c0_16, %c0_17] : memref<1x32xf32, #tpu.memory_space<vmem>>, vector<1x32xf32>
    %25 = vector.broadcast %24 : vector<1x32xf32> to vector<128x32xf32>
    %26 = arith.mulf %25, %13 : vector<128x32xf32>
    %27 = vector.broadcast %23 : vector<1x32xf32> to vector<128x32xf32>
    %28 = arith.mulf %26, %27 : vector<128x32xf32>
    %c0_18 = arith.constant 0 : index
    %c0_19 = arith.constant 0 : index
    %29 = vector.load %arg5[%c0_18, %c0_19] : memref<1x32xf32, #tpu.memory_space<vmem>>, vector<1x32xf32>
    %30 = vector.broadcast %29 : vector<1x32xf32> to vector<128x32xf32>
    %31 = arith.addf %28, %30 : vector<128x32xf32>
    %cst_20 = arith.constant 0.000000e+00 : f32
    %32 = vector.broadcast %cst_20 : f32 to vector<128x32xf32>
    %33 = arith.maximumf %31, %32 : vector<128x32xf32>
    %34 = arith.truncf %33 : vector<128x32xf32> to vector<128x32xbf16>
    %c0_21 = arith.constant 0 : index
    %c0_22 = arith.constant 0 : index
    %35 = vector.load %arg7[%c0_21, %c0_22] : memref<128x32xbf16, #tpu.memory_space<vmem>>, vector<128x32xbf16>
    tpu.vector_store %arg7[%c0_21, %c0_22], %34 {strides = array<i32>} : memref<128x32xbf16, #tpu.memory_space<vmem>>, vector<128x32xbf16>,
    return
  }
  func.func @transform_0(%arg0: i32) -> (i32, i32) {
    %c0_i32 = arith.constant 0 : i32
    %c0_i32_0 = arith.constant 0 : i32
    %c0_i32_1 = arith.constant 0 : i32
    return %c0_i32, %c0_i32_0 : i32, i32
  }
  func.func @transform_1(%arg0: i32) -> (i32, i32) {
    %c0_i32 = arith.constant 0 : i32
    %c0_i32_0 = arith.constant 0 : i32
    %c0_i32_1 = arith.constant 0 : i32
    return %c0_i32, %c0_i32_0 : i32, i32
  }
  func.func @transform_2(%arg0: i32) -> (i32, i32) {
    %c0_i32 = arith.constant 0 : i32
    %c0_i32_0 = arith.constant 0 : i32
    %c0_i32_1 = arith.constant 0 : i32
    return %c0_i32, %c0_i32_0 : i32, i32
  }
  func.func @transform_3(%arg0: i32) -> (i32, i32) {
    %c0_i32 = arith.constant 0 : i32
    %c0_i32_0 = arith.constant 0 : i32
    %c0_i32_1 = arith.constant 0 : i32
    return %c0_i32, %c0_i32_0 : i32, i32
  }
  func.func @transform_4(%arg0: i32) -> (i32, i32) {
    %c0_i32 = arith.constant 0 : i32
    %c0_i32_0 = arith.constant 0 : i32
    %c0_i32_1 = arith.constant 0 : i32
    return %c0_i32, %c0_i32_0 : i32, i32
  }
  func.func @transform_5(%arg0: i32) -> (i32, i32) {
    %c0_i32 = arith.constant 0 : i32
    %c0_i32_0 = arith.constant 0 : i32
    %c0_i32_1 = arith.constant 0 : i32
    return %c0_i32, %c0_i32_0 : i32, i32
  }
  func.func @transform_6(%arg0: i32) -> (i32, i32) {
    %c0_i32 = arith.constant 0 : i32
    %c0_i32_0 = arith.constant 0 : i32
    %c0_i32_1 = arith.constant 0 : i32
    return %c0_i32, %c0_i32_0 : i32, i32
  }
}

module attributes {stable_mosaic.version = 11 : i64} {
  func.func @kernel(%arg0: i32, %arg1: memref<512x392xbf16, #tpu.memory_space<vmem>>, %arg2: memref<392x3xbf16, #tpu.memory_space<vmem>>, %arg3: memref<1x3xf32, #tpu.memory_space<vmem>>, %arg4: memref<512x3xf32, #tpu.memory_space<vmem>>) attributes {dimension_semantics = [#tpu.dimension_semantics<arbitrary>], iteration_bounds = array<i64: 1>, scalar_prefetch = 0 : i64, scratch_operands = 0 : i64, tpu.core_type = #tpu.core_type<tc>, window_params = [{pipeline_mode = #tpu.pipeline_mode<synchronous>, transform_indices = @transform_0, window_bounds = array<i64: 512, 392>}, {pipeline_mode = #tpu.pipeline_mode<synchronous>, transform_indices = @transform_1, window_bounds = array<i64: 392, 3>}, {pipeline_mode = #tpu.pipeline_mode<synchronous>, transform_indices = @transform_2, window_bounds = array<i64: 1, 3>}, {pipeline_mode = #tpu.pipeline_mode<synchronous>, transform_indices = @transform_3, window_bounds = array<i64: 512, 3>}]} {
    %c0 = arith.constant 0 : index
    %c0_0 = arith.constant 0 : index
    %0 = vector.load %arg1[%c0, %c0_0] : memref<512x392xbf16, #tpu.memory_space<vmem>>, vector<512x392xbf16>
    %c0_1 = arith.constant 0 : index
    %c0_2 = arith.constant 0 : index
    %1 = vector.load %arg2[%c0_1, %c0_2] : memref<392x3xbf16, #tpu.memory_space<vmem>>, vector<392x3xbf16>
    %cst = arith.constant dense<0.000000e+00> : vector<512x3xf32>
    %2 = tpu.matmul %0, %1, %cst {dimension_numbers = #tpu.dot_dimension_numbers<[1], [0], [0], [1], [0, 0, 1, 1], [], []>} : vector<512x392xbf16>, vector<392x3xbf16>, vector<512x3xf32> -> vector<512x3xf32>
    %c0_3 = arith.constant 0 : index
    %c0_4 = arith.constant 0 : index
    %3 = vector.load %arg3[%c0_3, %c0_4] : memref<1x3xf32, #tpu.memory_space<vmem>>, vector<1x3xf32>
    %4 = vector.broadcast %3 : vector<1x3xf32> to vector<512x3xf32>
    %5 = arith.addf %2, %4 : vector<512x3xf32>
    %6 = math.tanh %5 : vector<512x3xf32>
    %c0_5 = arith.constant 0 : index
    %c0_6 = arith.constant 0 : index
    %7 = vector.load %arg4[%c0_5, %c0_6] : memref<512x3xf32, #tpu.memory_space<vmem>>, vector<512x3xf32>
    tpu.vector_store %arg4[%c0_5, %c0_6], %6 {strides = array<i32>} : memref<512x3xf32, #tpu.memory_space<vmem>>, vector<512x3xf32>,
    return
  }
  func.func @transform_0(%arg0: i32) -> (i32, i32) {
    %c0_i32 = arith.constant 0 : i32
    %c0_i32_0 = arith.constant 0 : i32
    %c0_i32_1 = arith.constant 0 : i32
    return %c0_i32, %c0_i32_0 : i32, i32
  }
  func.func @transform_1(%arg0: i32) -> (i32, i32) {
    %c0_i32 = arith.constant 0 : i32
    %c0_i32_0 = arith.constant 0 : i32
    %c0_i32_1 = arith.constant 0 : i32
    return %c0_i32, %c0_i32_0 : i32, i32
  }
  func.func @transform_2(%arg0: i32) -> (i32, i32) {
    %c0_i32 = arith.constant 0 : i32
    %c0_i32_0 = arith.constant 0 : i32
    %c0_i32_1 = arith.constant 0 : i32
    return %c0_i32, %c0_i32_0 : i32, i32
  }
  func.func @transform_3(%arg0: i32) -> (i32, i32) {
    %c0_i32 = arith.constant 0 : i32
    %c0_i32_0 = arith.constant 0 : i32
    %c0_i32_1 = arith.constant 0 : i32
    return %c0_i32, %c0_i32_0 : i32, i32
  }
}

</mosaic_0001>

<llo_original>
// kernel: global_generator_forward.12
$region0: #{global_generator_forward.12}
  #allocation0 [shape = 'u32[]', space=smem, size = 0x4, offset = 0x4, fixed_abs, tag = 'smem constant byte address 0x4 - core index']
  #allocation1 [shape = 'u32[144,128]{1,0:T(1,128)}', space=vmem, size = 0x12000, scoped, tag = 'internal scratch']
  %s0 = inlined_call_operand.vmem [shape: bf16[512,196], index: 0, kind: input, shape index: {}]
  %s1 = inlined_call_operand.vmem [shape: bf16[196,8], index: 1, kind: input, shape index: {}]
  %s2 = inlined_call_operand.vmem [shape: f32[1,8], index: 2, kind: input, shape index: {}]
  %s3 = inlined_call_operand.vmem [shape: f32[1,8], index: 3, kind: input, shape index: {}]
  %s4 = inlined_call_operand.vmem [shape: f32[1,8], index: 4, kind: input, shape index: {}]
  %s5 = inlined_call_operand.vmem [shape: bf16[512,8], index: 5, kind: output, shape index: {}]
  %s6 = sld [smem:[#allocation0]]
  $region30: #{global_generator_forward.12} parent=0
    _
  %s8 = ssub.s32 1, %s6
  %s9 = scalar_select 0, %s8, %s6
  // Predicated region
  $region2: #{global_generator_forward.12} parent=0 // pred_check
    _
  $region3: #{global_generator_forward.12} parent=0 // pred_check_branch
    %11 = sbr.rel (0) target = $region5
  $region4: #{global_generator_forward.12} parent=0 // pred_region
    _
  $region5: #{global_generator_forward.12} parent=0 // pred_fallthru
    _
  // Predicated region
  $region6: #{global_generator_forward.12} parent=0 // pred_check
    _
  $region7: #{global_generator_forward.12} parent=0 // pred_check_branch
    %13 = sbr.rel (0) target = $region9
  $region8: #{global_generator_forward.12} parent=0 // pred_region
    _
  $region9: #{global_generator_forward.12} parent=0 // pred_fallthru
    _
  // Predicated region
  $region10: #{global_generator_forward.12} parent=0 // pred_check
    _
  $region11: #{global_generator_forward.12} parent=0 // pred_check_branch
    %15 = sbr.rel (0) target = $region13
  $region12: #{global_generator_forward.12} parent=0 // pred_region
    _
  $region13: #{global_generator_forward.12} parent=0 // pred_fallthru
    _
  // Predicated region
  $region14: #{global_generator_forward.12} parent=0 // pred_check
    _
  $region15: #{global_generator_forward.12} parent=0 // pred_check_branch
    %17 = sbr.rel (0) target = $region17
  $region16: #{global_generator_forward.12} parent=0 // pred_region
    _
  $region17: #{global_generator_forward.12} parent=0 // pred_fallthru
    _
  // Predicated region
  $region18: #{global_generator_forward.12} parent=0 // pred_check
    _
  $region19: #{global_generator_forward.12} parent=0 // pred_check_branch
    %19 = sbr.rel (0) target = $region21
  $region20: #{global_generator_forward.12} parent=0 // pred_region
    _
  $region21: #{global_generator_forward.12} parent=0 // pred_fallthru
    _
  %v21 = vld [vmem:[%s0] sm:$0xff]
  %v22 = vld [vmem:[%s0 + $0x8] sm:$0xff]
  %v23 = vld [vmem:[%s0 + $0x10] sm:$0xff]
  %v24 = vld [vmem:[%s0 + $0x18] sm:$0xff]
  %v25 = vld [vmem:[%s0 + $0x20] sm:$0xff]
  %v26 = vld [vmem:[%s0 + $0x28] sm:$0xff]
  %v27 = vld [vmem:[%s0 + $0x30] sm:$0xff]
  %v28 = vld [vmem:[%s0 + $0x38] sm:$0xff]
  %v29 = vld [vmem:[%s0 + $0x40] sm:$0xff]
  %v30 = vld [vmem:[%s0 + $0x48] sm:$0xff]
  %v31 = vld [vmem:[%s0 + $0x50] sm:$0xff]
  %v32 = vld [vmem:[%s0 + $0x58] sm:$0xff]
  %v33 = vld [vmem:[%s0 + $0x60] sm:$0xff]
  %v34 = vld [vmem:[%s0 + $0x68] sm:$0xff]
  %v35 = vld [vmem:[%s0 + $0x70] sm:$0xff]
  %v36 = vld [vmem:[%s0 + $0x78] sm:$0xff]
  %v37 = vld [vmem:[%s0 + $0x80] sm:$0xff]
  %v38 = vld [vmem:[%s0 + $0x88] sm:$0xff]
  %v39 = vld [vmem:[%s0 + $0x90] sm:$0xff]
  %v40 = vld [vmem:[%s0 + $0x98] sm:$0xff]
  %v41 = vld [vmem:[%s0 + $0xa0] sm:$0xff]
  %v42 = vld [vmem:[%s0 + $0xa8] sm:$0xff]
  %v43 = vld [vmem:[%s0 + $0xb0] sm:$0xff]
  %v44 = vld [vmem:[%s0 + $0xb8] sm:$0xff]
  %v45 = vld [vmem:[%s0 + $0xc0] sm:$0xff]
  %v46 = vld [vmem:[%s0 + $0xc8] sm:$0xff]
  %v47 = vld [vmem:[%s0 + $0xd0] sm:$0xff]
  %v48 = vld [vmem:[%s0 + $0xd8] sm:$0xff]
  %v49 = vld [vmem:[%s0 + $0xe0] sm:$0xff]
  %v50 = vld [vmem:[%s0 + $0xe8] sm:$0xff]
  %v51 = vld [vmem:[%s0 + $0xf0] sm:$0xff]
  %v52 = vld [vmem:[%s0 + $0xf8] sm:$0xff]
  %v53 = vld [vmem:[%s0 + $0x100] sm:$0xff]
  %v54 = vld [vmem:[%s0 + $0x108] sm:$0xff]
  %v55 = vld [vmem:[%s0 + $0x110] sm:$0xff]
  %v56 = vld [vmem:[%s0 + $0x118] sm:$0xff]
  %v57 = vld [vmem:[%s0 + $0x120] sm:$0xff]
  %v58 = vld [vmem:[%s0 + $0x128] sm:$0xff]
  %v59 = vld [vmem:[%s0 + $0x130] sm:$0xff]
  %v60 = vld [vmem:[%s0 + $0x138] sm:$0xff]
  %v61 = vld [vmem:[%s0 + $0x140] sm:$0xff]
  %v62 = vld [vmem:[%s0 + $0x148] sm:$0xff]
  %v63 = vld [vmem:[%s0 + $0x150] sm:$0xff]
  %v64 = vld [vmem:[%s0 + $0x158] sm:$0xff]
  %v65 = vld [vmem:[%s0 + $0x160] sm:$0xff]
  %v66 = vld [vmem:[%s0 + $0x168] sm:$0xff]
  %v67 = vld [vmem:[%s0 + $0x170] sm:$0xff]
  %v68 = vld [vmem:[%s0 + $0x178] sm:$0xff]
  %v69 = vld [vmem:[%s0 + $0x180] sm:$0xff]
  %v70 = vld [vmem:[%s0 + $0x188] sm:$0xff]
  %v71 = vld [vmem:[%s0 + $0x190] sm:$0xff]
  %v72 = vld [vmem:[%s0 + $0x198] sm:$0xff]
  %v73 = vld [vmem:[%s0 + $0x1a0] sm:$0xff]
  %v74 = vld [vmem:[%s0 + $0x1a8] sm:$0xff]
  %v75 = vld [vmem:[%s0 + $0x1b0] sm:$0xff]
  %v76 = vld [vmem:[%s0 + $0x1b8] sm:$0xff]
  %v77 = vld [vmem:[%s0 + $0x1c0] sm:$0xff]
  %v78 = vld [vmem:[%s0 + $0x1c8] sm:$0xff]
  %v79 = vld [vmem:[%s0 + $0x1d0] sm:$0xff]
  %v80 = vld [vmem:[%s0 + $0x1d8] sm:$0xff]
  %v81 = vld [vmem:[%s0 + $0x1e0] sm:$0xff]
  %v82 = vld [vmem:[%s0 + $0x1e8] sm:$0xff]
  %v83 = vld [vmem:[%s0 + $0x1f0] sm:$0xff]
  %v84 = vld [vmem:[%s0 + $0x1f8] sm:$0xff]
  %v85 = vld [vmem:[%s1] sm:$0xf]
  %v86 = vld [vmem:[%s1 + $0x4] sm:$0xf]
  %v87 = vld [vmem:[%s1 + $0x8] sm:$0xf]
  %v88 = vld [vmem:[%s1 + $0xc] sm:$0xf]
  %v89 = vld [vmem:[%s1 + $0x10] sm:$0xf]
  %v90 = vld [vmem:[%s1 + $0x14] sm:$0xf]
  %v91 = vld [vmem:[%s1 + $0x18] sm:$0xf]
  %v92 = vld [vmem:[%s1 + $0x1c] sm:$0xf]
  %v93 = vld [vmem:[%s1 + $0x20] sm:$0xf]
  %v94 = vld [vmem:[%s1 + $0x24] sm:$0xf]
  %v95 = vld [vmem:[%s1 + $0x28] sm:$0xf]
  %v96 = vld [vmem:[%s1 + $0x2c] sm:$0xf]
  %v97 = vld [vmem:[%s1 + $0x30] sm:$0xf]
  %v98 = vld [vmem:[%s1 + $0x34] sm:$0xf]
  %v99 = vld [vmem:[%s1 + $0x38] sm:$0xf]
  %v100 = vld [vmem:[%s1 + $0x3c] sm:$0xf]
  %v101 = vld [vmem:[%s1 + $0x40] sm:$0xf]
  %v102 = vld [vmem:[%s1 + $0x44] sm:$0xf]
  %v103 = vld [vmem:[%s1 + $0x48] sm:$0xf]
  %v104 = vld [vmem:[%s1 + $0x4c] sm:$0xf]
  %v105 = vld [vmem:[%s1 + $0x50] sm:$0xf]
  %v106 = vld [vmem:[%s1 + $0x54] sm:$0xf]
  %v107 = vld [vmem:[%s1 + $0x58] sm:$0xf]
  %v108 = vld [vmem:[%s1 + $0x5c] sm:$0xf]
  %v109 = vld [vmem:[%s1 + $0x60] sm:$0x3]
  %v110 = vld [vmem:[%s2] sm:$0x1]
  %v112 = vlaneseq
  %v113 = vshrl.u32 %v112, 7
  %v114 = vsub.s32 0, %v113
  %v115 = vrot.slane %v110, %v114
  %v181 = vunpack.c.l.b16 %v21
  %v182 = vunpack.c.h.b16 %v21
  %v183 = vunpack.c.l.b16 %v22
  %v184 = vunpack.c.h.b16 %v22
  %v185 = vunpack.c.l.b16 %v23
  %v186 = vunpack.c.h.b16 %v23
  %v187 = vunpack.c.l.b16 %v24
  %v188 = vunpack.c.h.b16 %v24
  %v189 = vunpack.c.l.b16 %v25
  %v190 = vunpack.c.h.b16 %v25
  %v191 = vunpack.c.l.b16 %v26
  %v192 = vunpack.c.h.b16 %v26
  %v193 = vunpack.c.l.b16 %v27
  %v194 = vunpack.c.h.b16 %v27
  %v195 = vunpack.c.l.b16 %v28
  %v196 = vunpack.c.h.b16 %v28
  %v197 = vunpack.c.l.b16 %v29
  %v198 = vunpack.c.h.b16 %v29
  %v199 = vunpack.c.l.b16 %v30
  %v200 = vunpack.c.h.b16 %v30
  %v201 = vunpack.c.l.b16 %v31
  %v202 = vunpack.c.h.b16 %v31
  %v203 = vunpack.c.l.b16 %v32
  %v204 = vunpack.c.h.b16 %v32
  %v205 = vunpack.c.l.b16 %v33
  %v206 = vunpack.c.h.b16 %v33
  %v207 = vunpack.c.l.b16 %v34
  %v208 = vunpack.c.h.b16 %v34
  %v209 = vunpack.c.l.b16 %v35
  %v210 = vunpack.c.h.b16 %v35
  %v211 = vunpack.c.l.b16 %v36
  %v212 = vunpack.c.h.b16 %v36
  %v213 = vunpack.c.l.b16 %v37
  %v214 = vunpack.c.h.b16 %v37
  %v215 = vunpack.c.l.b16 %v38
  %v216 = vunpack.c.h.b16 %v38
  %v217 = vunpack.c.l.b16 %v39
  %v218 = vunpack.c.h.b16 %v39
  %v219 = vunpack.c.l.b16 %v40
  %v220 = vunpack.c.h.b16 %v40
  %v221 = vunpack.c.l.b16 %v41
  %v222 = vunpack.c.h.b16 %v41
  %v223 = vunpack.c.l.b16 %v42
  %v224 = vunpack.c.h.b16 %v42
  %v225 = vunpack.c.l.b16 %v43
  %v226 = vunpack.c.h.b16 %v43
  %v227 = vunpack.c.l.b16 %v44
  %v228 = vunpack.c.h.b16 %v44
  %v229 = vunpack.c.l.b16 %v45
  %v230 = vunpack.c.h.b16 %v45
  %v231 = vunpack.c.l.b16 %v46
  %v232 = vunpack.c.h.b16 %v46
  %v233 = vunpack.c.l.b16 %v47
  %v234 = vunpack.c.h.b16 %v47
  %v235 = vunpack.c.l.b16 %v48
  %v236 = vunpack.c.h.b16 %v48
  %v237 = vunpack.c.l.b16 %v49
  %v238 = vunpack.c.h.b16 %v49
  %v239 = vunpack.c.l.b16 %v50
  %v240 = vunpack.c.h.b16 %v50
  %v241 = vunpack.c.l.b16 %v51
  %v242 = vunpack.c.h.b16 %v51
  %v243 = vunpack.c.l.b16 %v52
  %v244 = vunpack.c.h.b16 %v52
  %v245 = vunpack.c.l.b16 %v53
  %v246 = vunpack.c.h.b16 %v53
  %v247 = vunpack.c.l.b16 %v54
  %v248 = vunpack.c.h.b16 %v54
  %v249 = vunpack.c.l.b16 %v55
  %v250 = vunpack.c.h.b16 %v55
  %v251 = vunpack.c.l.b16 %v56
  %v252 = vunpack.c.h.b16 %v56
  %v253 = vunpack.c.l.b16 %v57
  %v254 = vunpack.c.h.b16 %v57
  %v255 = vunpack.c.l.b16 %v58
  %v256 = vunpack.c.h.b16 %v58
  %v257 = vunpack.c.l.b16 %v59
  %v258 = vunpack.c.h.b16 %v59
  %v259 = vunpack.c.l.b16 %v60
  %v260 = vunpack.c.h.b16 %v60
  %v261 = vunpack.c.l.b16 %v61
  %v262 = vunpack.c.h.b16 %v61
  %v263 = vunpack.c.l.b16 %v62
  %v264 = vunpack.c.h.b16 %v62
  %v265 = vunpack.c.l.b16 %v63
  %v266 = vunpack.c.h.b16 %v63
  %v267 = vunpack.c.l.b16 %v64
  %v268 = vunpack.c.h.b16 %v64
  %v269 = vunpack.c.l.b16 %v65
  %v270 = vunpack.c.h.b16 %v65
  %v271 = vunpack.c.l.b16 %v66
  %v272 = vunpack.c.h.b16 %v66
  %v273 = vunpack.c.l.b16 %v67
  %v274 = vunpack.c.h.b16 %v67
  %v275 = vunpack.c.l.b16 %v68
  %v276 = vunpack.c.h.b16 %v68
  %v277 = vunpack.c.l.b16 %v69
  %v278 = vunpack.c.h.b16 %v69
  %v279 = vunpack.c.l.b16 %v70
  %v280 = vunpack.c.h.b16 %v70
  %v281 = vunpack.c.l.b16 %v71
  %v282 = vunpack.c.h.b16 %v71
  %v283 = vunpack.c.l.b16 %v72
  %v284 = vunpack.c.h.b16 %v72
  %v285 = vunpack.c.l.b16 %v73
  %v286 = vunpack.c.h.b16 %v73
  %v287 = vunpack.c.l.b16 %v74
  %v288 = vunpack.c.h.b16 %v74
  %v289 = vunpack.c.l.b16 %v75
  %v290 = vunpack.c.h.b16 %v75
  %v291 = vunpack.c.l.b16 %v76
  %v292 = vunpack.c.h.b16 %v76
  %v293 = vunpack.c.l.b16 %v77
  %v294 = vunpack.c.h.b16 %v77
  %v295 = vunpack.c.l.b16 %v78
  %v296 = vunpack.c.h.b16 %v78
  %v297 = vunpack.c.l.b16 %v79
  %v298 = vunpack.c.h.b16 %v79
  %v299 = vunpack.c.l.b16 %v80
  %v300 = vunpack.c.h.b16 %v80
  %v301 = vunpack.c.l.b16 %v81
  %v302 = vunpack.c.h.b16 %v81
  %v303 = vunpack.c.l.b16 %v82
  %v304 = vunpack.c.h.b16 %v82
  %v305 = vunpack.c.l.b16 %v83
  %v306 = vunpack.c.h.b16 %v83
  %v307 = vunpack.c.l.b16 %v84
  %v308 = vunpack.c.h.b16 %v84
  %v309 = vpack.c.b16 %v183, %v181
  %v310 = vpack.c.b16 %v184, %v182
  %v311 = vpack.c.b16 %v187, %v185
  %v312 = vpack.c.b16 %v188, %v186
  %v313 = vpack.c.b16 %v191, %v189
  %v314 = vpack.c.b16 %v192, %v190
  %v315 = vpack.c.b16 %v195, %v193
  %v316 = vpack.c.b16 %v196, %v194
  %v317 = vpack.c.b16 %v199, %v197
  %v318 = vpack.c.b16 %v200, %v198
  %v319 = vpack.c.b16 %v203, %v201
  %v320 = vpack.c.b16 %v204, %v202
  %v321 = vpack.c.b16 %v207, %v205
  %v322 = vpack.c.b16 %v208, %v206
  %v323 = vpack.c.b16 %v211, %v209
  %v324 = vpack.c.b16 %v212, %v210
  %v325 = vpack.c.b16 %v215, %v213
  %v326 = vpack.c.b16 %v216, %v214
  %v327 = vpack.c.b16 %v219, %v217
  %v328 = vpack.c.b16 %v220, %v218
  %v329 = vpack.c.b16 %v223, %v221
  %v330 = vpack.c.b16 %v224, %v222
  %v331 = vpack.c.b16 %v227, %v225
  %v332 = vpack.c.b16 %v228, %v226
  %v333 = vpack.c.b16 %v231, %v229
  %v334 = vpack.c.b16 %v232, %v230
  %v335 = vpack.c.b16 %v235, %v233
  %v336 = vpack.c.b16 %v236, %v234
  %v337 = vpack.c.b16 %v239, %v237
  %v338 = vpack.c.b16 %v240, %v238
  %v339 = vpack.c.b16 %v243, %v241
  %v340 = vpack.c.b16 %v244, %v242
  %v341 = vpack.c.b16 %v247, %v245
  %v342 = vpack.c.b16 %v248, %v246
  %v343 = vpack.c.b16 %v251, %v249
  %v344 = vpack.c.b16 %v252, %v250
  %v345 = vpack.c.b16 %v255, %v253
  %v346 = vpack.c.b16 %v256, %v254
  %v347 = vpack.c.b16 %v259, %v257
  %v348 = vpack.c.b16 %v260, %v258
  %v349 = vpack.c.b16 %v263, %v261
  %v350 = vpack.c.b16 %v264, %v262
  %v351 = vpack.c.b16 %v267, %v265
  %v352 = vpack.c.b16 %v268, %v266
  %v353 = vpack.c.b16 %v271, %v269
  %v354 = vpack.c.b16 %v272, %v270
  %v355 = vpack.c.b16 %v275, %v273
  %v356 = vpack.c.b16 %v276, %v274
  %v357 = vpack.c.b16 %v279, %v277
  %v358 = vpack.c.b16 %v280, %v278
  %v359 = vpack.c.b16 %v283, %v281
  %v360 = vpack.c.b16 %v284, %v282
  %v361 = vpack.c.b16 %v287, %v285
  %v362 = vpack.c.b16 %v288, %v286
  %v363 = vpack.c.b16 %v291, %v289
  %v364 = vpack.c.b16 %v292, %v290
  %v365 = vpack.c.b16 %v295, %v293
  %v366 = vpack.c.b16 %v296, %v294
  %v367 = vpack.c.b16 %v299, %v297
  %v368 = vpack.c.b16 %v300, %v298
  %v369 = vpack.c.b16 %v303, %v301
  %v370 = vpack.c.b16 %v304, %v302
  %v371 = vpack.c.b16 %v307, %v305
  %v372 = vpack.c.b16 %v308, %v306
  %v430 = vunpack.c.l.b16 %v85
  %v431 = vunpack.c.l.b16 %v86
  %v432 = vunpack.c.l.b16 %v87
  %v433 = vunpack.c.l.b16 %v88
  %v434 = vunpack.c.l.b16 %v89
  %v435 = vunpack.c.l.b16 %v90
  %v436 = vunpack.c.l.b16 %v91
  %v437 = vunpack.c.l.b16 %v92
  %v438 = vunpack.c.l.b16 %v93
  %v439 = vunpack.c.l.b16 %v94
  %v440 = vunpack.c.l.b16 %v95
  %v441 = vunpack.c.l.b16 %v96
  %v442 = vunpack.c.l.b16 %v97
  %v443 = vunpack.c.l.b16 %v98
  %v444 = vunpack.c.l.b16 %v99
  %v445 = vunpack.c.l.b16 %v100
  %v446 = vunpack.c.l.b16 %v101
  %v447 = vunpack.c.l.b16 %v102
  %v448 = vunpack.c.l.b16 %v103
  %v449 = vunpack.c.l.b16 %v104
  %v450 = vunpack.c.l.b16 %v105
  %v451 = vunpack.c.l.b16 %v106
  %v452 = vunpack.c.l.b16 %v107
  %v453 = vunpack.c.l.b16 %v108
  %v454 = vunpack.c.l.b16 %v109
  %v455 = vpack.c.b16 %v431, %v430
  %v456 = vpack.c.b16 %v433, %v432
  %v457 = vpack.c.b16 %v435, %v434
  %v458 = vpack.c.b16 %v437, %v436
  %v459 = vpack.c.b16 %v439, %v438
  %v460 = vpack.c.b16 %v441, %v440
  %v461 = vpack.c.b16 %v443, %v442
  %v462 = vpack.c.b16 %v445, %v444
  %v463 = vpack.c.b16 %v447, %v446
  %v464 = vpack.c.b16 %v449, %v448
  %v465 = vpack.c.b16 %v451, %v450
  %v466 = vpack.c.b16 %v453, %v452
  %v467 = vpack.c.b16 %v454, %v454
  %vm480 = vcmask 556032
  %v482 = vsel %vm480, %v310, 0
  %v485 = vsel %vm480, %v312, 0
  %v488 = vsel %vm480, %v314, 0
  %v491 = vsel %vm480, %v316, 0
  %v494 = vsel %vm480, %v318, 0
  %v497 = vsel %vm480, %v320, 0
  %v500 = vsel %vm480, %v322, 0
  %v503 = vsel %vm480, %v324, 0
  %v506 = vsel %vm480, %v326, 0
  %v509 = vsel %vm480, %v328, 0
  %v512 = vsel %vm480, %v330, 0
  %v515 = vsel %vm480, %v332, 0
  %v518 = vsel %vm480, %v334, 0
  %v521 = vsel %vm480, %v336, 0
  %v524 = vsel %vm480, %v338, 0
  %v527 = vsel %vm480, %v340, 0
  %v530 = vsel %vm480, %v342, 0
  %v533 = vsel %vm480, %v344, 0
  %v536 = vsel %vm480, %v346, 0
  %v539 = vsel %vm480, %v348, 0
  %v542 = vsel %vm480, %v350, 0
  %v545 = vsel %vm480, %v352, 0
  %v548 = vsel %vm480, %v354, 0
  %v551 = vsel %vm480, %v356, 0
  %v554 = vsel %vm480, %v358, 0
  %v557 = vsel %vm480, %v360, 0
  %v560 = vsel %vm480, %v362, 0
  %v563 = vsel %vm480, %v364, 0
  %v566 = vsel %vm480, %v366, 0
  %v569 = vsel %vm480, %v368, 0
  %v572 = vsel %vm480, %v370, 0
  %v575 = vsel %vm480, %v372, 0
  %vm577 = vcmask 1041408
  %v579 = vsel %vm577, %v467, 0
  %581 = vmatprep.subr.bf16.mxu0 0
  %582 = vmatpush1.bf16.msra.mxu0 %v455
  %583 = vmatprep.subr.bf16.mxu0 0
  %584 = vmatpush1.bf16.msra.mxu0 %v456
  %585 = vmatprep.subr.bf16.mxu0 0
  %586 = vmatpush1.bf16.msra.mxu0 %v457
  %587 = vmatprep.subr.bf16.mxu0 0
  %588 = vmatpush1.bf16.msra.mxu0 %v458
  %589 = vmatprep.subr.bf16.mxu0 0
  %590 = vmatpush1.bf16.msra.mxu0 %v459
  %591 = vmatprep.subr.bf16.mxu0 0
  %592 = vmatpush1.bf16.msra.mxu0 %v460
  %593 = vmatprep.subr.bf16.mxu0 0
  %594 = vmatpush1.bf16.msra.mxu0 %v461
  %595 = vmatprep.subr.bf16.mxu0 0
  %596 = vmatpush1.bf16.msra.mxu0 %v462
  %597 = vmatprep.subr.bf16.mxu0 0
  %598 = vmatpush1.bf16.msra.mxu0 %v463
  %599 = vmatprep.subr.bf16.mxu0 0
  %600 = vmatpush1.bf16.msra.mxu0 %v464
  %601 = vmatprep.subr.bf16.mxu0 0
  %602 = vmatpush1.bf16.msra.mxu0 %v465
  %603 = vmatprep.subr.bf16.mxu0 0
  %604 = vmatpush1.bf16.msra.mxu0 %v466
  %605 = vmatprep.subr.bf16.mxu0 0
  %606 = vmatpush1.bf16.msra.mxu0 %v579
  %607 = vmatprep.subr.bf16.mxu0 0
  %608 = vmatpush1.bf16.msra.mxu0 0
  %609 = vmatprep.subr.bf16.mxu0 0
  %610 = vmatpush1.bf16.msra.mxu0 0
  %611 = vmatprep.subr.bf16.mxu0 0
  %612 = vmatpush1.bf16.msra.mxu0 0
  %613 = vmatprep.mubr.bf16.mxu0 %v482
  %614 = vmatmul.mubr.bf16.gmra.mrb[0].mxu0 %v309
  %v615 = vpop.f32.mrb[0].mxu0
  %v616 = vadd.f32 %v115, %v615
  %v617 = vpop.f32.mrb[0].mxu0
  %v618 = vpop.f32.mrb[0].mxu0
  %v619 = vadd.f32 %v115, %v618
  %v620 = vpop.f32.mrb[0].mxu0
  %621 = vmatprep.mubr.bf16.mxu0 %v485
  %622 = vmatmul.mubr.bf16.gmra.mrb[0].mxu0 %v311
  %v623 = vpop.f32.mrb[0].mxu0
  %v624 = vadd.f32 %v115, %v623
  %v625 = vpop.f32.mrb[0].mxu0
  %v626 = vpop.f32.mrb[0].mxu0
  %v627 = vadd.f32 %v115, %v626
  %v628 = vpop.f32.mrb[0].mxu0
  %629 = vmatprep.mubr.bf16.mxu0 %v488
  %630 = vmatmul.mubr.bf16.gmra.mrb[0].mxu0 %v313
  %v631 = vpop.f32.mrb[0].mxu0
  %v632 = vadd.f32 %v115, %v631
  %v633 = vpop.f32.mrb[0].mxu0
  %v634 = vpop.f32.mrb[0].mxu0
  %v635 = vadd.f32 %v115, %v634
  %v636 = vpop.f32.mrb[0].mxu0
  %637 = vmatprep.mubr.bf16.mxu0 %v491
  %638 = vmatmul.mubr.bf16.gmra.mrb[0].mxu0 %v315
  %v639 = vpop.f32.mrb[0].mxu0
  %v640 = vadd.f32 %v115, %v639
  %v641 = vpop.f32.mrb[0].mxu0
  %v642 = vpop.f32.mrb[0].mxu0
  %v643 = vadd.f32 %v115, %v642
  %v644 = vpop.f32.mrb[0].mxu0
  %645 = vmatprep.mubr.bf16.mxu0 %v494
  %646 = vmatmul.mubr.bf16.gmra.mrb[0].mxu0 %v317
  %v647 = vpop.f32.mrb[0].mxu0
  %v648 = vadd.f32 %v115, %v647
  %v649 = vpop.f32.mrb[0].mxu0
  %v650 = vpop.f32.mrb[0].mxu0
  %v651 = vadd.f32 %v115, %v650
  %v652 = vpop.f32.mrb[0].mxu0
  %653 = vmatprep.mubr.bf16.mxu0 %v497
  %654 = vmatmul.mubr.bf16.gmra.mrb[0].mxu0 %v319
  %v655 = vpop.f32.mrb[0].mxu0
  %v656 = vadd.f32 %v115, %v655
  %v657 = vpop.f32.mrb[0].mxu0
  %v658 = vpop.f32.mrb[0].mxu0
  %v659 = vadd.f32 %v115, %v658
  %v660 = vpop.f32.mrb[0].mxu0
  %661 = vmatprep.mubr.bf16.mxu0 %v500
  %662 = vmatmul.mubr.bf16.gmra.mrb[0].mxu0 %v321
  %v663 = vpop.f32.mrb[0].mxu0
  %v664 = vadd.f32 %v115, %v663
  %v665 = vpop.f32.mrb[0].mxu0
  %v666 = vpop.f32.mrb[0].mxu0
  %v667 = vadd.f32 %v115, %v666
  %v668 = vpop.f32.mrb[0].mxu0
  %669 = vmatprep.mubr.bf16.mxu0 %v503
  %670 = vmatmul.mubr.bf16.gmra.mrb[0].mxu0 %v323
  %v671 = vpop.f32.mrb[0].mxu0
  %v672 = vadd.f32 %v115, %v671
  %v673 = vpop.f32.mrb[0].mxu0
  %v674 = vpop.f32.mrb[0].mxu0
  %v675 = vadd.f32 %v115, %v674
  %v676 = vpop.f32.mrb[0].mxu0
  %677 = vmatprep.mubr.bf16.mxu0 %v506
  %678 = vmatmul.mubr.bf16.gmra.mrb[0].mxu0 %v325
  %v679 = vpop.f32.mrb[0].mxu0
  %v680 = vadd.f32 %v115, %v679
  %v681 = vpop.f32.mrb[0].mxu0
  %v682 = vpop.f32.mrb[0].mxu0
  %v683 = vadd.f32 %v115, %v682
  %v684 = vpop.f32.mrb[0].mxu0
  %685 = vmatprep.mubr.bf16.mxu0 %v509
  %686 = vmatmul.mubr.bf16.gmra.mrb[0].mxu0 %v327
  %v687 = vpop.f32.mrb[0].mxu0
  %v688 = vadd.f32 %v115, %v687
  %v689 = vpop.f32.mrb[0].mxu0
  %v690 = vpop.f32.mrb[0].mxu0
  %v691 = vadd.f32 %v115, %v690
  %v692 = vpop.f32.mrb[0].mxu0
  %693 = vmatprep.mubr.bf16.mxu0 %v512
  %694 = vmatmul.mubr.bf16.gmra.mrb[0].mxu0 %v329
  %v695 = vpop.f32.mrb[0].mxu0
  %v696 = vadd.f32 %v115, %v695
  %v697 = vpop.f32.mrb[0].mxu0
  %v698 = vpop.f32.mrb[0].mxu0
  %v699 = vadd.f32 %v115, %v698
  %v700 = vpop.f32.mrb[0].mxu0
  %701 = vmatprep.mubr.bf16.mxu0 %v515
  %702 = vmatmul.mubr.bf16.gmra.mrb[0].mxu0 %v331
  %v703 = vpop.f32.mrb[0].mxu0
  %v704 = vadd.f32 %v115, %v703
  %v705 = vpop.f32.mrb[0].mxu0
  %v706 = vpop.f32.mrb[0].mxu0
  %v707 = vadd.f32 %v115, %v706
  %v708 = vpop.f32.mrb[0].mxu0
  %709 = vmatprep.mubr.bf16.mxu0 %v518
  %710 = vmatmul.mubr.bf16.gmra.mrb[0].mxu0 %v333
  %v711 = vpop.f32.mrb[0].mxu0
  %v712 = vadd.f32 %v115, %v711
  %v713 = vpop.f32.mrb[0].mxu0
  %v714 = vpop.f32.mrb[0].mxu0
  %v715 = vadd.f32 %v115, %v714
  %v716 = vpop.f32.mrb[0].mxu0
  %717 = vmatprep.mubr.bf16.mxu0 %v521
  %718 = vmatmul.mubr.bf16.gmra.mrb[0].mxu0 %v335
  %v719 = vpop.f32.mrb[0].mxu0
  %v720 = vadd.f32 %v115, %v719
  %v721 = vpop.f32.mrb[0].mxu0
  %v722 = vpop.f32.mrb[0].mxu0
  %v723 = vadd.f32 %v115, %v722
  %v724 = vpop.f32.mrb[0].mxu0
  %725 = vmatprep.mubr.bf16.mxu0 %v524
  %726 = vmatmul.mubr.bf16.gmra.mrb[0].mxu0 %v337
  %v727 = vpop.f32.mrb[0].mxu0
  %v728 = vadd.f32 %v115, %v727
  %v729 = vpop.f32.mrb[0].mxu0
  %v730 = vpop.f32.mrb[0].mxu0
  %v731 = vadd.f32 %v115, %v730
  %v732 = vpop.f32.mrb[0].mxu0
  %733 = vmatprep.mubr.bf16.mxu0 %v527
  %734 = vmatmul.mubr.bf16.gmra.mrb[0].mxu0 %v339
  %v735 = vpop.f32.mrb[0].mxu0
  %v736 = vadd.f32 %v115, %v735
  %v737 = vpop.f32.mrb[0].mxu0
  %v738 = vpop.f32.mrb[0].mxu0
  %v739 = vadd.f32 %v115, %v738
  %v740 = vpop.f32.mrb[0].mxu0
  %741 = vmatprep.mubr.bf16.mxu0 %v530
  %742 = vmatmul.mubr.bf16.gmra.mrb[0].mxu0 %v341
  %v743 = vpop.f32.mrb[0].mxu0
  %v744 = vadd.f32 %v115, %v743
  %v745 = vpop.f32.mrb[0].mxu0
  %v746 = vpop.f32.mrb[0].mxu0
  %v747 = vadd.f32 %v115, %v746
  %v748 = vpop.f32.mrb[0].mxu0
  %749 = vmatprep.mubr.bf16.mxu0 %v533
  %750 = vmatmul.mubr.bf16.gmra.mrb[0].mxu0 %v343
  %v751 = vpop.f32.mrb[0].mxu0
  %v752 = vadd.f32 %v115, %v751
  %v753 = vpop.f32.mrb[0].mxu0
  %v754 = vpop.f32.mrb[0].mxu0
  %v755 = vadd.f32 %v115, %v754
  %v756 = vpop.f32.mrb[0].mxu0
  %757 = vmatprep.mubr.bf16.mxu0 %v536
  %758 = vmatmul.mubr.bf16.gmra.mrb[0].mxu0 %v345
  %v759 = vpop.f32.mrb[0].mxu0
  %v760 = vadd.f32 %v115, %v759
  %v761 = vpop.f32.mrb[0].mxu0
  %v762 = vpop.f32.mrb[0].mxu0
  %v763 = vadd.f32 %v115, %v762
  %v764 = vpop.f32.mrb[0].mxu0
  %765 = vmatprep.mubr.bf16.mxu0 %v539
  %766 = vmatmul.mubr.bf16.gmra.mrb[0].mxu0 %v347
  %v767 = vpop.f32.mrb[0].mxu0
  %v768 = vadd.f32 %v115, %v767
  %v769 = vpop.f32.mrb[0].mxu0
  %v770 = vpop.f32.mrb[0].mxu0
  %v771 = vadd.f32 %v115, %v770
  %v772 = vpop.f32.mrb[0].mxu0
  %773 = vmatprep.mubr.bf16.mxu0 %v542
  %774 = vmatmul.mubr.bf16.gmra.mrb[0].mxu0 %v349
  %v775 = vpop.f32.mrb[0].mxu0
  %v776 = vadd.f32 %v115, %v775
  %v777 = vpop.f32.mrb[0].mxu0
  %v778 = vpop.f32.mrb[0].mxu0
  %v779 = vadd.f32 %v115, %v778
  %v780 = vpop.f32.mrb[0].mxu0
  %781 = vmatprep.mubr.bf16.mxu0 %v545
  %782 = vmatmul.mubr.bf16.gmra.mrb[0].mxu0 %v351
  %v783 = vpop.f32.mrb[0].mxu0
  %v784 = vadd.f32 %v115, %v783
  %v785 = vpop.f32.mrb[0].mxu0
  %v786 = vpop.f32.mrb[0].mxu0
  %v787 = vadd.f32 %v115, %v786
  %v788 = vpop.f32.mrb[0].mxu0
  %789 = vmatprep.mubr.bf16.mxu0 %v548
  %790 = vmatmul.mubr.bf16.gmra.mrb[0].mxu0 %v353
  %v791 = vpop.f32.mrb[0].mxu0
  %v792 = vadd.f32 %v115, %v791
  %v793 = vpop.f32.mrb[0].mxu0
  %v794 = vpop.f32.mrb[0].mxu0
  %v795 = vadd.f32 %v115, %v794
  %v796 = vpop.f32.mrb[0].mxu0
  %797 = vmatprep.mubr.bf16.mxu0 %v551
  %798 = vmatmul.mubr.bf16.gmra.mrb[0].mxu0 %v355
  %v799 = vpop.f32.mrb[0].mxu0
  %v800 = vadd.f32 %v115, %v799
  %v801 = vpop.f32.mrb[0].mxu0
  %v802 = vpop.f32.mrb[0].mxu0
  %v803 = vadd.f32 %v115, %v802
  %v804 = vpop.f32.mrb[0].mxu0
  %805 = vmatprep.mubr.bf16.mxu0 %v554
  %806 = vmatmul.mubr.bf16.gmra.mrb[0].mxu0 %v357
  %v807 = vpop.f32.mrb[0].mxu0
  %v808 = vadd.f32 %v115, %v807
  %v809 = vpop.f32.mrb[0].mxu0
  %v810 = vpop.f32.mrb[0].mxu0
  %v811 = vadd.f32 %v115, %v810
  %v812 = vpop.f32.mrb[0].mxu0
  %813 = vmatprep.mubr.bf16.mxu0 %v557
  %814 = vmatmul.mubr.bf16.gmra.mrb[0].mxu0 %v359
  %v815 = vpop.f32.mrb[0].mxu0
  %v816 = vadd.f32 %v115, %v815
  %v817 = vpop.f32.mrb[0].mxu0
  %v818 = vpop.f32.mrb[0].mxu0
  %v819 = vadd.f32 %v115, %v818
  %v820 = vpop.f32.mrb[0].mxu0
  %821 = vmatprep.mubr.bf16.mxu0 %v560
  %822 = vmatmul.mubr.bf16.gmra.mrb[0].mxu0 %v361
  %v823 = vpop.f32.mrb[0].mxu0
  %v824 = vadd.f32 %v115, %v823
  %v825 = vpop.f32.mrb[0].mxu0
  %v826 = vpop.f32.mrb[0].mxu0
  %v827 = vadd.f32 %v115, %v826
  %v828 = vpop.f32.mrb[0].mxu0
  %829 = vmatprep.mubr.bf16.mxu0 %v563
  %830 = vmatmul.mubr.bf16.gmra.mrb[0].mxu0 %v363
  %v831 = vpop.f32.mrb[0].mxu0
  %v832 = vadd.f32 %v115, %v831
  %v833 = vpop.f32.mrb[0].mxu0
  %v834 = vpop.f32.mrb[0].mxu0
  %v835 = vadd.f32 %v115, %v834
  %v836 = vpop.f32.mrb[0].mxu0
  %837 = vmatprep.mubr.bf16.mxu0 %v566
  %838 = vmatmul.mubr.bf16.gmra.mrb[0].mxu0 %v365
  %v839 = vpop.f32.mrb[0].mxu0
  %v840 = vadd.f32 %v115, %v839
  %v841 = vpop.f32.mrb[0].mxu0
  %v842 = vpop.f32.mrb[0].mxu0
  %v843 = vadd.f32 %v115, %v842
  %v844 = vpop.f32.mrb[0].mxu0
  %845 = vmatprep.mubr.bf16.mxu0 %v569
  %846 = vmatmul.mubr.bf16.gmra.mrb[0].mxu0 %v367
  %v847 = vpop.f32.mrb[0].mxu0
  %v848 = vadd.f32 %v115, %v847
  %v849 = vpop.f32.mrb[0].mxu0
  %v850 = vpop.f32.mrb[0].mxu0
  %v851 = vadd.f32 %v115, %v850
  %v852 = vpop.f32.mrb[0].mxu0
  %853 = vmatprep.mubr.bf16.mxu0 %v572
  %854 = vmatmul.mubr.bf16.gmra.mrb[0].mxu0 %v369
  %v855 = vpop.f32.mrb[0].mxu0
  %v856 = vadd.f32 %v115, %v855
  %v857 = vpop.f32.mrb[0].mxu0
  %v858 = vpop.f32.mrb[0].mxu0
  %v859 = vadd.f32 %v115, %v858
  %v860 = vpop.f32.mrb[0].mxu0
  %861 = vmatprep.mubr.bf16.mxu0 %v575
  %862 = vmatmul.mubr.bf16.gmra.mrb[0].mxu0 %v371
  %v863 = vpop.f32.mrb[0].mxu0
  %v864 = vadd.f32 %v115, %v863
  %v865 = vpop.f32.mrb[0].mxu0
  %v866 = vpop.f32.mrb[0].mxu0
  %v867 = vadd.f32 %v115, %v866
  %v868 = vpop.f32.mrb[0].mxu0
  %869 = vdwg.mxu0
  %vm870 = vcmask 64512
  %v871 = vsel %vm870, %v616, 0.0
  %v872 = vsel %vm870, %v619, 0.0
  %v873 = vadd.f32 %v871, %v872
  %v874 = vsel %vm870, %v624, 0.0
  %v875 = vadd.f32 %v873, %v874
  %v876 = vsel %vm870, %v627, 0.0
  %v877 = vadd.f32 %v875, %v876
  %v878 = vsel %vm870, %v632, 0.0
  %v879 = vadd.f32 %v877, %v878
  %v880 = vsel %vm870, %v635, 0.0
  %v881 = vadd.f32 %v879, %v880
  %v882 = vsel %vm870, %v640, 0.0
  %v883 = vadd.f32 %v881, %v882
  %v884 = vsel %vm870, %v643, 0.0
  %v885 = vadd.f32 %v883, %v884
  %v886 = vsel %vm870, %v648, 0.0
  %v887 = vadd.f32 %v885, %v886
  %v888 = vsel %vm870, %v651, 0.0
  %v889 = vadd.f32 %v887, %v888
  %v890 = vsel %vm870, %v656, 0.0
  %v891 = vadd.f32 %v889, %v890
  %v892 = vsel %vm870, %v659, 0.0
  %v893 = vadd.f32 %v891, %v892
  %v894 = vsel %vm870, %v664, 0.0
  %v895 = vadd.f32 %v893, %v894
  %v896 = vsel %vm870, %v667, 0.0
  %v897 = vadd.f32 %v895, %v896
  %v898 = vsel %vm870, %v672, 0.0
  %v899 = vadd.f32 %v897, %v898
  %v900 = vsel %vm870, %v675, 0.0
  %v901 = vadd.f32 %v899, %v900
  %v902 = vsel %vm870, %v680, 0.0
  %v903 = vadd.f32 %v901, %v902
  %v904 = vsel %vm870, %v683, 0.0
  %v905 = vadd.f32 %v903, %v904
  %v906 = vsel %vm870, %v688, 0.0
  %v907 = vadd.f32 %v905, %v906
  %v908 = vsel %vm870, %v691, 0.0
  %v909 = vadd.f32 %v907, %v908
  %v910 = vsel %vm870, %v696, 0.0
  %v911 = vadd.f32 %v909, %v910
  %v912 = vsel %vm870, %v699, 0.0
  %v913 = vadd.f32 %v911, %v912
  %v914 = vsel %vm870, %v704, 0.0
  %v915 = vadd.f32 %v913, %v914
  %v916 = vsel %vm870, %v707, 0.0
  %v917 = vadd.f32 %v915, %v916
  %v918 = vsel %vm870, %v712, 0.0
  %v919 = vadd.f32 %v917, %v918
  %v920 = vsel %vm870, %v715, 0.0
  %v921 = vadd.f32 %v919, %v920
  %v922 = vsel %vm870, %v720, 0.0
  %v923 = vadd.f32 %v921, %v922
  %v924 = vsel %vm870, %v723, 0.0
  %v925 = vadd.f32 %v923, %v924
  %v926 = vsel %vm870, %v728, 0.0
  %v927 = vadd.f32 %v925, %v926
  %v928 = vsel %vm870, %v731, 0.0
  %v929 = vadd.f32 %v927, %v928
  %v930 = vsel %vm870, %v736, 0.0
  %v931 = vadd.f32 %v929, %v930
  %v932 = vsel %vm870, %v739, 0.0
  %v933 = vadd.f32 %v931, %v932
  %v934 = vsel %vm870, %v744, 0.0
  %v935 = vadd.f32 %v933, %v934
  %v936 = vsel %vm870, %v747, 0.0
  %v937 = vadd.f32 %v935, %v936
  %v938 = vsel %vm870, %v752, 0.0
  %v939 = vadd.f32 %v937, %v938
  %v940 = vsel %vm870, %v755, 0.0
  %v941 = vadd.f32 %v939, %v940
  %v942 = vsel %vm870, %v760, 0.0
  %v943 = vadd.f32 %v941, %v942
  %v944 = vsel %vm870, %v763, 0.0
  %v945 = vadd.f32 %v943, %v944
  %v946 = vsel %vm870, %v768, 0.0
  %v947 = vadd.f32 %v945, %v946
  %v948 = vsel %vm870, %v771, 0.0
  %v949 = vadd.f32 %v947, %v948
  %v950 = vsel %vm870, %v776, 0.0
  %v951 = vadd.f32 %v949, %v950
  %v952 = vsel %vm870, %v779, 0.0
  %v953 = vadd.f32 %v951, %v952
  %v954 = vsel %vm870, %v784, 0.0
  %v955 = vadd.f32 %v953, %v954
  %v956 = vsel %vm870, %v787, 0.0
  %v957 = vadd.f32 %v955, %v956
  %v958 = vsel %vm870, %v792, 0.0
  %v959 = vadd.f32 %v957, %v958
  %v960 = vsel %vm870, %v795, 0.0
  %v961 = vadd.f32 %v959, %v960
  %v962 = vsel %vm870, %v800, 0.0
  %v963 = vadd.f32 %v961, %v962
  %v964 = vsel %vm870, %v803, 0.0
  %v965 = vadd.f32 %v963, %v964
  %v966 = vsel %vm870, %v808, 0.0
  %v967 = vadd.f32 %v965, %v966
  %v968 = vsel %vm870, %v811, 0.0
  %v969 = vadd.f32 %v967, %v968
  %v970 = vsel %vm870, %v816, 0.0
  %v971 = vadd.f32 %v969, %v970
  %v972 = vsel %vm870, %v819, 0.0
  %v973 = vadd.f32 %v971, %v972
  %v974 = vsel %vm870, %v824, 0.0
  %v975 = vadd.f32 %v973, %v974
  %v976 = vsel %vm870, %v827, 0.0
  %v977 = vadd.f32 %v975, %v976
  %v978 = vsel %vm870, %v832, 0.0
  %v979 = vadd.f32 %v977, %v978
  %v980 = vsel %vm870, %v835, 0.0
  %v981 = vadd.f32 %v979, %v980
  %v982 = vsel %vm870, %v840, 0.0
  %v983 = vadd.f32 %v981, %v982
  %v984 = vsel %vm870, %v843, 0.0
  %v985 = vadd.f32 %v983, %v984
  %v986 = vsel %vm870, %v848, 0.0
  %v987 = vadd.f32 %v985, %v986
  %v988 = vsel %vm870, %v851, 0.0
  %v989 = vadd.f32 %v987, %v988
  %v990 = vsel %vm870, %v856, 0.0
  %v991 = vadd.f32 %v989, %v990
  %v992 = vsel %vm870, %v859, 0.0
  %v993 = vadd.f32 %v991, %v992
  %v994 = vsel %vm870, %v864, 0.0
  %v995 = vadd.f32 %v993, %v994
  %v996 = vsel %vm870, %v867, 0.0
  %v997 = vadd.f32 %v995, %v996
  %v998 = vrot.slane %v997, 4
  %v999 = vadd.f32 %v997, %v998
  %v1000 = vrot.slane %v999, 2
  %v1001 = vadd.f32 %v999, %v1000
  %v1002 = vrot.slane %v1001, 1
  %v1003 = vadd.f32 %v1001, %v1002
  %v1004 = vmul.f32 %v1003, 0.001953125
  %v1005 = vsub.f32 %v616, %v1004
  %v1006 = vsub.f32 %v619, %v1004
  %v1007 = vsub.f32 %v624, %v1004
  %v1008 = vsub.f32 %v627, %v1004
  %v1009 = vsub.f32 %v632, %v1004
  %v1010 = vsub.f32 %v635, %v1004
  %v1011 = vsub.f32 %v640, %v1004
  %v1012 = vsub.f32 %v643, %v1004
  %v1013 = vsub.f32 %v648, %v1004
  %v1014 = vsub.f32 %v651, %v1004
  %v1015 = vsub.f32 %v656, %v1004
  %v1016 = vsub.f32 %v659, %v1004
  %v1017 = vsub.f32 %v664, %v1004
  %v1018 = vsub.f32 %v667, %v1004
  %v1019 = vsub.f32 %v672, %v1004
  %v1020 = vsub.f32 %v675, %v1004
  %v1021 = vsub.f32 %v680, %v1004
  %v1022 = vsub.f32 %v683, %v1004
  %v1023 = vsub.f32 %v688, %v1004
  %v1024 = vsub.f32 %v691, %v1004
  %v1025 = vsub.f32 %v696, %v1004
  %v1026 = vsub.f32 %v699, %v1004
  %v1027 = vsub.f32 %v704, %v1004
  %v1028 = vsub.f32 %v707, %v1004
  %v1029 = vsub.f32 %v712, %v1004
  %v1030 = vsub.f32 %v715, %v1004
  %v1031 = vsub.f32 %v720, %v1004
  %v1032 = vsub.f32 %v723, %v1004
  %v1033 = vsub.f32 %v728, %v1004
  %v1034 = vsub.f32 %v731, %v1004
  %v1035 = vsub.f32 %v736, %v1004
  %v1036 = vsub.f32 %v739, %v1004
  %v1037 = vsub.f32 %v744, %v1004
  %v1038 = vsub.f32 %v747, %v1004
  %v1039 = vsub.f32 %v752, %v1004
  %v1040 = vsub.f32 %v755, %v1004
  %v1041 = vsub.f32 %v760, %v1004
  %v1042 = vsub.f32 %v763, %v1004
  %v1043 = vsub.f32 %v768, %v1004
  %v1044 = vsub.f32 %v771, %v1004
  %v1045 = vsub.f32 %v776, %v1004
  %v1046 = vsub.f32 %v779, %v1004
  %v1047 = vsub.f32 %v784, %v1004
  %v1048 = vsub.f32 %v787, %v1004
  %v1049 = vsub.f32 %v792, %v1004
  %v1050 = vsub.f32 %v795, %v1004
  %v1051 = vsub.f32 %v800, %v1004
  %v1052 = vsub.f32 %v803, %v1004
  %v1053 = vsub.f32 %v808, %v1004
  %v1054 = vsub.f32 %v811, %v1004
  %v1055 = vsub.f32 %v816, %v1004
  %v1056 = vsub.f32 %v819, %v1004
  %v1057 = vsub.f32 %v824, %v1004
  %v1058 = vsub.f32 %v827, %v1004
  %v1059 = vsub.f32 %v832, %v1004
  %v1060 = vsub.f32 %v835, %v1004
  %v1061 = vsub.f32 %v840, %v1004
  %v1062 = vsub.f32 %v843, %v1004
  %v1063 = vsub.f32 %v848, %v1004
  %v1064 = vsub.f32 %v851, %v1004
  %v1065 = vsub.f32 %v856, %v1004
  %v1066 = vsub.f32 %v859, %v1004
  %v1067 = vsub.f32 %v864, %v1004
  %v1068 = vsub.f32 %v867, %v1004
  %v1069 = vmul.f32 %v1005, %v1005
  %v1070 = vmul.f32 %v1006, %v1006
  %v1071 = vmul.f32 %v1007, %v1007
  %v1072 = vmul.f32 %v1008, %v1008
  %v1073 = vmul.f32 %v1009, %v1009
  %v1074 = vmul.f32 %v1010, %v1010
  %v1075 = vmul.f32 %v1011, %v1011
  %v1076 = vmul.f32 %v1012, %v1012
  %v1077 = vmul.f32 %v1013, %v1013
  %v1078 = vmul.f32 %v1014, %v1014
  %v1079 = vmul.f32 %v1015, %v1015
  %v1080 = vmul.f32 %v1016, %v1016
  %v1081 = vmul.f32 %v1017, %v1017
  %v1082 = vmul.f32 %v1018, %v1018
  %v1083 = vmul.f32 %v1019, %v1019
  %v1084 = vmul.f32 %v1020, %v1020
  %v1085 = vmul.f32 %v1021, %v1021
  %v1086 = vmul.f32 %v1022, %v1022
  %v1087 = vmul.f32 %v1023, %v1023
  %v1088 = vmul.f32 %v1024, %v1024
  %v1089 = vmul.f32 %v1025, %v1025
  %v1090 = vmul.f32 %v1026, %v1026
  %v1091 = vmul.f32 %v1027, %v1027
  %v1092 = vmul.f32 %v1028, %v1028
  %v1093 = vmul.f32 %v1029, %v1029
  %v1094 = vmul.f32 %v1030, %v1030
  %v1095 = vmul.f32 %v1031, %v1031
  %v1096 = vmul.f32 %v1032, %v1032
  %v1097 = vmul.f32 %v1033, %v1033
  %v1098 = vmul.f32 %v1034, %v1034
  %v1099 = vmul.f32 %v1035, %v1035
  %v1100 = vmul.f32 %v1036, %v1036
  %v1101 = vmul.f32 %v1037, %v1037
  %v1102 = vmul.f32 %v1038, %v1038
  %v1103 = vmul.f32 %v1039, %v1039
  %v1104 = vmul.f32 %v1040, %v1040
  %v1105 = vmul.f32 %v1041, %v1041
  %v1106 = vmul.f32 %v1042, %v1042
  %v1107 = vmul.f32 %v1043, %v1043
  %v1108 = vmul.f32 %v1044, %v1044
  %v1109 = vmul.f32 %v1045, %v1045
  %v1110 = vmul.f32 %v1046, %v1046
  %v1111 = vmul.f32 %v1047, %v1047
  %v1112 = vmul.f32 %v1048, %v1048
  %v1113 = vmul.f32 %v1049, %v1049
  %v1114 = vmul.f32 %v1050, %v1050
  %v1115 = vmul.f32 %v1051, %v1051
  %v1116 = vmul.f32 %v1052, %v1052
  %v1117 = vmul.f32 %v1053, %v1053
  %v1118 = vmul.f32 %v1054, %v1054
  %v1119 = vmul.f32 %v1055, %v1055
  %v1120 = vmul.f32 %v1056, %v1056
  %v1121 = vmul.f32 %v1057, %v1057
  %v1122 = vmul.f32 %v1058, %v1058
  %v1123 = vmul.f32 %v1059, %v1059
  %v1124 = vmul.f32 %v1060, %v1060
  %v1125 = vmul.f32 %v1061, %v1061
  %v1126 = vmul.f32 %v1062, %v1062
  %v1127 = vmul.f32 %v1063, %v1063
  %v1128 = vmul.f32 %v1064, %v1064
  %v1129 = vmul.f32 %v1065, %v1065
  %v1130 = vmul.f32 %v1066, %v1066
  %v1131 = vmul.f32 %v1067, %v1067
  %v1132 = vmul.f32 %v1068, %v1068
  %v1133 = vsel %vm870, %v1069, 0.0
  %v1134 = vsel %vm870, %v1070, 0.0
  %v1135 = vadd.f32 %v1133, %v1134
  %v1136 = vsel %vm870, %v1071, 0.0
  %v1137 = vadd.f32 %v1135, %v1136
  %v1138 = vsel %vm870, %v1072, 0.0
  %v1139 = vadd.f32 %v1137, %v1138
  %v1140 = vsel %vm870, %v1073, 0.0
  %v1141 = vadd.f32 %v1139, %v1140
  %v1142 = vsel %vm870, %v1074, 0.0
  %v1143 = vadd.f32 %v1141, %v1142
  %v1144 = vsel %vm870, %v1075, 0.0
  %v1145 = vadd.f32 %v1143, %v1144
  %v1146 = vsel %vm870, %v1076, 0.0
  %v1147 = vadd.f32 %v1145, %v1146
  %v1148 = vsel %vm870, %v1077, 0.0
  %v1149 = vadd.f32 %v1147, %v1148
  %v1150 = vsel %vm870, %v1078, 0.0
  %v1151 = vadd.f32 %v1149, %v1150
  %v1152 = vsel %vm870, %v1079, 0.0
  %v1153 = vadd.f32 %v1151, %v1152
  %v1154 = vsel %vm870, %v1080, 0.0
  %v1155 = vadd.f32 %v1153, %v1154
  %v1156 = vsel %vm870, %v1081, 0.0
  %v1157 = vadd.f32 %v1155, %v1156
  %v1158 = vsel %vm870, %v1082, 0.0
  %v1159 = vadd.f32 %v1157, %v1158
  %v1160 = vsel %vm870, %v1083, 0.0
  %v1161 = vadd.f32 %v1159, %v1160
  %v1162 = vsel %vm870, %v1084, 0.0
  %v1163 = vadd.f32 %v1161, %v1162
  %v1164 = vsel %vm870, %v1085, 0.0
  %v1165 = vadd.f32 %v1163, %v1164
  %v1166 = vsel %vm870, %v1086, 0.0
  %v1167 = vadd.f32 %v1165, %v1166
  %v1168 = vsel %vm870, %v1087, 0.0
  %v1169 = vadd.f32 %v1167, %v1168
  %v1170 = vsel %vm870, %v1088, 0.0
  %v1171 = vadd.f32 %v1169, %v1170
  %v1172 = vsel %vm870, %v1089, 0.0
  %v1173 = vadd.f32 %v1171, %v1172
  %v1174 = vsel %vm870, %v1090, 0.0
  %v1175 = vadd.f32 %v1173, %v1174
  %v1176 = vsel %vm870, %v1091, 0.0
  %v1177 = vadd.f32 %v1175, %v1176
  %v1178 = vsel %vm870, %v1092, 0.0
  %v1179 = vadd.f32 %v1177, %v1178
  %v1180 = vsel %vm870, %v1093, 0.0
  %v1181 = vadd.f32 %v1179, %v1180
  %v1182 = vsel %vm870, %v1094, 0.0
  %v1183 = vadd.f32 %v1181, %v1182
  %v1184 = vsel %vm870, %v1095, 0.0
  %v1185 = vadd.f32 %v1183, %v1184
  %v1186 = vsel %vm870, %v1096, 0.0
  %v1187 = vadd.f32 %v1185, %v1186
  %v1188 = vsel %vm870, %v1097, 0.0
  %v1189 = vadd.f32 %v1187, %v1188
  %v1190 = vsel %vm870, %v1098, 0.0
  %v1191 = vadd.f32 %v1189, %v1190
  %v1192 = vsel %vm870, %v1099, 0.0
  %v1193 = vadd.f32 %v1191, %v1192
  %v1194 = vsel %vm870, %v1100, 0.0
  %v1195 = vadd.f32 %v1193, %v1194
  %v1196 = vsel %vm870, %v1101, 0.0
  %v1197 = vadd.f32 %v1195, %v1196
  %v1198 = vsel %vm870, %v1102, 0.0
  %v1199 = vadd.f32 %v1197, %v1198
  %v1200 = vsel %vm870, %v1103, 0.0
  %v1201 = vadd.f32 %v1199, %v1200
  %v1202 = vsel %vm870, %v1104, 0.0
  %v1203 = vadd.f32 %v1201, %v1202
  %v1204 = vsel %vm870, %v1105, 0.0
  %v1205 = vadd.f32 %v1203, %v1204
  %v1206 = vsel %vm870, %v1106, 0.0
  %v1207 = vadd.f32 %v1205, %v1206
  %v1208 = vsel %vm870, %v1107, 0.0
  %v1209 = vadd.f32 %v1207, %v1208
  %v1210 = vsel %vm870, %v1108, 0.0
  %v1211 = vadd.f32 %v1209, %v1210
  %v1212 = vsel %vm870, %v1109, 0.0
  %v1213 = vadd.f32 %v1211, %v1212
  %v1214 = vsel %vm870, %v1110, 0.0
  %v1215 = vadd.f32 %v1213, %v1214
  %v1216 = vsel %vm870, %v1111, 0.0
  %v1217 = vadd.f32 %v1215, %v1216
  %v1218 = vsel %vm870, %v1112, 0.0
  %v1219 = vadd.f32 %v1217, %v1218
  %v1220 = vsel %vm870, %v1113, 0.0
  %v1221 = vadd.f32 %v1219, %v1220
  %v1222 = vsel %vm870, %v1114, 0.0
  %v1223 = vadd.f32 %v1221, %v1222
  %v1224 = vsel %vm870, %v1115, 0.0
  %v1225 = vadd.f32 %v1223, %v1224
  %v1226 = vsel %vm870, %v1116, 0.0
  %v1227 = vadd.f32 %v1225, %v1226
  %v1228 = vsel %vm870, %v1117, 0.0
  %v1229 = vadd.f32 %v1227, %v1228
  %v1230 = vsel %vm870, %v1118, 0.0
  %v1231 = vadd.f32 %v1229, %v1230
  %v1232 = vsel %vm870, %v1119, 0.0
  %v1233 = vadd.f32 %v1231, %v1232
  %v1234 = vsel %vm870, %v1120, 0.0
  %v1235 = vadd.f32 %v1233, %v1234
  %v1236 = vsel %vm870, %v1121, 0.0
  %v1237 = vadd.f32 %v1235, %v1236
  %v1238 = vsel %vm870, %v1122, 0.0
  %v1239 = vadd.f32 %v1237, %v1238
  %v1240 = vsel %vm870, %v1123, 0.0
  %v1241 = vadd.f32 %v1239, %v1240
  %v1242 = vsel %vm870, %v1124, 0.0
  %v1243 = vadd.f32 %v1241, %v1242
  %v1244 = vsel %vm870, %v1125, 0.0
  %v1245 = vadd.f32 %v1243, %v1244
  %v1246 = vsel %vm870, %v1126, 0.0
  %v1247 = vadd.f32 %v1245, %v1246
  %v1248 = vsel %vm870, %v1127, 0.0
  %v1249 = vadd.f32 %v1247, %v1248
  %v1250 = vsel %vm870, %v1128, 0.0
  %v1251 = vadd.f32 %v1249, %v1250
  %v1252 = vsel %vm870, %v1129, 0.0
  %v1253 = vadd.f32 %v1251, %v1252
  %v1254 = vsel %vm870, %v1130, 0.0
  %v1255 = vadd.f32 %v1253, %v1254
  %v1256 = vsel %vm870, %v1131, 0.0
  %v1257 = vadd.f32 %v1255, %v1256
  %v1258 = vsel %vm870, %v1132, 0.0
  %v1259 = vadd.f32 %v1257, %v1258
  %v1260 = vrot.slane %v1259, 4
  %v1261 = vadd.f32 %v1259, %v1260
  %v1262 = vrot.slane %v1261, 2
  %v1263 = vadd.f32 %v1261, %v1262
  %v1264 = vrot.slane %v1263, 1
  %v1265 = vadd.f32 %v1263, %v1264
  %v1266 = vmul.f32 %v1265, 0.001953125
  %v1267 = vadd.f32 %v1266, 1e-05
  %v1268 = vrsqrt.pop %v1267
  %v1269 = vld [vmem:[%s3] sm:$0x1]
  %v1271 = vlaneseq
  %v1272 = vshrl.u32 %v1271, 7
  %v1273 = vsub.s32 0, %v1272
  %v1274 = vrot.slane %v1269, %v1273
  %v1276 = vmul.f32 %v1274, %v1005
  %v1277 = vmul.f32 %v1274, %v1006
  %v1278 = vmul.f32 %v1274, %v1007
  %v1279 = vmul.f32 %v1274, %v1008
  %v1280 = vmul.f32 %v1274, %v1009
  %v1281 = vmul.f32 %v1274, %v1010
  %v1282 = vmul.f32 %v1274, %v1011
  %v1283 = vmul.f32 %v1274, %v1012
  %v1284 = vmul.f32 %v1274, %v1013
  %v1285 = vmul.f32 %v1274, %v1014
  %v1286 = vmul.f32 %v1274, %v1015
  %v1287 = vmul.f32 %v1274, %v1016
  %v1288 = vmul.f32 %v1274, %v1017
  %v1289 = vmul.f32 %v1274, %v1018
  %v1290 = vmul.f32 %v1274, %v1019
  %v1291 = vmul.f32 %v1274, %v1020
  %v1292 = vmul.f32 %v1274, %v1021
  %v1293 = vmul.f32 %v1274, %v1022
  %v1294 = vmul.f32 %v1274, %v1023
  %v1295 = vmul.f32 %v1274, %v1024
  %v1296 = vmul.f32 %v1274, %v1025
  %v1297 = vmul.f32 %v1274, %v1026
  %v1298 = vmul.f32 %v1274, %v1027
  %v1299 = vmul.f32 %v1274, %v1028
  %v1300 = vmul.f32 %v1274, %v1029
  %v1301 = vmul.f32 %v1274, %v1030
  %v1302 = vmul.f32 %v1274, %v1031
  %v1303 = vmul.f32 %v1274, %v1032
  %v1304 = vmul.f32 %v1274, %v1033
  %v1305 = vmul.f32 %v1274, %v1034
  %v1306 = vmul.f32 %v1274, %v1035
  %v1307 = vmul.f32 %v1274, %v1036
  %v1308 = vmul.f32 %v1274, %v1037
  %v1309 = vmul.f32 %v1274, %v1038
  %v1310 = vmul.f32 %v1274, %v1039
  %v1311 = vmul.f32 %v1274, %v1040
  %v1312 = vmul.f32 %v1274, %v1041
  %v1313 = vmul.f32 %v1274, %v1042
  %v1314 = vmul.f32 %v1274, %v1043
  %v1315 = vmul.f32 %v1274, %v1044
  %v1316 = vmul.f32 %v1274, %v1045
  %v1317 = vmul.f32 %v1274, %v1046
  %v1318 = vmul.f32 %v1274, %v1047
  %v1319 = vmul.f32 %v1274, %v1048
  %v1320 = vmul.f32 %v1274, %v1049
  %v1321 = vmul.f32 %v1274, %v1050
  %v1322 = vmul.f32 %v1274, %v1051
  %v1323 = vmul.f32 %v1274, %v1052
  %v1324 = vmul.f32 %v1274, %v1053
  %v1325 = vmul.f32 %v1274, %v1054
  %v1326 = vmul.f32 %v1274, %v1055
  %v1327 = vmul.f32 %v1274, %v1056
  %v1328 = vmul.f32 %v1274, %v1057
  %v1329 = vmul.f32 %v1274, %v1058
  %v1330 = vmul.f32 %v1274, %v1059
  %v1331 = vmul.f32 %v1274, %v1060
  %v1332 = vmul.f32 %v1274, %v1061
  %v1333 = vmul.f32 %v1274, %v1062
  %v1334 = vmul.f32 %v1274, %v1063
  %v1335 = vmul.f32 %v1274, %v1064
  %v1336 = vmul.f32 %v1274, %v1065
  %v1337 = vmul.f32 %v1274, %v1066
  %v1338 = vmul.f32 %v1274, %v1067
  %v1339 = vmul.f32 %v1274, %v1068
  %v1340 = vmul.f32 %v1276, %v1268
  %v1341 = vmul.f32 %v1277, %v1268
  %v1342 = vmul.f32 %v1278, %v1268
  %v1343 = vmul.f32 %v1279, %v1268
  %v1344 = vmul.f32 %v1280, %v1268
  %v1345 = vmul.f32 %v1281, %v1268
  %v1346 = vmul.f32 %v1282, %v1268
  %v1347 = vmul.f32 %v1283, %v1268
  %v1348 = vmul.f32 %v1284, %v1268
  %v1349 = vmul.f32 %v1285, %v1268
  %v1350 = vmul.f32 %v1286, %v1268
  %v1351 = vmul.f32 %v1287, %v1268
  %v1352 = vmul.f32 %v1288, %v1268
  %v1353 = vmul.f32 %v1289, %v1268
  %v1354 = vmul.f32 %v1290, %v1268
  %v1355 = vmul.f32 %v1291, %v1268
  %v1356 = vmul.f32 %v1292, %v1268
  %v1357 = vmul.f32 %v1293, %v1268
  %v1358 = vmul.f32 %v1294, %v1268
  %v1359 = vmul.f32 %v1295, %v1268
  %v1360 = vmul.f32 %v1296, %v1268
  %v1361 = vmul.f32 %v1297, %v1268
  %v1362 = vmul.f32 %v1298, %v1268
  %v1363 = vmul.f32 %v1299, %v1268
  %v1364 = vmul.f32 %v1300, %v1268
  %v1365 = vmul.f32 %v1301, %v1268
  %v1366 = vmul.f32 %v1302, %v1268
  %v1367 = vmul.f32 %v1303, %v1268
  %v1368 = vmul.f32 %v1304, %v1268
  %v1369 = vmul.f32 %v1305, %v1268
  %v1370 = vmul.f32 %v1306, %v1268
  %v1371 = vmul.f32 %v1307, %v1268
  %v1372 = vmul.f32 %v1308, %v1268
  %v1373 = vmul.f32 %v1309, %v1268
  %v1374 = vmul.f32 %v1310, %v1268
  %v1375 = vmul.f32 %v1311, %v1268
  %v1376 = vmul.f32 %v1312, %v1268
  %v1377 = vmul.f32 %v1313, %v1268
  %v1378 = vmul.f32 %v1314, %v1268
  %v1379 = vmul.f32 %v1315, %v1268
  %v1380 = vmul.f32 %v1316, %v1268
  %v1381 = vmul.f32 %v1317, %v1268
  %v1382 = vmul.f32 %v1318, %v1268
  %v1383 = vmul.f32 %v1319, %v1268
  %v1384 = vmul.f32 %v1320, %v1268
  %v1385 = vmul.f32 %v1321, %v1268
  %v1386 = vmul.f32 %v1322, %v1268
  %v1387 = vmul.f32 %v1323, %v1268
  %v1388 = vmul.f32 %v1324, %v1268
  %v1389 = vmul.f32 %v1325, %v1268
  %v1390 = vmul.f32 %v1326, %v1268
  %v1391 = vmul.f32 %v1327, %v1268
  %v1392 = vmul.f32 %v1328, %v1268
  %v1393 = vmul.f32 %v1329, %v1268
  %v1394 = vmul.f32 %v1330, %v1268
  %v1395 = vmul.f32 %v1331, %v1268
  %v1396 = vmul.f32 %v1332, %v1268
  %v1397 = vmul.f32 %v1333, %v1268
  %v1398 = vmul.f32 %v1334, %v1268
  %v1399 = vmul.f32 %v1335, %v1268
  %v1400 = vmul.f32 %v1336, %v1268
  %v1401 = vmul.f32 %v1337, %v1268
  %v1402 = vmul.f32 %v1338, %v1268
  %v1403 = vmul.f32 %v1339, %v1268
  %v1404 = vld [vmem:[%s4] sm:$0x1]
  %v1406 = vlaneseq
  %v1407 = vshrl.u32 %v1406, 7
  %v1408 = vsub.s32 0, %v1407
  %v1409 = vrot.slane %v1404, %v1408
  %v1411 = vadd.f32 %v1340, %v1409
  %v1412 = vadd.f32 %v1341, %v1409
  %v1413 = vadd.f32 %v1342, %v1409
  %v1414 = vadd.f32 %v1343, %v1409
  %v1415 = vadd.f32 %v1344, %v1409
  %v1416 = vadd.f32 %v1345, %v1409
  %v1417 = vadd.f32 %v1346, %v1409
  %v1418 = vadd.f32 %v1347, %v1409
  %v1419 = vadd.f32 %v1348, %v1409
  %v1420 = vadd.f32 %v1349, %v1409
  %v1421 = vadd.f32 %v1350, %v1409
  %v1422 = vadd.f32 %v1351, %v1409
  %v1423 = vadd.f32 %v1352, %v1409
  %v1424 = vadd.f32 %v1353, %v1409
  %v1425 = vadd.f32 %v1354, %v1409
  %v1426 = vadd.f32 %v1355, %v1409
  %v1427 = vadd.f32 %v1356, %v1409
  %v1428 = vadd.f32 %v1357, %v1409
  %v1429 = vadd.f32 %v1358, %v1409
  %v1430 = vadd.f32 %v1359, %v1409
  %v1431 = vadd.f32 %v1360, %v1409
  %v1432 = vadd.f32 %v1361, %v1409
  %v1433 = vadd.f32 %v1362, %v1409
  %v1434 = vadd.f32 %v1363, %v1409
  %v1435 = vadd.f32 %v1364, %v1409
  %v1436 = vadd.f32 %v1365, %v1409
  %v1437 = vadd.f32 %v1366, %v1409
  %v1438 = vadd.f32 %v1367, %v1409
  %v1439 = vadd.f32 %v1368, %v1409
  %v1440 = vadd.f32 %v1369, %v1409
  %v1441 = vadd.f32 %v1370, %v1409
  %v1442 = vadd.f32 %v1371, %v1409
  %v1443 = vadd.f32 %v1372, %v1409
  %v1444 = vadd.f32 %v1373, %v1409
  %v1445 = vadd.f32 %v1374, %v1409
  %v1446 = vadd.f32 %v1375, %v1409
  %v1447 = vadd.f32 %v1376, %v1409
  %v1448 = vadd.f32 %v1377, %v1409
  %v1449 = vadd.f32 %v1378, %v1409
  %v1450 = vadd.f32 %v1379, %v1409
  %v1451 = vadd.f32 %v1380, %v1409
  %v1452 = vadd.f32 %v1381, %v1409
  %v1453 = vadd.f32 %v1382, %v1409
  %v1454 = vadd.f32 %v1383, %v1409
  %v1455 = vadd.f32 %v1384, %v1409
  %v1456 = vadd.f32 %v1385, %v1409
  %v1457 = vadd.f32 %v1386, %v1409
  %v1458 = vadd.f32 %v1387, %v1409
  %v1459 = vadd.f32 %v1388, %v1409
  %v1460 = vadd.f32 %v1389, %v1409
  %v1461 = vadd.f32 %v1390, %v1409
  %v1462 = vadd.f32 %v1391, %v1409
  %v1463 = vadd.f32 %v1392, %v1409
  %v1464 = vadd.f32 %v1393, %v1409
  %v1465 = vadd.f32 %v1394, %v1409
  %v1466 = vadd.f32 %v1395, %v1409
  %v1467 = vadd.f32 %v1396, %v1409
  %v1468 = vadd.f32 %v1397, %v1409
  %v1469 = vadd.f32 %v1398, %v1409
  %v1470 = vadd.f32 %v1399, %v1409
  %v1471 = vadd.f32 %v1400, %v1409
  %v1472 = vadd.f32 %v1401, %v1409
  %v1473 = vadd.f32 %v1402, %v1409
  %v1474 = vadd.f32 %v1403, %v1409
  %v1475 = vmax.f32 %v1411, 0.0
  %v1476 = vmax.f32 %v1412, 0.0
  %v1477 = vmax.f32 %v1413, 0.0
  %v1478 = vmax.f32 %v1414, 0.0
  %v1479 = vmax.f32 %v1415, 0.0
  %v1480 = vmax.f32 %v1416, 0.0
  %v1481 = vmax.f32 %v1417, 0.0
  %v1482 = vmax.f32 %v1418, 0.0
  %v1483 = vmax.f32 %v1419, 0.0
  %v1484 = vmax.f32 %v1420, 0.0
  %v1485 = vmax.f32 %v1421, 0.0
  %v1486 = vmax.f32 %v1422, 0.0
  %v1487 = vmax.f32 %v1423, 0.0
  %v1488 = vmax.f32 %v1424, 0.0
  %v1489 = vmax.f32 %v1425, 0.0
  %v1490 = vmax.f32 %v1426, 0.0
  %v1491 = vmax.f32 %v1427, 0.0
  %v1492 = vmax.f32 %v1428, 0.0
  %v1493 = vmax.f32 %v1429, 0.0
  %v1494 = vmax.f32 %v1430, 0.0
  %v1495 = vmax.f32 %v1431, 0.0
  %v1496 = vmax.f32 %v1432, 0.0
  %v1497 = vmax.f32 %v1433, 0.0
  %v1498 = vmax.f32 %v1434, 0.0
  %v1499 = vmax.f32 %v1435, 0.0
  %v1500 = vmax.f32 %v1436, 0.0
  %v1501 = vmax.f32 %v1437, 0.0
  %v1502 = vmax.f32 %v1438, 0.0
  %v1503 = vmax.f32 %v1439, 0.0
  %v1504 = vmax.f32 %v1440, 0.0
  %v1505 = vmax.f32 %v1441, 0.0
  %v1506 = vmax.f32 %v1442, 0.0
  %v1507 = vmax.f32 %v1443, 0.0
  %v1508 = vmax.f32 %v1444, 0.0
  %v1509 = vmax.f32 %v1445, 0.0
  %v1510 = vmax.f32 %v1446, 0.0
  %v1511 = vmax.f32 %v1447, 0.0
  %v1512 = vmax.f32 %v1448, 0.0
  %v1513 = vmax.f32 %v1449, 0.0
  %v1514 = vmax.f32 %v1450, 0.0
  %v1515 = vmax.f32 %v1451, 0.0
  %v1516 = vmax.f32 %v1452, 0.0
  %v1517 = vmax.f32 %v1453, 0.0
  %v1518 = vmax.f32 %v1454, 0.0
  %v1519 = vmax.f32 %v1455, 0.0
  %v1520 = vmax.f32 %v1456, 0.0
  %v1521 = vmax.f32 %v1457, 0.0
  %v1522 = vmax.f32 %v1458, 0.0
  %v1523 = vmax.f32 %v1459, 0.0
  %v1524 = vmax.f32 %v1460, 0.0
  %v1525 = vmax.f32 %v1461, 0.0
  %v1526 = vmax.f32 %v1462, 0.0
  %v1527 = vmax.f32 %v1463, 0.0
  %v1528 = vmax.f32 %v1464, 0.0
  %v1529 = vmax.f32 %v1465, 0.0
  %v1530 = vmax.f32 %v1466, 0.0
  %v1531 = vmax.f32 %v1467, 0.0
  %v1532 = vmax.f32 %v1468, 0.0
  %v1533 = vmax.f32 %v1469, 0.0
  %v1534 = vmax.f32 %v1470, 0.0
  %v1535 = vmax.f32 %v1471, 0.0
  %v1536 = vmax.f32 %v1472, 0.0
  %v1537 = vmax.f32 %v1473, 0.0
  %v1538 = vmax.f32 %v1474, 0.0
  %v1539 = vpack.c.bf16 %v1476, %v1475
  %v1540 = vpack.c.bf16 %v1478, %v1477
  %v1541 = vpack.c.bf16 %v1480, %v1479
  %v1542 = vpack.c.bf16 %v1482, %v1481
  %v1543 = vpack.c.bf16 %v1484, %v1483
  %v1544 = vpack.c.bf16 %v1486, %v1485
  %v1545 = vpack.c.bf16 %v1488, %v1487
  %v1546 = vpack.c.bf16 %v1490, %v1489
  %v1547 = vpack.c.bf16 %v1492, %v1491
  %v1548 = vpack.c.bf16 %v1494, %v1493
  %v1549 = vpack.c.bf16 %v1496, %v1495
  %v1550 = vpack.c.bf16 %v1498, %v1497
  %v1551 = vpack.c.bf16 %v1500, %v1499
  %v1552 = vpack.c.bf16 %v1502, %v1501
  %v1553 = vpack.c.bf16 %v1504, %v1503
  %v1554 = vpack.c.bf16 %v1506, %v1505
  %v1555 = vpack.c.bf16 %v1508, %v1507
  %v1556 = vpack.c.bf16 %v1510, %v1509
  %v1557 = vpack.c.bf16 %v1512, %v1511
  %v1558 = vpack.c.bf16 %v1514, %v1513
  %v1559 = vpack.c.bf16 %v1516, %v1515
  %v1560 = vpack.c.bf16 %v1518, %v1517
  %v1561 = vpack.c.bf16 %v1520, %v1519
  %v1562 = vpack.c.bf16 %v1522, %v1521
  %v1563 = vpack.c.bf16 %v1524, %v1523
  %v1564 = vpack.c.bf16 %v1526, %v1525
  %v1565 = vpack.c.bf16 %v1528, %v1527
  %v1566 = vpack.c.bf16 %v1530, %v1529
  %v1567 = vpack.c.bf16 %v1532, %v1531
  %v1568 = vpack.c.bf16 %v1534, %v1533
  %v1569 = vpack.c.bf16 %v1536, %v1535
  %v1570 = vpack.c.bf16 %v1538, %v1537
  %v1603 = vunpack.c.l.b16 %v1539
  %v1604 = vunpack.c.h.b16 %v1539
  %v1605 = vunpack.c.l.b16 %v1540
  %v1606 = vunpack.c.h.b16 %v1540
  %v1607 = vunpack.c.l.b16 %v1541
  %v1608 = vunpack.c.h.b16 %v1541
  %v1609 = vunpack.c.l.b16 %v1542
  %v1610 = vunpack.c.h.b16 %v1542
  %v1611 = vunpack.c.l.b16 %v1543
  %v1612 = vunpack.c.h.b16 %v1543
  %v1613 = vunpack.c.l.b16 %v1544
  %v1614 = vunpack.c.h.b16 %v1544
  %v1615 = vunpack.c.l.b16 %v1545
  %v1616 = vunpack.c.h.b16 %v1545
  %v1617 = vunpack.c.l.b16 %v1546
  %v1618 = vunpack.c.h.b16 %v1546
  %v1619 = vunpack.c.l.b16 %v1547
  %v1620 = vunpack.c.h.b16 %v1547
  %v1621 = vunpack.c.l.b16 %v1548
  %v1622 = vunpack.c.h.b16 %v1548
  %v1623 = vunpack.c.l.b16 %v1549
  %v1624 = vunpack.c.h.b16 %v1549
  %v1625 = vunpack.c.l.b16 %v1550
  %v1626 = vunpack.c.h.b16 %v1550
  %v1627 = vunpack.c.l.b16 %v1551
  %v1628 = vunpack.c.h.b16 %v1551
  %v1629 = vunpack.c.l.b16 %v1552
  %v1630 = vunpack.c.h.b16 %v1552
  %v1631 = vunpack.c.l.b16 %v1553
  %v1632 = vunpack.c.h.b16 %v1553
  %v1633 = vunpack.c.l.b16 %v1554
  %v1634 = vunpack.c.h.b16 %v1554
  %v1635 = vunpack.c.l.b16 %v1555
  %v1636 = vunpack.c.h.b16 %v1555
  %v1637 = vunpack.c.l.b16 %v1556
  %v1638 = vunpack.c.h.b16 %v1556
  %v1639 = vunpack.c.l.b16 %v1557
  %v1640 = vunpack.c.h.b16 %v1557
  %v1641 = vunpack.c.l.b16 %v1558
  %v1642 = vunpack.c.h.b16 %v1558
  %v1643 = vunpack.c.l.b16 %v1559
  %v1644 = vunpack.c.h.b16 %v1559
  %v1645 = vunpack.c.l.b16 %v1560
  %v1646 = vunpack.c.h.b16 %v1560
  %v1647 = vunpack.c.l.b16 %v1561
  %v1648 = vunpack.c.h.b16 %v1561
  %v1649 = vunpack.c.l.b16 %v1562
  %v1650 = vunpack.c.h.b16 %v1562
  %v1651 = vunpack.c.l.b16 %v1563
  %v1652 = vunpack.c.h.b16 %v1563
  %v1653 = vunpack.c.l.b16 %v1564
  %v1654 = vunpack.c.h.b16 %v1564
  %v1655 = vunpack.c.l.b16 %v1565
  %v1656 = vunpack.c.h.b16 %v1565
  %v1657 = vunpack.c.l.b16 %v1566
  %v1658 = vunpack.c.h.b16 %v1566
  %v1659 = vunpack.c.l.b16 %v1567
  %v1660 = vunpack.c.h.b16 %v1567
  %v1661 = vunpack.c.l.b16 %v1568
  %v1662 = vunpack.c.h.b16 %v1568
  %v1663 = vunpack.c.l.b16 %v1569
  %v1664 = vunpack.c.h.b16 %v1569
  %v1665 = vunpack.c.l.b16 %v1570
  %v1666 = vunpack.c.h.b16 %v1570
  %v1667 = vpack.c.b16 %v1603, %v1603
  %v1668 = vpack.c.b16 %v1604, %v1604
  %v1669 = vpack.c.b16 %v1605, %v1605
  %v1670 = vpack.c.b16 %v1606, %v1606
  %v1671 = vpack.c.b16 %v1607, %v1607
  %v1672 = vpack.c.b16 %v1608, %v1608
  %v1673 = vpack.c.b16 %v1609, %v1609
  %v1674 = vpack.c.b16 %v1610, %v1610
  %v1675 = vpack.c.b16 %v1611, %v1611
  %v1676 = vpack.c.b16 %v1612, %v1612
  %v1677 = vpack.c.b16 %v1613, %v1613
  %v1678 = vpack.c.b16 %v1614, %v1614
  %v1679 = vpack.c.b16 %v1615, %v1615
  %v1680 = vpack.c.b16 %v1616, %v1616
  %v1681 = vpack.c.b16 %v1617, %v1617
  %v1682 = vpack.c.b16 %v1618, %v1618
  %v1683 = vpack.c.b16 %v1619, %v1619
  %v1684 = vpack.c.b16 %v1620, %v1620
  %v1685 = vpack.c.b16 %v1621, %v1621
  %v1686 = vpack.c.b16 %v1622, %v1622
  %v1687 = vpack.c.b16 %v1623, %v1623
  %v1688 = vpack.c.b16 %v1624, %v1624
  %v1689 = vpack.c.b16 %v1625, %v1625
  %v1690 = vpack.c.b16 %v1626, %v1626
  %v1691 = vpack.c.b16 %v1627, %v1627
  %v1692 = vpack.c.b16 %v1628, %v1628
  %v1693 = vpack.c.b16 %v1629, %v1629
  %v1694 = vpack.c.b16 %v1630, %v1630
  %v1695 = vpack.c.b16 %v1631, %v1631
  %v1696 = vpack.c.b16 %v1632, %v1632
  %v1697 = vpack.c.b16 %v1633, %v1633
  %v1698 = vpack.c.b16 %v1634, %v1634
  %v1699 = vpack.c.b16 %v1635, %v1635
  %v1700 = vpack.c.b16 %v1636, %v1636
  %v1701 = vpack.c.b16 %v1637, %v1637
  %v1702 = vpack.c.b16 %v1638, %v1638
  %v1703 = vpack.c.b16 %v1639, %v1639
  %v1704 = vpack.c.b16 %v1640, %v1640
  %v1705 = vpack.c.b16 %v1641, %v1641
  %v1706 = vpack.c.b16 %v1642, %v1642
  %v1707 = vpack.c.b16 %v1643, %v1643
  %v1708 = vpack.c.b16 %v1644, %v1644
  %v1709 = vpack.c.b16 %v1645, %v1645
  %v1710 = vpack.c.b16 %v1646, %v1646
  %v1711 = vpack.c.b16 %v1647, %v1647
  %v1712 = vpack.c.b16 %v1648, %v1648
  %v1713 = vpack.c.b16 %v1649, %v1649
  %v1714 = vpack.c.b16 %v1650, %v1650
  %v1715 = vpack.c.b16 %v1651, %v1651
  %v1716 = vpack.c.b16 %v1652, %v1652
  %v1717 = vpack.c.b16 %v1653, %v1653
  %v1718 = vpack.c.b16 %v1654, %v1654
  %v1719 = vpack.c.b16 %v1655, %v1655
  %v1720 = vpack.c.b16 %v1656, %v1656
  %v1721 = vpack.c.b16 %v1657, %v1657
  %v1722 = vpack.c.b16 %v1658, %v1658
  %v1723 = vpack.c.b16 %v1659, %v1659
  %v1724 = vpack.c.b16 %v1660, %v1660
  %v1725 = vpack.c.b16 %v1661, %v1661
  %v1726 = vpack.c.b16 %v1662, %v1662
  %v1727 = vpack.c.b16 %v1663, %v1663
  %v1728 = vpack.c.b16 %v1664, %v1664
  %v1729 = vpack.c.b16 %v1665, %v1665
  %v1730 = vpack.c.b16 %v1666, %v1666
  %vm1795 = vcmask 60416
  %1796 = vst.msk [vmem:[%s5] sm:$0xf] %vm1795, %v1667
  %1797 = vst.msk [vmem:[%s5 + $0x4] sm:$0xf] %vm1795, %v1668
  %1798 = vst.msk [vmem:[%s5 + $0x8] sm:$0xf] %vm1795, %v1669
  %1799 = vst.msk [vmem:[%s5 + $0xc] sm:$0xf] %vm1795, %v1670
  %1800 = vst.msk [vmem:[%s5 + $0x10] sm:$0xf] %vm1795, %v1671
  %1801 = vst.msk [vmem:[%s5 + $0x14] sm:$0xf] %vm1795, %v1672
  %1802 = vst.msk [vmem:[%s5 + $0x18] sm:$0xf] %vm1795, %v1673
  %1803 = vst.msk [vmem:[%s5 + $0x1c] sm:$0xf] %vm1795, %v1674
  %1804 = vst.msk [vmem:[%s5 + $0x20] sm:$0xf] %vm1795, %v1675
  %1805 = vst.msk [vmem:[%s5 + $0x24] sm:$0xf] %vm1795, %v1676
  %1806 = vst.msk [vmem:[%s5 + $0x28] sm:$0xf] %vm1795, %v1677
  %1807 = vst.msk [vmem:[%s5 + $0x2c] sm:$0xf] %vm1795, %v1678
  %1808 = vst.msk [vmem:[%s5 + $0x30] sm:$0xf] %vm1795, %v1679
  %1809 = vst.msk [vmem:[%s5 + $0x34] sm:$0xf] %vm1795, %v1680
  %1810 = vst.msk [vmem:[%s5 + $0x38] sm:$0xf] %vm1795, %v1681
  %1811 = vst.msk [vmem:[%s5 + $0x3c] sm:$0xf] %vm1795, %v1682
  %1812 = vst.msk [vmem:[%s5 + $0x40] sm:$0xf] %vm1795, %v1683
  %1813 = vst.msk [vmem:[%s5 + $0x44] sm:$0xf] %vm1795, %v1684
  %1814 = vst.msk [vmem:[%s5 + $0x48] sm:$0xf] %vm1795, %v1685
  %1815 = vst.msk [vmem:[%s5 + $0x4c] sm:$0xf] %vm1795, %v1686
  %1816 = vst.msk [vmem:[%s5 + $0x50] sm:$0xf] %vm1795, %v1687
  %1817 = vst.msk [vmem:[%s5 + $0x54] sm:$0xf] %vm1795, %v1688
  %1818 = vst.msk [vmem:[%s5 + $0x58] sm:$0xf] %vm1795, %v1689
  %1819 = vst.msk [vmem:[%s5 + $0x5c] sm:$0xf] %vm1795, %v1690
  %1820 = vst.msk [vmem:[%s5 + $0x60] sm:$0xf] %vm1795, %v1691
  %1821 = vst.msk [vmem:[%s5 + $0x64] sm:$0xf] %vm1795, %v1692
  %1822 = vst.msk [vmem:[%s5 + $0x68] sm:$0xf] %vm1795, %v1693
  %1823 = vst.msk [vmem:[%s5 + $0x6c] sm:$0xf] %vm1795, %v1694
  %1824 = vst.msk [vmem:[%s5 + $0x70] sm:$0xf] %vm1795, %v1695
  %1825 = vst.msk [vmem:[%s5 + $0x74] sm:$0xf] %vm1795, %v1696
  %1826 = vst.msk [vmem:[%s5 + $0x78] sm:$0xf] %vm1795, %v1697
  %1827 = vst.msk [vmem:[%s5 + $0x7c] sm:$0xf] %vm1795, %v1698
  %1828 = vst.msk [vmem:[%s5 + $0x80] sm:$0xf] %vm1795, %v1699
  %1829 = vst.msk [vmem:[%s5 + $0x84] sm:$0xf] %vm1795, %v1700
  %1830 = vst.msk [vmem:[%s5 + $0x88] sm:$0xf] %vm1795, %v1701
  %1831 = vst.msk [vmem:[%s5 + $0x8c] sm:$0xf] %vm1795, %v1702
  %1832 = vst.msk [vmem:[%s5 + $0x90] sm:$0xf] %vm1795, %v1703
  %1833 = vst.msk [vmem:[%s5 + $0x94] sm:$0xf] %vm1795, %v1704
  %1834 = vst.msk [vmem:[%s5 + $0x98] sm:$0xf] %vm1795, %v1705
  %1835 = vst.msk [vmem:[%s5 + $0x9c] sm:$0xf] %vm1795, %v1706
  %1836 = vst.msk [vmem:[%s5 + $0xa0] sm:$0xf] %vm1795, %v1707
  %1837 = vst.msk [vmem:[%s5 + $0xa4] sm:$0xf] %vm1795, %v1708
  %1838 = vst.msk [vmem:[%s5 + $0xa8] sm:$0xf] %vm1795, %v1709
  %1839 = vst.msk [vmem:[%s5 + $0xac] sm:$0xf] %vm1795, %v1710
  %1840 = vst.msk [vmem:[%s5 + $0xb0] sm:$0xf] %vm1795, %v1711
  %1841 = vst.msk [vmem:[%s5 + $0xb4] sm:$0xf] %vm1795, %v1712
  %1842 = vst.msk [vmem:[%s5 + $0xb8] sm:$0xf] %vm1795, %v1713
  %1843 = vst.msk [vmem:[%s5 + $0xbc] sm:$0xf] %vm1795, %v1714
  %1844 = vst.msk [vmem:[%s5 + $0xc0] sm:$0xf] %vm1795, %v1715
  %1845 = vst.msk [vmem:[%s5 + $0xc4] sm:$0xf] %vm1795, %v1716
  %1846 = vst.msk [vmem:[%s5 + $0xc8] sm:$0xf] %vm1795, %v1717
  %1847 = vst.msk [vmem:[%s5 + $0xcc] sm:$0xf] %vm1795, %v1718
  %1848 = vst.msk [vmem:[%s5 + $0xd0] sm:$0xf] %vm1795, %v1719
  %1849 = vst.msk [vmem:[%s5 + $0xd4] sm:$0xf] %vm1795, %v1720
  %1850 = vst.msk [vmem:[%s5 + $0xd8] sm:$0xf] %vm1795, %v1721
  %1851 = vst.msk [vmem:[%s5 + $0xdc] sm:$0xf] %vm1795, %v1722
  %1852 = vst.msk [vmem:[%s5 + $0xe0] sm:$0xf] %vm1795, %v1723
  %1853 = vst.msk [vmem:[%s5 + $0xe4] sm:$0xf] %vm1795, %v1724
  %1854 = vst.msk [vmem:[%s5 + $0xe8] sm:$0xf] %vm1795, %v1725
  %1855 = vst.msk [vmem:[%s5 + $0xec] sm:$0xf] %vm1795, %v1726
  %1856 = vst.msk [vmem:[%s5 + $0xf0] sm:$0xf] %vm1795, %v1727
  %1857 = vst.msk [vmem:[%s5 + $0xf4] sm:$0xf] %vm1795, %v1728
  %1858 = vst.msk [vmem:[%s5 + $0xf8] sm:$0xf] %vm1795, %v1729
  %1859 = vst.msk [vmem:[%s5 + $0xfc] sm:$0xf] %vm1795, %v1730
  // Predicated region
  $region22: #{global_generator_forward.12} parent=0 // pred_check
    _
  $region23: #{global_generator_forward.12} parent=0 // pred_check_branch
    %1861 = sbr.rel (0) target = $region25
  $region24: #{global_generator_forward.12} parent=0 // pred_region
    _
  $region25: #{global_generator_forward.12} parent=0 // pred_fallthru
    _
  // Predicated region
  $region26: #{global_generator_forward.12} parent=0 // pred_check
    _
  $region27: #{global_generator_forward.12} parent=0 // pred_check_branch
    %1863 = sbr.rel (0) target = $region29
  $region28: #{global_generator_forward.12} parent=0 // pred_region
    _
  $region29: #{global_generator_forward.12} parent=0 // pred_fallthru
    _

// kernel: global_generator_forward.13
$region0: #{global_generator_forward.13}
  #allocation0 [shape = 'u32[]', space=smem, size = 0x4, offset = 0x4, fixed_abs, tag = 'smem constant byte address 0x4 - core index']
  #allocation1 [shape = 'u32[144,128]{1,0:T(1,128)}', space=vmem, size = 0x12000, scoped, tag = 'internal scratch']
  %s0 = inlined_call_operand.vmem [shape: bf16[128,200], index: 0, kind: input, shape index: {}]
  %s1 = inlined_call_operand.vmem [shape: bf16[200,16], index: 1, kind: input, shape index: {}]
  %s2 = inlined_call_operand.vmem [shape: f32[1,16], index: 2, kind: input, shape index: {}]
  %s3 = inlined_call_operand.vmem [shape: f32[1,16], index: 3, kind: input, shape index: {}]
  %s4 = inlined_call_operand.vmem [shape: f32[1,16], index: 4, kind: input, shape index: {}]
  %s5 = inlined_call_operand.vmem [shape: bf16[128,16], index: 5, kind: output, shape index: {}]
  %s6 = sld [smem:[#allocation0]]
  $region30: #{global_generator_forward.13} parent=0
    _
  %s8 = ssub.s32 1, %s6
  %s9 = scalar_select 0, %s8, %s6
  // Predicated region
  $region2: #{global_generator_forward.13} parent=0 // pred_check
    _
  $region3: #{global_generator_forward.13} parent=0 // pred_check_branch
    %11 = sbr.rel (0) target = $region5
  $region4: #{global_generator_forward.13} parent=0 // pred_region
    _
  $region5: #{global_generator_forward.13} parent=0 // pred_fallthru
    _
  // Predicated region
  $region6: #{global_generator_forward.13} parent=0 // pred_check
    _
  $region7: #{global_generator_forward.13} parent=0 // pred_check_branch
    %13 = sbr.rel (0) target = $region9
  $region8: #{global_generator_forward.13} parent=0 // pred_region
    _
  $region9: #{global_generator_forward.13} parent=0 // pred_fallthru
    _
  // Predicated region
  $region10: #{global_generator_forward.13} parent=0 // pred_check
    _
  $region11: #{global_generator_forward.13} parent=0 // pred_check_branch
    %15 = sbr.rel (0) target = $region13
  $region12: #{global_generator_forward.13} parent=0 // pred_region
    _
  $region13: #{global_generator_forward.13} parent=0 // pred_fallthru
    _
  // Predicated region
  $region14: #{global_generator_forward.13} parent=0 // pred_check
    _
  $region15: #{global_generator_forward.13} parent=0 // pred_check_branch
    %17 = sbr.rel (0) target = $region17
  $region16: #{global_generator_forward.13} parent=0 // pred_region
    _
  $region17: #{global_generator_forward.13} parent=0 // pred_fallthru
    _
  // Predicated region
  $region18: #{global_generator_forward.13} parent=0 // pred_check
    _
  $region19: #{global_generator_forward.13} parent=0 // pred_check_branch
    %19 = sbr.rel (0) target = $region21
  $region20: #{global_generator_forward.13} parent=0 // pred_region
    _
  $region21: #{global_generator_forward.13} parent=0 // pred_fallthru
    _
  %v21 = vld [vmem:[%s0] sm:$0xff]
  %v22 = vld [vmem:[%s0 + $0x8] sm:$0xff]
  %v23 = vld [vmem:[%s0 + $0x10] sm:$0xff]
  %v24 = vld [vmem:[%s0 + $0x18] sm:$0xff]
  %v25 = vld [vmem:[%s0 + $0x20] sm:$0xff]
  %v26 = vld [vmem:[%s0 + $0x28] sm:$0xff]
  %v27 = vld [vmem:[%s0 + $0x30] sm:$0xff]
  %v28 = vld [vmem:[%s0 + $0x38] sm:$0xff]
  %v29 = vld [vmem:[%s0 + $0x40] sm:$0xff]
  %v30 = vld [vmem:[%s0 + $0x48] sm:$0xff]
  %v31 = vld [vmem:[%s0 + $0x50] sm:$0xff]
  %v32 = vld [vmem:[%s0 + $0x58] sm:$0xff]
  %v33 = vld [vmem:[%s0 + $0x60] sm:$0xff]
  %v34 = vld [vmem:[%s0 + $0x68] sm:$0xff]
  %v35 = vld [vmem:[%s0 + $0x70] sm:$0xff]
  %v36 = vld [vmem:[%s0 + $0x78] sm:$0xff]
  %v37 = vld [vmem:[%s1] sm:$0xf]
  %v38 = vld [vmem:[%s1 + $0x4] sm:$0xf]
  %v39 = vld [vmem:[%s1 + $0x8] sm:$0xf]
  %v40 = vld [vmem:[%s1 + $0xc] sm:$0xf]
  %v41 = vld [vmem:[%s1 + $0x10] sm:$0xf]
  %v42 = vld [vmem:[%s1 + $0x14] sm:$0xf]
  %v43 = vld [vmem:[%s1 + $0x18] sm:$0xf]
  %v44 = vld [vmem:[%s1 + $0x1c] sm:$0xf]
  %v45 = vld [vmem:[%s1 + $0x20] sm:$0xf]
  %v46 = vld [vmem:[%s1 + $0x24] sm:$0xf]
  %v47 = vld [vmem:[%s1 + $0x28] sm:$0xf]
  %v48 = vld [vmem:[%s1 + $0x2c] sm:$0xf]
  %v49 = vld [vmem:[%s1 + $0x30] sm:$0xf]
  %v50 = vld [vmem:[%s1 + $0x34] sm:$0xf]
  %v51 = vld [vmem:[%s1 + $0x38] sm:$0xf]
  %v52 = vld [vmem:[%s1 + $0x3c] sm:$0xf]
  %v53 = vld [vmem:[%s1 + $0x40] sm:$0xf]
  %v54 = vld [vmem:[%s1 + $0x44] sm:$0xf]
  %v55 = vld [vmem:[%s1 + $0x48] sm:$0xf]
  %v56 = vld [vmem:[%s1 + $0x4c] sm:$0xf]
  %v57 = vld [vmem:[%s1 + $0x50] sm:$0xf]
  %v58 = vld [vmem:[%s1 + $0x54] sm:$0xf]
  %v59 = vld [vmem:[%s1 + $0x58] sm:$0xf]
  %v60 = vld [vmem:[%s1 + $0x5c] sm:$0xf]
  %v61 = vld [vmem:[%s1 + $0x60] sm:$0xf]
  %v62 = vld [vmem:[%s2] sm:$0x1]
  %v64 = vlaneseq
  %v65 = vshrl.u32 %v64, 7
  %v66 = vsub.s32 0, %v65
  %v67 = vrot.slane %v62, %v66
  %v85 = vunpack.c.l.b16 %v21
  %v86 = vunpack.c.h.b16 %v21
  %v87 = vunpack.c.l.b16 %v22
  %v88 = vunpack.c.h.b16 %v22
  %v89 = vunpack.c.l.b16 %v23
  %v90 = vunpack.c.h.b16 %v23
  %v91 = vunpack.c.l.b16 %v24
  %v92 = vunpack.c.h.b16 %v24
  %v93 = vunpack.c.l.b16 %v25
  %v94 = vunpack.c.h.b16 %v25
  %v95 = vunpack.c.l.b16 %v26
  %v96 = vunpack.c.h.b16 %v26
  %v97 = vunpack.c.l.b16 %v27
  %v98 = vunpack.c.h.b16 %v27
  %v99 = vunpack.c.l.b16 %v28
  %v100 = vunpack.c.h.b16 %v28
  %v101 = vunpack.c.l.b16 %v29
  %v102 = vunpack.c.h.b16 %v29
  %v103 = vunpack.c.l.b16 %v30
  %v104 = vunpack.c.h.b16 %v30
  %v105 = vunpack.c.l.b16 %v31
  %v106 = vunpack.c.h.b16 %v31
  %v107 = vunpack.c.l.b16 %v32
  %v108 = vunpack.c.h.b16 %v32
  %v109 = vunpack.c.l.b16 %v33
  %v110 = vunpack.c.h.b16 %v33
  %v111 = vunpack.c.l.b16 %v34
  %v112 = vunpack.c.h.b16 %v34
  %v113 = vunpack.c.l.b16 %v35
  %v114 = vunpack.c.h.b16 %v35
  %v115 = vunpack.c.l.b16 %v36
  %v116 = vunpack.c.h.b16 %v36
  %v117 = vpack.c.b16 %v87, %v85
  %v118 = vpack.c.b16 %v88, %v86
  %v119 = vpack.c.b16 %v91, %v89
  %v120 = vpack.c.b16 %v92, %v90
  %v121 = vpack.c.b16 %v95, %v93
  %v122 = vpack.c.b16 %v96, %v94
  %v123 = vpack.c.b16 %v99, %v97
  %v124 = vpack.c.b16 %v100, %v98
  %v125 = vpack.c.b16 %v103, %v101
  %v126 = vpack.c.b16 %v104, %v102
  %v127 = vpack.c.b16 %v107, %v105
  %v128 = vpack.c.b16 %v108, %v106
  %v129 = vpack.c.b16 %v111, %v109
  %v130 = vpack.c.b16 %v112, %v110
  %v131 = vpack.c.b16 %v115, %v113
  %v132 = vpack.c.b16 %v116, %v114
  %v166 = vunpack.c.l.b16 %v37
  %v167 = vunpack.c.l.b16 %v38
  %v168 = vunpack.c.l.b16 %v39
  %v169 = vunpack.c.l.b16 %v40
  %v170 = vunpack.c.l.b16 %v41
  %v171 = vunpack.c.l.b16 %v42
  %v172 = vunpack.c.l.b16 %v43
  %v173 = vunpack.c.l.b16 %v44
  %v174 = vunpack.c.l.b16 %v45
  %v175 = vunpack.c.l.b16 %v46
  %v176 = vunpack.c.l.b16 %v47
  %v177 = vunpack.c.l.b16 %v48
  %v178 = vunpack.c.l.b16 %v49
  %v179 = vunpack.c.l.b16 %v50
  %v180 = vunpack.c.l.b16 %v51
  %v181 = vunpack.c.l.b16 %v52
  %v182 = vunpack.c.l.b16 %v53
  %v183 = vunpack.c.l.b16 %v54
  %v184 = vunpack.c.l.b16 %v55
  %v185 = vunpack.c.l.b16 %v56
  %v186 = vunpack.c.l.b16 %v57
  %v187 = vunpack.c.l.b16 %v58
  %v188 = vunpack.c.l.b16 %v59
  %v189 = vunpack.c.l.b16 %v60
  %v190 = vunpack.c.l.b16 %v61
  %v191 = vpack.c.b16 %v167, %v166
  %v192 = vpack.c.b16 %v169, %v168
  %v193 = vpack.c.b16 %v171, %v170
  %v194 = vpack.c.b16 %v173, %v172
  %v195 = vpack.c.b16 %v175, %v174
  %v196 = vpack.c.b16 %v177, %v176
  %v197 = vpack.c.b16 %v179, %v178
  %v198 = vpack.c.b16 %v181, %v180
  %v199 = vpack.c.b16 %v183, %v182
  %v200 = vpack.c.b16 %v185, %v184
  %v201 = vpack.c.b16 %v187, %v186
  %v202 = vpack.c.b16 %v189, %v188
  %v203 = vpack.c.b16 %v190, %v190
  %vm216 = vcmask 588800
  %v218 = vsel %vm216, %v118, 0
  %v221 = vsel %vm216, %v120, 0
  %v224 = vsel %vm216, %v122, 0
  %v227 = vsel %vm216, %v124, 0
  %v230 = vsel %vm216, %v126, 0
  %v233 = vsel %vm216, %v128, 0
  %v236 = vsel %vm216, %v130, 0
  %v239 = vsel %vm216, %v132, 0
  %vm241 = vcmask 1043456
  %v243 = vsel %vm241, %v203, 0
  %245 = vmatprep.subr.bf16.mxu0 0
  %246 = vmatpush1.bf16.msra.mxu0 %v191
  %247 = vmatprep.subr.bf16.mxu0 0
  %248 = vmatpush1.bf16.msra.mxu0 %v192
  %249 = vmatprep.subr.bf16.mxu0 0
  %250 = vmatpush1.bf16.msra.mxu0 %v193
  %251 = vmatprep.subr.bf16.mxu0 0
  %252 = vmatpush1.bf16.msra.mxu0 %v194
  %253 = vmatprep.subr.bf16.mxu0 0
  %254 = vmatpush1.bf16.msra.mxu0 %v195
  %255 = vmatprep.subr.bf16.mxu0 0
  %256 = vmatpush1.bf16.msra.mxu0 %v196
  %257 = vmatprep.subr.bf16.mxu0 0
  %258 = vmatpush1.bf16.msra.mxu0 %v197
  %259 = vmatprep.subr.bf16.mxu0 0
  %260 = vmatpush1.bf16.msra.mxu0 %v198
  %261 = vmatprep.subr.bf16.mxu0 0
  %262 = vmatpush1.bf16.msra.mxu0 %v199
  %263 = vmatprep.subr.bf16.mxu0 0
  %264 = vmatpush1.bf16.msra.mxu0 %v200
  %265 = vmatprep.subr.bf16.mxu0 0
  %266 = vmatpush1.bf16.msra.mxu0 %v201
  %267 = vmatprep.subr.bf16.mxu0 0
  %268 = vmatpush1.bf16.msra.mxu0 %v202
  %269 = vmatprep.subr.bf16.mxu0 0
  %270 = vmatpush1.bf16.msra.mxu0 %v243
  %271 = vmatprep.subr.bf16.mxu0 0
  %272 = vmatpush1.bf16.msra.mxu0 0
  %273 = vmatprep.subr.bf16.mxu0 0
  %274 = vmatpush1.bf16.msra.mxu0 0
  %275 = vmatprep.subr.bf16.mxu0 0
  %276 = vmatpush1.bf16.msra.mxu0 0
  %277 = vmatprep.mubr.bf16.mxu0 %v218
  %278 = vmatmul.mubr.bf16.gmra.mrb[0].mxu0 %v117
  %v279 = vpop.f32.mrb[0].mxu0
  %v280 = vadd.f32 %v67, %v279
  %v281 = vpop.f32.mrb[0].mxu0
  %v282 = vpop.f32.mrb[0].mxu0
  %v283 = vadd.f32 %v67, %v282
  %v284 = vpop.f32.mrb[0].mxu0
  %285 = vmatprep.mubr.bf16.mxu0 %v221
  %286 = vmatmul.mubr.bf16.gmra.mrb[0].mxu0 %v119
  %v287 = vpop.f32.mrb[0].mxu0
  %v288 = vadd.f32 %v67, %v287
  %v289 = vpop.f32.mrb[0].mxu0
  %v290 = vpop.f32.mrb[0].mxu0
  %v291 = vadd.f32 %v67, %v290
  %v292 = vpop.f32.mrb[0].mxu0
  %293 = vmatprep.mubr.bf16.mxu0 %v224
  %294 = vmatmul.mubr.bf16.gmra.mrb[0].mxu0 %v121
  %v295 = vpop.f32.mrb[0].mxu0
  %v296 = vadd.f32 %v67, %v295
  %v297 = vpop.f32.mrb[0].mxu0
  %v298 = vpop.f32.mrb[0].mxu0
  %v299 = vadd.f32 %v67, %v298
  %v300 = vpop.f32.mrb[0].mxu0
  %301 = vmatprep.mubr.bf16.mxu0 %v227
  %302 = vmatmul.mubr.bf16.gmra.mrb[0].mxu0 %v123
  %v303 = vpop.f32.mrb[0].mxu0
  %v304 = vadd.f32 %v67, %v303
  %v305 = vpop.f32.mrb[0].mxu0
  %v306 = vpop.f32.mrb[0].mxu0
  %v307 = vadd.f32 %v67, %v306
  %v308 = vpop.f32.mrb[0].mxu0
  %309 = vmatprep.mubr.bf16.mxu0 %v230
  %310 = vmatmul.mubr.bf16.gmra.mrb[0].mxu0 %v125
  %v311 = vpop.f32.mrb[0].mxu0
  %v312 = vadd.f32 %v67, %v311
  %v313 = vpop.f32.mrb[0].mxu0
  %v314 = vpop.f32.mrb[0].mxu0
  %v315 = vadd.f32 %v67, %v314
  %v316 = vpop.f32.mrb[0].mxu0
  %317 = vmatprep.mubr.bf16.mxu0 %v233
  %318 = vmatmul.mubr.bf16.gmra.mrb[0].mxu0 %v127
  %v319 = vpop.f32.mrb[0].mxu0
  %v320 = vadd.f32 %v67, %v319
  %v321 = vpop.f32.mrb[0].mxu0
  %v322 = vpop.f32.mrb[0].mxu0
  %v323 = vadd.f32 %v67, %v322
  %v324 = vpop.f32.mrb[0].mxu0
  %325 = vmatprep.mubr.bf16.mxu0 %v236
  %326 = vmatmul.mubr.bf16.gmra.mrb[0].mxu0 %v129
  %v327 = vpop.f32.mrb[0].mxu0
  %v328 = vadd.f32 %v67, %v327
  %v329 = vpop.f32.mrb[0].mxu0
  %v330 = vpop.f32.mrb[0].mxu0
  %v331 = vadd.f32 %v67, %v330
  %v332 = vpop.f32.mrb[0].mxu0
  %333 = vmatprep.mubr.bf16.mxu0 %v239
  %334 = vmatmul.mubr.bf16.gmra.mrb[0].mxu0 %v131
  %v335 = vpop.f32.mrb[0].mxu0
  %v336 = vadd.f32 %v67, %v335
  %v337 = vpop.f32.mrb[0].mxu0
  %v338 = vpop.f32.mrb[0].mxu0
  %v339 = vadd.f32 %v67, %v338
  %v340 = vpop.f32.mrb[0].mxu0
  %341 = vdwg.mxu0
  %vm342 = vcmask 130048
  %v343 = vsel %vm342, %v280, 0.0
  %v344 = vsel %vm342, %v283, 0.0
  %v345 = vadd.f32 %v343, %v344
  %v346 = vsel %vm342, %v288, 0.0
  %v347 = vadd.f32 %v345, %v346
  %v348 = vsel %vm342, %v291, 0.0
  %v349 = vadd.f32 %v347, %v348
  %v350 = vsel %vm342, %v296, 0.0
  %v351 = vadd.f32 %v349, %v350
  %v352 = vsel %vm342, %v299, 0.0
  %v353 = vadd.f32 %v351, %v352
  %v354 = vsel %vm342, %v304, 0.0
  %v355 = vadd.f32 %v353, %v354
  %v356 = vsel %vm342, %v307, 0.0
  %v357 = vadd.f32 %v355, %v356
  %v358 = vsel %vm342, %v312, 0.0
  %v359 = vadd.f32 %v357, %v358
  %v360 = vsel %vm342, %v315, 0.0
  %v361 = vadd.f32 %v359, %v360
  %v362 = vsel %vm342, %v320, 0.0
  %v363 = vadd.f32 %v361, %v362
  %v364 = vsel %vm342, %v323, 0.0
  %v365 = vadd.f32 %v363, %v364
  %v366 = vsel %vm342, %v328, 0.0
  %v367 = vadd.f32 %v365, %v366
  %v368 = vsel %vm342, %v331, 0.0
  %v369 = vadd.f32 %v367, %v368
  %v370 = vsel %vm342, %v336, 0.0
  %v371 = vadd.f32 %v369, %v370
  %v372 = vsel %vm342, %v339, 0.0
  %v373 = vadd.f32 %v371, %v372
  %v374 = vrot.slane %v373, 4
  %v375 = vadd.f32 %v373, %v374
  %v376 = vrot.slane %v375, 2
  %v377 = vadd.f32 %v375, %v376
  %v378 = vrot.slane %v377, 1
  %v379 = vadd.f32 %v377, %v378
  %v380 = vmul.f32 %v379, 0.0078125
  %v381 = vsub.f32 %v280, %v380
  %v382 = vsub.f32 %v283, %v380
  %v383 = vsub.f32 %v288, %v380
  %v384 = vsub.f32 %v291, %v380
  %v385 = vsub.f32 %v296, %v380
  %v386 = vsub.f32 %v299, %v380
  %v387 = vsub.f32 %v304, %v380
  %v388 = vsub.f32 %v307, %v380
  %v389 = vsub.f32 %v312, %v380
  %v390 = vsub.f32 %v315, %v380
  %v391 = vsub.f32 %v320, %v380
  %v392 = vsub.f32 %v323, %v380
  %v393 = vsub.f32 %v328, %v380
  %v394 = vsub.f32 %v331, %v380
  %v395 = vsub.f32 %v336, %v380
  %v396 = vsub.f32 %v339, %v380
  %v397 = vmul.f32 %v381, %v381
  %v398 = vmul.f32 %v382, %v382
  %v399 = vmul.f32 %v383, %v383
  %v400 = vmul.f32 %v384, %v384
  %v401 = vmul.f32 %v385, %v385
  %v402 = vmul.f32 %v386, %v386
  %v403 = vmul.f32 %v387, %v387
  %v404 = vmul.f32 %v388, %v388
  %v405 = vmul.f32 %v389, %v389
  %v406 = vmul.f32 %v390, %v390
  %v407 = vmul.f32 %v391, %v391
  %v408 = vmul.f32 %v392, %v392
  %v409 = vmul.f32 %v393, %v393
  %v410 = vmul.f32 %v394, %v394
  %v411 = vmul.f32 %v395, %v395
  %v412 = vmul.f32 %v396, %v396
  %v413 = vsel %vm342, %v397, 0.0
  %v414 = vsel %vm342, %v398, 0.0
  %v415 = vadd.f32 %v413, %v414
  %v416 = vsel %vm342, %v399, 0.0
  %v417 = vadd.f32 %v415, %v416
  %v418 = vsel %vm342, %v400, 0.0
  %v419 = vadd.f32 %v417, %v418
  %v420 = vsel %vm342, %v401, 0.0
  %v421 = vadd.f32 %v419, %v420
  %v422 = vsel %vm342, %v402, 0.0
  %v423 = vadd.f32 %v421, %v422
  %v424 = vsel %vm342, %v403, 0.0
  %v425 = vadd.f32 %v423, %v424
  %v426 = vsel %vm342, %v404, 0.0
  %v427 = vadd.f32 %v425, %v426
  %v428 = vsel %vm342, %v405, 0.0
  %v429 = vadd.f32 %v427, %v428
  %v430 = vsel %vm342, %v406, 0.0
  %v431 = vadd.f32 %v429, %v430
  %v432 = vsel %vm342, %v407, 0.0
  %v433 = vadd.f32 %v431, %v432
  %v434 = vsel %vm342, %v408, 0.0
  %v435 = vadd.f32 %v433, %v434
  %v436 = vsel %vm342, %v409, 0.0
  %v437 = vadd.f32 %v435, %v436
  %v438 = vsel %vm342, %v410, 0.0
  %v439 = vadd.f32 %v437, %v438
  %v440 = vsel %vm342, %v411, 0.0
  %v441 = vadd.f32 %v439, %v440
  %v442 = vsel %vm342, %v412, 0.0
  %v443 = vadd.f32 %v441, %v442
  %v444 = vrot.slane %v443, 4
  %v445 = vadd.f32 %v443, %v444
  %v446 = vrot.slane %v445, 2
  %v447 = vadd.f32 %v445, %v446
  %v448 = vrot.slane %v447, 1
  %v449 = vadd.f32 %v447, %v448
  %v450 = vmul.f32 %v449, 0.0078125
  %v451 = vadd.f32 %v450, 1e-05
  %v452 = vrsqrt.pop %v451
  %v453 = vld [vmem:[%s3] sm:$0x1]
  %v455 = vlaneseq
  %v456 = vshrl.u32 %v455, 7
  %v457 = vsub.s32 0, %v456
  %v458 = vrot.slane %v453, %v457
  %v460 = vmul.f32 %v458, %v381
  %v461 = vmul.f32 %v458, %v382
  %v462 = vmul.f32 %v458, %v383
  %v463 = vmul.f32 %v458, %v384
  %v464 = vmul.f32 %v458, %v385
  %v465 = vmul.f32 %v458, %v386
  %v466 = vmul.f32 %v458, %v387
  %v467 = vmul.f32 %v458, %v388
  %v468 = vmul.f32 %v458, %v389
  %v469 = vmul.f32 %v458, %v390
  %v470 = vmul.f32 %v458, %v391
  %v471 = vmul.f32 %v458, %v392
  %v472 = vmul.f32 %v458, %v393
  %v473 = vmul.f32 %v458, %v394
  %v474 = vmul.f32 %v458, %v395
  %v475 = vmul.f32 %v458, %v396
  %v476 = vmul.f32 %v460, %v452
  %v477 = vmul.f32 %v461, %v452
  %v478 = vmul.f32 %v462, %v452
  %v479 = vmul.f32 %v463, %v452
  %v480 = vmul.f32 %v464, %v452
  %v481 = vmul.f32 %v465, %v452
  %v482 = vmul.f32 %v466, %v452
  %v483 = vmul.f32 %v467, %v452
  %v484 = vmul.f32 %v468, %v452
  %v485 = vmul.f32 %v469, %v452
  %v486 = vmul.f32 %v470, %v452
  %v487 = vmul.f32 %v471, %v452
  %v488 = vmul.f32 %v472, %v452
  %v489 = vmul.f32 %v473, %v452
  %v490 = vmul.f32 %v474, %v452
  %v491 = vmul.f32 %v475, %v452
  %v492 = vld [vmem:[%s4] sm:$0x1]
  %v494 = vlaneseq
  %v495 = vshrl.u32 %v494, 7
  %v496 = vsub.s32 0, %v495
  %v497 = vrot.slane %v492, %v496
  %v499 = vadd.f32 %v476, %v497
  %v500 = vadd.f32 %v477, %v497
  %v501 = vadd.f32 %v478, %v497
  %v502 = vadd.f32 %v479, %v497
  %v503 = vadd.f32 %v480, %v497
  %v504 = vadd.f32 %v481, %v497
  %v505 = vadd.f32 %v482, %v497
  %v506 = vadd.f32 %v483, %v497
  %v507 = vadd.f32 %v484, %v497
  %v508 = vadd.f32 %v485, %v497
  %v509 = vadd.f32 %v486, %v497
  %v510 = vadd.f32 %v487, %v497
  %v511 = vadd.f32 %v488, %v497
  %v512 = vadd.f32 %v489, %v497
  %v513 = vadd.f32 %v490, %v497
  %v514 = vadd.f32 %v491, %v497
  %v515 = vmax.f32 %v499, 0.0
  %v516 = vmax.f32 %v500, 0.0
  %v517 = vmax.f32 %v501, 0.0
  %v518 = vmax.f32 %v502, 0.0
  %v519 = vmax.f32 %v503, 0.0
  %v520 = vmax.f32 %v504, 0.0
  %v521 = vmax.f32 %v505, 0.0
  %v522 = vmax.f32 %v506, 0.0
  %v523 = vmax.f32 %v507, 0.0
  %v524 = vmax.f32 %v508, 0.0
  %v525 = vmax.f32 %v509, 0.0
  %v526 = vmax.f32 %v510, 0.0
  %v527 = vmax.f32 %v511, 0.0
  %v528 = vmax.f32 %v512, 0.0
  %v529 = vmax.f32 %v513, 0.0
  %v530 = vmax.f32 %v514, 0.0
  %v531 = vpack.c.bf16 %v516, %v515
  %v532 = vpack.c.bf16 %v518, %v517
  %v533 = vpack.c.bf16 %v520, %v519
  %v534 = vpack.c.bf16 %v522, %v521
  %v535 = vpack.c.bf16 %v524, %v523
  %v536 = vpack.c.bf16 %v526, %v525
  %v537 = vpack.c.bf16 %v528, %v527
  %v538 = vpack.c.bf16 %v530, %v529
  %v547 = vunpack.c.l.b16 %v531
  %v548 = vunpack.c.h.b16 %v531
  %v549 = vunpack.c.l.b16 %v532
  %v550 = vunpack.c.h.b16 %v532
  %v551 = vunpack.c.l.b16 %v533
  %v552 = vunpack.c.h.b16 %v533
  %v553 = vunpack.c.l.b16 %v534
  %v554 = vunpack.c.h.b16 %v534
  %v555 = vunpack.c.l.b16 %v535
  %v556 = vunpack.c.h.b16 %v535
  %v557 = vunpack.c.l.b16 %v536
  %v558 = vunpack.c.h.b16 %v536
  %v559 = vunpack.c.l.b16 %v537
  %v560 = vunpack.c.h.b16 %v537
  %v561 = vunpack.c.l.b16 %v538
  %v562 = vunpack.c.h.b16 %v538
  %v563 = vpack.c.b16 %v547, %v547
  %v564 = vpack.c.b16 %v548, %v548
  %v565 = vpack.c.b16 %v549, %v549
  %v566 = vpack.c.b16 %v550, %v550
  %v567 = vpack.c.b16 %v551, %v551
  %v568 = vpack.c.b16 %v552, %v552
  %v569 = vpack.c.b16 %v553, %v553
  %v570 = vpack.c.b16 %v554, %v554
  %v571 = vpack.c.b16 %v555, %v555
  %v572 = vpack.c.b16 %v556, %v556
  %v573 = vpack.c.b16 %v557, %v557
  %v574 = vpack.c.b16 %v558, %v558
  %v575 = vpack.c.b16 %v559, %v559
  %v576 = vpack.c.b16 %v560, %v560
  %v577 = vpack.c.b16 %v561, %v561
  %v578 = vpack.c.b16 %v562, %v562
  %vm595 = vcmask 125952
  %596 = vst.msk [vmem:[%s5] sm:$0xf] %vm595, %v563
  %597 = vst.msk [vmem:[%s5 + $0x4] sm:$0xf] %vm595, %v564
  %598 = vst.msk [vmem:[%s5 + $0x8] sm:$0xf] %vm595, %v565
  %599 = vst.msk [vmem:[%s5 + $0xc] sm:$0xf] %vm595, %v566
  %600 = vst.msk [vmem:[%s5 + $0x10] sm:$0xf] %vm595, %v567
  %601 = vst.msk [vmem:[%s5 + $0x14] sm:$0xf] %vm595, %v568
  %602 = vst.msk [vmem:[%s5 + $0x18] sm:$0xf] %vm595, %v569
  %603 = vst.msk [vmem:[%s5 + $0x1c] sm:$0xf] %vm595, %v570
  %604 = vst.msk [vmem:[%s5 + $0x20] sm:$0xf] %vm595, %v571
  %605 = vst.msk [vmem:[%s5 + $0x24] sm:$0xf] %vm595, %v572
  %606 = vst.msk [vmem:[%s5 + $0x28] sm:$0xf] %vm595, %v573
  %607 = vst.msk [vmem:[%s5 + $0x2c] sm:$0xf] %vm595, %v574
  %608 = vst.msk [vmem:[%s5 + $0x30] sm:$0xf] %vm595, %v575
  %609 = vst.msk [vmem:[%s5 + $0x34] sm:$0xf] %vm595, %v576
  %610 = vst.msk [vmem:[%s5 + $0x38] sm:$0xf] %vm595, %v577
  %611 = vst.msk [vmem:[%s5 + $0x3c] sm:$0xf] %vm595, %v578
  // Predicated region
  $region22: #{global_generator_forward.13} parent=0 // pred_check
    _
  $region23: #{global_generator_forward.13} parent=0 // pred_check_branch
    %613 = sbr.rel (0) target = $region25
  $region24: #{global_generator_forward.13} parent=0 // pred_region
    _
  $region25: #{global_generator_forward.13} parent=0 // pred_fallthru
    _
  // Predicated region
  $region26: #{global_generator_forward.13} parent=0 // pred_check
    _
  $region27: #{global_generator_forward.13} parent=0 // pred_check_branch
    %615 = sbr.rel (0) target = $region29
  $region28: #{global_generator_forward.13} parent=0 // pred_region
    _
  $region29: #{global_generator_forward.13} parent=0 // pred_fallthru
    _

// kernel: global_generator_forward.14
$region0: #{global_generator_forward.14}
  #allocation0 [shape = 'u32[]', space=smem, size = 0x4, offset = 0x4, fixed_abs, tag = 'smem constant byte address 0x4 - core index']
  #allocation1 [shape = 'u32[144,128]{1,0:T(1,128)}', space=vmem, size = 0x12000, scoped, tag = 'internal scratch']
  %s0 = inlined_call_operand.vmem [shape: bf16[32,400], index: 0, kind: input, shape index: {}]
  %s1 = inlined_call_operand.vmem [shape: bf16[400,32], index: 1, kind: input, shape index: {}]
  %s2 = inlined_call_operand.vmem [shape: f32[1,32], index: 2, kind: input, shape index: {}]
  %s3 = inlined_call_operand.vmem [shape: f32[1,32], index: 3, kind: input, shape index: {}]
  %s4 = inlined_call_operand.vmem [shape: f32[1,32], index: 4, kind: input, shape index: {}]
  %s5 = inlined_call_operand.vmem [shape: bf16[32,32], index: 5, kind: output, shape index: {}]
  %s6 = sld [smem:[#allocation0]]
  $region30: #{global_generator_forward.14} parent=0
    _
  %s8 = ssub.s32 1, %s6
  %s9 = scalar_select 0, %s8, %s6
  // Predicated region
  $region2: #{global_generator_forward.14} parent=0 // pred_check
    _
  $region3: #{global_generator_forward.14} parent=0 // pred_check_branch
    %11 = sbr.rel (0) target = $region5
  $region4: #{global_generator_forward.14} parent=0 // pred_region
    _
  $region5: #{global_generator_forward.14} parent=0 // pred_fallthru
    _
  // Predicated region
  $region6: #{global_generator_forward.14} parent=0 // pred_check
    _
  $region7: #{global_generator_forward.14} parent=0 // pred_check_branch
    %13 = sbr.rel (0) target = $region9
  $region8: #{global_generator_forward.14} parent=0 // pred_region
    _
  $region9: #{global_generator_forward.14} parent=0 // pred_fallthru
    _
  // Predicated region
  $region10: #{global_generator_forward.14} parent=0 // pred_check
    _
  $region11: #{global_generator_forward.14} parent=0 // pred_check_branch
    %15 = sbr.rel (0) target = $region13
  $region12: #{global_generator_forward.14} parent=0 // pred_region
    _
  $region13: #{global_generator_forward.14} parent=0 // pred_fallthru
    _
  // Predicated region
  $region14: #{global_generator_forward.14} parent=0 // pred_check
    _
  $region15: #{global_generator_forward.14} parent=0 // pred_check_branch
    %17 = sbr.rel (0) target = $region17
  $region16: #{global_generator_forward.14} parent=0 // pred_region
    _
  $region17: #{global_generator_forward.14} parent=0 // pred_fallthru
    _
  // Predicated region
  $region18: #{global_generator_forward.14} parent=0 // pred_check
    _
  $region19: #{global_generator_forward.14} parent=0 // pred_check_branch
    %19 = sbr.rel (0) target = $region21
  $region20: #{global_generator_forward.14} parent=0 // pred_region
    _
  $region21: #{global_generator_forward.14} parent=0 // pred_fallthru
    _
  %v21 = vld [vmem:[%s0] sm:$0xff]
  %v22 = vld [vmem:[%s0 + $0x8] sm:$0xff]
  %v23 = vld [vmem:[%s0 + $0x10] sm:$0xff]
  %v24 = vld [vmem:[%s0 + $0x18] sm:$0xff]
  %v25 = vld [vmem:[%s0 + $0x20] sm:$0xff]
  %v26 = vld [vmem:[%s0 + $0x28] sm:$0xff]
  %v27 = vld [vmem:[%s0 + $0x30] sm:$0xff]
  %v28 = vld [vmem:[%s0 + $0x38] sm:$0xff]
  %v29 = vld [vmem:[%s1] sm:$0xf]
  %v30 = vld [vmem:[%s1 + $0x4] sm:$0xf]
  %v31 = vld [vmem:[%s1 + $0x8] sm:$0xf]
  %v32 = vld [vmem:[%s1 + $0xc] sm:$0xf]
  %v33 = vld [vmem:[%s1 + $0x10] sm:$0xf]
  %v34 = vld [vmem:[%s1 + $0x14] sm:$0xf]
  %v35 = vld [vmem:[%s1 + $0x18] sm:$0xf]
  %v36 = vld [vmem:[%s1 + $0x1c] sm:$0xf]
  %v37 = vld [vmem:[%s1 + $0x20] sm:$0xf]
  %v38 = vld [vmem:[%s1 + $0x24] sm:$0xf]
  %v39 = vld [vmem:[%s1 + $0x28] sm:$0xf]
  %v40 = vld [vmem:[%s1 + $0x2c] sm:$0xf]
  %v41 = vld [vmem:[%s1 + $0x30] sm:$0xf]
  %v42 = vld [vmem:[%s1 + $0x34] sm:$0xf]
  %v43 = vld [vmem:[%s1 + $0x38] sm:$0xf]
  %v44 = vld [vmem:[%s1 + $0x3c] sm:$0xf]
  %v45 = vld [vmem:[%s1 + $0x40] sm:$0xf]
  %v46 = vld [vmem:[%s1 + $0x44] sm:$0xf]
  %v47 = vld [vmem:[%s1 + $0x48] sm:$0xf]
  %v48 = vld [vmem:[%s1 + $0x4c] sm:$0xf]
  %v49 = vld [vmem:[%s1 + $0x50] sm:$0xf]
  %v50 = vld [vmem:[%s1 + $0x54] sm:$0xf]
  %v51 = vld [vmem:[%s1 + $0x58] sm:$0xf]
  %v52 = vld [vmem:[%s1 + $0x5c] sm:$0xf]
  %v53 = vld [vmem:[%s1 + $0x60] sm:$0xf]
  %v54 = vld [vmem:[%s1 + $0x64] sm:$0xf]
  %v55 = vld [vmem:[%s1 + $0x68] sm:$0xf]
  %v56 = vld [vmem:[%s1 + $0x6c] sm:$0xf]
  %v57 = vld [vmem:[%s1 + $0x70] sm:$0xf]
  %v58 = vld [vmem:[%s1 + $0x74] sm:$0xf]
  %v59 = vld [vmem:[%s1 + $0x78] sm:$0xf]
  %v60 = vld [vmem:[%s1 + $0x7c] sm:$0xf]
  %v61 = vld [vmem:[%s1 + $0x80] sm:$0xf]
  %v62 = vld [vmem:[%s1 + $0x84] sm:$0xf]
  %v63 = vld [vmem:[%s1 + $0x88] sm:$0xf]
  %v64 = vld [vmem:[%s1 + $0x8c] sm:$0xf]
  %v65 = vld [vmem:[%s1 + $0x90] sm:$0xf]
  %v66 = vld [vmem:[%s1 + $0x94] sm:$0xf]
  %v67 = vld [vmem:[%s1 + $0x98] sm:$0xf]
  %v68 = vld [vmem:[%s1 + $0x9c] sm:$0xf]
  %v69 = vld [vmem:[%s1 + $0xa0] sm:$0xf]
  %v70 = vld [vmem:[%s1 + $0xa4] sm:$0xf]
  %v71 = vld [vmem:[%s1 + $0xa8] sm:$0xf]
  %v72 = vld [vmem:[%s1 + $0xac] sm:$0xf]
  %v73 = vld [vmem:[%s1 + $0xb0] sm:$0xf]
  %v74 = vld [vmem:[%s1 + $0xb4] sm:$0xf]
  %v75 = vld [vmem:[%s1 + $0xb8] sm:$0xf]
  %v76 = vld [vmem:[%s1 + $0xbc] sm:$0xf]
  %v77 = vld [vmem:[%s1 + $0xc0] sm:$0xf]
  %v78 = vld [vmem:[%s1 + $0xc4] sm:$0xf]
  %v79 = vld [vmem:[%s2] sm:$0x1]
  %v81 = vlaneseq
  %v82 = vshrl.u32 %v81, 7
  %v83 = vsub.s32 0, %v82
  %v84 = vrot.slane %v79, %v83
  %v94 = vunpack.c.l.b16 %v21
  %v95 = vunpack.c.h.b16 %v21
  %v96 = vunpack.c.l.b16 %v22
  %v97 = vunpack.c.h.b16 %v22
  %v98 = vunpack.c.l.b16 %v23
  %v99 = vunpack.c.h.b16 %v23
  %v100 = vunpack.c.l.b16 %v24
  %v101 = vunpack.c.h.b16 %v24
  %v102 = vunpack.c.l.b16 %v25
  %v103 = vunpack.c.h.b16 %v25
  %v104 = vunpack.c.l.b16 %v26
  %v105 = vunpack.c.h.b16 %v26
  %v106 = vunpack.c.l.b16 %v27
  %v107 = vunpack.c.h.b16 %v27
  %v108 = vunpack.c.l.b16 %v28
  %v109 = vunpack.c.h.b16 %v28
  %v110 = vpack.c.b16 %v98, %v94
  %v111 = vpack.c.b16 %v99, %v95
  %v112 = vpack.c.b16 %v100, %v96
  %v113 = vpack.c.b16 %v101, %v97
  %v114 = vpack.c.b16 %v106, %v102
  %v115 = vpack.c.b16 %v107, %v103
  %v116 = vpack.c.b16 %v108, %v104
  %v117 = vpack.c.b16 %v109, %v105
  %v174 = vunpack.c.l.b16 %v29
  %v175 = vunpack.c.l.b16 %v30
  %v176 = vunpack.c.l.b16 %v31
  %v177 = vunpack.c.l.b16 %v32
  %v178 = vunpack.c.l.b16 %v33
  %v179 = vunpack.c.l.b16 %v34
  %v180 = vunpack.c.l.b16 %v35
  %v181 = vunpack.c.l.b16 %v36
  %v182 = vunpack.c.l.b16 %v37
  %v183 = vunpack.c.l.b16 %v38
  %v184 = vunpack.c.l.b16 %v39
  %v185 = vunpack.c.l.b16 %v40
  %v186 = vunpack.c.l.b16 %v41
  %v187 = vunpack.c.l.b16 %v42
  %v188 = vunpack.c.l.b16 %v43
  %v189 = vunpack.c.l.b16 %v44
  %v190 = vunpack.c.l.b16 %v45
  %v191 = vunpack.c.l.b16 %v46
  %v192 = vunpack.c.l.b16 %v47
  %v193 = vunpack.c.l.b16 %v48
  %v194 = vunpack.c.l.b16 %v49
  %v195 = vunpack.c.l.b16 %v50
  %v196 = vunpack.c.l.b16 %v51
  %v197 = vunpack.c.l.b16 %v52
  %v198 = vunpack.c.l.b16 %v53
  %v199 = vunpack.c.l.b16 %v54
  %v200 = vunpack.c.l.b16 %v55
  %v201 = vunpack.c.l.b16 %v56
  %v202 = vunpack.c.l.b16 %v57
  %v203 = vunpack.c.l.b16 %v58
  %v204 = vunpack.c.l.b16 %v59
  %v205 = vunpack.c.l.b16 %v60
  %v206 = vunpack.c.l.b16 %v61
  %v207 = vunpack.c.l.b16 %v62
  %v208 = vunpack.c.l.b16 %v63
  %v209 = vunpack.c.l.b16 %v64
  %v210 = vunpack.c.l.b16 %v65
  %v211 = vunpack.c.l.b16 %v66
  %v212 = vunpack.c.l.b16 %v67
  %v213 = vunpack.c.l.b16 %v68
  %v214 = vunpack.c.l.b16 %v69
  %v215 = vunpack.c.l.b16 %v70
  %v216 = vunpack.c.l.b16 %v71
  %v217 = vunpack.c.l.b16 %v72
  %v218 = vunpack.c.l.b16 %v73
  %v219 = vunpack.c.l.b16 %v74
  %v220 = vunpack.c.l.b16 %v75
  %v221 = vunpack.c.l.b16 %v76
  %v222 = vunpack.c.l.b16 %v77
  %v223 = vunpack.c.l.b16 %v78
  %v224 = vpack.c.b16 %v175, %v174
  %v225 = vpack.c.b16 %v177, %v176
  %v226 = vpack.c.b16 %v179, %v178
  %v227 = vpack.c.b16 %v181, %v180
  %v228 = vpack.c.b16 %v183, %v182
  %v229 = vpack.c.b16 %v185, %v184
  %v230 = vpack.c.b16 %v187, %v186
  %v231 = vpack.c.b16 %v189, %v188
  %v232 = vpack.c.b16 %v191, %v190
  %v233 = vpack.c.b16 %v193, %v192
  %v234 = vpack.c.b16 %v195, %v194
  %v235 = vpack.c.b16 %v197, %v196
  %v236 = vpack.c.b16 %v199, %v198
  %v237 = vpack.c.b16 %v201, %v200
  %v238 = vpack.c.b16 %v203, %v202
  %v239 = vpack.c.b16 %v205, %v204
  %v240 = vpack.c.b16 %v207, %v206
  %v241 = vpack.c.b16 %v209, %v208
  %v242 = vpack.c.b16 %v211, %v210
  %v243 = vpack.c.b16 %v213, %v212
  %v244 = vpack.c.b16 %v215, %v214
  %v245 = vpack.c.b16 %v217, %v216
  %v246 = vpack.c.b16 %v219, %v218
  %v247 = vpack.c.b16 %v221, %v220
  %v248 = vpack.c.b16 %v223, %v222
  %vm274 = vcmask 130048
  %v276 = vsel %vm274, %v113, 0
  %v279 = vsel %vm274, %v117, 0
  %281 = vmatprep.subr.bf16.mxu0 0
  %282 = vmatpush1.bf16.msra.mxu0 %v224
  %283 = vmatprep.subr.bf16.mxu0 0
  %284 = vmatpush1.bf16.msra.mxu0 %v225
  %285 = vmatprep.subr.bf16.mxu0 0
  %286 = vmatpush1.bf16.msra.mxu0 %v226
  %287 = vmatprep.subr.bf16.mxu0 0
  %288 = vmatpush1.bf16.msra.mxu0 %v227
  %289 = vmatprep.subr.bf16.mxu0 0
  %290 = vmatpush1.bf16.msra.mxu0 %v228
  %291 = vmatprep.subr.bf16.mxu0 0
  %292 = vmatpush1.bf16.msra.mxu0 %v229
  %293 = vmatprep.subr.bf16.mxu0 0
  %294 = vmatpush1.bf16.msra.mxu0 %v230
  %295 = vmatprep.subr.bf16.mxu0 0
  %296 = vmatpush1.bf16.msra.mxu0 %v231
  %297 = vmatprep.subr.bf16.mxu0 0
  %298 = vmatpush1.bf16.msra.mxu0 %v232
  %299 = vmatprep.subr.bf16.mxu0 0
  %300 = vmatpush1.bf16.msra.mxu0 %v233
  %301 = vmatprep.subr.bf16.mxu0 0
  %302 = vmatpush1.bf16.msra.mxu0 %v234
  %303 = vmatprep.subr.bf16.mxu0 0
  %304 = vmatpush1.bf16.msra.mxu0 %v235
  %305 = vmatprep.subr.bf16.mxu0 0
  %306 = vmatpush1.bf16.msra.mxu0 %v236
  %307 = vmatprep.subr.bf16.mxu0 0
  %308 = vmatpush1.bf16.msra.mxu0 %v237
  %309 = vmatprep.subr.bf16.mxu0 0
  %310 = vmatpush1.bf16.msra.mxu0 %v238
  %311 = vmatprep.subr.bf16.mxu0 0
  %312 = vmatpush1.bf16.msra.mxu0 %v239
  %313 = vmatprep.mubr.bf16.mxu0 %v111
  %314 = vmatmul.mubr.bf16.gmra.mrb[0].mxu0 %v110
  %v315 = vpop.f32.mrb[0].mxu0
  %v316 = vadd.f32 %v84, %v315
  %v317 = vpop.f32.mrb[0].mxu0
  %v318 = vpop.f32.mrb[0].mxu0
  %v319 = vadd.f32 %v84, %v318
  %v320 = vpop.f32.mrb[0].mxu0
  %321 = vmatprep.mubr.bf16.mxu0 %v115
  %322 = vmatmul.mubr.bf16.gmra.mrb[0].mxu0 %v114
  %v323 = vpop.f32.mrb[0].mxu0
  %v324 = vadd.f32 %v84, %v323
  %v325 = vpop.f32.mrb[0].mxu0
  %v326 = vpop.f32.mrb[0].mxu0
  %v327 = vadd.f32 %v84, %v326
  %v328 = vpop.f32.mrb[0].mxu0
  %329 = vdwg.mxu0
  %330 = vmatprep.subr.bf16.mxu0 0
  %331 = vmatpush1.bf16.msra.mxu0 %v240
  %332 = vmatprep.subr.bf16.mxu0 0
  %333 = vmatpush1.bf16.msra.mxu0 %v241
  %334 = vmatprep.subr.bf16.mxu0 0
  %335 = vmatpush1.bf16.msra.mxu0 %v242
  %336 = vmatprep.subr.bf16.mxu0 0
  %337 = vmatpush1.bf16.msra.mxu0 %v243
  %338 = vmatprep.subr.bf16.mxu0 0
  %339 = vmatpush1.bf16.msra.mxu0 %v244
  %340 = vmatprep.subr.bf16.mxu0 0
  %341 = vmatpush1.bf16.msra.mxu0 %v245
  %342 = vmatprep.subr.bf16.mxu0 0
  %343 = vmatpush1.bf16.msra.mxu0 %v246
  %344 = vmatprep.subr.bf16.mxu0 0
  %345 = vmatpush1.bf16.msra.mxu0 %v247
  %346 = vmatprep.subr.bf16.mxu0 0
  %347 = vmatpush1.bf16.msra.mxu0 %v248
  %348 = vmatprep.subr.bf16.mxu0 0
  %349 = vmatpush1.bf16.msra.mxu0 0
  %350 = vmatprep.subr.bf16.mxu0 0
  %351 = vmatpush1.bf16.msra.mxu0 0
  %352 = vmatprep.subr.bf16.mxu0 0
  %353 = vmatpush1.bf16.msra.mxu0 0
  %354 = vmatprep.subr.bf16.mxu0 0
  %355 = vmatpush1.bf16.msra.mxu0 0
  %356 = vmatprep.subr.bf16.mxu0 0
  %357 = vmatpush1.bf16.msra.mxu0 0
  %358 = vmatprep.subr.bf16.mxu0 0
  %359 = vmatpush1.bf16.msra.mxu0 0
  %360 = vmatprep.subr.bf16.mxu0 0
  %361 = vmatpush1.bf16.msra.mxu0 0
  %362 = vmatprep.mubr.bf16.mxu0 %v276
  %363 = vmatmul.mubr.bf16.gmra.mrb[0].mxu0 %v112
  %v364 = vpop.f32.mrb[0].mxu0
  %v365 = vadd.f32 %v316, %v364
  %v366 = vpop.f32.mrb[0].mxu0
  %v367 = vpop.f32.mrb[0].mxu0
  %v368 = vadd.f32 %v319, %v367
  %v369 = vpop.f32.mrb[0].mxu0
  %370 = vmatprep.mubr.bf16.mxu0 %v279
  %371 = vmatmul.mubr.bf16.gmra.mrb[0].mxu0 %v116
  %v372 = vpop.f32.mrb[0].mxu0
  %v373 = vadd.f32 %v324, %v372
  %v374 = vpop.f32.mrb[0].mxu0
  %v375 = vpop.f32.mrb[0].mxu0
  %v376 = vadd.f32 %v327, %v375
  %v377 = vpop.f32.mrb[0].mxu0
  %378 = vdwg.mxu0
  %vm379 = vcmask 261120
  %v380 = vsel %vm379, %v365, 0.0
  %v381 = vsel %vm379, %v368, 0.0
  %v382 = vadd.f32 %v380, %v381
  %v383 = vsel %vm379, %v373, 0.0
  %v384 = vadd.f32 %v382, %v383
  %v385 = vsel %vm379, %v376, 0.0
  %v386 = vadd.f32 %v384, %v385
  %v387 = vrot.slane %v386, 4
  %v388 = vadd.f32 %v386, %v387
  %v389 = vrot.slane %v388, 2
  %v390 = vadd.f32 %v388, %v389
  %v391 = vrot.slane %v390, 1
  %v392 = vadd.f32 %v390, %v391
  %v393 = vmul.f32 %v392, 0.03125
  %v394 = vsub.f32 %v365, %v393
  %v395 = vsub.f32 %v368, %v393
  %v396 = vsub.f32 %v373, %v393
  %v397 = vsub.f32 %v376, %v393
  %v398 = vmul.f32 %v394, %v394
  %v399 = vmul.f32 %v395, %v395
  %v400 = vmul.f32 %v396, %v396
  %v401 = vmul.f32 %v397, %v397
  %v402 = vsel %vm379, %v398, 0.0
  %v403 = vsel %vm379, %v399, 0.0
  %v404 = vadd.f32 %v402, %v403
  %v405 = vsel %vm379, %v400, 0.0
  %v406 = vadd.f32 %v404, %v405
  %v407 = vsel %vm379, %v401, 0.0
  %v408 = vadd.f32 %v406, %v407
  %v409 = vrot.slane %v408, 4
  %v410 = vadd.f32 %v408, %v409
  %v411 = vrot.slane %v410, 2
  %v412 = vadd.f32 %v410, %v411
  %v413 = vrot.slane %v412, 1
  %v414 = vadd.f32 %v412, %v413
  %v415 = vmul.f32 %v414, 0.03125
  %v416 = vadd.f32 %v415, 1e-05
  %v417 = vrsqrt.pop %v416
  %v418 = vld [vmem:[%s3] sm:$0x1]
  %v420 = vlaneseq
  %v421 = vshrl.u32 %v420, 7
  %v422 = vsub.s32 0, %v421
  %v423 = vrot.slane %v418, %v422
  %v425 = vmul.f32 %v423, %v394
  %v426 = vmul.f32 %v423, %v395
  %v427 = vmul.f32 %v423, %v396
  %v428 = vmul.f32 %v423, %v397
  %v429 = vmul.f32 %v425, %v417
  %v430 = vmul.f32 %v426, %v417
  %v431 = vmul.f32 %v427, %v417
  %v432 = vmul.f32 %v428, %v417
  %v433 = vld [vmem:[%s4] sm:$0x1]
  %v435 = vlaneseq
  %v436 = vshrl.u32 %v435, 7
  %v437 = vsub.s32 0, %v436
  %v438 = vrot.slane %v433, %v437
  %v440 = vadd.f32 %v429, %v438
  %v441 = vadd.f32 %v430, %v438
  %v442 = vadd.f32 %v431, %v438
  %v443 = vadd.f32 %v432, %v438
  %v444 = vmax.f32 %v440, 0.0
  %v445 = vmax.f32 %v441, 0.0
  %v446 = vmax.f32 %v442, 0.0
  %v447 = vmax.f32 %v443, 0.0
  %v448 = vpack.c.bf16 %v445, %v444
  %v449 = vpack.c.bf16 %v447, %v446
  %v452 = vunpack.c.l.b16 %v448
  %v453 = vunpack.c.h.b16 %v448
  %v454 = vunpack.c.l.b16 %v449
  %v455 = vunpack.c.h.b16 %v449
  %v456 = vpack.c.b16 %v452, %v452
  %v457 = vpack.c.b16 %v453, %v453
  %v458 = vpack.c.b16 %v454, %v454
  %v459 = vpack.c.b16 %v455, %v455
  %vm464 = vcmask 257024
  %465 = vst.msk [vmem:[%s5] sm:$0xf] %vm464, %v456
  %466 = vst.msk [vmem:[%s5 + $0x4] sm:$0xf] %vm464, %v457
  %467 = vst.msk [vmem:[%s5 + $0x8] sm:$0xf] %vm464, %v458
  %468 = vst.msk [vmem:[%s5 + $0xc] sm:$0xf] %vm464, %v459
  // Predicated region
  $region22: #{global_generator_forward.14} parent=0 // pred_check
    _
  $region23: #{global_generator_forward.14} parent=0 // pred_check_branch
    %470 = sbr.rel (0) target = $region25
  $region24: #{global_generator_forward.14} parent=0 // pred_region
    _
  $region25: #{global_generator_forward.14} parent=0 // pred_fallthru
    _
  // Predicated region
  $region26: #{global_generator_forward.14} parent=0 // pred_check
    _
  $region27: #{global_generator_forward.14} parent=0 // pred_check_branch
    %472 = sbr.rel (0) target = $region29
  $region28: #{global_generator_forward.14} parent=0 // pred_region
    _
  $region29: #{global_generator_forward.14} parent=0 // pred_fallthru
    _

// kernel: global_generator_forward.15
$region0: #{global_generator_forward.15}
  #allocation0 [shape = 'u32[]', space=smem, size = 0x4, offset = 0x4, fixed_abs, tag = 'smem constant byte address 0x4 - core index']
  #allocation1 [shape = 'u32[144,128]{1,0:T(1,128)}', space=vmem, size = 0x12000, scoped, tag = 'internal scratch']
  %s0 = inlined_call_operand.vmem [shape: bf16[32,288], index: 0, kind: input, shape index: {}]
  %s1 = inlined_call_operand.vmem [shape: bf16[288,32], index: 1, kind: input, shape index: {}]
  %s2 = inlined_call_operand.vmem [shape: f32[1,32], index: 2, kind: input, shape index: {}]
  %s3 = inlined_call_operand.vmem [shape: f32[1,32], index: 3, kind: input, shape index: {}]
  %s4 = inlined_call_operand.vmem [shape: f32[1,32], index: 4, kind: input, shape index: {}]
  %s5 = inlined_call_operand.vmem [shape: bf16[32,32], index: 5, kind: output, shape index: {}]
  %s6 = sld [smem:[#allocation0]]
  $region30: #{global_generator_forward.15} parent=0
    _
  %s8 = ssub.s32 1, %s6
  %s9 = scalar_select 0, %s8, %s6
  // Predicated region
  $region2: #{global_generator_forward.15} parent=0 // pred_check
    _
  $region3: #{global_generator_forward.15} parent=0 // pred_check_branch
    %11 = sbr.rel (0) target = $region5
  $region4: #{global_generator_forward.15} parent=0 // pred_region
    _
  $region5: #{global_generator_forward.15} parent=0 // pred_fallthru
    _
  // Predicated region
  $region6: #{global_generator_forward.15} parent=0 // pred_check
    _
  $region7: #{global_generator_forward.15} parent=0 // pred_check_branch
    %13 = sbr.rel (0) target = $region9
  $region8: #{global_generator_forward.15} parent=0 // pred_region
    _
  $region9: #{global_generator_forward.15} parent=0 // pred_fallthru
    _
  // Predicated region
  $region10: #{global_generator_forward.15} parent=0 // pred_check
    _
  $region11: #{global_generator_forward.15} parent=0 // pred_check_branch
    %15 = sbr.rel (0) target = $region13
  $region12: #{global_generator_forward.15} parent=0 // pred_region
    _
  $region13: #{global_generator_forward.15} parent=0 // pred_fallthru
    _
  // Predicated region
  $region14: #{global_generator_forward.15} parent=0 // pred_check
    _
  $region15: #{global_generator_forward.15} parent=0 // pred_check_branch
    %17 = sbr.rel (0) target = $region17
  $region16: #{global_generator_forward.15} parent=0 // pred_region
    _
  $region17: #{global_generator_forward.15} parent=0 // pred_fallthru
    _
  // Predicated region
  $region18: #{global_generator_forward.15} parent=0 // pred_check
    _
  $region19: #{global_generator_forward.15} parent=0 // pred_check_branch
    %19 = sbr.rel (0) target = $region21
  $region20: #{global_generator_forward.15} parent=0 // pred_region
    _
  $region21: #{global_generator_forward.15} parent=0 // pred_fallthru
    _
  %v21 = vld [vmem:[%s0] sm:$0xff]
  %v22 = vld [vmem:[%s0 + $0x8] sm:$0xf]
  %v23 = vld [vmem:[%s0 + $0xc] sm:$0xff]
  %v24 = vld [vmem:[%s0 + $0x14] sm:$0xf]
  %v25 = vld [vmem:[%s0 + $0x18] sm:$0xff]
  %v26 = vld [vmem:[%s0 + $0x20] sm:$0xf]
  %v27 = vld [vmem:[%s0 + $0x24] sm:$0xff]
  %v28 = vld [vmem:[%s0 + $0x2c] sm:$0xf]
  %v29 = vld [vmem:[%s1] sm:$0xf]
  %v30 = vld [vmem:[%s1 + $0x4] sm:$0xf]
  %v31 = vld [vmem:[%s1 + $0x8] sm:$0xf]
  %v32 = vld [vmem:[%s1 + $0xc] sm:$0xf]
  %v33 = vld [vmem:[%s1 + $0x10] sm:$0xf]
  %v34 = vld [vmem:[%s1 + $0x14] sm:$0xf]
  %v35 = vld [vmem:[%s1 + $0x18] sm:$0xf]
  %v36 = vld [vmem:[%s1 + $0x1c] sm:$0xf]
  %v37 = vld [vmem:[%s1 + $0x20] sm:$0xf]
  %v38 = vld [vmem:[%s1 + $0x24] sm:$0xf]
  %v39 = vld [vmem:[%s1 + $0x28] sm:$0xf]
  %v40 = vld [vmem:[%s1 + $0x2c] sm:$0xf]
  %v41 = vld [vmem:[%s1 + $0x30] sm:$0xf]
  %v42 = vld [vmem:[%s1 + $0x34] sm:$0xf]
  %v43 = vld [vmem:[%s1 + $0x38] sm:$0xf]
  %v44 = vld [vmem:[%s1 + $0x3c] sm:$0xf]
  %v45 = vld [vmem:[%s1 + $0x40] sm:$0xf]
  %v46 = vld [vmem:[%s1 + $0x44] sm:$0xf]
  %v47 = vld [vmem:[%s1 + $0x48] sm:$0xf]
  %v48 = vld [vmem:[%s1 + $0x4c] sm:$0xf]
  %v49 = vld [vmem:[%s1 + $0x50] sm:$0xf]
  %v50 = vld [vmem:[%s1 + $0x54] sm:$0xf]
  %v51 = vld [vmem:[%s1 + $0x58] sm:$0xf]
  %v52 = vld [vmem:[%s1 + $0x5c] sm:$0xf]
  %v53 = vld [vmem:[%s1 + $0x60] sm:$0xf]
  %v54 = vld [vmem:[%s1 + $0x64] sm:$0xf]
  %v55 = vld [vmem:[%s1 + $0x68] sm:$0xf]
  %v56 = vld [vmem:[%s1 + $0x6c] sm:$0xf]
  %v57 = vld [vmem:[%s1 + $0x70] sm:$0xf]
  %v58 = vld [vmem:[%s1 + $0x74] sm:$0xf]
  %v59 = vld [vmem:[%s1 + $0x78] sm:$0xf]
  %v60 = vld [vmem:[%s1 + $0x7c] sm:$0xf]
  %v61 = vld [vmem:[%s1 + $0x80] sm:$0xf]
  %v62 = vld [vmem:[%s1 + $0x84] sm:$0xf]
  %v63 = vld [vmem:[%s1 + $0x88] sm:$0xf]
  %v64 = vld [vmem:[%s1 + $0x8c] sm:$0xf]
  %v65 = vld [vmem:[%s2] sm:$0x1]
  %v67 = vlaneseq
  %v68 = vshrl.u32 %v67, 7
  %v69 = vsub.s32 0, %v68
  %v70 = vrot.slane %v65, %v69
  %v80 = vunpack.c.l.b16 %v21
  %v81 = vunpack.c.h.b16 %v21
  %v82 = vunpack.c.l.b16 %v22
  %v83 = vunpack.c.l.b16 %v23
  %v84 = vunpack.c.h.b16 %v23
  %v85 = vunpack.c.l.b16 %v24
  %v86 = vunpack.c.l.b16 %v25
  %v87 = vunpack.c.h.b16 %v25
  %v88 = vunpack.c.l.b16 %v26
  %v89 = vunpack.c.l.b16 %v27
  %v90 = vunpack.c.h.b16 %v27
  %v91 = vunpack.c.l.b16 %v28
  %v92 = vpack.c.b16 %v83, %v80
  %v93 = vpack.c.b16 %v84, %v81
  %v94 = vpack.c.b16 %v85, %v82
  %v95 = vpack.c.b16 %v89, %v86
  %v96 = vpack.c.b16 %v90, %v87
  %v97 = vpack.c.b16 %v91, %v88
  %v138 = vunpack.c.l.b16 %v29
  %v139 = vunpack.c.l.b16 %v30
  %v140 = vunpack.c.l.b16 %v31
  %v141 = vunpack.c.l.b16 %v32
  %v142 = vunpack.c.l.b16 %v33
  %v143 = vunpack.c.l.b16 %v34
  %v144 = vunpack.c.l.b16 %v35
  %v145 = vunpack.c.l.b16 %v36
  %v146 = vunpack.c.l.b16 %v37
  %v147 = vunpack.c.l.b16 %v38
  %v148 = vunpack.c.l.b16 %v39
  %v149 = vunpack.c.l.b16 %v40
  %v150 = vunpack.c.l.b16 %v41
  %v151 = vunpack.c.l.b16 %v42
  %v152 = vunpack.c.l.b16 %v43
  %v153 = vunpack.c.l.b16 %v44
  %v154 = vunpack.c.l.b16 %v45
  %v155 = vunpack.c.l.b16 %v46
  %v156 = vunpack.c.l.b16 %v47
  %v157 = vunpack.c.l.b16 %v48
  %v158 = vunpack.c.l.b16 %v49
  %v159 = vunpack.c.l.b16 %v50
  %v160 = vunpack.c.l.b16 %v51
  %v161 = vunpack.c.l.b16 %v52
  %v162 = vunpack.c.l.b16 %v53
  %v163 = vunpack.c.l.b16 %v54
  %v164 = vunpack.c.l.b16 %v55
  %v165 = vunpack.c.l.b16 %v56
  %v166 = vunpack.c.l.b16 %v57
  %v167 = vunpack.c.l.b16 %v58
  %v168 = vunpack.c.l.b16 %v59
  %v169 = vunpack.c.l.b16 %v60
  %v170 = vunpack.c.l.b16 %v61
  %v171 = vunpack.c.l.b16 %v62
  %v172 = vunpack.c.l.b16 %v63
  %v173 = vunpack.c.l.b16 %v64
  %v174 = vpack.c.b16 %v139, %v138
  %v175 = vpack.c.b16 %v141, %v140
  %v176 = vpack.c.b16 %v143, %v142
  %v177 = vpack.c.b16 %v145, %v144
  %v178 = vpack.c.b16 %v147, %v146
  %v179 = vpack.c.b16 %v149, %v148
  %v180 = vpack.c.b16 %v151, %v150
  %v181 = vpack.c.b16 %v153, %v152
  %v182 = vpack.c.b16 %v155, %v154
  %v183 = vpack.c.b16 %v157, %v156
  %v184 = vpack.c.b16 %v159, %v158
  %v185 = vpack.c.b16 %v161, %v160
  %v186 = vpack.c.b16 %v163, %v162
  %v187 = vpack.c.b16 %v165, %v164
  %v188 = vpack.c.b16 %v167, %v166
  %v189 = vpack.c.b16 %v169, %v168
  %v190 = vpack.c.b16 %v171, %v170
  %v191 = vpack.c.b16 %v173, %v172
  %vm210 = vcmask 261120
  %v212 = vsel %vm210, %v94, 0
  %v215 = vsel %vm210, %v97, 0
  %217 = vmatprep.subr.bf16.mxu0 0
  %218 = vmatpush1.bf16.msra.mxu0 %v174
  %219 = vmatprep.subr.bf16.mxu0 0
  %220 = vmatpush1.bf16.msra.mxu0 %v175
  %221 = vmatprep.subr.bf16.mxu0 0
  %222 = vmatpush1.bf16.msra.mxu0 %v176
  %223 = vmatprep.subr.bf16.mxu0 0
  %224 = vmatpush1.bf16.msra.mxu0 %v177
  %225 = vmatprep.subr.bf16.mxu0 0
  %226 = vmatpush1.bf16.msra.mxu0 %v178
  %227 = vmatprep.subr.bf16.mxu0 0
  %228 = vmatpush1.bf16.msra.mxu0 %v179
  %229 = vmatprep.subr.bf16.mxu0 0
  %230 = vmatpush1.bf16.msra.mxu0 %v180
  %231 = vmatprep.subr.bf16.mxu0 0
  %232 = vmatpush1.bf16.msra.mxu0 %v181
  %233 = vmatprep.subr.bf16.mxu0 0
  %234 = vmatpush1.bf16.msra.mxu0 %v182
  %235 = vmatprep.subr.bf16.mxu0 0
  %236 = vmatpush1.bf16.msra.mxu0 %v183
  %237 = vmatprep.subr.bf16.mxu0 0
  %238 = vmatpush1.bf16.msra.mxu0 %v184
  %239 = vmatprep.subr.bf16.mxu0 0
  %240 = vmatpush1.bf16.msra.mxu0 %v185
  %241 = vmatprep.subr.bf16.mxu0 0
  %242 = vmatpush1.bf16.msra.mxu0 %v186
  %243 = vmatprep.subr.bf16.mxu0 0
  %244 = vmatpush1.bf16.msra.mxu0 %v187
  %245 = vmatprep.subr.bf16.mxu0 0
  %246 = vmatpush1.bf16.msra.mxu0 %v188
  %247 = vmatprep.subr.bf16.mxu0 0
  %248 = vmatpush1.bf16.msra.mxu0 %v189
  %249 = vmatprep.mubr.bf16.mxu0 %v93
  %250 = vmatmul.mubr.bf16.gmra.mrb[0].mxu0 %v92
  %v251 = vpop.f32.mrb[0].mxu0
  %v252 = vadd.f32 %v70, %v251
  %v253 = vpop.f32.mrb[0].mxu0
  %v254 = vpop.f32.mrb[0].mxu0
  %v255 = vadd.f32 %v70, %v254
  %v256 = vpop.f32.mrb[0].mxu0
  %257 = vmatprep.mubr.bf16.mxu0 %v96
  %258 = vmatmul.mubr.bf16.gmra.mrb[0].mxu0 %v95
  %v259 = vpop.f32.mrb[0].mxu0
  %v260 = vadd.f32 %v70, %v259
  %v261 = vpop.f32.mrb[0].mxu0
  %v262 = vpop.f32.mrb[0].mxu0
  %v263 = vadd.f32 %v70, %v262
  %v264 = vpop.f32.mrb[0].mxu0
  %265 = vdwg.mxu0
  %266 = vmatprep.subr.bf16.mxu0 0
  %267 = vmatpush1.bf16.msra.mxu0 %v190
  %268 = vmatprep.subr.bf16.mxu0 0
  %269 = vmatpush1.bf16.msra.mxu0 %v191
  %270 = vmatprep.subr.bf16.mxu0 0
  %271 = vmatpush1.bf16.msra.mxu0 0
  %272 = vmatprep.subr.bf16.mxu0 0
  %273 = vmatpush1.bf16.msra.mxu0 0
  %274 = vmatprep.subr.bf16.mxu0 0
  %275 = vmatpush1.bf16.msra.mxu0 0
  %276 = vmatprep.subr.bf16.mxu0 0
  %277 = vmatpush1.bf16.msra.mxu0 0
  %278 = vmatprep.subr.bf16.mxu0 0
  %279 = vmatpush1.bf16.msra.mxu0 0
  %280 = vmatprep.subr.bf16.mxu0 0
  %281 = vmatpush1.bf16.msra.mxu0 0
  %282 = vmatprep.subr.bf16.mxu0 0
  %283 = vmatpush1.bf16.msra.mxu0 0
  %284 = vmatprep.subr.bf16.mxu0 0
  %285 = vmatpush1.bf16.msra.mxu0 0
  %286 = vmatprep.subr.bf16.mxu0 0
  %287 = vmatpush1.bf16.msra.mxu0 0
  %288 = vmatprep.subr.bf16.mxu0 0
  %289 = vmatpush1.bf16.msra.mxu0 0
  %290 = vmatprep.subr.bf16.mxu0 0
  %291 = vmatpush1.bf16.msra.mxu0 0
  %292 = vmatprep.subr.bf16.mxu0 0
  %293 = vmatpush1.bf16.msra.mxu0 0
  %294 = vmatprep.subr.bf16.mxu0 0
  %295 = vmatpush1.bf16.msra.mxu0 0
  %296 = vmatprep.subr.bf16.mxu0 0
  %297 = vmatpush1.bf16.msra.mxu0 0
  %298 = vmatprep.mubr.bf16.mxu0 0
  %299 = vmatmul.mubr.bf16.gmra.mrb[0].mxu0 %v212
  %v300 = vpop.f32.mrb[0].mxu0
  %v301 = vadd.f32 %v252, %v300
  %v302 = vpop.f32.mrb[0].mxu0
  %v303 = vpop.f32.mrb[0].mxu0
  %v304 = vadd.f32 %v255, %v303
  %v305 = vpop.f32.mrb[0].mxu0
  %306 = vmatprep.mubr.bf16.mxu0 0
  %307 = vmatmul.mubr.bf16.gmra.mrb[0].mxu0 %v215
  %v308 = vpop.f32.mrb[0].mxu0
  %v309 = vadd.f32 %v260, %v308
  %v310 = vpop.f32.mrb[0].mxu0
  %v311 = vpop.f32.mrb[0].mxu0
  %v312 = vadd.f32 %v263, %v311
  %v313 = vpop.f32.mrb[0].mxu0
  %314 = vdwg.mxu0
  %v315 = vsel %vm210, %v301, 0.0
  %v316 = vsel %vm210, %v304, 0.0
  %v317 = vadd.f32 %v315, %v316
  %v318 = vsel %vm210, %v309, 0.0
  %v319 = vadd.f32 %v317, %v318
  %v320 = vsel %vm210, %v312, 0.0
  %v321 = vadd.f32 %v319, %v320
  %v322 = vrot.slane %v321, 4
  %v323 = vadd.f32 %v321, %v322
  %v324 = vrot.slane %v323, 2
  %v325 = vadd.f32 %v323, %v324
  %v326 = vrot.slane %v325, 1
  %v327 = vadd.f32 %v325, %v326
  %v328 = vmul.f32 %v327, 0.03125
  %v329 = vsub.f32 %v301, %v328
  %v330 = vsub.f32 %v304, %v328
  %v331 = vsub.f32 %v309, %v328
  %v332 = vsub.f32 %v312, %v328
  %v333 = vmul.f32 %v329, %v329
  %v334 = vmul.f32 %v330, %v330
  %v335 = vmul.f32 %v331, %v331
  %v336 = vmul.f32 %v332, %v332
  %v337 = vsel %vm210, %v333, 0.0
  %v338 = vsel %vm210, %v334, 0.0
  %v339 = vadd.f32 %v337, %v338
  %v340 = vsel %vm210, %v335, 0.0
  %v341 = vadd.f32 %v339, %v340
  %v342 = vsel %vm210, %v336, 0.0
  %v343 = vadd.f32 %v341, %v342
  %v344 = vrot.slane %v343, 4
  %v345 = vadd.f32 %v343, %v344
  %v346 = vrot.slane %v345, 2
  %v347 = vadd.f32 %v345, %v346
  %v348 = vrot.slane %v347, 1
  %v349 = vadd.f32 %v347, %v348
  %v350 = vmul.f32 %v349, 0.03125
  %v351 = vadd.f32 %v350, 1e-05
  %v352 = vrsqrt.pop %v351
  %v353 = vld [vmem:[%s3] sm:$0x1]
  %v355 = vlaneseq
  %v356 = vshrl.u32 %v355, 7
  %v357 = vsub.s32 0, %v356
  %v358 = vrot.slane %v353, %v357
  %v360 = vmul.f32 %v358, %v329
  %v361 = vmul.f32 %v358, %v330
  %v362 = vmul.f32 %v358, %v331
  %v363 = vmul.f32 %v358, %v332
  %v364 = vmul.f32 %v360, %v352
  %v365 = vmul.f32 %v361, %v352
  %v366 = vmul.f32 %v362, %v352
  %v367 = vmul.f32 %v363, %v352
  %v368 = vld [vmem:[%s4] sm:$0x1]
  %v370 = vlaneseq
  %v371 = vshrl.u32 %v370, 7
  %v372 = vsub.s32 0, %v371
  %v373 = vrot.slane %v368, %v372
  %v375 = vadd.f32 %v364, %v373
  %v376 = vadd.f32 %v365, %v373
  %v377 = vadd.f32 %v366, %v373
  %v378 = vadd.f32 %v367, %v373
  %v379 = vmax.f32 %v375, 0.0
  %v380 = vmax.f32 %v376, 0.0
  %v381 = vmax.f32 %v377, 0.0
  %v382 = vmax.f32 %v378, 0.0
  %v383 = vpack.c.bf16 %v380, %v379
  %v384 = vpack.c.bf16 %v382, %v381
  %v387 = vunpack.c.l.b16 %v383
  %v388 = vunpack.c.h.b16 %v383
  %v389 = vunpack.c.l.b16 %v384
  %v390 = vunpack.c.h.b16 %v384
  %v391 = vpack.c.b16 %v387, %v387
  %v392 = vpack.c.b16 %v388, %v388
  %v393 = vpack.c.b16 %v389, %v389
  %v394 = vpack.c.b16 %v390, %v390
  %vm399 = vcmask 257024
  %400 = vst.msk [vmem:[%s5] sm:$0xf] %vm399, %v391
  %401 = vst.msk [vmem:[%s5 + $0x4] sm:$0xf] %vm399, %v392
  %402 = vst.msk [vmem:[%s5 + $0x8] sm:$0xf] %vm399, %v393
  %403 = vst.msk [vmem:[%s5 + $0xc] sm:$0xf] %vm399, %v394
  // Predicated region
  $region22: #{global_generator_forward.15} parent=0 // pred_check
    _
  $region23: #{global_generator_forward.15} parent=0 // pred_check_branch
    %405 = sbr.rel (0) target = $region25
  $region24: #{global_generator_forward.15} parent=0 // pred_region
    _
  $region25: #{global_generator_forward.15} parent=0 // pred_fallthru
    _
  // Predicated region
  $region26: #{global_generator_forward.15} parent=0 // pred_check
    _
  $region27: #{global_generator_forward.15} parent=0 // pred_check_branch
    %407 = sbr.rel (0) target = $region29
  $region28: #{global_generator_forward.15} parent=0 // pred_region
    _
  $region29: #{global_generator_forward.15} parent=0 // pred_fallthru
    _

// kernel: global_generator_forward.16
$region0: #{global_generator_forward.16}
  #allocation0 [shape = 'u32[]', space=smem, size = 0x4, offset = 0x4, fixed_abs, tag = 'smem constant byte address 0x4 - core index']
  #allocation1 [shape = 'u32[144,128]{1,0:T(1,128)}', space=vmem, size = 0x12000, scoped, tag = 'internal scratch']
  %s0 = inlined_call_operand.vmem [shape: bf16[32,288], index: 0, kind: input, shape index: {}]
  %s1 = inlined_call_operand.vmem [shape: bf16[288,32], index: 1, kind: input, shape index: {}]
  %s2 = inlined_call_operand.vmem [shape: f32[1,32], index: 2, kind: input, shape index: {}]
  %s3 = inlined_call_operand.vmem [shape: f32[1,32], index: 3, kind: input, shape index: {}]
  %s4 = inlined_call_operand.vmem [shape: f32[1,32], index: 4, kind: input, shape index: {}]
  %s5 = inlined_call_operand.vmem [shape: bf16[32,32], index: 5, kind: input, shape index: {}]
  %s6 = inlined_call_operand.vmem [shape: bf16[32,32], index: 6, kind: output, shape index: {}]
  %s7 = sld [smem:[#allocation0]]
  $region34: #{global_generator_forward.16} parent=0
    _
  %s9 = ssub.s32 1, %s7
  %s10 = scalar_select 0, %s9, %s7
  // Predicated region
  $region2: #{global_generator_forward.16} parent=0 // pred_check
    _
  $region3: #{global_generator_forward.16} parent=0 // pred_check_branch
    %12 = sbr.rel (0) target = $region5
  $region4: #{global_generator_forward.16} parent=0 // pred_region
    _
  $region5: #{global_generator_forward.16} parent=0 // pred_fallthru
    _
  // Predicated region
  $region6: #{global_generator_forward.16} parent=0 // pred_check
    _
  $region7: #{global_generator_forward.16} parent=0 // pred_check_branch
    %14 = sbr.rel (0) target = $region9
  $region8: #{global_generator_forward.16} parent=0 // pred_region
    _
  $region9: #{global_generator_forward.16} parent=0 // pred_fallthru
    _
  // Predicated region
  $region10: #{global_generator_forward.16} parent=0 // pred_check
    _
  $region11: #{global_generator_forward.16} parent=0 // pred_check_branch
    %16 = sbr.rel (0) target = $region13
  $region12: #{global_generator_forward.16} parent=0 // pred_region
    _
  $region13: #{global_generator_forward.16} parent=0 // pred_fallthru
    _
  // Predicated region
  $region14: #{global_generator_forward.16} parent=0 // pred_check
    _
  $region15: #{global_generator_forward.16} parent=0 // pred_check_branch
    %18 = sbr.rel (0) target = $region17
  $region16: #{global_generator_forward.16} parent=0 // pred_region
    _
  $region17: #{global_generator_forward.16} parent=0 // pred_fallthru
    _
  // Predicated region
  $region18: #{global_generator_forward.16} parent=0 // pred_check
    _
  $region19: #{global_generator_forward.16} parent=0 // pred_check_branch
    %20 = sbr.rel (0) target = $region21
  $region20: #{global_generator_forward.16} parent=0 // pred_region
    _
  $region21: #{global_generator_forward.16} parent=0 // pred_fallthru
    _
  // Predicated region
  $region22: #{global_generator_forward.16} parent=0 // pred_check
    _
  $region23: #{global_generator_forward.16} parent=0 // pred_check_branch
    %22 = sbr.rel (0) target = $region25
  $region24: #{global_generator_forward.16} parent=0 // pred_region
    _
  $region25: #{global_generator_forward.16} parent=0 // pred_fallthru
    _
  %v24 = vld [vmem:[%s0] sm:$0xff]
  %v25 = vld [vmem:[%s0 + $0x8] sm:$0xf]
  %v26 = vld [vmem:[%s0 + $0xc] sm:$0xff]
  %v27 = vld [vmem:[%s0 + $0x14] sm:$0xf]
  %v28 = vld [vmem:[%s0 + $0x18] sm:$0xff]
  %v29 = vld [vmem:[%s0 + $0x20] sm:$0xf]
  %v30 = vld [vmem:[%s0 + $0x24] sm:$0xff]
  %v31 = vld [vmem:[%s0 + $0x2c] sm:$0xf]
  %v32 = vld [vmem:[%s1] sm:$0xf]
  %v33 = vld [vmem:[%s1 + $0x4] sm:$0xf]
  %v34 = vld [vmem:[%s1 + $0x8] sm:$0xf]
  %v35 = vld [vmem:[%s1 + $0xc] sm:$0xf]
  %v36 = vld [vmem:[%s1 + $0x10] sm:$0xf]
  %v37 = vld [vmem:[%s1 + $0x14] sm:$0xf]
  %v38 = vld [vmem:[%s1 + $0x18] sm:$0xf]
  %v39 = vld [vmem:[%s1 + $0x1c] sm:$0xf]
  %v40 = vld [vmem:[%s1 + $0x20] sm:$0xf]
  %v41 = vld [vmem:[%s1 + $0x24] sm:$0xf]
  %v42 = vld [vmem:[%s1 + $0x28] sm:$0xf]
  %v43 = vld [vmem:[%s1 + $0x2c] sm:$0xf]
  %v44 = vld [vmem:[%s1 + $0x30] sm:$0xf]
  %v45 = vld [vmem:[%s1 + $0x34] sm:$0xf]
  %v46 = vld [vmem:[%s1 + $0x38] sm:$0xf]
  %v47 = vld [vmem:[%s1 + $0x3c] sm:$0xf]
  %v48 = vld [vmem:[%s1 + $0x40] sm:$0xf]
  %v49 = vld [vmem:[%s1 + $0x44] sm:$0xf]
  %v50 = vld [vmem:[%s1 + $0x48] sm:$0xf]
  %v51 = vld [vmem:[%s1 + $0x4c] sm:$0xf]
  %v52 = vld [vmem:[%s1 + $0x50] sm:$0xf]
  %v53 = vld [vmem:[%s1 + $0x54] sm:$0xf]
  %v54 = vld [vmem:[%s1 + $0x58] sm:$0xf]
  %v55 = vld [vmem:[%s1 + $0x5c] sm:$0xf]
  %v56 = vld [vmem:[%s1 + $0x60] sm:$0xf]
  %v57 = vld [vmem:[%s1 + $0x64] sm:$0xf]
  %v58 = vld [vmem:[%s1 + $0x68] sm:$0xf]
  %v59 = vld [vmem:[%s1 + $0x6c] sm:$0xf]
  %v60 = vld [vmem:[%s1 + $0x70] sm:$0xf]
  %v61 = vld [vmem:[%s1 + $0x74] sm:$0xf]
  %v62 = vld [vmem:[%s1 + $0x78] sm:$0xf]
  %v63 = vld [vmem:[%s1 + $0x7c] sm:$0xf]
  %v64 = vld [vmem:[%s1 + $0x80] sm:$0xf]
  %v65 = vld [vmem:[%s1 + $0x84] sm:$0xf]
  %v66 = vld [vmem:[%s1 + $0x88] sm:$0xf]
  %v67 = vld [vmem:[%s1 + $0x8c] sm:$0xf]
  %v68 = vld [vmem:[%s2] sm:$0x1]
  %v70 = vlaneseq
  %v71 = vshrl.u32 %v70, 7
  %v72 = vsub.s32 0, %v71
  %v73 = vrot.slane %v68, %v72
  %v83 = vunpack.c.l.b16 %v24
  %v84 = vunpack.c.h.b16 %v24
  %v85 = vunpack.c.l.b16 %v25
  %v86 = vunpack.c.l.b16 %v26
  %v87 = vunpack.c.h.b16 %v26
  %v88 = vunpack.c.l.b16 %v27
  %v89 = vunpack.c.l.b16 %v28
  %v90 = vunpack.c.h.b16 %v28
  %v91 = vunpack.c.l.b16 %v29
  %v92 = vunpack.c.l.b16 %v30
  %v93 = vunpack.c.h.b16 %v30
  %v94 = vunpack.c.l.b16 %v31
  %v95 = vpack.c.b16 %v86, %v83
  %v96 = vpack.c.b16 %v87, %v84
  %v97 = vpack.c.b16 %v88, %v85
  %v98 = vpack.c.b16 %v92, %v89
  %v99 = vpack.c.b16 %v93, %v90
  %v100 = vpack.c.b16 %v94, %v91
  %v141 = vunpack.c.l.b16 %v32
  %v142 = vunpack.c.l.b16 %v33
  %v143 = vunpack.c.l.b16 %v34
  %v144 = vunpack.c.l.b16 %v35
  %v145 = vunpack.c.l.b16 %v36
  %v146 = vunpack.c.l.b16 %v37
  %v147 = vunpack.c.l.b16 %v38
  %v148 = vunpack.c.l.b16 %v39
  %v149 = vunpack.c.l.b16 %v40
  %v150 = vunpack.c.l.b16 %v41
  %v151 = vunpack.c.l.b16 %v42
  %v152 = vunpack.c.l.b16 %v43
  %v153 = vunpack.c.l.b16 %v44
  %v154 = vunpack.c.l.b16 %v45
  %v155 = vunpack.c.l.b16 %v46
  %v156 = vunpack.c.l.b16 %v47
  %v157 = vunpack.c.l.b16 %v48
  %v158 = vunpack.c.l.b16 %v49
  %v159 = vunpack.c.l.b16 %v50
  %v160 = vunpack.c.l.b16 %v51
  %v161 = vunpack.c.l.b16 %v52
  %v162 = vunpack.c.l.b16 %v53
  %v163 = vunpack.c.l.b16 %v54
  %v164 = vunpack.c.l.b16 %v55
  %v165 = vunpack.c.l.b16 %v56
  %v166 = vunpack.c.l.b16 %v57
  %v167 = vunpack.c.l.b16 %v58
  %v168 = vunpack.c.l.b16 %v59
  %v169 = vunpack.c.l.b16 %v60
  %v170 = vunpack.c.l.b16 %v61
  %v171 = vunpack.c.l.b16 %v62
  %v172 = vunpack.c.l.b16 %v63
  %v173 = vunpack.c.l.b16 %v64
  %v174 = vunpack.c.l.b16 %v65
  %v175 = vunpack.c.l.b16 %v66
  %v176 = vunpack.c.l.b16 %v67
  %v177 = vpack.c.b16 %v142, %v141
  %v178 = vpack.c.b16 %v144, %v143
  %v179 = vpack.c.b16 %v146, %v145
  %v180 = vpack.c.b16 %v148, %v147
  %v181 = vpack.c.b16 %v150, %v149
  %v182 = vpack.c.b16 %v152, %v151
  %v183 = vpack.c.b16 %v154, %v153
  %v184 = vpack.c.b16 %v156, %v155
  %v185 = vpack.c.b16 %v158, %v157
  %v186 = vpack.c.b16 %v160, %v159
  %v187 = vpack.c.b16 %v162, %v161
  %v188 = vpack.c.b16 %v164, %v163
  %v189 = vpack.c.b16 %v166, %v165
  %v190 = vpack.c.b16 %v168, %v167
  %v191 = vpack.c.b16 %v170, %v169
  %v192 = vpack.c.b16 %v172, %v171
  %v193 = vpack.c.b16 %v174, %v173
  %v194 = vpack.c.b16 %v176, %v175
  %vm213 = vcmask 261120
  %v215 = vsel %vm213, %v97, 0
  %v218 = vsel %vm213, %v100, 0
  %220 = vmatprep.subr.bf16.mxu0 0
  %221 = vmatpush1.bf16.msra.mxu0 %v177
  %222 = vmatprep.subr.bf16.mxu0 0
  %223 = vmatpush1.bf16.msra.mxu0 %v178
  %224 = vmatprep.subr.bf16.mxu0 0
  %225 = vmatpush1.bf16.msra.mxu0 %v179
  %226 = vmatprep.subr.bf16.mxu0 0
  %227 = vmatpush1.bf16.msra.mxu0 %v180
  %228 = vmatprep.subr.bf16.mxu0 0
  %229 = vmatpush1.bf16.msra.mxu0 %v181
  %230 = vmatprep.subr.bf16.mxu0 0
  %231 = vmatpush1.bf16.msra.mxu0 %v182
  %232 = vmatprep.subr.bf16.mxu0 0
  %233 = vmatpush1.bf16.msra.mxu0 %v183
  %234 = vmatprep.subr.bf16.mxu0 0
  %235 = vmatpush1.bf16.msra.mxu0 %v184
  %236 = vmatprep.subr.bf16.mxu0 0
  %237 = vmatpush1.bf16.msra.mxu0 %v185
  %238 = vmatprep.subr.bf16.mxu0 0
  %239 = vmatpush1.bf16.msra.mxu0 %v186
  %240 = vmatprep.subr.bf16.mxu0 0
  %241 = vmatpush1.bf16.msra.mxu0 %v187
  %242 = vmatprep.subr.bf16.mxu0 0
  %243 = vmatpush1.bf16.msra.mxu0 %v188
  %244 = vmatprep.subr.bf16.mxu0 0
  %245 = vmatpush1.bf16.msra.mxu0 %v189
  %246 = vmatprep.subr.bf16.mxu0 0
  %247 = vmatpush1.bf16.msra.mxu0 %v190
  %248 = vmatprep.subr.bf16.mxu0 0
  %249 = vmatpush1.bf16.msra.mxu0 %v191
  %250 = vmatprep.subr.bf16.mxu0 0
  %251 = vmatpush1.bf16.msra.mxu0 %v192
  %252 = vmatprep.mubr.bf16.mxu0 %v96
  %253 = vmatmul.mubr.bf16.gmra.mrb[0].mxu0 %v95
  %v254 = vpop.f32.mrb[0].mxu0
  %v255 = vadd.f32 %v73, %v254
  %v256 = vpop.f32.mrb[0].mxu0
  %v257 = vpop.f32.mrb[0].mxu0
  %v258 = vadd.f32 %v73, %v257
  %v259 = vpop.f32.mrb[0].mxu0
  %260 = vmatprep.mubr.bf16.mxu0 %v99
  %261 = vmatmul.mubr.bf16.gmra.mrb[0].mxu0 %v98
  %v262 = vpop.f32.mrb[0].mxu0
  %v263 = vadd.f32 %v73, %v262
  %v264 = vpop.f32.mrb[0].mxu0
  %v265 = vpop.f32.mrb[0].mxu0
  %v266 = vadd.f32 %v73, %v265
  %v267 = vpop.f32.mrb[0].mxu0
  %268 = vdwg.mxu0
  %269 = vmatprep.subr.bf16.mxu0 0
  %270 = vmatpush1.bf16.msra.mxu0 %v193
  %271 = vmatprep.subr.bf16.mxu0 0
  %272 = vmatpush1.bf16.msra.mxu0 %v194
  %273 = vmatprep.subr.bf16.mxu0 0
  %274 = vmatpush1.bf16.msra.mxu0 0
  %275 = vmatprep.subr.bf16.mxu0 0
  %276 = vmatpush1.bf16.msra.mxu0 0
  %277 = vmatprep.subr.bf16.mxu0 0
  %278 = vmatpush1.bf16.msra.mxu0 0
  %279 = vmatprep.subr.bf16.mxu0 0
  %280 = vmatpush1.bf16.msra.mxu0 0
  %281 = vmatprep.subr.bf16.mxu0 0
  %282 = vmatpush1.bf16.msra.mxu0 0
  %283 = vmatprep.subr.bf16.mxu0 0
  %284 = vmatpush1.bf16.msra.mxu0 0
  %285 = vmatprep.subr.bf16.mxu0 0
  %286 = vmatpush1.bf16.msra.mxu0 0
  %287 = vmatprep.subr.bf16.mxu0 0
  %288 = vmatpush1.bf16.msra.mxu0 0
  %289 = vmatprep.subr.bf16.mxu0 0
  %290 = vmatpush1.bf16.msra.mxu0 0
  %291 = vmatprep.subr.bf16.mxu0 0
  %292 = vmatpush1.bf16.msra.mxu0 0
  %293 = vmatprep.subr.bf16.mxu0 0
  %294 = vmatpush1.bf16.msra.mxu0 0
  %295 = vmatprep.subr.bf16.mxu0 0
  %296 = vmatpush1.bf16.msra.mxu0 0
  %297 = vmatprep.subr.bf16.mxu0 0
  %298 = vmatpush1.bf16.msra.mxu0 0
  %299 = vmatprep.subr.bf16.mxu0 0
  %300 = vmatpush1.bf16.msra.mxu0 0
  %301 = vmatprep.mubr.bf16.mxu0 0
  %302 = vmatmul.mubr.bf16.gmra.mrb[0].mxu0 %v215
  %v303 = vpop.f32.mrb[0].mxu0
  %v304 = vadd.f32 %v255, %v303
  %v305 = vpop.f32.mrb[0].mxu0
  %v306 = vpop.f32.mrb[0].mxu0
  %v307 = vadd.f32 %v258, %v306
  %v308 = vpop.f32.mrb[0].mxu0
  %309 = vmatprep.mubr.bf16.mxu0 0
  %310 = vmatmul.mubr.bf16.gmra.mrb[0].mxu0 %v218
  %v311 = vpop.f32.mrb[0].mxu0
  %v312 = vadd.f32 %v263, %v311
  %v313 = vpop.f32.mrb[0].mxu0
  %v314 = vpop.f32.mrb[0].mxu0
  %v315 = vadd.f32 %v266, %v314
  %v316 = vpop.f32.mrb[0].mxu0
  %317 = vdwg.mxu0
  %v318 = vsel %vm213, %v304, 0.0
  %v319 = vsel %vm213, %v307, 0.0
  %v320 = vadd.f32 %v318, %v319
  %v321 = vsel %vm213, %v312, 0.0
  %v322 = vadd.f32 %v320, %v321
  %v323 = vsel %vm213, %v315, 0.0
  %v324 = vadd.f32 %v322, %v323
  %v325 = vrot.slane %v324, 4
  %v326 = vadd.f32 %v324, %v325
  %v327 = vrot.slane %v326, 2
  %v328 = vadd.f32 %v326, %v327
  %v329 = vrot.slane %v328, 1
  %v330 = vadd.f32 %v328, %v329
  %v331 = vmul.f32 %v330, 0.03125
  %v332 = vsub.f32 %v304, %v331
  %v333 = vsub.f32 %v307, %v331
  %v334 = vsub.f32 %v312, %v331
  %v335 = vsub.f32 %v315, %v331
  %v336 = vmul.f32 %v332, %v332
  %v337 = vmul.f32 %v333, %v333
  %v338 = vmul.f32 %v334, %v334
  %v339 = vmul.f32 %v335, %v335
  %v340 = vsel %vm213, %v336, 0.0
  %v341 = vsel %vm213, %v337, 0.0
  %v342 = vadd.f32 %v340, %v341
  %v343 = vsel %vm213, %v338, 0.0
  %v344 = vadd.f32 %v342, %v343
  %v345 = vsel %vm213, %v339, 0.0
  %v346 = vadd.f32 %v344, %v345
  %v347 = vrot.slane %v346, 4
  %v348 = vadd.f32 %v346, %v347
  %v349 = vrot.slane %v348, 2
  %v350 = vadd.f32 %v348, %v349
  %v351 = vrot.slane %v350, 1
  %v352 = vadd.f32 %v350, %v351
  %v353 = vmul.f32 %v352, 0.03125
  %v354 = vadd.f32 %v353, 1e-05
  %v355 = vrsqrt.pop %v354
  %v356 = vld [vmem:[%s3] sm:$0x1]
  %v358 = vlaneseq
  %v359 = vshrl.u32 %v358, 7
  %v360 = vsub.s32 0, %v359
  %v361 = vrot.slane %v356, %v360
  %v363 = vmul.f32 %v361, %v332
  %v364 = vmul.f32 %v361, %v333
  %v365 = vmul.f32 %v361, %v334
  %v366 = vmul.f32 %v361, %v335
  %v367 = vmul.f32 %v363, %v355
  %v368 = vmul.f32 %v364, %v355
  %v369 = vmul.f32 %v365, %v355
  %v370 = vmul.f32 %v366, %v355
  %v371 = vld [vmem:[%s4] sm:$0x1]
  %v373 = vlaneseq
  %v374 = vshrl.u32 %v373, 7
  %v375 = vsub.s32 0, %v374
  %v376 = vrot.slane %v371, %v375
  %v378 = vadd.f32 %v367, %v376
  %v379 = vadd.f32 %v368, %v376
  %v380 = vadd.f32 %v369, %v376
  %v381 = vadd.f32 %v370, %v376
  %v382 = vld [vmem:[%s5] sm:$0xf]
  %v383 = vld [vmem:[%s5 + $0x4] sm:$0xf]
  %v384 = vld [vmem:[%s5 + $0x8] sm:$0xf]
  %v385 = vld [vmem:[%s5 + $0xc] sm:$0xf]
  %v386 = vunpack.c.l.bf16 %v382
  %v387 = vunpack.c.l.bf16 %v383
  %v388 = vunpack.c.l.bf16 %v384
  %v389 = vunpack.c.l.bf16 %v385
  %v390 = vadd.f32 %v378, %v386
  %v391 = vadd.f32 %v379, %v387
  %v392 = vadd.f32 %v380, %v388
  %v393 = vadd.f32 %v381, %v389
  %v394 = vpack.c.bf16 %v391, %v390
  %v395 = vpack.c.bf16 %v393, %v392
  %v398 = vunpack.c.l.b16 %v394
  %v399 = vunpack.c.h.b16 %v394
  %v400 = vunpack.c.l.b16 %v395
  %v401 = vunpack.c.h.b16 %v395
  %v402 = vpack.c.b16 %v398, %v398
  %v403 = vpack.c.b16 %v399, %v399
  %v404 = vpack.c.b16 %v400, %v400
  %v405 = vpack.c.b16 %v401, %v401
  %vm410 = vcmask 257024
  %411 = vst.msk [vmem:[%s6] sm:$0xf] %vm410, %v402
  %412 = vst.msk [vmem:[%s6 + $0x4] sm:$0xf] %vm410, %v403
  %413 = vst.msk [vmem:[%s6 + $0x8] sm:$0xf] %vm410, %v404
  %414 = vst.msk [vmem:[%s6 + $0xc] sm:$0xf] %vm410, %v405
  // Predicated region
  $region26: #{global_generator_forward.16} parent=0 // pred_check
    _
  $region27: #{global_generator_forward.16} parent=0 // pred_check_branch
    %416 = sbr.rel (0) target = $region29
  $region28: #{global_generator_forward.16} parent=0 // pred_region
    _
  $region29: #{global_generator_forward.16} parent=0 // pred_fallthru
    _
  // Predicated region
  $region30: #{global_generator_forward.16} parent=0 // pred_check
    _
  $region31: #{global_generator_forward.16} parent=0 // pred_check_branch
    %418 = sbr.rel (0) target = $region33
  $region32: #{global_generator_forward.16} parent=0 // pred_region
    _
  $region33: #{global_generator_forward.16} parent=0 // pred_fallthru
    _

// kernel: global_generator_forward.21
$region0: #{global_generator_forward.21}
  #allocation0 [shape = 'u32[]', space=smem, size = 0x4, offset = 0x4, fixed_abs, tag = 'smem constant byte address 0x4 - core index']
  #allocation1 [shape = 'u32[144,128]{1,0:T(1,128)}', space=vmem, size = 0x12000, scoped, tag = 'internal scratch']
  %s0 = inlined_call_operand.vmem [shape: bf16[32,288], index: 0, kind: input, shape index: {}]
  %s1 = inlined_call_operand.vmem [shape: bf16[288,64], index: 1, kind: input, shape index: {}]
  %s2 = inlined_call_operand.vmem [shape: f32[1,64], index: 2, kind: input, shape index: {}]
  %s3 = inlined_call_operand.vmem [shape: f32[1,64], index: 3, kind: input, shape index: {}]
  %s4 = inlined_call_operand.vmem [shape: f32[1,64], index: 4, kind: input, shape index: {}]
  %s5 = inlined_call_operand.vmem [shape: f32[64,64], index: 5, kind: input, shape index: {}]
  %s6 = inlined_call_operand.vmem [shape: bf16[32,64], index: 6, kind: output, shape index: {}]
  %s7 = sld [smem:[#allocation0]]
  $region34: #{global_generator_forward.21} parent=0
    _
  %s9 = ssub.s32 1, %s7
  %s10 = scalar_select 0, %s9, %s7
  // Predicated region
  $region2: #{global_generator_forward.21} parent=0 // pred_check
    _
  $region3: #{global_generator_forward.21} parent=0 // pred_check_branch
    %12 = sbr.rel (0) target = $region5
  $region4: #{global_generator_forward.21} parent=0 // pred_region
    _
  $region5: #{global_generator_forward.21} parent=0 // pred_fallthru
    _
  // Predicated region
  $region6: #{global_generator_forward.21} parent=0 // pred_check
    _
  $region7: #{global_generator_forward.21} parent=0 // pred_check_branch
    %14 = sbr.rel (0) target = $region9
  $region8: #{global_generator_forward.21} parent=0 // pred_region
    _
  $region9: #{global_generator_forward.21} parent=0 // pred_fallthru
    _
  // Predicated region
  $region10: #{global_generator_forward.21} parent=0 // pred_check
    _
  $region11: #{global_generator_forward.21} parent=0 // pred_check_branch
    %16 = sbr.rel (0) target = $region13
  $region12: #{global_generator_forward.21} parent=0 // pred_region
    _
  $region13: #{global_generator_forward.21} parent=0 // pred_fallthru
    _
  // Predicated region
  $region14: #{global_generator_forward.21} parent=0 // pred_check
    _
  $region15: #{global_generator_forward.21} parent=0 // pred_check_branch
    %18 = sbr.rel (0) target = $region17
  $region16: #{global_generator_forward.21} parent=0 // pred_region
    _
  $region17: #{global_generator_forward.21} parent=0 // pred_fallthru
    _
  // Predicated region
  $region18: #{global_generator_forward.21} parent=0 // pred_check
    _
  $region19: #{global_generator_forward.21} parent=0 // pred_check_branch
    %20 = sbr.rel (0) target = $region21
  $region20: #{global_generator_forward.21} parent=0 // pred_region
    _
  $region21: #{global_generator_forward.21} parent=0 // pred_fallthru
    _
  // Predicated region
  $region22: #{global_generator_forward.21} parent=0 // pred_check
    _
  $region23: #{global_generator_forward.21} parent=0 // pred_check_branch
    %22 = sbr.rel (0) target = $region25
  $region24: #{global_generator_forward.21} parent=0 // pred_region
    _
  $region25: #{global_generator_forward.21} parent=0 // pred_fallthru
    _
  %v24 = vld [vmem:[%s0] sm:$0xff]
  %v25 = vld [vmem:[%s0 + $0x8] sm:$0xf]
  %v26 = vld [vmem:[%s0 + $0xc] sm:$0xff]
  %v27 = vld [vmem:[%s0 + $0x14] sm:$0xf]
  %v28 = vld [vmem:[%s0 + $0x18] sm:$0xff]
  %v29 = vld [vmem:[%s0 + $0x20] sm:$0xf]
  %v30 = vld [vmem:[%s0 + $0x24] sm:$0xff]
  %v31 = vld [vmem:[%s0 + $0x2c] sm:$0xf]
  %v32 = vld [vmem:[%s1] sm:$0xf]
  %v33 = vld [vmem:[%s1 + $0x4] sm:$0xf]
  %v34 = vld [vmem:[%s1 + $0x8] sm:$0xf]
  %v35 = vld [vmem:[%s1 + $0xc] sm:$0xf]
  %v36 = vld [vmem:[%s1 + $0x10] sm:$0xf]
  %v37 = vld [vmem:[%s1 + $0x14] sm:$0xf]
  %v38 = vld [vmem:[%s1 + $0x18] sm:$0xf]
  %v39 = vld [vmem:[%s1 + $0x1c] sm:$0xf]
  %v40 = vld [vmem:[%s1 + $0x20] sm:$0xf]
  %v41 = vld [vmem:[%s1 + $0x24] sm:$0xf]
  %v42 = vld [vmem:[%s1 + $0x28] sm:$0xf]
  %v43 = vld [vmem:[%s1 + $0x2c] sm:$0xf]
  %v44 = vld [vmem:[%s1 + $0x30] sm:$0xf]
  %v45 = vld [vmem:[%s1 + $0x34] sm:$0xf]
  %v46 = vld [vmem:[%s1 + $0x38] sm:$0xf]
  %v47 = vld [vmem:[%s1 + $0x3c] sm:$0xf]
  %v48 = vld [vmem:[%s1 + $0x40] sm:$0xf]
  %v49 = vld [vmem:[%s1 + $0x44] sm:$0xf]
  %v50 = vld [vmem:[%s1 + $0x48] sm:$0xf]
  %v51 = vld [vmem:[%s1 + $0x4c] sm:$0xf]
  %v52 = vld [vmem:[%s1 + $0x50] sm:$0xf]
  %v53 = vld [vmem:[%s1 + $0x54] sm:$0xf]
  %v54 = vld [vmem:[%s1 + $0x58] sm:$0xf]
  %v55 = vld [vmem:[%s1 + $0x5c] sm:$0xf]
  %v56 = vld [vmem:[%s1 + $0x60] sm:$0xf]
  %v57 = vld [vmem:[%s1 + $0x64] sm:$0xf]
  %v58 = vld [vmem:[%s1 + $0x68] sm:$0xf]
  %v59 = vld [vmem:[%s1 + $0x6c] sm:$0xf]
  %v60 = vld [vmem:[%s1 + $0x70] sm:$0xf]
  %v61 = vld [vmem:[%s1 + $0x74] sm:$0xf]
  %v62 = vld [vmem:[%s1 + $0x78] sm:$0xf]
  %v63 = vld [vmem:[%s1 + $0x7c] sm:$0xf]
  %v64 = vld [vmem:[%s1 + $0x80] sm:$0xf]
  %v65 = vld [vmem:[%s1 + $0x84] sm:$0xf]
  %v66 = vld [vmem:[%s1 + $0x88] sm:$0xf]
  %v67 = vld [vmem:[%s1 + $0x8c] sm:$0xf]
  %v68 = vld [vmem:[%s2] sm:$0x1]
  %v70 = vlaneseq
  %v71 = vshrl.u32 %v70, 7
  %v72 = vsub.s32 0, %v71
  %v73 = vrot.slane %v68, %v72
  %v83 = vunpack.c.l.b16 %v24
  %v84 = vunpack.c.h.b16 %v24
  %v85 = vunpack.c.l.b16 %v25
  %v86 = vunpack.c.l.b16 %v26
  %v87 = vunpack.c.h.b16 %v26
  %v88 = vunpack.c.l.b16 %v27
  %v89 = vunpack.c.l.b16 %v28
  %v90 = vunpack.c.h.b16 %v28
  %v91 = vunpack.c.l.b16 %v29
  %v92 = vunpack.c.l.b16 %v30
  %v93 = vunpack.c.h.b16 %v30
  %v94 = vunpack.c.l.b16 %v31
  %v95 = vpack.c.b16 %v86, %v83
  %v96 = vpack.c.b16 %v87, %v84
  %v97 = vpack.c.b16 %v88, %v85
  %v98 = vpack.c.b16 %v92, %v89
  %v99 = vpack.c.b16 %v93, %v90
  %v100 = vpack.c.b16 %v94, %v91
  %v141 = vunpack.c.l.b16 %v32
  %v142 = vunpack.c.l.b16 %v33
  %v143 = vunpack.c.l.b16 %v34
  %v144 = vunpack.c.l.b16 %v35
  %v145 = vunpack.c.l.b16 %v36
  %v146 = vunpack.c.l.b16 %v37
  %v147 = vunpack.c.l.b16 %v38
  %v148 = vunpack.c.l.b16 %v39
  %v149 = vunpack.c.l.b16 %v40
  %v150 = vunpack.c.l.b16 %v41
  %v151 = vunpack.c.l.b16 %v42
  %v152 = vunpack.c.l.b16 %v43
  %v153 = vunpack.c.l.b16 %v44
  %v154 = vunpack.c.l.b16 %v45
  %v155 = vunpack.c.l.b16 %v46
  %v156 = vunpack.c.l.b16 %v47
  %v157 = vunpack.c.l.b16 %v48
  %v158 = vunpack.c.l.b16 %v49
  %v159 = vunpack.c.l.b16 %v50
  %v160 = vunpack.c.l.b16 %v51
  %v161 = vunpack.c.l.b16 %v52
  %v162 = vunpack.c.l.b16 %v53
  %v163 = vunpack.c.l.b16 %v54
  %v164 = vunpack.c.l.b16 %v55
  %v165 = vunpack.c.l.b16 %v56
  %v166 = vunpack.c.l.b16 %v57
  %v167 = vunpack.c.l.b16 %v58
  %v168 = vunpack.c.l.b16 %v59
  %v169 = vunpack.c.l.b16 %v60
  %v170 = vunpack.c.l.b16 %v61
  %v171 = vunpack.c.l.b16 %v62
  %v172 = vunpack.c.l.b16 %v63
  %v173 = vunpack.c.l.b16 %v64
  %v174 = vunpack.c.l.b16 %v65
  %v175 = vunpack.c.l.b16 %v66
  %v176 = vunpack.c.l.b16 %v67
  %v177 = vpack.c.b16 %v142, %v141
  %v178 = vpack.c.b16 %v144, %v143
  %v179 = vpack.c.b16 %v146, %v145
  %v180 = vpack.c.b16 %v148, %v147
  %v181 = vpack.c.b16 %v150, %v149
  %v182 = vpack.c.b16 %v152, %v151
  %v183 = vpack.c.b16 %v154, %v153
  %v184 = vpack.c.b16 %v156, %v155
  %v185 = vpack.c.b16 %v158, %v157
  %v186 = vpack.c.b16 %v160, %v159
  %v187 = vpack.c.b16 %v162, %v161
  %v188 = vpack.c.b16 %v164, %v163
  %v189 = vpack.c.b16 %v166, %v165
  %v190 = vpack.c.b16 %v168, %v167
  %v191 = vpack.c.b16 %v170, %v169
  %v192 = vpack.c.b16 %v172, %v171
  %v193 = vpack.c.b16 %v174, %v173
  %v194 = vpack.c.b16 %v176, %v175
  %vm213 = vcmask 261120
  %v215 = vsel %vm213, %v97, 0
  %v218 = vsel %vm213, %v100, 0
  %220 = vmatprep.subr.bf16.mxu0 0
  %221 = vmatpush1.bf16.msra.mxu0 %v177
  %222 = vmatprep.subr.bf16.mxu0 0
  %223 = vmatpush1.bf16.msra.mxu0 %v178
  %224 = vmatprep.subr.bf16.mxu0 0
  %225 = vmatpush1.bf16.msra.mxu0 %v179
  %226 = vmatprep.subr.bf16.mxu0 0
  %227 = vmatpush1.bf16.msra.mxu0 %v180
  %228 = vmatprep.subr.bf16.mxu0 0
  %229 = vmatpush1.bf16.msra.mxu0 %v181
  %230 = vmatprep.subr.bf16.mxu0 0
  %231 = vmatpush1.bf16.msra.mxu0 %v182
  %232 = vmatprep.subr.bf16.mxu0 0
  %233 = vmatpush1.bf16.msra.mxu0 %v183
  %234 = vmatprep.subr.bf16.mxu0 0
  %235 = vmatpush1.bf16.msra.mxu0 %v184
  %236 = vmatprep.subr.bf16.mxu0 0
  %237 = vmatpush1.bf16.msra.mxu0 %v185
  %238 = vmatprep.subr.bf16.mxu0 0
  %239 = vmatpush1.bf16.msra.mxu0 %v186
  %240 = vmatprep.subr.bf16.mxu0 0
  %241 = vmatpush1.bf16.msra.mxu0 %v187
  %242 = vmatprep.subr.bf16.mxu0 0
  %243 = vmatpush1.bf16.msra.mxu0 %v188
  %244 = vmatprep.subr.bf16.mxu0 0
  %245 = vmatpush1.bf16.msra.mxu0 %v189
  %246 = vmatprep.subr.bf16.mxu0 0
  %247 = vmatpush1.bf16.msra.mxu0 %v190
  %248 = vmatprep.subr.bf16.mxu0 0
  %249 = vmatpush1.bf16.msra.mxu0 %v191
  %250 = vmatprep.subr.bf16.mxu0 0
  %251 = vmatpush1.bf16.msra.mxu0 %v192
  %252 = vmatprep.mubr.bf16.mxu0 %v96
  %253 = vmatmul.mubr.bf16.gmra.mrb[0].mxu0 %v95
  %v254 = vpop.f32.mrb[0].mxu0
  %v255 = vadd.f32 %v73, %v254
  %v256 = vpop.f32.mrb[0].mxu0
  %v257 = vpop.f32.mrb[0].mxu0
  %v258 = vadd.f32 %v73, %v257
  %v259 = vpop.f32.mrb[0].mxu0
  %260 = vmatprep.mubr.bf16.mxu0 %v99
  %261 = vmatmul.mubr.bf16.gmra.mrb[0].mxu0 %v98
  %v262 = vpop.f32.mrb[0].mxu0
  %v263 = vadd.f32 %v73, %v262
  %v264 = vpop.f32.mrb[0].mxu0
  %v265 = vpop.f32.mrb[0].mxu0
  %v266 = vadd.f32 %v73, %v265
  %v267 = vpop.f32.mrb[0].mxu0
  %268 = vdwg.mxu0
  %269 = vmatprep.subr.bf16.mxu0 0
  %270 = vmatpush1.bf16.msra.mxu0 %v193
  %271 = vmatprep.subr.bf16.mxu0 0
  %272 = vmatpush1.bf16.msra.mxu0 %v194
  %273 = vmatprep.subr.bf16.mxu0 0
  %274 = vmatpush1.bf16.msra.mxu0 0
  %275 = vmatprep.subr.bf16.mxu0 0
  %276 = vmatpush1.bf16.msra.mxu0 0
  %277 = vmatprep.subr.bf16.mxu0 0
  %278 = vmatpush1.bf16.msra.mxu0 0
  %279 = vmatprep.subr.bf16.mxu0 0
  %280 = vmatpush1.bf16.msra.mxu0 0
  %281 = vmatprep.subr.bf16.mxu0 0
  %282 = vmatpush1.bf16.msra.mxu0 0
  %283 = vmatprep.subr.bf16.mxu0 0
  %284 = vmatpush1.bf16.msra.mxu0 0
  %285 = vmatprep.subr.bf16.mxu0 0
  %286 = vmatpush1.bf16.msra.mxu0 0
  %287 = vmatprep.subr.bf16.mxu0 0
  %288 = vmatpush1.bf16.msra.mxu0 0
  %289 = vmatprep.subr.bf16.mxu0 0
  %290 = vmatpush1.bf16.msra.mxu0 0
  %291 = vmatprep.subr.bf16.mxu0 0
  %292 = vmatpush1.bf16.msra.mxu0 0
  %293 = vmatprep.subr.bf16.mxu0 0
  %294 = vmatpush1.bf16.msra.mxu0 0
  %295 = vmatprep.subr.bf16.mxu0 0
  %296 = vmatpush1.bf16.msra.mxu0 0
  %297 = vmatprep.subr.bf16.mxu0 0
  %298 = vmatpush1.bf16.msra.mxu0 0
  %299 = vmatprep.subr.bf16.mxu0 0
  %300 = vmatpush1.bf16.msra.mxu0 0
  %301 = vmatprep.mubr.bf16.mxu0 0
  %302 = vmatmul.mubr.bf16.gmra.mrb[0].mxu0 %v215
  %v303 = vpop.f32.mrb[0].mxu0
  %v304 = vadd.f32 %v255, %v303
  %v305 = vpop.f32.mrb[0].mxu0
  %v306 = vpop.f32.mrb[0].mxu0
  %v307 = vadd.f32 %v258, %v306
  %v308 = vpop.f32.mrb[0].mxu0
  %309 = vmatprep.mubr.bf16.mxu0 0
  %310 = vmatmul.mubr.bf16.gmra.mrb[0].mxu0 %v218
  %v311 = vpop.f32.mrb[0].mxu0
  %v312 = vadd.f32 %v263, %v311
  %v313 = vpop.f32.mrb[0].mxu0
  %v314 = vpop.f32.mrb[0].mxu0
  %v315 = vadd.f32 %v266, %v314
  %v316 = vpop.f32.mrb[0].mxu0
  %317 = vdwg.mxu0
  %v318 = vld [vmem:[%s5] sm:$0xff]
  %v319 = vld [vmem:[%s5 + $0x8] sm:$0xff]
  %v320 = vld [vmem:[%s5 + $0x10] sm:$0xff]
  %v321 = vld [vmem:[%s5 + $0x18] sm:$0xff]
  %v322 = vld [vmem:[%s5 + $0x20] sm:$0xff]
  %v323 = vld [vmem:[%s5 + $0x28] sm:$0xff]
  %v324 = vld [vmem:[%s5 + $0x30] sm:$0xff]
  %v325 = vld [vmem:[%s5 + $0x38] sm:$0xff]
  %vm326 = vcmask 523264
  %v328 = vsel %vm326, %v304, 0
  %v331 = vsel %vm326, %v307, 0
  %v334 = vsel %vm326, %v312, 0
  %v337 = vsel %vm326, %v315, 0
  %339 = vmatprep.subr.mxu0 0.0
  %340 = vmatpush1.msra.mxu0 %v318
  %341 = vmatprep.subr.mxu0 0.0
  %342 = vmatpush1.msra.mxu0 %v319
  %343 = vmatprep.subr.mxu0 0.0
  %344 = vmatpush1.msra.mxu0 %v320
  %345 = vmatprep.subr.mxu0 0.0
  %346 = vmatpush1.msra.mxu0 %v321
  %347 = vmatprep.subr.mxu0 0.0
  %348 = vmatpush1.msra.mxu0 %v322
  %349 = vmatprep.subr.mxu0 0.0
  %350 = vmatpush1.msra.mxu0 %v323
  %351 = vmatprep.subr.mxu0 0.0
  %352 = vmatpush1.msra.mxu0 %v324
  %353 = vmatprep.subr.mxu0 0.0
  %354 = vmatpush1.msra.mxu0 %v325
  %355 = vmatprep.subr.mxu0 0.0
  %356 = vmatpush1.msra.mxu0 0.0
  %357 = vmatprep.subr.mxu0 0.0
  %358 = vmatpush1.msra.mxu0 0.0
  %359 = vmatprep.subr.mxu0 0.0
  %360 = vmatpush1.msra.mxu0 0.0
  %361 = vmatprep.subr.mxu0 0.0
  %362 = vmatpush1.msra.mxu0 0.0
  %363 = vmatprep.subr.mxu0 0.0
  %364 = vmatpush1.msra.mxu0 0.0
  %365 = vmatprep.subr.mxu0 0.0
  %366 = vmatpush1.msra.mxu0 0.0
  %367 = vmatprep.subr.mxu0 0.0
  %368 = vmatpush1.msra.mxu0 0.0
  %369 = vmatprep.subr.mxu0 0.0
  %370 = vmatpush1.msra.mxu0 0.0
  %371 = vmatprep.subr.mxu0 0.0
  %372 = vmatpush1.msra.mxu0 0.0
  %373 = vmatprep.subr.mxu0 0.0
  %374 = vmatpush1.msra.mxu0 0.0
  %375 = vmatprep.subr.mxu0 0.0
  %376 = vmatpush1.msra.mxu0 0.0
  %377 = vmatprep.subr.mxu0 0.0
  %378 = vmatpush1.msra.mxu0 0.0
  %379 = vmatprep.subr.mxu0 0.0
  %380 = vmatpush1.msra.mxu0 0.0
  %381 = vmatprep.subr.mxu0 0.0
  %382 = vmatpush1.msra.mxu0 0.0
  %383 = vmatprep.subr.mxu0 0.0
  %384 = vmatpush1.msra.mxu0 0.0
  %385 = vmatprep.subr.mxu0 0.0
  %386 = vmatpush1.msra.mxu0 0.0
  %387 = vmatprep.subr.mxu0 0.0
  %388 = vmatpush1.msra.mxu0 0.0
  %389 = vmatprep.subr.mxu0 0.0
  %390 = vmatpush1.msra.mxu0 0.0
  %391 = vmatprep.subr.mxu0 0.0
  %392 = vmatpush1.msra.mxu0 0.0
  %393 = vmatprep.subr.mxu0 0.0
  %394 = vmatpush1.msra.mxu0 0.0
  %395 = vmatprep.subr.mxu0 0.0
  %396 = vmatpush1.msra.mxu0 0.0
  %397 = vmatprep.subr.mxu0 0.0
  %398 = vmatpush1.msra.mxu0 0.0
  %399 = vmatprep.subr.mxu0 0.0
  %400 = vmatpush1.msra.mxu0 0.0
  %401 = vmatprep.subr.mxu0 0.0
  %402 = vmatpush1.msra.mxu0 0.0
  %403 = vmatprep.mubr.f32.mxu0 0.0
  %404 = vmatmul.mubr.f32.gmra.mrb[0].mxu0 %v328
  %v405 = vpop.f32.mrb[0].mxu0
  %v406 = vadd.f32 0.0, %v405
  %v407 = vpop.f32.mrb[0].mxu0
  %408 = vmatprep.mubr.f32.mxu0 0.0
  %409 = vmatmul.mubr.f32.gmra.mrb[0].mxu0 %v331
  %v410 = vpop.f32.mrb[0].mxu0
  %v411 = vadd.f32 0.0, %v410
  %v412 = vpop.f32.mrb[0].mxu0
  %413 = vmatprep.mubr.f32.mxu0 0.0
  %414 = vmatmul.mubr.f32.gmra.mrb[0].mxu0 %v334
  %v415 = vpop.f32.mrb[0].mxu0
  %v416 = vadd.f32 0.0, %v415
  %v417 = vpop.f32.mrb[0].mxu0
  %418 = vmatprep.mubr.f32.mxu0 0.0
  %419 = vmatmul.mubr.f32.gmra.mrb[0].mxu0 %v337
  %v420 = vpop.f32.mrb[0].mxu0
  %v421 = vadd.f32 0.0, %v420
  %v422 = vpop.f32.mrb[0].mxu0
  %423 = vdwg.mxu0
  %v424 = vsel %vm326, %v406, 0.0
  %v425 = vsel %vm326, %v411, 0.0
  %v426 = vadd.f32 %v424, %v425
  %v427 = vsel %vm326, %v416, 0.0
  %v428 = vadd.f32 %v426, %v427
  %v429 = vsel %vm326, %v421, 0.0
  %v430 = vadd.f32 %v428, %v429
  %v431 = vrot.slane %v430, 4
  %v432 = vadd.f32 %v430, %v431
  %v433 = vrot.slane %v432, 2
  %v434 = vadd.f32 %v432, %v433
  %v435 = vrot.slane %v434, 1
  %v436 = vadd.f32 %v434, %v435
  %v437 = vmul.f32 %v436, 0.0078125
  %v438 = vsub.f32 %v304, %v437
  %v439 = vsub.f32 %v307, %v437
  %v440 = vsub.f32 %v312, %v437
  %v441 = vsub.f32 %v315, %v437
  %v442 = vmul.f32 %v438, %v438
  %v443 = vmul.f32 %v439, %v439
  %v444 = vmul.f32 %v440, %v440
  %v445 = vmul.f32 %v441, %v441
  %v447 = vsel %vm326, %v442, 0
  %v450 = vsel %vm326, %v443, 0
  %v453 = vsel %vm326, %v444, 0
  %v456 = vsel %vm326, %v445, 0
  %458 = vmatprep.subr.mxu0 0.0
  %459 = vmatpush1.msra.mxu0 %v318
  %460 = vmatprep.subr.mxu0 0.0
  %461 = vmatpush1.msra.mxu0 %v319
  %462 = vmatprep.subr.mxu0 0.0
  %463 = vmatpush1.msra.mxu0 %v320
  %464 = vmatprep.subr.mxu0 0.0
  %465 = vmatpush1.msra.mxu0 %v321
  %466 = vmatprep.subr.mxu0 0.0
  %467 = vmatpush1.msra.mxu0 %v322
  %468 = vmatprep.subr.mxu0 0.0
  %469 = vmatpush1.msra.mxu0 %v323
  %470 = vmatprep.subr.mxu0 0.0
  %471 = vmatpush1.msra.mxu0 %v324
  %472 = vmatprep.subr.mxu0 0.0
  %473 = vmatpush1.msra.mxu0 %v325
  %474 = vmatprep.subr.mxu0 0.0
  %475 = vmatpush1.msra.mxu0 0.0
  %476 = vmatprep.subr.mxu0 0.0
  %477 = vmatpush1.msra.mxu0 0.0
  %478 = vmatprep.subr.mxu0 0.0
  %479 = vmatpush1.msra.mxu0 0.0
  %480 = vmatprep.subr.mxu0 0.0
  %481 = vmatpush1.msra.mxu0 0.0
  %482 = vmatprep.subr.mxu0 0.0
  %483 = vmatpush1.msra.mxu0 0.0
  %484 = vmatprep.subr.mxu0 0.0
  %485 = vmatpush1.msra.mxu0 0.0
  %486 = vmatprep.subr.mxu0 0.0
  %487 = vmatpush1.msra.mxu0 0.0
  %488 = vmatprep.subr.mxu0 0.0
  %489 = vmatpush1.msra.mxu0 0.0
  %490 = vmatprep.subr.mxu0 0.0
  %491 = vmatpush1.msra.mxu0 0.0
  %492 = vmatprep.subr.mxu0 0.0
  %493 = vmatpush1.msra.mxu0 0.0
  %494 = vmatprep.subr.mxu0 0.0
  %495 = vmatpush1.msra.mxu0 0.0
  %496 = vmatprep.subr.mxu0 0.0
  %497 = vmatpush1.msra.mxu0 0.0
  %498 = vmatprep.subr.mxu0 0.0
  %499 = vmatpush1.msra.mxu0 0.0
  %500 = vmatprep.subr.mxu0 0.0
  %501 = vmatpush1.msra.mxu0 0.0
  %502 = vmatprep.subr.mxu0 0.0
  %503 = vmatpush1.msra.mxu0 0.0
  %504 = vmatprep.subr.mxu0 0.0
  %505 = vmatpush1.msra.mxu0 0.0
  %506 = vmatprep.subr.mxu0 0.0
  %507 = vmatpush1.msra.mxu0 0.0
  %508 = vmatprep.subr.mxu0 0.0
  %509 = vmatpush1.msra.mxu0 0.0
  %510 = vmatprep.subr.mxu0 0.0
  %511 = vmatpush1.msra.mxu0 0.0
  %512 = vmatprep.subr.mxu0 0.0
  %513 = vmatpush1.msra.mxu0 0.0
  %514 = vmatprep.subr.mxu0 0.0
  %515 = vmatpush1.msra.mxu0 0.0
  %516 = vmatprep.subr.mxu0 0.0
  %517 = vmatpush1.msra.mxu0 0.0
  %518 = vmatprep.subr.mxu0 0.0
  %519 = vmatpush1.msra.mxu0 0.0
  %520 = vmatprep.subr.mxu0 0.0
  %521 = vmatpush1.msra.mxu0 0.0
  %522 = vmatprep.mubr.f32.mxu0 0.0
  %523 = vmatmul.mubr.f32.gmra.mrb[0].mxu0 %v447
  %v524 = vpop.f32.mrb[0].mxu0
  %v525 = vadd.f32 0.0, %v524
  %v526 = vpop.f32.mrb[0].mxu0
  %527 = vmatprep.mubr.f32.mxu0 0.0
  %528 = vmatmul.mubr.f32.gmra.mrb[0].mxu0 %v450
  %v529 = vpop.f32.mrb[0].mxu0
  %v530 = vadd.f32 0.0, %v529
  %v531 = vpop.f32.mrb[0].mxu0
  %532 = vmatprep.mubr.f32.mxu0 0.0
  %533 = vmatmul.mubr.f32.gmra.mrb[0].mxu0 %v453
  %v534 = vpop.f32.mrb[0].mxu0
  %v535 = vadd.f32 0.0, %v534
  %v536 = vpop.f32.mrb[0].mxu0
  %537 = vmatprep.mubr.f32.mxu0 0.0
  %538 = vmatmul.mubr.f32.gmra.mrb[0].mxu0 %v456
  %v539 = vpop.f32.mrb[0].mxu0
  %v540 = vadd.f32 0.0, %v539
  %v541 = vpop.f32.mrb[0].mxu0
  %542 = vdwg.mxu0
  %v543 = vsel %vm326, %v525, 0.0
  %v544 = vsel %vm326, %v530, 0.0
  %v545 = vadd.f32 %v543, %v544
  %v546 = vsel %vm326, %v535, 0.0
  %v547 = vadd.f32 %v545, %v546
  %v548 = vsel %vm326, %v540, 0.0
  %v549 = vadd.f32 %v547, %v548
  %v550 = vrot.slane %v549, 4
  %v551 = vadd.f32 %v549, %v550
  %v552 = vrot.slane %v551, 2
  %v553 = vadd.f32 %v551, %v552
  %v554 = vrot.slane %v553, 1
  %v555 = vadd.f32 %v553, %v554
  %v556 = vmul.f32 %v555, 0.0078125
  %v557 = vadd.f32 %v556, 1e-05
  %v558 = vrsqrt.pop %v557
  %v559 = vld [vmem:[%s3] sm:$0x1]
  %v561 = vlaneseq
  %v562 = vshrl.u32 %v561, 7
  %v563 = vsub.s32 0, %v562
  %v564 = vrot.slane %v559, %v563
  %v566 = vmul.f32 %v564, %v438
  %v567 = vmul.f32 %v564, %v439
  %v568 = vmul.f32 %v564, %v440
  %v569 = vmul.f32 %v564, %v441
  %v570 = vmul.f32 %v566, %v558
  %v571 = vmul.f32 %v567, %v558
  %v572 = vmul.f32 %v568, %v558
  %v573 = vmul.f32 %v569, %v558
  %v574 = vld [vmem:[%s4] sm:$0x1]
  %v576 = vlaneseq
  %v577 = vshrl.u32 %v576, 7
  %v578 = vsub.s32 0, %v577
  %v579 = vrot.slane %v574, %v578
  %v581 = vadd.f32 %v570, %v579
  %v582 = vadd.f32 %v571, %v579
  %v583 = vadd.f32 %v572, %v579
  %v584 = vadd.f32 %v573, %v579
  %v585 = vmax.f32 %v581, 0.0
  %v586 = vmax.f32 %v582, 0.0
  %v587 = vmax.f32 %v583, 0.0
  %v588 = vmax.f32 %v584, 0.0
  %v589 = vpack.c.bf16 %v586, %v585
  %v590 = vpack.c.bf16 %v588, %v587
  %v593 = vunpack.c.l.b16 %v589
  %v594 = vunpack.c.h.b16 %v589
  %v595 = vunpack.c.l.b16 %v590
  %v596 = vunpack.c.h.b16 %v590
  %v597 = vpack.c.b16 %v593, %v593
  %v598 = vpack.c.b16 %v594, %v594
  %v599 = vpack.c.b16 %v595, %v595
  %v600 = vpack.c.b16 %v596, %v596
  %vm605 = vcmask 519168
  %606 = vst.msk [vmem:[%s6] sm:$0xf] %vm605, %v597
  %607 = vst.msk [vmem:[%s6 + $0x4] sm:$0xf] %vm605, %v598
  %608 = vst.msk [vmem:[%s6 + $0x8] sm:$0xf] %vm605, %v599
  %609 = vst.msk [vmem:[%s6 + $0xc] sm:$0xf] %vm605, %v600
  // Predicated region
  $region26: #{global_generator_forward.21} parent=0 // pred_check
    _
  $region27: #{global_generator_forward.21} parent=0 // pred_check_branch
    %611 = sbr.rel (0) target = $region29
  $region28: #{global_generator_forward.21} parent=0 // pred_region
    _
  $region29: #{global_generator_forward.21} parent=0 // pred_fallthru
    _
  // Predicated region
  $region30: #{global_generator_forward.21} parent=0 // pred_check
    _
  $region31: #{global_generator_forward.21} parent=0 // pred_check_branch
    %613 = sbr.rel (0) target = $region33
  $region32: #{global_generator_forward.21} parent=0 // pred_region
    _
  $region33: #{global_generator_forward.21} parent=0 // pred_fallthru
    _

// kernel: global_generator_forward.22
$region0: #{global_generator_forward.22}
  #allocation0 [shape = 'u32[]', space=smem, size = 0x4, offset = 0x4, fixed_abs, tag = 'smem constant byte address 0x4 - core index']
  #allocation1 [shape = 'u32[144,128]{1,0:T(1,128)}', space=vmem, size = 0x12000, scoped, tag = 'internal scratch']
  %s0 = inlined_call_operand.vmem [shape: bf16[128,144], index: 0, kind: input, shape index: {}]
  %s1 = inlined_call_operand.vmem [shape: bf16[144,32], index: 1, kind: input, shape index: {}]
  %s2 = inlined_call_operand.vmem [shape: f32[1,32], index: 2, kind: input, shape index: {}]
  %s3 = inlined_call_operand.vmem [shape: f32[1,32], index: 3, kind: input, shape index: {}]
  %s4 = inlined_call_operand.vmem [shape: f32[1,32], index: 4, kind: input, shape index: {}]
  %s5 = inlined_call_operand.vmem [shape: f32[32,32], index: 5, kind: input, shape index: {}]
  %s6 = inlined_call_operand.vmem [shape: bf16[128,32], index: 6, kind: output, shape index: {}]
  %s7 = sld [smem:[#allocation0]]
  $region34: #{global_generator_forward.22} parent=0
    _
  %s9 = ssub.s32 1, %s7
  %s10 = scalar_select 0, %s9, %s7
  // Predicated region
  $region2: #{global_generator_forward.22} parent=0 // pred_check
    _
  $region3: #{global_generator_forward.22} parent=0 // pred_check_branch
    %12 = sbr.rel (0) target = $region5
  $region4: #{global_generator_forward.22} parent=0 // pred_region
    _
  $region5: #{global_generator_forward.22} parent=0 // pred_fallthru
    _
  // Predicated region
  $region6: #{global_generator_forward.22} parent=0 // pred_check
    _
  $region7: #{global_generator_forward.22} parent=0 // pred_check_branch
    %14 = sbr.rel (0) target = $region9
  $region8: #{global_generator_forward.22} parent=0 // pred_region
    _
  $region9: #{global_generator_forward.22} parent=0 // pred_fallthru
    _
  // Predicated region
  $region10: #{global_generator_forward.22} parent=0 // pred_check
    _
  $region11: #{global_generator_forward.22} parent=0 // pred_check_branch
    %16 = sbr.rel (0) target = $region13
  $region12: #{global_generator_forward.22} parent=0 // pred_region
    _
  $region13: #{global_generator_forward.22} parent=0 // pred_fallthru
    _
  // Predicated region
  $region14: #{global_generator_forward.22} parent=0 // pred_check
    _
  $region15: #{global_generator_forward.22} parent=0 // pred_check_branch
    %18 = sbr.rel (0) target = $region17
  $region16: #{global_generator_forward.22} parent=0 // pred_region
    _
  $region17: #{global_generator_forward.22} parent=0 // pred_fallthru
    _
  // Predicated region
  $region18: #{global_generator_forward.22} parent=0 // pred_check
    _
  $region19: #{global_generator_forward.22} parent=0 // pred_check_branch
    %20 = sbr.rel (0) target = $region21
  $region20: #{global_generator_forward.22} parent=0 // pred_region
    _
  $region21: #{global_generator_forward.22} parent=0 // pred_fallthru
    _
  // Predicated region
  $region22: #{global_generator_forward.22} parent=0 // pred_check
    _
  $region23: #{global_generator_forward.22} parent=0 // pred_check_branch
    %22 = sbr.rel (0) target = $region25
  $region24: #{global_generator_forward.22} parent=0 // pred_region
    _
  $region25: #{global_generator_forward.22} parent=0 // pred_fallthru
    _
  %v24 = vld [vmem:[%s0] sm:$0xff]
  %v25 = vld [vmem:[%s0 + $0x8] sm:$0xff]
  %v26 = vld [vmem:[%s0 + $0x10] sm:$0xff]
  %v27 = vld [vmem:[%s0 + $0x18] sm:$0xff]
  %v28 = vld [vmem:[%s0 + $0x20] sm:$0xff]
  %v29 = vld [vmem:[%s0 + $0x28] sm:$0xff]
  %v30 = vld [vmem:[%s0 + $0x30] sm:$0xff]
  %v31 = vld [vmem:[%s0 + $0x38] sm:$0xff]
  %v32 = vld [vmem:[%s0 + $0x40] sm:$0xff]
  %v33 = vld [vmem:[%s0 + $0x48] sm:$0xff]
  %v34 = vld [vmem:[%s0 + $0x50] sm:$0xff]
  %v35 = vld [vmem:[%s0 + $0x58] sm:$0xff]
  %v36 = vld [vmem:[%s0 + $0x60] sm:$0xff]
  %v37 = vld [vmem:[%s0 + $0x68] sm:$0xff]
  %v38 = vld [vmem:[%s0 + $0x70] sm:$0xff]
  %v39 = vld [vmem:[%s0 + $0x78] sm:$0xff]
  %v40 = vld [vmem:[%s1] sm:$0xf]
  %v41 = vld [vmem:[%s1 + $0x4] sm:$0xf]
  %v42 = vld [vmem:[%s1 + $0x8] sm:$0xf]
  %v43 = vld [vmem:[%s1 + $0xc] sm:$0xf]
  %v44 = vld [vmem:[%s1 + $0x10] sm:$0xf]
  %v45 = vld [vmem:[%s1 + $0x14] sm:$0xf]
  %v46 = vld [vmem:[%s1 + $0x18] sm:$0xf]
  %v47 = vld [vmem:[%s1 + $0x1c] sm:$0xf]
  %v48 = vld [vmem:[%s1 + $0x20] sm:$0xf]
  %v49 = vld [vmem:[%s1 + $0x24] sm:$0xf]
  %v50 = vld [vmem:[%s1 + $0x28] sm:$0xf]
  %v51 = vld [vmem:[%s1 + $0x2c] sm:$0xf]
  %v52 = vld [vmem:[%s1 + $0x30] sm:$0xf]
  %v53 = vld [vmem:[%s1 + $0x34] sm:$0xf]
  %v54 = vld [vmem:[%s1 + $0x38] sm:$0xf]
  %v55 = vld [vmem:[%s1 + $0x3c] sm:$0xf]
  %v56 = vld [vmem:[%s1 + $0x40] sm:$0xf]
  %v57 = vld [vmem:[%s1 + $0x44] sm:$0xf]
  %v58 = vld [vmem:[%s2] sm:$0x1]
  %v60 = vlaneseq
  %v61 = vshrl.u32 %v60, 7
  %v62 = vsub.s32 0, %v61
  %v63 = vrot.slane %v58, %v62
  %v81 = vunpack.c.l.b16 %v24
  %v82 = vunpack.c.h.b16 %v24
  %v83 = vunpack.c.l.b16 %v25
  %v84 = vunpack.c.h.b16 %v25
  %v85 = vunpack.c.l.b16 %v26
  %v86 = vunpack.c.h.b16 %v26
  %v87 = vunpack.c.l.b16 %v27
  %v88 = vunpack.c.h.b16 %v27
  %v89 = vunpack.c.l.b16 %v28
  %v90 = vunpack.c.h.b16 %v28
  %v91 = vunpack.c.l.b16 %v29
  %v92 = vunpack.c.h.b16 %v29
  %v93 = vunpack.c.l.b16 %v30
  %v94 = vunpack.c.h.b16 %v30
  %v95 = vunpack.c.l.b16 %v31
  %v96 = vunpack.c.h.b16 %v31
  %v97 = vunpack.c.l.b16 %v32
  %v98 = vunpack.c.h.b16 %v32
  %v99 = vunpack.c.l.b16 %v33
  %v100 = vunpack.c.h.b16 %v33
  %v101 = vunpack.c.l.b16 %v34
  %v102 = vunpack.c.h.b16 %v34
  %v103 = vunpack.c.l.b16 %v35
  %v104 = vunpack.c.h.b16 %v35
  %v105 = vunpack.c.l.b16 %v36
  %v106 = vunpack.c.h.b16 %v36
  %v107 = vunpack.c.l.b16 %v37
  %v108 = vunpack.c.h.b16 %v37
  %v109 = vunpack.c.l.b16 %v38
  %v110 = vunpack.c.h.b16 %v38
  %v111 = vunpack.c.l.b16 %v39
  %v112 = vunpack.c.h.b16 %v39
  %v113 = vpack.c.b16 %v83, %v81
  %v114 = vpack.c.b16 %v84, %v82
  %v115 = vpack.c.b16 %v87, %v85
  %v116 = vpack.c.b16 %v88, %v86
  %v117 = vpack.c.b16 %v91, %v89
  %v118 = vpack.c.b16 %v92, %v90
  %v119 = vpack.c.b16 %v95, %v93
  %v120 = vpack.c.b16 %v96, %v94
  %v121 = vpack.c.b16 %v99, %v97
  %v122 = vpack.c.b16 %v100, %v98
  %v123 = vpack.c.b16 %v103, %v101
  %v124 = vpack.c.b16 %v104, %v102
  %v125 = vpack.c.b16 %v107, %v105
  %v126 = vpack.c.b16 %v108, %v106
  %v127 = vpack.c.b16 %v111, %v109
  %v128 = vpack.c.b16 %v112, %v110
  %v155 = vunpack.c.l.b16 %v40
  %v156 = vunpack.c.l.b16 %v41
  %v157 = vunpack.c.l.b16 %v42
  %v158 = vunpack.c.l.b16 %v43
  %v159 = vunpack.c.l.b16 %v44
  %v160 = vunpack.c.l.b16 %v45
  %v161 = vunpack.c.l.b16 %v46
  %v162 = vunpack.c.l.b16 %v47
  %v163 = vunpack.c.l.b16 %v48
  %v164 = vunpack.c.l.b16 %v49
  %v165 = vunpack.c.l.b16 %v50
  %v166 = vunpack.c.l.b16 %v51
  %v167 = vunpack.c.l.b16 %v52
  %v168 = vunpack.c.l.b16 %v53
  %v169 = vunpack.c.l.b16 %v54
  %v170 = vunpack.c.l.b16 %v55
  %v171 = vunpack.c.l.b16 %v56
  %v172 = vunpack.c.l.b16 %v57
  %v173 = vpack.c.b16 %v156, %v155
  %v174 = vpack.c.b16 %v158, %v157
  %v175 = vpack.c.b16 %v160, %v159
  %v176 = vpack.c.b16 %v162, %v161
  %v177 = vpack.c.b16 %v164, %v163
  %v178 = vpack.c.b16 %v166, %v165
  %v179 = vpack.c.b16 %v168, %v167
  %v180 = vpack.c.b16 %v170, %v169
  %v181 = vpack.c.b16 %v172, %v171
  %vm191 = vcmask 130048
  %v193 = vsel %vm191, %v114, 0
  %v196 = vsel %vm191, %v116, 0
  %v199 = vsel %vm191, %v118, 0
  %v202 = vsel %vm191, %v120, 0
  %v205 = vsel %vm191, %v122, 0
  %v208 = vsel %vm191, %v124, 0
  %v211 = vsel %vm191, %v126, 0
  %v214 = vsel %vm191, %v128, 0
  %216 = vmatprep.subr.bf16.mxu0 0
  %217 = vmatpush1.bf16.msra.mxu0 %v173
  %218 = vmatprep.subr.bf16.mxu0 0
  %219 = vmatpush1.bf16.msra.mxu0 %v174
  %220 = vmatprep.subr.bf16.mxu0 0
  %221 = vmatpush1.bf16.msra.mxu0 %v175
  %222 = vmatprep.subr.bf16.mxu0 0
  %223 = vmatpush1.bf16.msra.mxu0 %v176
  %224 = vmatprep.subr.bf16.mxu0 0
  %225 = vmatpush1.bf16.msra.mxu0 %v177
  %226 = vmatprep.subr.bf16.mxu0 0
  %227 = vmatpush1.bf16.msra.mxu0 %v178
  %228 = vmatprep.subr.bf16.mxu0 0
  %229 = vmatpush1.bf16.msra.mxu0 %v179
  %230 = vmatprep.subr.bf16.mxu0 0
  %231 = vmatpush1.bf16.msra.mxu0 %v180
  %232 = vmatprep.subr.bf16.mxu0 0
  %233 = vmatpush1.bf16.msra.mxu0 %v181
  %234 = vmatprep.subr.bf16.mxu0 0
  %235 = vmatpush1.bf16.msra.mxu0 0
  %236 = vmatprep.subr.bf16.mxu0 0
  %237 = vmatpush1.bf16.msra.mxu0 0
  %238 = vmatprep.subr.bf16.mxu0 0
  %239 = vmatpush1.bf16.msra.mxu0 0
  %240 = vmatprep.subr.bf16.mxu0 0
  %241 = vmatpush1.bf16.msra.mxu0 0
  %242 = vmatprep.subr.bf16.mxu0 0
  %243 = vmatpush1.bf16.msra.mxu0 0
  %244 = vmatprep.subr.bf16.mxu0 0
  %245 = vmatpush1.bf16.msra.mxu0 0
  %246 = vmatprep.subr.bf16.mxu0 0
  %247 = vmatpush1.bf16.msra.mxu0 0
  %248 = vmatprep.mubr.bf16.mxu0 %v193
  %249 = vmatmul.mubr.bf16.gmra.mrb[0].mxu0 %v113
  %v250 = vpop.f32.mrb[0].mxu0
  %v251 = vadd.f32 %v63, %v250
  %v252 = vpop.f32.mrb[0].mxu0
  %v253 = vpop.f32.mrb[0].mxu0
  %v254 = vadd.f32 %v63, %v253
  %v255 = vpop.f32.mrb[0].mxu0
  %256 = vmatprep.mubr.bf16.mxu0 %v196
  %257 = vmatmul.mubr.bf16.gmra.mrb[0].mxu0 %v115
  %v258 = vpop.f32.mrb[0].mxu0
  %v259 = vadd.f32 %v63, %v258
  %v260 = vpop.f32.mrb[0].mxu0
  %v261 = vpop.f32.mrb[0].mxu0
  %v262 = vadd.f32 %v63, %v261
  %v263 = vpop.f32.mrb[0].mxu0
  %264 = vmatprep.mubr.bf16.mxu0 %v199
  %265 = vmatmul.mubr.bf16.gmra.mrb[0].mxu0 %v117
  %v266 = vpop.f32.mrb[0].mxu0
  %v267 = vadd.f32 %v63, %v266
  %v268 = vpop.f32.mrb[0].mxu0
  %v269 = vpop.f32.mrb[0].mxu0
  %v270 = vadd.f32 %v63, %v269
  %v271 = vpop.f32.mrb[0].mxu0
  %272 = vmatprep.mubr.bf16.mxu0 %v202
  %273 = vmatmul.mubr.bf16.gmra.mrb[0].mxu0 %v119
  %v274 = vpop.f32.mrb[0].mxu0
  %v275 = vadd.f32 %v63, %v274
  %v276 = vpop.f32.mrb[0].mxu0
  %v277 = vpop.f32.mrb[0].mxu0
  %v278 = vadd.f32 %v63, %v277
  %v279 = vpop.f32.mrb[0].mxu0
  %280 = vmatprep.mubr.bf16.mxu0 %v205
  %281 = vmatmul.mubr.bf16.gmra.mrb[0].mxu0 %v121
  %v282 = vpop.f32.mrb[0].mxu0
  %v283 = vadd.f32 %v63, %v282
  %v284 = vpop.f32.mrb[0].mxu0
  %v285 = vpop.f32.mrb[0].mxu0
  %v286 = vadd.f32 %v63, %v285
  %v287 = vpop.f32.mrb[0].mxu0
  %288 = vmatprep.mubr.bf16.mxu0 %v208
  %289 = vmatmul.mubr.bf16.gmra.mrb[0].mxu0 %v123
  %v290 = vpop.f32.mrb[0].mxu0
  %v291 = vadd.f32 %v63, %v290
  %v292 = vpop.f32.mrb[0].mxu0
  %v293 = vpop.f32.mrb[0].mxu0
  %v294 = vadd.f32 %v63, %v293
  %v295 = vpop.f32.mrb[0].mxu0
  %296 = vmatprep.mubr.bf16.mxu0 %v211
  %297 = vmatmul.mubr.bf16.gmra.mrb[0].mxu0 %v125
  %v298 = vpop.f32.mrb[0].mxu0
  %v299 = vadd.f32 %v63, %v298
  %v300 = vpop.f32.mrb[0].mxu0
  %v301 = vpop.f32.mrb[0].mxu0
  %v302 = vadd.f32 %v63, %v301
  %v303 = vpop.f32.mrb[0].mxu0
  %304 = vmatprep.mubr.bf16.mxu0 %v214
  %305 = vmatmul.mubr.bf16.gmra.mrb[0].mxu0 %v127
  %v306 = vpop.f32.mrb[0].mxu0
  %v307 = vadd.f32 %v63, %v306
  %v308 = vpop.f32.mrb[0].mxu0
  %v309 = vpop.f32.mrb[0].mxu0
  %v310 = vadd.f32 %v63, %v309
  %v311 = vpop.f32.mrb[0].mxu0
  %312 = vdwg.mxu0
  %v313 = vld [vmem:[%s5] sm:$0xff]
  %v314 = vld [vmem:[%s5 + $0x8] sm:$0xff]
  %v315 = vld [vmem:[%s5 + $0x10] sm:$0xff]
  %v316 = vld [vmem:[%s5 + $0x18] sm:$0xff]
  %vm317 = vcmask 261120
  %v319 = vsel %vm317, %v251, 0
  %v322 = vsel %vm317, %v254, 0
  %v325 = vsel %vm317, %v259, 0
  %v328 = vsel %vm317, %v262, 0
  %v331 = vsel %vm317, %v267, 0
  %v334 = vsel %vm317, %v270, 0
  %v337 = vsel %vm317, %v275, 0
  %v340 = vsel %vm317, %v278, 0
  %v343 = vsel %vm317, %v283, 0
  %v346 = vsel %vm317, %v286, 0
  %v349 = vsel %vm317, %v291, 0
  %v352 = vsel %vm317, %v294, 0
  %v355 = vsel %vm317, %v299, 0
  %v358 = vsel %vm317, %v302, 0
  %v361 = vsel %vm317, %v307, 0
  %v364 = vsel %vm317, %v310, 0
  %366 = vmatprep.subr.mxu0 0.0
  %367 = vmatpush1.msra.mxu0 %v313
  %368 = vmatprep.subr.mxu0 0.0
  %369 = vmatpush1.msra.mxu0 %v314
  %370 = vmatprep.subr.mxu0 0.0
  %371 = vmatpush1.msra.mxu0 %v315
  %372 = vmatprep.subr.mxu0 0.0
  %373 = vmatpush1.msra.mxu0 %v316
  %374 = vmatprep.subr.mxu0 0.0
  %375 = vmatpush1.msra.mxu0 0.0
  %376 = vmatprep.subr.mxu0 0.0
  %377 = vmatpush1.msra.mxu0 0.0
  %378 = vmatprep.subr.mxu0 0.0
  %379 = vmatpush1.msra.mxu0 0.0
  %380 = vmatprep.subr.mxu0 0.0
  %381 = vmatpush1.msra.mxu0 0.0
  %382 = vmatprep.subr.mxu0 0.0
  %383 = vmatpush1.msra.mxu0 0.0
  %384 = vmatprep.subr.mxu0 0.0
  %385 = vmatpush1.msra.mxu0 0.0
  %386 = vmatprep.subr.mxu0 0.0
  %387 = vmatpush1.msra.mxu0 0.0
  %388 = vmatprep.subr.mxu0 0.0
  %389 = vmatpush1.msra.mxu0 0.0
  %390 = vmatprep.subr.mxu0 0.0
  %391 = vmatpush1.msra.mxu0 0.0
  %392 = vmatprep.subr.mxu0 0.0
  %393 = vmatpush1.msra.mxu0 0.0
  %394 = vmatprep.subr.mxu0 0.0
  %395 = vmatpush1.msra.mxu0 0.0
  %396 = vmatprep.subr.mxu0 0.0
  %397 = vmatpush1.msra.mxu0 0.0
  %398 = vmatprep.subr.mxu0 0.0
  %399 = vmatpush1.msra.mxu0 0.0
  %400 = vmatprep.subr.mxu0 0.0
  %401 = vmatpush1.msra.mxu0 0.0
  %402 = vmatprep.subr.mxu0 0.0
  %403 = vmatpush1.msra.mxu0 0.0
  %404 = vmatprep.subr.mxu0 0.0
  %405 = vmatpush1.msra.mxu0 0.0
  %406 = vmatprep.subr.mxu0 0.0
  %407 = vmatpush1.msra.mxu0 0.0
  %408 = vmatprep.subr.mxu0 0.0
  %409 = vmatpush1.msra.mxu0 0.0
  %410 = vmatprep.subr.mxu0 0.0
  %411 = vmatpush1.msra.mxu0 0.0
  %412 = vmatprep.subr.mxu0 0.0
  %413 = vmatpush1.msra.mxu0 0.0
  %414 = vmatprep.subr.mxu0 0.0
  %415 = vmatpush1.msra.mxu0 0.0
  %416 = vmatprep.subr.mxu0 0.0
  %417 = vmatpush1.msra.mxu0 0.0
  %418 = vmatprep.subr.mxu0 0.0
  %419 = vmatpush1.msra.mxu0 0.0
  %420 = vmatprep.subr.mxu0 0.0
  %421 = vmatpush1.msra.mxu0 0.0
  %422 = vmatprep.subr.mxu0 0.0
  %423 = vmatpush1.msra.mxu0 0.0
  %424 = vmatprep.subr.mxu0 0.0
  %425 = vmatpush1.msra.mxu0 0.0
  %426 = vmatprep.subr.mxu0 0.0
  %427 = vmatpush1.msra.mxu0 0.0
  %428 = vmatprep.subr.mxu0 0.0
  %429 = vmatpush1.msra.mxu0 0.0
  %430 = vmatprep.mubr.f32.mxu0 0.0
  %431 = vmatmul.mubr.f32.gmra.mrb[0].mxu0 %v319
  %v432 = vpop.f32.mrb[0].mxu0
  %v433 = vadd.f32 0.0, %v432
  %v434 = vpop.f32.mrb[0].mxu0
  %435 = vmatprep.mubr.f32.mxu0 0.0
  %436 = vmatmul.mubr.f32.gmra.mrb[0].mxu0 %v322
  %v437 = vpop.f32.mrb[0].mxu0
  %v438 = vadd.f32 0.0, %v437
  %v439 = vpop.f32.mrb[0].mxu0
  %440 = vmatprep.mubr.f32.mxu0 0.0
  %441 = vmatmul.mubr.f32.gmra.mrb[0].mxu0 %v325
  %v442 = vpop.f32.mrb[0].mxu0
  %v443 = vadd.f32 0.0, %v442
  %v444 = vpop.f32.mrb[0].mxu0
  %445 = vmatprep.mubr.f32.mxu0 0.0
  %446 = vmatmul.mubr.f32.gmra.mrb[0].mxu0 %v328
  %v447 = vpop.f32.mrb[0].mxu0
  %v448 = vadd.f32 0.0, %v447
  %v449 = vpop.f32.mrb[0].mxu0
  %450 = vmatprep.mubr.f32.mxu0 0.0
  %451 = vmatmul.mubr.f32.gmra.mrb[0].mxu0 %v331
  %v452 = vpop.f32.mrb[0].mxu0
  %v453 = vadd.f32 0.0, %v452
  %v454 = vpop.f32.mrb[0].mxu0
  %455 = vmatprep.mubr.f32.mxu0 0.0
  %456 = vmatmul.mubr.f32.gmra.mrb[0].mxu0 %v334
  %v457 = vpop.f32.mrb[0].mxu0
  %v458 = vadd.f32 0.0, %v457
  %v459 = vpop.f32.mrb[0].mxu0
  %460 = vmatprep.mubr.f32.mxu0 0.0
  %461 = vmatmul.mubr.f32.gmra.mrb[0].mxu0 %v337
  %v462 = vpop.f32.mrb[0].mxu0
  %v463 = vadd.f32 0.0, %v462
  %v464 = vpop.f32.mrb[0].mxu0
  %465 = vmatprep.mubr.f32.mxu0 0.0
  %466 = vmatmul.mubr.f32.gmra.mrb[0].mxu0 %v340
  %v467 = vpop.f32.mrb[0].mxu0
  %v468 = vadd.f32 0.0, %v467
  %v469 = vpop.f32.mrb[0].mxu0
  %470 = vmatprep.mubr.f32.mxu0 0.0
  %471 = vmatmul.mubr.f32.gmra.mrb[0].mxu0 %v343
  %v472 = vpop.f32.mrb[0].mxu0
  %v473 = vadd.f32 0.0, %v472
  %v474 = vpop.f32.mrb[0].mxu0
  %475 = vmatprep.mubr.f32.mxu0 0.0
  %476 = vmatmul.mubr.f32.gmra.mrb[0].mxu0 %v346
  %v477 = vpop.f32.mrb[0].mxu0
  %v478 = vadd.f32 0.0, %v477
  %v479 = vpop.f32.mrb[0].mxu0
  %480 = vmatprep.mubr.f32.mxu0 0.0
  %481 = vmatmul.mubr.f32.gmra.mrb[0].mxu0 %v349
  %v482 = vpop.f32.mrb[0].mxu0
  %v483 = vadd.f32 0.0, %v482
  %v484 = vpop.f32.mrb[0].mxu0
  %485 = vmatprep.mubr.f32.mxu0 0.0
  %486 = vmatmul.mubr.f32.gmra.mrb[0].mxu0 %v352
  %v487 = vpop.f32.mrb[0].mxu0
  %v488 = vadd.f32 0.0, %v487
  %v489 = vpop.f32.mrb[0].mxu0
  %490 = vmatprep.mubr.f32.mxu0 0.0
  %491 = vmatmul.mubr.f32.gmra.mrb[0].mxu0 %v355
  %v492 = vpop.f32.mrb[0].mxu0
  %v493 = vadd.f32 0.0, %v492
  %v494 = vpop.f32.mrb[0].mxu0
  %495 = vmatprep.mubr.f32.mxu0 0.0
  %496 = vmatmul.mubr.f32.gmra.mrb[0].mxu0 %v358
  %v497 = vpop.f32.mrb[0].mxu0
  %v498 = vadd.f32 0.0, %v497
  %v499 = vpop.f32.mrb[0].mxu0
  %500 = vmatprep.mubr.f32.mxu0 0.0
  %501 = vmatmul.mubr.f32.gmra.mrb[0].mxu0 %v361
  %v502 = vpop.f32.mrb[0].mxu0
  %v503 = vadd.f32 0.0, %v502
  %v504 = vpop.f32.mrb[0].mxu0
  %505 = vmatprep.mubr.f32.mxu0 0.0
  %506 = vmatmul.mubr.f32.gmra.mrb[0].mxu0 %v364
  %v507 = vpop.f32.mrb[0].mxu0
  %v508 = vadd.f32 0.0, %v507
  %v509 = vpop.f32.mrb[0].mxu0
  %510 = vdwg.mxu0
  %v511 = vsel %vm317, %v433, 0.0
  %v512 = vsel %vm317, %v438, 0.0
  %v513 = vadd.f32 %v511, %v512
  %v514 = vsel %vm317, %v443, 0.0
  %v515 = vadd.f32 %v513, %v514
  %v516 = vsel %vm317, %v448, 0.0
  %v517 = vadd.f32 %v515, %v516
  %v518 = vsel %vm317, %v453, 0.0
  %v519 = vadd.f32 %v517, %v518
  %v520 = vsel %vm317, %v458, 0.0
  %v521 = vadd.f32 %v519, %v520
  %v522 = vsel %vm317, %v463, 0.0
  %v523 = vadd.f32 %v521, %v522
  %v524 = vsel %vm317, %v468, 0.0
  %v525 = vadd.f32 %v523, %v524
  %v526 = vsel %vm317, %v473, 0.0
  %v527 = vadd.f32 %v525, %v526
  %v528 = vsel %vm317, %v478, 0.0
  %v529 = vadd.f32 %v527, %v528
  %v530 = vsel %vm317, %v483, 0.0
  %v531 = vadd.f32 %v529, %v530
  %v532 = vsel %vm317, %v488, 0.0
  %v533 = vadd.f32 %v531, %v532
  %v534 = vsel %vm317, %v493, 0.0
  %v535 = vadd.f32 %v533, %v534
  %v536 = vsel %vm317, %v498, 0.0
  %v537 = vadd.f32 %v535, %v536
  %v538 = vsel %vm317, %v503, 0.0
  %v539 = vadd.f32 %v537, %v538
  %v540 = vsel %vm317, %v508, 0.0
  %v541 = vadd.f32 %v539, %v540
  %v542 = vrot.slane %v541, 4
  %v543 = vadd.f32 %v541, %v542
  %v544 = vrot.slane %v543, 2
  %v545 = vadd.f32 %v543, %v544
  %v546 = vrot.slane %v545, 1
  %v547 = vadd.f32 %v545, %v546
  %v548 = vmul.f32 %v547, 0.001953125
  %v549 = vsub.f32 %v251, %v548
  %v550 = vsub.f32 %v254, %v548
  %v551 = vsub.f32 %v259, %v548
  %v552 = vsub.f32 %v262, %v548
  %v553 = vsub.f32 %v267, %v548
  %v554 = vsub.f32 %v270, %v548
  %v555 = vsub.f32 %v275, %v548
  %v556 = vsub.f32 %v278, %v548
  %v557 = vsub.f32 %v283, %v548
  %v558 = vsub.f32 %v286, %v548
  %v559 = vsub.f32 %v291, %v548
  %v560 = vsub.f32 %v294, %v548
  %v561 = vsub.f32 %v299, %v548
  %v562 = vsub.f32 %v302, %v548
  %v563 = vsub.f32 %v307, %v548
  %v564 = vsub.f32 %v310, %v548
  %v565 = vmul.f32 %v549, %v549
  %v566 = vmul.f32 %v550, %v550
  %v567 = vmul.f32 %v551, %v551
  %v568 = vmul.f32 %v552, %v552
  %v569 = vmul.f32 %v553, %v553
  %v570 = vmul.f32 %v554, %v554
  %v571 = vmul.f32 %v555, %v555
  %v572 = vmul.f32 %v556, %v556
  %v573 = vmul.f32 %v557, %v557
  %v574 = vmul.f32 %v558, %v558
  %v575 = vmul.f32 %v559, %v559
  %v576 = vmul.f32 %v560, %v560
  %v577 = vmul.f32 %v561, %v561
  %v578 = vmul.f32 %v562, %v562
  %v579 = vmul.f32 %v563, %v563
  %v580 = vmul.f32 %v564, %v564
  %v582 = vsel %vm317, %v565, 0
  %v585 = vsel %vm317, %v566, 0
  %v588 = vsel %vm317, %v567, 0
  %v591 = vsel %vm317, %v568, 0
  %v594 = vsel %vm317, %v569, 0
  %v597 = vsel %vm317, %v570, 0
  %v600 = vsel %vm317, %v571, 0
  %v603 = vsel %vm317, %v572, 0
  %v606 = vsel %vm317, %v573, 0
  %v609 = vsel %vm317, %v574, 0
  %v612 = vsel %vm317, %v575, 0
  %v615 = vsel %vm317, %v576, 0
  %v618 = vsel %vm317, %v577, 0
  %v621 = vsel %vm317, %v578, 0
  %v624 = vsel %vm317, %v579, 0
  %v627 = vsel %vm317, %v580, 0
  %629 = vmatprep.subr.mxu0 0.0
  %630 = vmatpush1.msra.mxu0 %v313
  %631 = vmatprep.subr.mxu0 0.0
  %632 = vmatpush1.msra.mxu0 %v314
  %633 = vmatprep.subr.mxu0 0.0
  %634 = vmatpush1.msra.mxu0 %v315
  %635 = vmatprep.subr.mxu0 0.0
  %636 = vmatpush1.msra.mxu0 %v316
  %637 = vmatprep.subr.mxu0 0.0
  %638 = vmatpush1.msra.mxu0 0.0
  %639 = vmatprep.subr.mxu0 0.0
  %640 = vmatpush1.msra.mxu0 0.0
  %641 = vmatprep.subr.mxu0 0.0
  %642 = vmatpush1.msra.mxu0 0.0
  %643 = vmatprep.subr.mxu0 0.0
  %644 = vmatpush1.msra.mxu0 0.0
  %645 = vmatprep.subr.mxu0 0.0
  %646 = vmatpush1.msra.mxu0 0.0
  %647 = vmatprep.subr.mxu0 0.0
  %648 = vmatpush1.msra.mxu0 0.0
  %649 = vmatprep.subr.mxu0 0.0
  %650 = vmatpush1.msra.mxu0 0.0
  %651 = vmatprep.subr.mxu0 0.0
  %652 = vmatpush1.msra.mxu0 0.0
  %653 = vmatprep.subr.mxu0 0.0
  %654 = vmatpush1.msra.mxu0 0.0
  %655 = vmatprep.subr.mxu0 0.0
  %656 = vmatpush1.msra.mxu0 0.0
  %657 = vmatprep.subr.mxu0 0.0
  %658 = vmatpush1.msra.mxu0 0.0
  %659 = vmatprep.subr.mxu0 0.0
  %660 = vmatpush1.msra.mxu0 0.0
  %661 = vmatprep.subr.mxu0 0.0
  %662 = vmatpush1.msra.mxu0 0.0
  %663 = vmatprep.subr.mxu0 0.0
  %664 = vmatpush1.msra.mxu0 0.0
  %665 = vmatprep.subr.mxu0 0.0
  %666 = vmatpush1.msra.mxu0 0.0
  %667 = vmatprep.subr.mxu0 0.0
  %668 = vmatpush1.msra.mxu0 0.0
  %669 = vmatprep.subr.mxu0 0.0
  %670 = vmatpush1.msra.mxu0 0.0
  %671 = vmatprep.subr.mxu0 0.0
  %672 = vmatpush1.msra.mxu0 0.0
  %673 = vmatprep.subr.mxu0 0.0
  %674 = vmatpush1.msra.mxu0 0.0
  %675 = vmatprep.subr.mxu0 0.0
  %676 = vmatpush1.msra.mxu0 0.0
  %677 = vmatprep.subr.mxu0 0.0
  %678 = vmatpush1.msra.mxu0 0.0
  %679 = vmatprep.subr.mxu0 0.0
  %680 = vmatpush1.msra.mxu0 0.0
  %681 = vmatprep.subr.mxu0 0.0
  %682 = vmatpush1.msra.mxu0 0.0
  %683 = vmatprep.subr.mxu0 0.0
  %684 = vmatpush1.msra.mxu0 0.0
  %685 = vmatprep.subr.mxu0 0.0
  %686 = vmatpush1.msra.mxu0 0.0
  %687 = vmatprep.subr.mxu0 0.0
  %688 = vmatpush1.msra.mxu0 0.0
  %689 = vmatprep.subr.mxu0 0.0
  %690 = vmatpush1.msra.mxu0 0.0
  %691 = vmatprep.subr.mxu0 0.0
  %692 = vmatpush1.msra.mxu0 0.0
  %693 = vmatprep.mubr.f32.mxu0 0.0
  %694 = vmatmul.mubr.f32.gmra.mrb[0].mxu0 %v582
  %v695 = vpop.f32.mrb[0].mxu0
  %v696 = vadd.f32 0.0, %v695
  %v697 = vpop.f32.mrb[0].mxu0
  %698 = vmatprep.mubr.f32.mxu0 0.0
  %699 = vmatmul.mubr.f32.gmra.mrb[0].mxu0 %v585
  %v700 = vpop.f32.mrb[0].mxu0
  %v701 = vadd.f32 0.0, %v700
  %v702 = vpop.f32.mrb[0].mxu0
  %703 = vmatprep.mubr.f32.mxu0 0.0
  %704 = vmatmul.mubr.f32.gmra.mrb[0].mxu0 %v588
  %v705 = vpop.f32.mrb[0].mxu0
  %v706 = vadd.f32 0.0, %v705
  %v707 = vpop.f32.mrb[0].mxu0
  %708 = vmatprep.mubr.f32.mxu0 0.0
  %709 = vmatmul.mubr.f32.gmra.mrb[0].mxu0 %v591
  %v710 = vpop.f32.mrb[0].mxu0
  %v711 = vadd.f32 0.0, %v710
  %v712 = vpop.f32.mrb[0].mxu0
  %713 = vmatprep.mubr.f32.mxu0 0.0
  %714 = vmatmul.mubr.f32.gmra.mrb[0].mxu0 %v594
  %v715 = vpop.f32.mrb[0].mxu0
  %v716 = vadd.f32 0.0, %v715
  %v717 = vpop.f32.mrb[0].mxu0
  %718 = vmatprep.mubr.f32.mxu0 0.0
  %719 = vmatmul.mubr.f32.gmra.mrb[0].mxu0 %v597
  %v720 = vpop.f32.mrb[0].mxu0
  %v721 = vadd.f32 0.0, %v720
  %v722 = vpop.f32.mrb[0].mxu0
  %723 = vmatprep.mubr.f32.mxu0 0.0
  %724 = vmatmul.mubr.f32.gmra.mrb[0].mxu0 %v600
  %v725 = vpop.f32.mrb[0].mxu0
  %v726 = vadd.f32 0.0, %v725
  %v727 = vpop.f32.mrb[0].mxu0
  %728 = vmatprep.mubr.f32.mxu0 0.0
  %729 = vmatmul.mubr.f32.gmra.mrb[0].mxu0 %v603
  %v730 = vpop.f32.mrb[0].mxu0
  %v731 = vadd.f32 0.0, %v730
  %v732 = vpop.f32.mrb[0].mxu0
  %733 = vmatprep.mubr.f32.mxu0 0.0
  %734 = vmatmul.mubr.f32.gmra.mrb[0].mxu0 %v606
  %v735 = vpop.f32.mrb[0].mxu0
  %v736 = vadd.f32 0.0, %v735
  %v737 = vpop.f32.mrb[0].mxu0
  %738 = vmatprep.mubr.f32.mxu0 0.0
  %739 = vmatmul.mubr.f32.gmra.mrb[0].mxu0 %v609
  %v740 = vpop.f32.mrb[0].mxu0
  %v741 = vadd.f32 0.0, %v740
  %v742 = vpop.f32.mrb[0].mxu0
  %743 = vmatprep.mubr.f32.mxu0 0.0
  %744 = vmatmul.mubr.f32.gmra.mrb[0].mxu0 %v612
  %v745 = vpop.f32.mrb[0].mxu0
  %v746 = vadd.f32 0.0, %v745
  %v747 = vpop.f32.mrb[0].mxu0
  %748 = vmatprep.mubr.f32.mxu0 0.0
  %749 = vmatmul.mubr.f32.gmra.mrb[0].mxu0 %v615
  %v750 = vpop.f32.mrb[0].mxu0
  %v751 = vadd.f32 0.0, %v750
  %v752 = vpop.f32.mrb[0].mxu0
  %753 = vmatprep.mubr.f32.mxu0 0.0
  %754 = vmatmul.mubr.f32.gmra.mrb[0].mxu0 %v618
  %v755 = vpop.f32.mrb[0].mxu0
  %v756 = vadd.f32 0.0, %v755
  %v757 = vpop.f32.mrb[0].mxu0
  %758 = vmatprep.mubr.f32.mxu0 0.0
  %759 = vmatmul.mubr.f32.gmra.mrb[0].mxu0 %v621
  %v760 = vpop.f32.mrb[0].mxu0
  %v761 = vadd.f32 0.0, %v760
  %v762 = vpop.f32.mrb[0].mxu0
  %763 = vmatprep.mubr.f32.mxu0 0.0
  %764 = vmatmul.mubr.f32.gmra.mrb[0].mxu0 %v624
  %v765 = vpop.f32.mrb[0].mxu0
  %v766 = vadd.f32 0.0, %v765
  %v767 = vpop.f32.mrb[0].mxu0
  %768 = vmatprep.mubr.f32.mxu0 0.0
  %769 = vmatmul.mubr.f32.gmra.mrb[0].mxu0 %v627
  %v770 = vpop.f32.mrb[0].mxu0
  %v771 = vadd.f32 0.0, %v770
  %v772 = vpop.f32.mrb[0].mxu0
  %773 = vdwg.mxu0
  %v774 = vsel %vm317, %v696, 0.0
  %v775 = vsel %vm317, %v701, 0.0
  %v776 = vadd.f32 %v774, %v775
  %v777 = vsel %vm317, %v706, 0.0
  %v778 = vadd.f32 %v776, %v777
  %v779 = vsel %vm317, %v711, 0.0
  %v780 = vadd.f32 %v778, %v779
  %v781 = vsel %vm317, %v716, 0.0
  %v782 = vadd.f32 %v780, %v781
  %v783 = vsel %vm317, %v721, 0.0
  %v784 = vadd.f32 %v782, %v783
  %v785 = vsel %vm317, %v726, 0.0
  %v786 = vadd.f32 %v784, %v785
  %v787 = vsel %vm317, %v731, 0.0
  %v788 = vadd.f32 %v786, %v787
  %v789 = vsel %vm317, %v736, 0.0
  %v790 = vadd.f32 %v788, %v789
  %v791 = vsel %vm317, %v741, 0.0
  %v792 = vadd.f32 %v790, %v791
  %v793 = vsel %vm317, %v746, 0.0
  %v794 = vadd.f32 %v792, %v793
  %v795 = vsel %vm317, %v751, 0.0
  %v796 = vadd.f32 %v794, %v795
  %v797 = vsel %vm317, %v756, 0.0
  %v798 = vadd.f32 %v796, %v797
  %v799 = vsel %vm317, %v761, 0.0
  %v800 = vadd.f32 %v798, %v799
  %v801 = vsel %vm317, %v766, 0.0
  %v802 = vadd.f32 %v800, %v801
  %v803 = vsel %vm317, %v771, 0.0
  %v804 = vadd.f32 %v802, %v803
  %v805 = vrot.slane %v804, 4
  %v806 = vadd.f32 %v804, %v805
  %v807 = vrot.slane %v806, 2
  %v808 = vadd.f32 %v806, %v807
  %v809 = vrot.slane %v808, 1
  %v810 = vadd.f32 %v808, %v809
  %v811 = vmul.f32 %v810, 0.001953125
  %v812 = vadd.f32 %v811, 1e-05
  %v813 = vrsqrt.pop %v812
  %v814 = vld [vmem:[%s3] sm:$0x1]
  %v816 = vlaneseq
  %v817 = vshrl.u32 %v816, 7
  %v818 = vsub.s32 0, %v817
  %v819 = vrot.slane %v814, %v818
  %v821 = vmul.f32 %v819, %v549
  %v822 = vmul.f32 %v819, %v550
  %v823 = vmul.f32 %v819, %v551
  %v824 = vmul.f32 %v819, %v552
  %v825 = vmul.f32 %v819, %v553
  %v826 = vmul.f32 %v819, %v554
  %v827 = vmul.f32 %v819, %v555
  %v828 = vmul.f32 %v819, %v556
  %v829 = vmul.f32 %v819, %v557
  %v830 = vmul.f32 %v819, %v558
  %v831 = vmul.f32 %v819, %v559
  %v832 = vmul.f32 %v819, %v560
  %v833 = vmul.f32 %v819, %v561
  %v834 = vmul.f32 %v819, %v562
  %v835 = vmul.f32 %v819, %v563
  %v836 = vmul.f32 %v819, %v564
  %v837 = vmul.f32 %v821, %v813
  %v838 = vmul.f32 %v822, %v813
  %v839 = vmul.f32 %v823, %v813
  %v840 = vmul.f32 %v824, %v813
  %v841 = vmul.f32 %v825, %v813
  %v842 = vmul.f32 %v826, %v813
  %v843 = vmul.f32 %v827, %v813
  %v844 = vmul.f32 %v828, %v813
  %v845 = vmul.f32 %v829, %v813
  %v846 = vmul.f32 %v830, %v813
  %v847 = vmul.f32 %v831, %v813
  %v848 = vmul.f32 %v832, %v813
  %v849 = vmul.f32 %v833, %v813
  %v850 = vmul.f32 %v834, %v813
  %v851 = vmul.f32 %v835, %v813
  %v852 = vmul.f32 %v836, %v813
  %v853 = vld [vmem:[%s4] sm:$0x1]
  %v855 = vlaneseq
  %v856 = vshrl.u32 %v855, 7
  %v857 = vsub.s32 0, %v856
  %v858 = vrot.slane %v853, %v857
  %v860 = vadd.f32 %v837, %v858
  %v861 = vadd.f32 %v838, %v858
  %v862 = vadd.f32 %v839, %v858
  %v863 = vadd.f32 %v840, %v858
  %v864 = vadd.f32 %v841, %v858
  %v865 = vadd.f32 %v842, %v858
  %v866 = vadd.f32 %v843, %v858
  %v867 = vadd.f32 %v844, %v858
  %v868 = vadd.f32 %v845, %v858
  %v869 = vadd.f32 %v846, %v858
  %v870 = vadd.f32 %v847, %v858
  %v871 = vadd.f32 %v848, %v858
  %v872 = vadd.f32 %v849, %v858
  %v873 = vadd.f32 %v850, %v858
  %v874 = vadd.f32 %v851, %v858
  %v875 = vadd.f32 %v852, %v858
  %v876 = vmax.f32 %v860, 0.0
  %v877 = vmax.f32 %v861, 0.0
  %v878 = vmax.f32 %v862, 0.0
  %v879 = vmax.f32 %v863, 0.0
  %v880 = vmax.f32 %v864, 0.0
  %v881 = vmax.f32 %v865, 0.0
  %v882 = vmax.f32 %v866, 0.0
  %v883 = vmax.f32 %v867, 0.0
  %v884 = vmax.f32 %v868, 0.0
  %v885 = vmax.f32 %v869, 0.0
  %v886 = vmax.f32 %v870, 0.0
  %v887 = vmax.f32 %v871, 0.0
  %v888 = vmax.f32 %v872, 0.0
  %v889 = vmax.f32 %v873, 0.0
  %v890 = vmax.f32 %v874, 0.0
  %v891 = vmax.f32 %v875, 0.0
  %v892 = vpack.c.bf16 %v877, %v876
  %v893 = vpack.c.bf16 %v879, %v878
  %v894 = vpack.c.bf16 %v881, %v880
  %v895 = vpack.c.bf16 %v883, %v882
  %v896 = vpack.c.bf16 %v885, %v884
  %v897 = vpack.c.bf16 %v887, %v886
  %v898 = vpack.c.bf16 %v889, %v888
  %v899 = vpack.c.bf16 %v891, %v890
  %v908 = vunpack.c.l.b16 %v892
  %v909 = vunpack.c.h.b16 %v892
  %v910 = vunpack.c.l.b16 %v893
  %v911 = vunpack.c.h.b16 %v893
  %v912 = vunpack.c.l.b16 %v894
  %v913 = vunpack.c.h.b16 %v894
  %v914 = vunpack.c.l.b16 %v895
  %v915 = vunpack.c.h.b16 %v895
  %v916 = vunpack.c.l.b16 %v896
  %v917 = vunpack.c.h.b16 %v896
  %v918 = vunpack.c.l.b16 %v897
  %v919 = vunpack.c.h.b16 %v897
  %v920 = vunpack.c.l.b16 %v898
  %v921 = vunpack.c.h.b16 %v898
  %v922 = vunpack.c.l.b16 %v899
  %v923 = vunpack.c.h.b16 %v899
  %v924 = vpack.c.b16 %v908, %v908
  %v925 = vpack.c.b16 %v909, %v909
  %v926 = vpack.c.b16 %v910, %v910
  %v927 = vpack.c.b16 %v911, %v911
  %v928 = vpack.c.b16 %v912, %v912
  %v929 = vpack.c.b16 %v913, %v913
  %v930 = vpack.c.b16 %v914, %v914
  %v931 = vpack.c.b16 %v915, %v915
  %v932 = vpack.c.b16 %v916, %v916
  %v933 = vpack.c.b16 %v917, %v917
  %v934 = vpack.c.b16 %v918, %v918
  %v935 = vpack.c.b16 %v919, %v919
  %v936 = vpack.c.b16 %v920, %v920
  %v937 = vpack.c.b16 %v921, %v921
  %v938 = vpack.c.b16 %v922, %v922
  %v939 = vpack.c.b16 %v923, %v923
  %vm956 = vcmask 257024
  %957 = vst.msk [vmem:[%s6] sm:$0xf] %vm956, %v924
  %958 = vst.msk [vmem:[%s6 + $0x4] sm:$0xf] %vm956, %v925
  %959 = vst.msk [vmem:[%s6 + $0x8] sm:$0xf] %vm956, %v926
  %960 = vst.msk [vmem:[%s6 + $0xc] sm:$0xf] %vm956, %v927
  %961 = vst.msk [vmem:[%s6 + $0x10] sm:$0xf] %vm956, %v928
  %962 = vst.msk [vmem:[%s6 + $0x14] sm:$0xf] %vm956, %v929
  %963 = vst.msk [vmem:[%s6 + $0x18] sm:$0xf] %vm956, %v930
  %964 = vst.msk [vmem:[%s6 + $0x1c] sm:$0xf] %vm956, %v931
  %965 = vst.msk [vmem:[%s6 + $0x20] sm:$0xf] %vm956, %v932
  %966 = vst.msk [vmem:[%s6 + $0x24] sm:$0xf] %vm956, %v933
  %967 = vst.msk [vmem:[%s6 + $0x28] sm:$0xf] %vm956, %v934
  %968 = vst.msk [vmem:[%s6 + $0x2c] sm:$0xf] %vm956, %v935
  %969 = vst.msk [vmem:[%s6 + $0x30] sm:$0xf] %vm956, %v936
  %970 = vst.msk [vmem:[%s6 + $0x34] sm:$0xf] %vm956, %v937
  %971 = vst.msk [vmem:[%s6 + $0x38] sm:$0xf] %vm956, %v938
  %972 = vst.msk [vmem:[%s6 + $0x3c] sm:$0xf] %vm956, %v939
  // Predicated region
  $region26: #{global_generator_forward.22} parent=0 // pred_check
    _
  $region27: #{global_generator_forward.22} parent=0 // pred_check_branch
    %974 = sbr.rel (0) target = $region29
  $region28: #{global_generator_forward.22} parent=0 // pred_region
    _
  $region29: #{global_generator_forward.22} parent=0 // pred_fallthru
    _
  // Predicated region
  $region30: #{global_generator_forward.22} parent=0 // pred_check
    _
  $region31: #{global_generator_forward.22} parent=0 // pred_check_branch
    %976 = sbr.rel (0) target = $region33
  $region32: #{global_generator_forward.22} parent=0 // pred_region
    _
  $region33: #{global_generator_forward.22} parent=0 // pred_fallthru
    _

// kernel: global_generator_forward.23
$region0: #{global_generator_forward.23}
  #allocation0 [shape = 'u32[]', space=smem, size = 0x4, offset = 0x4, fixed_abs, tag = 'smem constant byte address 0x4 - core index']
  #allocation1 [shape = 'u32[144,128]{1,0:T(1,128)}', space=vmem, size = 0x12000, scoped, tag = 'internal scratch']
  %s0 = inlined_call_operand.vmem [shape: bf16[512,392], index: 0, kind: input, shape index: {}]
  %s1 = inlined_call_operand.vmem [shape: bf16[392,3], index: 1, kind: input, shape index: {}]
  %s2 = inlined_call_operand.vmem [shape: f32[1,3], index: 2, kind: input, shape index: {}]
  %s3 = inlined_call_operand.vmem [shape: f32[512,3], index: 3, kind: output, shape index: {}]
  %s4 = sld [smem:[#allocation0]]
  $region22: #{global_generator_forward.23} parent=0
    _
  %s6 = ssub.s32 1, %s4
  %s7 = scalar_select 0, %s6, %s4
  // Predicated region
  $region2: #{global_generator_forward.23} parent=0 // pred_check
    _
  $region3: #{global_generator_forward.23} parent=0 // pred_check_branch
    %9 = sbr.rel (0) target = $region5
  $region4: #{global_generator_forward.23} parent=0 // pred_region
    _
  $region5: #{global_generator_forward.23} parent=0 // pred_fallthru
    _
  // Predicated region
  $region6: #{global_generator_forward.23} parent=0 // pred_check
    _
  $region7: #{global_generator_forward.23} parent=0 // pred_check_branch
    %11 = sbr.rel (0) target = $region9
  $region8: #{global_generator_forward.23} parent=0 // pred_region
    _
  $region9: #{global_generator_forward.23} parent=0 // pred_fallthru
    _
  // Predicated region
  $region10: #{global_generator_forward.23} parent=0 // pred_check
    _
  $region11: #{global_generator_forward.23} parent=0 // pred_check_branch
    %13 = sbr.rel (0) target = $region13
  $region12: #{global_generator_forward.23} parent=0 // pred_region
    _
  $region13: #{global_generator_forward.23} parent=0 // pred_fallthru
    _
  %v15 = vld [vmem:[%s0] sm:$0xff]
  %v16 = vld [vmem:[%s0 + $0x8] sm:$0xff]
  %v17 = vld [vmem:[%s0 + $0x10] sm:$0xff]
  %v18 = vld [vmem:[%s0 + $0x18] sm:$0xff]
  %v19 = vld [vmem:[%s0 + $0x20] sm:$0xff]
  %v20 = vld [vmem:[%s0 + $0x28] sm:$0xff]
  %v21 = vld [vmem:[%s0 + $0x30] sm:$0xff]
  %v22 = vld [vmem:[%s0 + $0x38] sm:$0xff]
  %v23 = vld [vmem:[%s0 + $0x40] sm:$0xff]
  %v24 = vld [vmem:[%s0 + $0x48] sm:$0xff]
  %v25 = vld [vmem:[%s0 + $0x50] sm:$0xff]
  %v26 = vld [vmem:[%s0 + $0x58] sm:$0xff]
  %v27 = vld [vmem:[%s0 + $0x60] sm:$0xff]
  %v28 = vld [vmem:[%s0 + $0x68] sm:$0xff]
  %v29 = vld [vmem:[%s0 + $0x70] sm:$0xff]
  %v30 = vld [vmem:[%s0 + $0x78] sm:$0xff]
  %v31 = vld [vmem:[%s0 + $0x80] sm:$0xff]
  %v32 = vld [vmem:[%s0 + $0x88] sm:$0xff]
  %v33 = vld [vmem:[%s0 + $0x90] sm:$0xff]
  %v34 = vld [vmem:[%s0 + $0x98] sm:$0xff]
  %v35 = vld [vmem:[%s0 + $0xa0] sm:$0xff]
  %v36 = vld [vmem:[%s0 + $0xa8] sm:$0xff]
  %v37 = vld [vmem:[%s0 + $0xb0] sm:$0xff]
  %v38 = vld [vmem:[%s0 + $0xb8] sm:$0xff]
  %v39 = vld [vmem:[%s0 + $0xc0] sm:$0xff]
  %v40 = vld [vmem:[%s0 + $0xc8] sm:$0xff]
  %v41 = vld [vmem:[%s0 + $0xd0] sm:$0xff]
  %v42 = vld [vmem:[%s0 + $0xd8] sm:$0xff]
  %v43 = vld [vmem:[%s0 + $0xe0] sm:$0xff]
  %v44 = vld [vmem:[%s0 + $0xe8] sm:$0xff]
  %v45 = vld [vmem:[%s0 + $0xf0] sm:$0xff]
  %v46 = vld [vmem:[%s0 + $0xf8] sm:$0xff]
  %v47 = vld [vmem:[%s0 + $0x100] sm:$0xff]
  %v48 = vld [vmem:[%s0 + $0x108] sm:$0xff]
  %v49 = vld [vmem:[%s0 + $0x110] sm:$0xff]
  %v50 = vld [vmem:[%s0 + $0x118] sm:$0xff]
  %v51 = vld [vmem:[%s0 + $0x120] sm:$0xff]
  %v52 = vld [vmem:[%s0 + $0x128] sm:$0xff]
  %v53 = vld [vmem:[%s0 + $0x130] sm:$0xff]
  %v54 = vld [vmem:[%s0 + $0x138] sm:$0xff]
  %v55 = vld [vmem:[%s0 + $0x140] sm:$0xff]
  %v56 = vld [vmem:[%s0 + $0x148] sm:$0xff]
  %v57 = vld [vmem:[%s0 + $0x150] sm:$0xff]
  %v58 = vld [vmem:[%s0 + $0x158] sm:$0xff]
  %v59 = vld [vmem:[%s0 + $0x160] sm:$0xff]
  %v60 = vld [vmem:[%s0 + $0x168] sm:$0xff]
  %v61 = vld [vmem:[%s0 + $0x170] sm:$0xff]
  %v62 = vld [vmem:[%s0 + $0x178] sm:$0xff]
  %v63 = vld [vmem:[%s0 + $0x180] sm:$0xff]
  %v64 = vld [vmem:[%s0 + $0x188] sm:$0xff]
  %v65 = vld [vmem:[%s0 + $0x190] sm:$0xff]
  %v66 = vld [vmem:[%s0 + $0x198] sm:$0xff]
  %v67 = vld [vmem:[%s0 + $0x1a0] sm:$0xff]
  %v68 = vld [vmem:[%s0 + $0x1a8] sm:$0xff]
  %v69 = vld [vmem:[%s0 + $0x1b0] sm:$0xff]
  %v70 = vld [vmem:[%s0 + $0x1b8] sm:$0xff]
  %v71 = vld [vmem:[%s0 + $0x1c0] sm:$0xff]
  %v72 = vld [vmem:[%s0 + $0x1c8] sm:$0xff]
  %v73 = vld [vmem:[%s0 + $0x1d0] sm:$0xff]
  %v74 = vld [vmem:[%s0 + $0x1d8] sm:$0xff]
  %v75 = vld [vmem:[%s0 + $0x1e0] sm:$0xff]
  %v76 = vld [vmem:[%s0 + $0x1e8] sm:$0xff]
  %v77 = vld [vmem:[%s0 + $0x1f0] sm:$0xff]
  %v78 = vld [vmem:[%s0 + $0x1f8] sm:$0xff]
  %v79 = vld [vmem:[%s0 + $0x200] sm:$0xff]
  %v80 = vld [vmem:[%s0 + $0x208] sm:$0xff]
  %v81 = vld [vmem:[%s0 + $0x210] sm:$0xff]
  %v82 = vld [vmem:[%s0 + $0x218] sm:$0xff]
  %v83 = vld [vmem:[%s0 + $0x220] sm:$0xff]
  %v84 = vld [vmem:[%s0 + $0x228] sm:$0xff]
  %v85 = vld [vmem:[%s0 + $0x230] sm:$0xff]
  %v86 = vld [vmem:[%s0 + $0x238] sm:$0xff]
  %v87 = vld [vmem:[%s0 + $0x240] sm:$0xff]
  %v88 = vld [vmem:[%s0 + $0x248] sm:$0xff]
  %v89 = vld [vmem:[%s0 + $0x250] sm:$0xff]
  %v90 = vld [vmem:[%s0 + $0x258] sm:$0xff]
  %v91 = vld [vmem:[%s0 + $0x260] sm:$0xff]
  %v92 = vld [vmem:[%s0 + $0x268] sm:$0xff]
  %v93 = vld [vmem:[%s0 + $0x270] sm:$0xff]
  %v94 = vld [vmem:[%s0 + $0x278] sm:$0xff]
  %v95 = vld [vmem:[%s0 + $0x280] sm:$0xff]
  %v96 = vld [vmem:[%s0 + $0x288] sm:$0xff]
  %v97 = vld [vmem:[%s0 + $0x290] sm:$0xff]
  %v98 = vld [vmem:[%s0 + $0x298] sm:$0xff]
  %v99 = vld [vmem:[%s0 + $0x2a0] sm:$0xff]
  %v100 = vld [vmem:[%s0 + $0x2a8] sm:$0xff]
  %v101 = vld [vmem:[%s0 + $0x2b0] sm:$0xff]
  %v102 = vld [vmem:[%s0 + $0x2b8] sm:$0xff]
  %v103 = vld [vmem:[%s0 + $0x2c0] sm:$0xff]
  %v104 = vld [vmem:[%s0 + $0x2c8] sm:$0xff]
  %v105 = vld [vmem:[%s0 + $0x2d0] sm:$0xff]
  %v106 = vld [vmem:[%s0 + $0x2d8] sm:$0xff]
  %v107 = vld [vmem:[%s0 + $0x2e0] sm:$0xff]
  %v108 = vld [vmem:[%s0 + $0x2e8] sm:$0xff]
  %v109 = vld [vmem:[%s0 + $0x2f0] sm:$0xff]
  %v110 = vld [vmem:[%s0 + $0x2f8] sm:$0xff]
  %v111 = vld [vmem:[%s0 + $0x300] sm:$0xff]
  %v112 = vld [vmem:[%s0 + $0x308] sm:$0xff]
  %v113 = vld [vmem:[%s0 + $0x310] sm:$0xff]
  %v114 = vld [vmem:[%s0 + $0x318] sm:$0xff]
  %v115 = vld [vmem:[%s0 + $0x320] sm:$0xff]
  %v116 = vld [vmem:[%s0 + $0x328] sm:$0xff]
  %v117 = vld [vmem:[%s0 + $0x330] sm:$0xff]
  %v118 = vld [vmem:[%s0 + $0x338] sm:$0xff]
  %v119 = vld [vmem:[%s0 + $0x340] sm:$0xff]
  %v120 = vld [vmem:[%s0 + $0x348] sm:$0xff]
  %v121 = vld [vmem:[%s0 + $0x350] sm:$0xff]
  %v122 = vld [vmem:[%s0 + $0x358] sm:$0xff]
  %v123 = vld [vmem:[%s0 + $0x360] sm:$0xff]
  %v124 = vld [vmem:[%s0 + $0x368] sm:$0xff]
  %v125 = vld [vmem:[%s0 + $0x370] sm:$0xff]
  %v126 = vld [vmem:[%s0 + $0x378] sm:$0xff]
  %v127 = vld [vmem:[%s0 + $0x380] sm:$0xff]
  %v128 = vld [vmem:[%s0 + $0x388] sm:$0xff]
  %v129 = vld [vmem:[%s0 + $0x390] sm:$0xff]
  %v130 = vld [vmem:[%s0 + $0x398] sm:$0xff]
  %v131 = vld [vmem:[%s0 + $0x3a0] sm:$0xff]
  %v132 = vld [vmem:[%s0 + $0x3a8] sm:$0xff]
  %v133 = vld [vmem:[%s0 + $0x3b0] sm:$0xff]
  %v134 = vld [vmem:[%s0 + $0x3b8] sm:$0xff]
  %v135 = vld [vmem:[%s0 + $0x3c0] sm:$0xff]
  %v136 = vld [vmem:[%s0 + $0x3c8] sm:$0xff]
  %v137 = vld [vmem:[%s0 + $0x3d0] sm:$0xff]
  %v138 = vld [vmem:[%s0 + $0x3d8] sm:$0xff]
  %v139 = vld [vmem:[%s0 + $0x3e0] sm:$0xff]
  %v140 = vld [vmem:[%s0 + $0x3e8] sm:$0xff]
  %v141 = vld [vmem:[%s0 + $0x3f0] sm:$0xff]
  %v142 = vld [vmem:[%s0 + $0x3f8] sm:$0xff]
  %v143 = vld [vmem:[%s1] sm:$0xf]
  %v144 = vld [vmem:[%s1 + $0x4] sm:$0xf]
  %v145 = vld [vmem:[%s1 + $0x8] sm:$0xf]
  %v146 = vld [vmem:[%s1 + $0xc] sm:$0xf]
  %v147 = vld [vmem:[%s1 + $0x10] sm:$0xf]
  %v148 = vld [vmem:[%s1 + $0x14] sm:$0xf]
  %v149 = vld [vmem:[%s1 + $0x18] sm:$0xf]
  %v150 = vld [vmem:[%s1 + $0x1c] sm:$0xf]
  %v151 = vld [vmem:[%s1 + $0x20] sm:$0xf]
  %v152 = vld [vmem:[%s1 + $0x24] sm:$0xf]
  %v153 = vld [vmem:[%s1 + $0x28] sm:$0xf]
  %v154 = vld [vmem:[%s1 + $0x2c] sm:$0xf]
  %v155 = vld [vmem:[%s1 + $0x30] sm:$0xf]
  %v156 = vld [vmem:[%s1 + $0x34] sm:$0xf]
  %v157 = vld [vmem:[%s1 + $0x38] sm:$0xf]
  %v158 = vld [vmem:[%s1 + $0x3c] sm:$0xf]
  %v159 = vld [vmem:[%s1 + $0x40] sm:$0xf]
  %v160 = vld [vmem:[%s1 + $0x44] sm:$0xf]
  %v161 = vld [vmem:[%s1 + $0x48] sm:$0xf]
  %v162 = vld [vmem:[%s1 + $0x4c] sm:$0xf]
  %v163 = vld [vmem:[%s1 + $0x50] sm:$0xf]
  %v164 = vld [vmem:[%s1 + $0x54] sm:$0xf]
  %v165 = vld [vmem:[%s1 + $0x58] sm:$0xf]
  %v166 = vld [vmem:[%s1 + $0x5c] sm:$0xf]
  %v167 = vld [vmem:[%s1 + $0x60] sm:$0xf]
  %v168 = vld [vmem:[%s1 + $0x64] sm:$0xf]
  %v169 = vld [vmem:[%s1 + $0x68] sm:$0xf]
  %v170 = vld [vmem:[%s1 + $0x6c] sm:$0xf]
  %v171 = vld [vmem:[%s1 + $0x70] sm:$0xf]
  %v172 = vld [vmem:[%s1 + $0x74] sm:$0xf]
  %v173 = vld [vmem:[%s1 + $0x78] sm:$0xf]
  %v174 = vld [vmem:[%s1 + $0x7c] sm:$0xf]
  %v175 = vld [vmem:[%s1 + $0x80] sm:$0xf]
  %v176 = vld [vmem:[%s1 + $0x84] sm:$0xf]
  %v177 = vld [vmem:[%s1 + $0x88] sm:$0xf]
  %v178 = vld [vmem:[%s1 + $0x8c] sm:$0xf]
  %v179 = vld [vmem:[%s1 + $0x90] sm:$0xf]
  %v180 = vld [vmem:[%s1 + $0x94] sm:$0xf]
  %v181 = vld [vmem:[%s1 + $0x98] sm:$0xf]
  %v182 = vld [vmem:[%s1 + $0x9c] sm:$0xf]
  %v183 = vld [vmem:[%s1 + $0xa0] sm:$0xf]
  %v184 = vld [vmem:[%s1 + $0xa4] sm:$0xf]
  %v185 = vld [vmem:[%s1 + $0xa8] sm:$0xf]
  %v186 = vld [vmem:[%s1 + $0xac] sm:$0xf]
  %v187 = vld [vmem:[%s1 + $0xb0] sm:$0xf]
  %v188 = vld [vmem:[%s1 + $0xb4] sm:$0xf]
  %v189 = vld [vmem:[%s1 + $0xb8] sm:$0xf]
  %v190 = vld [vmem:[%s1 + $0xbc] sm:$0xf]
  %v191 = vld [vmem:[%s1 + $0xc0] sm:$0xf]
  %v192 = vld [vmem:[%s2] sm:$0x1]
  %v194 = vlaneseq
  %v195 = vshrl.u32 %v194, 7
  %v196 = vsub.s32 0, %v195
  %v197 = vrot.slane %v192, %v196
  %v327 = vunpack.c.l.b16 %v15
  %v328 = vunpack.c.h.b16 %v15
  %v329 = vunpack.c.l.b16 %v16
  %v330 = vunpack.c.h.b16 %v16
  %v331 = vunpack.c.l.b16 %v17
  %v332 = vunpack.c.h.b16 %v17
  %v333 = vunpack.c.l.b16 %v18
  %v334 = vunpack.c.h.b16 %v18
  %v335 = vunpack.c.l.b16 %v19
  %v336 = vunpack.c.h.b16 %v19
  %v337 = vunpack.c.l.b16 %v20
  %v338 = vunpack.c.h.b16 %v20
  %v339 = vunpack.c.l.b16 %v21
  %v340 = vunpack.c.h.b16 %v21
  %v341 = vunpack.c.l.b16 %v22
  %v342 = vunpack.c.h.b16 %v22
  %v343 = vunpack.c.l.b16 %v23
  %v344 = vunpack.c.h.b16 %v23
  %v345 = vunpack.c.l.b16 %v24
  %v346 = vunpack.c.h.b16 %v24
  %v347 = vunpack.c.l.b16 %v25
  %v348 = vunpack.c.h.b16 %v25
  %v349 = vunpack.c.l.b16 %v26
  %v350 = vunpack.c.h.b16 %v26
  %v351 = vunpack.c.l.b16 %v27
  %v352 = vunpack.c.h.b16 %v27
  %v353 = vunpack.c.l.b16 %v28
  %v354 = vunpack.c.h.b16 %v28
  %v355 = vunpack.c.l.b16 %v29
  %v356 = vunpack.c.h.b16 %v29
  %v357 = vunpack.c.l.b16 %v30
  %v358 = vunpack.c.h.b16 %v30
  %v359 = vunpack.c.l.b16 %v31
  %v360 = vunpack.c.h.b16 %v31
  %v361 = vunpack.c.l.b16 %v32
  %v362 = vunpack.c.h.b16 %v32
  %v363 = vunpack.c.l.b16 %v33
  %v364 = vunpack.c.h.b16 %v33
  %v365 = vunpack.c.l.b16 %v34
  %v366 = vunpack.c.h.b16 %v34
  %v367 = vunpack.c.l.b16 %v35
  %v368 = vunpack.c.h.b16 %v35
  %v369 = vunpack.c.l.b16 %v36
  %v370 = vunpack.c.h.b16 %v36
  %v371 = vunpack.c.l.b16 %v37
  %v372 = vunpack.c.h.b16 %v37
  %v373 = vunpack.c.l.b16 %v38
  %v374 = vunpack.c.h.b16 %v38
  %v375 = vunpack.c.l.b16 %v39
  %v376 = vunpack.c.h.b16 %v39
  %v377 = vunpack.c.l.b16 %v40
  %v378 = vunpack.c.h.b16 %v40
  %v379 = vunpack.c.l.b16 %v41
  %v380 = vunpack.c.h.b16 %v41
  %v381 = vunpack.c.l.b16 %v42
  %v382 = vunpack.c.h.b16 %v42
  %v383 = vunpack.c.l.b16 %v43
  %v384 = vunpack.c.h.b16 %v43
  %v385 = vunpack.c.l.b16 %v44
  %v386 = vunpack.c.h.b16 %v44
  %v387 = vunpack.c.l.b16 %v45
  %v388 = vunpack.c.h.b16 %v45
  %v389 = vunpack.c.l.b16 %v46
  %v390 = vunpack.c.h.b16 %v46
  %v391 = vunpack.c.l.b16 %v47
  %v392 = vunpack.c.h.b16 %v47
  %v393 = vunpack.c.l.b16 %v48
  %v394 = vunpack.c.h.b16 %v48
  %v395 = vunpack.c.l.b16 %v49
  %v396 = vunpack.c.h.b16 %v49
  %v397 = vunpack.c.l.b16 %v50
  %v398 = vunpack.c.h.b16 %v50
  %v399 = vunpack.c.l.b16 %v51
  %v400 = vunpack.c.h.b16 %v51
  %v401 = vunpack.c.l.b16 %v52
  %v402 = vunpack.c.h.b16 %v52
  %v403 = vunpack.c.l.b16 %v53
  %v404 = vunpack.c.h.b16 %v53
  %v405 = vunpack.c.l.b16 %v54
  %v406 = vunpack.c.h.b16 %v54
  %v407 = vunpack.c.l.b16 %v55
  %v408 = vunpack.c.h.b16 %v55
  %v409 = vunpack.c.l.b16 %v56
  %v410 = vunpack.c.h.b16 %v56
  %v411 = vunpack.c.l.b16 %v57
  %v412 = vunpack.c.h.b16 %v57
  %v413 = vunpack.c.l.b16 %v58
  %v414 = vunpack.c.h.b16 %v58
  %v415 = vunpack.c.l.b16 %v59
  %v416 = vunpack.c.h.b16 %v59
  %v417 = vunpack.c.l.b16 %v60
  %v418 = vunpack.c.h.b16 %v60
  %v419 = vunpack.c.l.b16 %v61
  %v420 = vunpack.c.h.b16 %v61
  %v421 = vunpack.c.l.b16 %v62
  %v422 = vunpack.c.h.b16 %v62
  %v423 = vunpack.c.l.b16 %v63
  %v424 = vunpack.c.h.b16 %v63
  %v425 = vunpack.c.l.b16 %v64
  %v426 = vunpack.c.h.b16 %v64
  %v427 = vunpack.c.l.b16 %v65
  %v428 = vunpack.c.h.b16 %v65
  %v429 = vunpack.c.l.b16 %v66
  %v430 = vunpack.c.h.b16 %v66
  %v431 = vunpack.c.l.b16 %v67
  %v432 = vunpack.c.h.b16 %v67
  %v433 = vunpack.c.l.b16 %v68
  %v434 = vunpack.c.h.b16 %v68
  %v435 = vunpack.c.l.b16 %v69
  %v436 = vunpack.c.h.b16 %v69
  %v437 = vunpack.c.l.b16 %v70
  %v438 = vunpack.c.h.b16 %v70
  %v439 = vunpack.c.l.b16 %v71
  %v440 = vunpack.c.h.b16 %v71
  %v441 = vunpack.c.l.b16 %v72
  %v442 = vunpack.c.h.b16 %v72
  %v443 = vunpack.c.l.b16 %v73
  %v444 = vunpack.c.h.b16 %v73
  %v445 = vunpack.c.l.b16 %v74
  %v446 = vunpack.c.h.b16 %v74
  %v447 = vunpack.c.l.b16 %v75
  %v448 = vunpack.c.h.b16 %v75
  %v449 = vunpack.c.l.b16 %v76
  %v450 = vunpack.c.h.b16 %v76
  %v451 = vunpack.c.l.b16 %v77
  %v452 = vunpack.c.h.b16 %v77
  %v453 = vunpack.c.l.b16 %v78
  %v454 = vunpack.c.h.b16 %v78
  %v455 = vunpack.c.l.b16 %v79
  %v456 = vunpack.c.h.b16 %v79
  %v457 = vunpack.c.l.b16 %v80
  %v458 = vunpack.c.h.b16 %v80
  %v459 = vunpack.c.l.b16 %v81
  %v460 = vunpack.c.h.b16 %v81
  %v461 = vunpack.c.l.b16 %v82
  %v462 = vunpack.c.h.b16 %v82
  %v463 = vunpack.c.l.b16 %v83
  %v464 = vunpack.c.h.b16 %v83
  %v465 = vunpack.c.l.b16 %v84
  %v466 = vunpack.c.h.b16 %v84
  %v467 = vunpack.c.l.b16 %v85
  %v468 = vunpack.c.h.b16 %v85
  %v469 = vunpack.c.l.b16 %v86
  %v470 = vunpack.c.h.b16 %v86
  %v471 = vunpack.c.l.b16 %v87
  %v472 = vunpack.c.h.b16 %v87
  %v473 = vunpack.c.l.b16 %v88
  %v474 = vunpack.c.h.b16 %v88
  %v475 = vunpack.c.l.b16 %v89
  %v476 = vunpack.c.h.b16 %v89
  %v477 = vunpack.c.l.b16 %v90
  %v478 = vunpack.c.h.b16 %v90
  %v479 = vunpack.c.l.b16 %v91
  %v480 = vunpack.c.h.b16 %v91
  %v481 = vunpack.c.l.b16 %v92
  %v482 = vunpack.c.h.b16 %v92
  %v483 = vunpack.c.l.b16 %v93
  %v484 = vunpack.c.h.b16 %v93
  %v485 = vunpack.c.l.b16 %v94
  %v486 = vunpack.c.h.b16 %v94
  %v487 = vunpack.c.l.b16 %v95
  %v488 = vunpack.c.h.b16 %v95
  %v489 = vunpack.c.l.b16 %v96
  %v490 = vunpack.c.h.b16 %v96
  %v491 = vunpack.c.l.b16 %v97
  %v492 = vunpack.c.h.b16 %v97
  %v493 = vunpack.c.l.b16 %v98
  %v494 = vunpack.c.h.b16 %v98
  %v495 = vunpack.c.l.b16 %v99
  %v496 = vunpack.c.h.b16 %v99
  %v497 = vunpack.c.l.b16 %v100
  %v498 = vunpack.c.h.b16 %v100
  %v499 = vunpack.c.l.b16 %v101
  %v500 = vunpack.c.h.b16 %v101
  %v501 = vunpack.c.l.b16 %v102
  %v502 = vunpack.c.h.b16 %v102
  %v503 = vunpack.c.l.b16 %v103
  %v504 = vunpack.c.h.b16 %v103
  %v505 = vunpack.c.l.b16 %v104
  %v506 = vunpack.c.h.b16 %v104
  %v507 = vunpack.c.l.b16 %v105
  %v508 = vunpack.c.h.b16 %v105
  %v509 = vunpack.c.l.b16 %v106
  %v510 = vunpack.c.h.b16 %v106
  %v511 = vunpack.c.l.b16 %v107
  %v512 = vunpack.c.h.b16 %v107
  %v513 = vunpack.c.l.b16 %v108
  %v514 = vunpack.c.h.b16 %v108
  %v515 = vunpack.c.l.b16 %v109
  %v516 = vunpack.c.h.b16 %v109
  %v517 = vunpack.c.l.b16 %v110
  %v518 = vunpack.c.h.b16 %v110
  %v519 = vunpack.c.l.b16 %v111
  %v520 = vunpack.c.h.b16 %v111
  %v521 = vunpack.c.l.b16 %v112
  %v522 = vunpack.c.h.b16 %v112
  %v523 = vunpack.c.l.b16 %v113
  %v524 = vunpack.c.h.b16 %v113
  %v525 = vunpack.c.l.b16 %v114
  %v526 = vunpack.c.h.b16 %v114
  %v527 = vunpack.c.l.b16 %v115
  %v528 = vunpack.c.h.b16 %v115
  %v529 = vunpack.c.l.b16 %v116
  %v530 = vunpack.c.h.b16 %v116
  %v531 = vunpack.c.l.b16 %v117
  %v532 = vunpack.c.h.b16 %v117
  %v533 = vunpack.c.l.b16 %v118
  %v534 = vunpack.c.h.b16 %v118
  %v535 = vunpack.c.l.b16 %v119
  %v536 = vunpack.c.h.b16 %v119
  %v537 = vunpack.c.l.b16 %v120
  %v538 = vunpack.c.h.b16 %v120
  %v539 = vunpack.c.l.b16 %v121
  %v540 = vunpack.c.h.b16 %v121
  %v541 = vunpack.c.l.b16 %v122
  %v542 = vunpack.c.h.b16 %v122
  %v543 = vunpack.c.l.b16 %v123
  %v544 = vunpack.c.h.b16 %v123
  %v545 = vunpack.c.l.b16 %v124
  %v546 = vunpack.c.h.b16 %v124
  %v547 = vunpack.c.l.b16 %v125
  %v548 = vunpack.c.h.b16 %v125
  %v549 = vunpack.c.l.b16 %v126
  %v550 = vunpack.c.h.b16 %v126
  %v551 = vunpack.c.l.b16 %v127
  %v552 = vunpack.c.h.b16 %v127
  %v553 = vunpack.c.l.b16 %v128
  %v554 = vunpack.c.h.b16 %v128
  %v555 = vunpack.c.l.b16 %v129
  %v556 = vunpack.c.h.b16 %v129
  %v557 = vunpack.c.l.b16 %v130
  %v558 = vunpack.c.h.b16 %v130
  %v559 = vunpack.c.l.b16 %v131
  %v560 = vunpack.c.h.b16 %v131
  %v561 = vunpack.c.l.b16 %v132
  %v562 = vunpack.c.h.b16 %v132
  %v563 = vunpack.c.l.b16 %v133
  %v564 = vunpack.c.h.b16 %v133
  %v565 = vunpack.c.l.b16 %v134
  %v566 = vunpack.c.h.b16 %v134
  %v567 = vunpack.c.l.b16 %v135
  %v568 = vunpack.c.h.b16 %v135
  %v569 = vunpack.c.l.b16 %v136
  %v570 = vunpack.c.h.b16 %v136
  %v571 = vunpack.c.l.b16 %v137
  %v572 = vunpack.c.h.b16 %v137
  %v573 = vunpack.c.l.b16 %v138
  %v574 = vunpack.c.h.b16 %v138
  %v575 = vunpack.c.l.b16 %v139
  %v576 = vunpack.c.h.b16 %v139
  %v577 = vunpack.c.l.b16 %v140
  %v578 = vunpack.c.h.b16 %v140
  %v579 = vunpack.c.l.b16 %v141
  %v580 = vunpack.c.h.b16 %v141
  %v581 = vunpack.c.l.b16 %v142
  %v582 = vunpack.c.h.b16 %v142
  %v583 = vpack.c.b16 %v331, %v327
  %v584 = vpack.c.b16 %v332, %v328
  %v585 = vpack.c.b16 %v333, %v329
  %v586 = vpack.c.b16 %v334, %v330
  %v587 = vpack.c.b16 %v339, %v335
  %v588 = vpack.c.b16 %v340, %v336
  %v589 = vpack.c.b16 %v341, %v337
  %v590 = vpack.c.b16 %v342, %v338
  %v591 = vpack.c.b16 %v347, %v343
  %v592 = vpack.c.b16 %v348, %v344
  %v593 = vpack.c.b16 %v349, %v345
  %v594 = vpack.c.b16 %v350, %v346
  %v595 = vpack.c.b16 %v355, %v351
  %v596 = vpack.c.b16 %v356, %v352
  %v597 = vpack.c.b16 %v357, %v353
  %v598 = vpack.c.b16 %v358, %v354
  %v599 = vpack.c.b16 %v363, %v359
  %v600 = vpack.c.b16 %v364, %v360
  %v601 = vpack.c.b16 %v365, %v361
  %v602 = vpack.c.b16 %v366, %v362
  %v603 = vpack.c.b16 %v371, %v367
  %v604 = vpack.c.b16 %v372, %v368
  %v605 = vpack.c.b16 %v373, %v369
  %v606 = vpack.c.b16 %v374, %v370
  %v607 = vpack.c.b16 %v379, %v375
  %v608 = vpack.c.b16 %v380, %v376
  %v609 = vpack.c.b16 %v381, %v377
  %v610 = vpack.c.b16 %v382, %v378
  %v611 = vpack.c.b16 %v387, %v383
  %v612 = vpack.c.b16 %v388, %v384
  %v613 = vpack.c.b16 %v389, %v385
  %v614 = vpack.c.b16 %v390, %v386
  %v615 = vpack.c.b16 %v395, %v391
  %v616 = vpack.c.b16 %v396, %v392
  %v617 = vpack.c.b16 %v397, %v393
  %v618 = vpack.c.b16 %v398, %v394
  %v619 = vpack.c.b16 %v403, %v399
  %v620 = vpack.c.b16 %v404, %v400
  %v621 = vpack.c.b16 %v405, %v401
  %v622 = vpack.c.b16 %v406, %v402
  %v623 = vpack.c.b16 %v411, %v407
  %v624 = vpack.c.b16 %v412, %v408
  %v625 = vpack.c.b16 %v413, %v409
  %v626 = vpack.c.b16 %v414, %v410
  %v627 = vpack.c.b16 %v419, %v415
  %v628 = vpack.c.b16 %v420, %v416
  %v629 = vpack.c.b16 %v421, %v417
  %v630 = vpack.c.b16 %v422, %v418
  %v631 = vpack.c.b16 %v427, %v423
  %v632 = vpack.c.b16 %v428, %v424
  %v633 = vpack.c.b16 %v429, %v425
  %v634 = vpack.c.b16 %v430, %v426
  %v635 = vpack.c.b16 %v435, %v431
  %v636 = vpack.c.b16 %v436, %v432
  %v637 = vpack.c.b16 %v437, %v433
  %v638 = vpack.c.b16 %v438, %v434
  %v639 = vpack.c.b16 %v443, %v439
  %v640 = vpack.c.b16 %v444, %v440
  %v641 = vpack.c.b16 %v445, %v441
  %v642 = vpack.c.b16 %v446, %v442
  %v643 = vpack.c.b16 %v451, %v447
  %v644 = vpack.c.b16 %v452, %v448
  %v645 = vpack.c.b16 %v453, %v449
  %v646 = vpack.c.b16 %v454, %v450
  %v647 = vpack.c.b16 %v459, %v455
  %v648 = vpack.c.b16 %v460, %v456
  %v649 = vpack.c.b16 %v461, %v457
  %v650 = vpack.c.b16 %v462, %v458
  %v651 = vpack.c.b16 %v467, %v463
  %v652 = vpack.c.b16 %v468, %v464
  %v653 = vpack.c.b16 %v469, %v465
  %v654 = vpack.c.b16 %v470, %v466
  %v655 = vpack.c.b16 %v475, %v471
  %v656 = vpack.c.b16 %v476, %v472
  %v657 = vpack.c.b16 %v477, %v473
  %v658 = vpack.c.b16 %v478, %v474
  %v659 = vpack.c.b16 %v483, %v479
  %v660 = vpack.c.b16 %v484, %v480
  %v661 = vpack.c.b16 %v485, %v481
  %v662 = vpack.c.b16 %v486, %v482
  %v663 = vpack.c.b16 %v491, %v487
  %v664 = vpack.c.b16 %v492, %v488
  %v665 = vpack.c.b16 %v493, %v489
  %v666 = vpack.c.b16 %v494, %v490
  %v667 = vpack.c.b16 %v499, %v495
  %v668 = vpack.c.b16 %v500, %v496
  %v669 = vpack.c.b16 %v501, %v497
  %v670 = vpack.c.b16 %v502, %v498
  %v671 = vpack.c.b16 %v507, %v503
  %v672 = vpack.c.b16 %v508, %v504
  %v673 = vpack.c.b16 %v509, %v505
  %v674 = vpack.c.b16 %v510, %v506
  %v675 = vpack.c.b16 %v515, %v511
  %v676 = vpack.c.b16 %v516, %v512
  %v677 = vpack.c.b16 %v517, %v513
  %v678 = vpack.c.b16 %v518, %v514
  %v679 = vpack.c.b16 %v523, %v519
  %v680 = vpack.c.b16 %v524, %v520
  %v681 = vpack.c.b16 %v525, %v521
  %v682 = vpack.c.b16 %v526, %v522
  %v683 = vpack.c.b16 %v531, %v527
  %v684 = vpack.c.b16 %v532, %v528
  %v685 = vpack.c.b16 %v533, %v529
  %v686 = vpack.c.b16 %v534, %v530
  %v687 = vpack.c.b16 %v539, %v535
  %v688 = vpack.c.b16 %v540, %v536
  %v689 = vpack.c.b16 %v541, %v537
  %v690 = vpack.c.b16 %v542, %v538
  %v691 = vpack.c.b16 %v547, %v543
  %v692 = vpack.c.b16 %v548, %v544
  %v693 = vpack.c.b16 %v549, %v545
  %v694 = vpack.c.b16 %v550, %v546
  %v695 = vpack.c.b16 %v555, %v551
  %v696 = vpack.c.b16 %v556, %v552
  %v697 = vpack.c.b16 %v557, %v553
  %v698 = vpack.c.b16 %v558, %v554
  %v699 = vpack.c.b16 %v563, %v559
  %v700 = vpack.c.b16 %v564, %v560
  %v701 = vpack.c.b16 %v565, %v561
  %v702 = vpack.c.b16 %v566, %v562
  %v703 = vpack.c.b16 %v571, %v567
  %v704 = vpack.c.b16 %v572, %v568
  %v705 = vpack.c.b16 %v573, %v569
  %v706 = vpack.c.b16 %v574, %v570
  %v707 = vpack.c.b16 %v579, %v575
  %v708 = vpack.c.b16 %v580, %v576
  %v709 = vpack.c.b16 %v581, %v577
  %v710 = vpack.c.b16 %v582, %v578
  %v856 = vunpack.c.l.b16 %v143
  %v857 = vunpack.c.l.b16 %v144
  %v858 = vunpack.c.l.b16 %v145
  %v859 = vunpack.c.l.b16 %v146
  %v860 = vunpack.c.l.b16 %v147
  %v861 = vunpack.c.l.b16 %v148
  %v862 = vunpack.c.l.b16 %v149
  %v863 = vunpack.c.l.b16 %v150
  %v864 = vunpack.c.l.b16 %v151
  %v865 = vunpack.c.l.b16 %v152
  %v866 = vunpack.c.l.b16 %v153
  %v867 = vunpack.c.l.b16 %v154
  %v868 = vunpack.c.l.b16 %v155
  %v869 = vunpack.c.l.b16 %v156
  %v870 = vunpack.c.l.b16 %v157
  %v871 = vunpack.c.l.b16 %v158
  %v872 = vunpack.c.l.b16 %v159
  %v873 = vunpack.c.l.b16 %v160
  %v874 = vunpack.c.l.b16 %v161
  %v875 = vunpack.c.l.b16 %v162
  %v876 = vunpack.c.l.b16 %v163
  %v877 = vunpack.c.l.b16 %v164
  %v878 = vunpack.c.l.b16 %v165
  %v879 = vunpack.c.l.b16 %v166
  %v880 = vunpack.c.l.b16 %v167
  %v881 = vunpack.c.l.b16 %v168
  %v882 = vunpack.c.l.b16 %v169
  %v883 = vunpack.c.l.b16 %v170
  %v884 = vunpack.c.l.b16 %v171
  %v885 = vunpack.c.l.b16 %v172
  %v886 = vunpack.c.l.b16 %v173
  %v887 = vunpack.c.l.b16 %v174
  %v888 = vunpack.c.l.b16 %v175
  %v889 = vunpack.c.l.b16 %v176
  %v890 = vunpack.c.l.b16 %v177
  %v891 = vunpack.c.l.b16 %v178
  %v892 = vunpack.c.l.b16 %v179
  %v893 = vunpack.c.l.b16 %v180
  %v894 = vunpack.c.l.b16 %v181
  %v895 = vunpack.c.l.b16 %v182
  %v896 = vunpack.c.l.b16 %v183
  %v897 = vunpack.c.l.b16 %v184
  %v898 = vunpack.c.l.b16 %v185
  %v899 = vunpack.c.l.b16 %v186
  %v900 = vunpack.c.l.b16 %v187
  %v901 = vunpack.c.l.b16 %v188
  %v902 = vunpack.c.l.b16 %v189
  %v903 = vunpack.c.l.b16 %v190
  %v904 = vunpack.c.l.b16 %v191
  %v905 = vpack.c.b16 %v857, %v856
  %v906 = vpack.c.b16 %v859, %v858
  %v907 = vpack.c.b16 %v861, %v860
  %v908 = vpack.c.b16 %v863, %v862
  %v909 = vpack.c.b16 %v865, %v864
  %v910 = vpack.c.b16 %v867, %v866
  %v911 = vpack.c.b16 %v869, %v868
  %v912 = vpack.c.b16 %v871, %v870
  %v913 = vpack.c.b16 %v873, %v872
  %v914 = vpack.c.b16 %v875, %v874
  %v915 = vpack.c.b16 %v877, %v876
  %v916 = vpack.c.b16 %v879, %v878
  %v917 = vpack.c.b16 %v881, %v880
  %v918 = vpack.c.b16 %v883, %v882
  %v919 = vpack.c.b16 %v885, %v884
  %v920 = vpack.c.b16 %v887, %v886
  %v921 = vpack.c.b16 %v889, %v888
  %v922 = vpack.c.b16 %v891, %v890
  %v923 = vpack.c.b16 %v893, %v892
  %v924 = vpack.c.b16 %v895, %v894
  %v925 = vpack.c.b16 %v897, %v896
  %v926 = vpack.c.b16 %v899, %v898
  %v927 = vpack.c.b16 %v901, %v900
  %v928 = vpack.c.b16 %v903, %v902
  %v929 = vpack.c.b16 %v904, %v904
  %vm954 = vcmask 64512
  %v956 = vsel %vm954, %v586, 0
  %v959 = vsel %vm954, %v590, 0
  %v962 = vsel %vm954, %v594, 0
  %v965 = vsel %vm954, %v598, 0
  %v968 = vsel %vm954, %v602, 0
  %v971 = vsel %vm954, %v606, 0
  %v974 = vsel %vm954, %v610, 0
  %v977 = vsel %vm954, %v614, 0
  %v980 = vsel %vm954, %v618, 0
  %v983 = vsel %vm954, %v622, 0
  %v986 = vsel %vm954, %v626, 0
  %v989 = vsel %vm954, %v630, 0
  %v992 = vsel %vm954, %v634, 0
  %v995 = vsel %vm954, %v638, 0
  %v998 = vsel %vm954, %v642, 0
  %v1001 = vsel %vm954, %v646, 0
  %v1004 = vsel %vm954, %v650, 0
  %v1007 = vsel %vm954, %v654, 0
  %v1010 = vsel %vm954, %v658, 0
  %v1013 = vsel %vm954, %v662, 0
  %v1016 = vsel %vm954, %v666, 0
  %v1019 = vsel %vm954, %v670, 0
  %v1022 = vsel %vm954, %v674, 0
  %v1025 = vsel %vm954, %v678, 0
  %v1028 = vsel %vm954, %v682, 0
  %v1031 = vsel %vm954, %v686, 0
  %v1034 = vsel %vm954, %v690, 0
  %v1037 = vsel %vm954, %v694, 0
  %v1040 = vsel %vm954, %v698, 0
  %v1043 = vsel %vm954, %v702, 0
  %v1046 = vsel %vm954, %v706, 0
  %v1049 = vsel %vm954, %v710, 0
  %vm1051 = vcmask 1043456
  %v1053 = vsel %vm1051, %v929, 0
  %1055 = vmatprep.subr.bf16.mxu0 0
  %1056 = vmatpush1.bf16.msra.mxu0 %v905
  %1057 = vmatprep.subr.bf16.mxu0 0
  %1058 = vmatpush1.bf16.msra.mxu0 %v906
  %1059 = vmatprep.subr.bf16.mxu0 0
  %1060 = vmatpush1.bf16.msra.mxu0 %v907
  %1061 = vmatprep.subr.bf16.mxu0 0
  %1062 = vmatpush1.bf16.msra.mxu0 %v908
  %1063 = vmatprep.subr.bf16.mxu0 0
  %1064 = vmatpush1.bf16.msra.mxu0 %v909
  %1065 = vmatprep.subr.bf16.mxu0 0
  %1066 = vmatpush1.bf16.msra.mxu0 %v910
  %1067 = vmatprep.subr.bf16.mxu0 0
  %1068 = vmatpush1.bf16.msra.mxu0 %v911
  %1069 = vmatprep.subr.bf16.mxu0 0
  %1070 = vmatpush1.bf16.msra.mxu0 %v912
  %1071 = vmatprep.subr.bf16.mxu0 0
  %1072 = vmatpush1.bf16.msra.mxu0 %v913
  %1073 = vmatprep.subr.bf16.mxu0 0
  %1074 = vmatpush1.bf16.msra.mxu0 %v914
  %1075 = vmatprep.subr.bf16.mxu0 0
  %1076 = vmatpush1.bf16.msra.mxu0 %v915
  %1077 = vmatprep.subr.bf16.mxu0 0
  %1078 = vmatpush1.bf16.msra.mxu0 %v916
  %1079 = vmatprep.subr.bf16.mxu0 0
  %1080 = vmatpush1.bf16.msra.mxu0 %v917
  %1081 = vmatprep.subr.bf16.mxu0 0
  %1082 = vmatpush1.bf16.msra.mxu0 %v918
  %1083 = vmatprep.subr.bf16.mxu0 0
  %1084 = vmatpush1.bf16.msra.mxu0 %v919
  %1085 = vmatprep.subr.bf16.mxu0 0
  %1086 = vmatpush1.bf16.msra.mxu0 %v920
  %1087 = vmatprep.mubr.bf16.mxu0 %v584
  %1088 = vmatmul.mubr.bf16.gmra.mrb[0].mxu0 %v583
  %v1089 = vpop.f32.mrb[0].mxu0
  %v1090 = vadd.f32 %v197, %v1089
  %v1091 = vpop.f32.mrb[0].mxu0
  %v1092 = vpop.f32.mrb[0].mxu0
  %v1093 = vadd.f32 %v197, %v1092
  %v1094 = vpop.f32.mrb[0].mxu0
  %1095 = vmatprep.mubr.bf16.mxu0 %v588
  %1096 = vmatmul.mubr.bf16.gmra.mrb[0].mxu0 %v587
  %v1097 = vpop.f32.mrb[0].mxu0
  %v1098 = vadd.f32 %v197, %v1097
  %v1099 = vpop.f32.mrb[0].mxu0
  %v1100 = vpop.f32.mrb[0].mxu0
  %v1101 = vadd.f32 %v197, %v1100
  %v1102 = vpop.f32.mrb[0].mxu0
  %1103 = vmatprep.mubr.bf16.mxu0 %v592
  %1104 = vmatmul.mubr.bf16.gmra.mrb[0].mxu0 %v591
  %v1105 = vpop.f32.mrb[0].mxu0
  %v1106 = vadd.f32 %v197, %v1105
  %v1107 = vpop.f32.mrb[0].mxu0
  %v1108 = vpop.f32.mrb[0].mxu0
  %v1109 = vadd.f32 %v197, %v1108
  %v1110 = vpop.f32.mrb[0].mxu0
  %1111 = vmatprep.mubr.bf16.mxu0 %v596
  %1112 = vmatmul.mubr.bf16.gmra.mrb[0].mxu0 %v595
  %v1113 = vpop.f32.mrb[0].mxu0
  %v1114 = vadd.f32 %v197, %v1113
  %v1115 = vpop.f32.mrb[0].mxu0
  %v1116 = vpop.f32.mrb[0].mxu0
  %v1117 = vadd.f32 %v197, %v1116
  %v1118 = vpop.f32.mrb[0].mxu0
  %1119 = vmatprep.mubr.bf16.mxu0 %v600
  %1120 = vmatmul.mubr.bf16.gmra.mrb[0].mxu0 %v599
  %v1121 = vpop.f32.mrb[0].mxu0
  %v1122 = vadd.f32 %v197, %v1121
  %v1123 = vpop.f32.mrb[0].mxu0
  %v1124 = vpop.f32.mrb[0].mxu0
  %v1125 = vadd.f32 %v197, %v1124
  %v1126 = vpop.f32.mrb[0].mxu0
  %1127 = vmatprep.mubr.bf16.mxu0 %v604
  %1128 = vmatmul.mubr.bf16.gmra.mrb[0].mxu0 %v603
  %v1129 = vpop.f32.mrb[0].mxu0
  %v1130 = vadd.f32 %v197, %v1129
  %v1131 = vpop.f32.mrb[0].mxu0
  %v1132 = vpop.f32.mrb[0].mxu0
  %v1133 = vadd.f32 %v197, %v1132
  %v1134 = vpop.f32.mrb[0].mxu0
  %1135 = vmatprep.mubr.bf16.mxu0 %v608
  %1136 = vmatmul.mubr.bf16.gmra.mrb[0].mxu0 %v607
  %v1137 = vpop.f32.mrb[0].mxu0
  %v1138 = vadd.f32 %v197, %v1137
  %v1139 = vpop.f32.mrb[0].mxu0
  %v1140 = vpop.f32.mrb[0].mxu0
  %v1141 = vadd.f32 %v197, %v1140
  %v1142 = vpop.f32.mrb[0].mxu0
  %1143 = vmatprep.mubr.bf16.mxu0 %v612
  %1144 = vmatmul.mubr.bf16.gmra.mrb[0].mxu0 %v611
  %v1145 = vpop.f32.mrb[0].mxu0
  %v1146 = vadd.f32 %v197, %v1145
  %v1147 = vpop.f32.mrb[0].mxu0
  %v1148 = vpop.f32.mrb[0].mxu0
  %v1149 = vadd.f32 %v197, %v1148
  %v1150 = vpop.f32.mrb[0].mxu0
  %1151 = vmatprep.mubr.bf16.mxu0 %v616
  %1152 = vmatmul.mubr.bf16.gmra.mrb[0].mxu0 %v615
  %v1153 = vpop.f32.mrb[0].mxu0
  %v1154 = vadd.f32 %v197, %v1153
  %v1155 = vpop.f32.mrb[0].mxu0
  %v1156 = vpop.f32.mrb[0].mxu0
  %v1157 = vadd.f32 %v197, %v1156
  %v1158 = vpop.f32.mrb[0].mxu0
  %1159 = vmatprep.mubr.bf16.mxu0 %v620
  %1160 = vmatmul.mubr.bf16.gmra.mrb[0].mxu0 %v619
  %v1161 = vpop.f32.mrb[0].mxu0
  %v1162 = vadd.f32 %v197, %v1161
  %v1163 = vpop.f32.mrb[0].mxu0
  %v1164 = vpop.f32.mrb[0].mxu0
  %v1165 = vadd.f32 %v197, %v1164
  %v1166 = vpop.f32.mrb[0].mxu0
  %1167 = vmatprep.mubr.bf16.mxu0 %v624
  %1168 = vmatmul.mubr.bf16.gmra.mrb[0].mxu0 %v623
  %v1169 = vpop.f32.mrb[0].mxu0
  %v1170 = vadd.f32 %v197, %v1169
  %v1171 = vpop.f32.mrb[0].mxu0
  %v1172 = vpop.f32.mrb[0].mxu0
  %v1173 = vadd.f32 %v197, %v1172
  %v1174 = vpop.f32.mrb[0].mxu0
  %1175 = vmatprep.mubr.bf16.mxu0 %v628
  %1176 = vmatmul.mubr.bf16.gmra.mrb[0].mxu0 %v627
  %v1177 = vpop.f32.mrb[0].mxu0
  %v1178 = vadd.f32 %v197, %v1177
  %v1179 = vpop.f32.mrb[0].mxu0
  %v1180 = vpop.f32.mrb[0].mxu0
  %v1181 = vadd.f32 %v197, %v1180
  %v1182 = vpop.f32.mrb[0].mxu0
  %1183 = vmatprep.mubr.bf16.mxu0 %v632
  %1184 = vmatmul.mubr.bf16.gmra.mrb[0].mxu0 %v631
  %v1185 = vpop.f32.mrb[0].mxu0
  %v1186 = vadd.f32 %v197, %v1185
  %v1187 = vpop.f32.mrb[0].mxu0
  %v1188 = vpop.f32.mrb[0].mxu0
  %v1189 = vadd.f32 %v197, %v1188
  %v1190 = vpop.f32.mrb[0].mxu0
  %1191 = vmatprep.mubr.bf16.mxu0 %v636
  %1192 = vmatmul.mubr.bf16.gmra.mrb[0].mxu0 %v635
  %v1193 = vpop.f32.mrb[0].mxu0
  %v1194 = vadd.f32 %v197, %v1193
  %v1195 = vpop.f32.mrb[0].mxu0
  %v1196 = vpop.f32.mrb[0].mxu0
  %v1197 = vadd.f32 %v197, %v1196
  %v1198 = vpop.f32.mrb[0].mxu0
  %1199 = vmatprep.mubr.bf16.mxu0 %v640
  %1200 = vmatmul.mubr.bf16.gmra.mrb[0].mxu0 %v639
  %v1201 = vpop.f32.mrb[0].mxu0
  %v1202 = vadd.f32 %v197, %v1201
  %v1203 = vpop.f32.mrb[0].mxu0
  %v1204 = vpop.f32.mrb[0].mxu0
  %v1205 = vadd.f32 %v197, %v1204
  %v1206 = vpop.f32.mrb[0].mxu0
  %1207 = vmatprep.mubr.bf16.mxu0 %v644
  %1208 = vmatmul.mubr.bf16.gmra.mrb[0].mxu0 %v643
  %v1209 = vpop.f32.mrb[0].mxu0
  %v1210 = vadd.f32 %v197, %v1209
  %v1211 = vpop.f32.mrb[0].mxu0
  %v1212 = vpop.f32.mrb[0].mxu0
  %v1213 = vadd.f32 %v197, %v1212
  %v1214 = vpop.f32.mrb[0].mxu0
  %1215 = vmatprep.mubr.bf16.mxu0 %v648
  %1216 = vmatmul.mubr.bf16.gmra.mrb[0].mxu0 %v647
  %v1217 = vpop.f32.mrb[0].mxu0
  %v1218 = vadd.f32 %v197, %v1217
  %v1219 = vpop.f32.mrb[0].mxu0
  %v1220 = vpop.f32.mrb[0].mxu0
  %v1221 = vadd.f32 %v197, %v1220
  %v1222 = vpop.f32.mrb[0].mxu0
  %1223 = vmatprep.mubr.bf16.mxu0 %v652
  %1224 = vmatmul.mubr.bf16.gmra.mrb[0].mxu0 %v651
  %v1225 = vpop.f32.mrb[0].mxu0
  %v1226 = vadd.f32 %v197, %v1225
  %v1227 = vpop.f32.mrb[0].mxu0
  %v1228 = vpop.f32.mrb[0].mxu0
  %v1229 = vadd.f32 %v197, %v1228
  %v1230 = vpop.f32.mrb[0].mxu0
  %1231 = vmatprep.mubr.bf16.mxu0 %v656
  %1232 = vmatmul.mubr.bf16.gmra.mrb[0].mxu0 %v655
  %v1233 = vpop.f32.mrb[0].mxu0
  %v1234 = vadd.f32 %v197, %v1233
  %v1235 = vpop.f32.mrb[0].mxu0
  %v1236 = vpop.f32.mrb[0].mxu0
  %v1237 = vadd.f32 %v197, %v1236
  %v1238 = vpop.f32.mrb[0].mxu0
  %1239 = vmatprep.mubr.bf16.mxu0 %v660
  %1240 = vmatmul.mubr.bf16.gmra.mrb[0].mxu0 %v659
  %v1241 = vpop.f32.mrb[0].mxu0
  %v1242 = vadd.f32 %v197, %v1241
  %v1243 = vpop.f32.mrb[0].mxu0
  %v1244 = vpop.f32.mrb[0].mxu0
  %v1245 = vadd.f32 %v197, %v1244
  %v1246 = vpop.f32.mrb[0].mxu0
  %1247 = vmatprep.mubr.bf16.mxu0 %v664
  %1248 = vmatmul.mubr.bf16.gmra.mrb[0].mxu0 %v663
  %v1249 = vpop.f32.mrb[0].mxu0
  %v1250 = vadd.f32 %v197, %v1249
  %v1251 = vpop.f32.mrb[0].mxu0
  %v1252 = vpop.f32.mrb[0].mxu0
  %v1253 = vadd.f32 %v197, %v1252
  %v1254 = vpop.f32.mrb[0].mxu0
  %1255 = vmatprep.mubr.bf16.mxu0 %v668
  %1256 = vmatmul.mubr.bf16.gmra.mrb[0].mxu0 %v667
  %v1257 = vpop.f32.mrb[0].mxu0
  %v1258 = vadd.f32 %v197, %v1257
  %v1259 = vpop.f32.mrb[0].mxu0
  %v1260 = vpop.f32.mrb[0].mxu0
  %v1261 = vadd.f32 %v197, %v1260
  %v1262 = vpop.f32.mrb[0].mxu0
  %1263 = vmatprep.mubr.bf16.mxu0 %v672
  %1264 = vmatmul.mubr.bf16.gmra.mrb[0].mxu0 %v671
  %v1265 = vpop.f32.mrb[0].mxu0
  %v1266 = vadd.f32 %v197, %v1265
  %v1267 = vpop.f32.mrb[0].mxu0
  %v1268 = vpop.f32.mrb[0].mxu0
  %v1269 = vadd.f32 %v197, %v1268
  %v1270 = vpop.f32.mrb[0].mxu0
  %1271 = vmatprep.mubr.bf16.mxu0 %v676
  %1272 = vmatmul.mubr.bf16.gmra.mrb[0].mxu0 %v675
  %v1273 = vpop.f32.mrb[0].mxu0
  %v1274 = vadd.f32 %v197, %v1273
  %v1275 = vpop.f32.mrb[0].mxu0
  %v1276 = vpop.f32.mrb[0].mxu0
  %v1277 = vadd.f32 %v197, %v1276
  %v1278 = vpop.f32.mrb[0].mxu0
  %1279 = vmatprep.mubr.bf16.mxu0 %v680
  %1280 = vmatmul.mubr.bf16.gmra.mrb[0].mxu0 %v679
  %v1281 = vpop.f32.mrb[0].mxu0
  %v1282 = vadd.f32 %v197, %v1281
  %v1283 = vpop.f32.mrb[0].mxu0
  %v1284 = vpop.f32.mrb[0].mxu0
  %v1285 = vadd.f32 %v197, %v1284
  %v1286 = vpop.f32.mrb[0].mxu0
  %1287 = vmatprep.mubr.bf16.mxu0 %v684
  %1288 = vmatmul.mubr.bf16.gmra.mrb[0].mxu0 %v683
  %v1289 = vpop.f32.mrb[0].mxu0
  %v1290 = vadd.f32 %v197, %v1289
  %v1291 = vpop.f32.mrb[0].mxu0
  %v1292 = vpop.f32.mrb[0].mxu0
  %v1293 = vadd.f32 %v197, %v1292
  %v1294 = vpop.f32.mrb[0].mxu0
  %1295 = vmatprep.mubr.bf16.mxu0 %v688
  %1296 = vmatmul.mubr.bf16.gmra.mrb[0].mxu0 %v687
  %v1297 = vpop.f32.mrb[0].mxu0
  %v1298 = vadd.f32 %v197, %v1297
  %v1299 = vpop.f32.mrb[0].mxu0
  %v1300 = vpop.f32.mrb[0].mxu0
  %v1301 = vadd.f32 %v197, %v1300
  %v1302 = vpop.f32.mrb[0].mxu0
  %1303 = vmatprep.mubr.bf16.mxu0 %v692
  %1304 = vmatmul.mubr.bf16.gmra.mrb[0].mxu0 %v691
  %v1305 = vpop.f32.mrb[0].mxu0
  %v1306 = vadd.f32 %v197, %v1305
  %v1307 = vpop.f32.mrb[0].mxu0
  %v1308 = vpop.f32.mrb[0].mxu0
  %v1309 = vadd.f32 %v197, %v1308
  %v1310 = vpop.f32.mrb[0].mxu0
  %1311 = vmatprep.mubr.bf16.mxu0 %v696
  %1312 = vmatmul.mubr.bf16.gmra.mrb[0].mxu0 %v695
  %v1313 = vpop.f32.mrb[0].mxu0
  %v1314 = vadd.f32 %v197, %v1313
  %v1315 = vpop.f32.mrb[0].mxu0
  %v1316 = vpop.f32.mrb[0].mxu0
  %v1317 = vadd.f32 %v197, %v1316
  %v1318 = vpop.f32.mrb[0].mxu0
  %1319 = vmatprep.mubr.bf16.mxu0 %v700
  %1320 = vmatmul.mubr.bf16.gmra.mrb[0].mxu0 %v699
  %v1321 = vpop.f32.mrb[0].mxu0
  %v1322 = vadd.f32 %v197, %v1321
  %v1323 = vpop.f32.mrb[0].mxu0
  %v1324 = vpop.f32.mrb[0].mxu0
  %v1325 = vadd.f32 %v197, %v1324
  %v1326 = vpop.f32.mrb[0].mxu0
  %1327 = vmatprep.mubr.bf16.mxu0 %v704
  %1328 = vmatmul.mubr.bf16.gmra.mrb[0].mxu0 %v703
  %v1329 = vpop.f32.mrb[0].mxu0
  %v1330 = vadd.f32 %v197, %v1329
  %v1331 = vpop.f32.mrb[0].mxu0
  %v1332 = vpop.f32.mrb[0].mxu0
  %v1333 = vadd.f32 %v197, %v1332
  %v1334 = vpop.f32.mrb[0].mxu0
  %1335 = vmatprep.mubr.bf16.mxu0 %v708
  %1336 = vmatmul.mubr.bf16.gmra.mrb[0].mxu0 %v707
  %v1337 = vpop.f32.mrb[0].mxu0
  %v1338 = vadd.f32 %v197, %v1337
  %v1339 = vpop.f32.mrb[0].mxu0
  %v1340 = vpop.f32.mrb[0].mxu0
  %v1341 = vadd.f32 %v197, %v1340
  %v1342 = vpop.f32.mrb[0].mxu0
  %1343 = vdwg.mxu0
  %1344 = vmatprep.subr.bf16.mxu0 0
  %1345 = vmatpush1.bf16.msra.mxu0 %v921
  %1346 = vmatprep.subr.bf16.mxu0 0
  %1347 = vmatpush1.bf16.msra.mxu0 %v922
  %1348 = vmatprep.subr.bf16.mxu0 0
  %1349 = vmatpush1.bf16.msra.mxu0 %v923
  %1350 = vmatprep.subr.bf16.mxu0 0
  %1351 = vmatpush1.bf16.msra.mxu0 %v924
  %1352 = vmatprep.subr.bf16.mxu0 0
  %1353 = vmatpush1.bf16.msra.mxu0 %v925
  %1354 = vmatprep.subr.bf16.mxu0 0
  %1355 = vmatpush1.bf16.msra.mxu0 %v926
  %1356 = vmatprep.subr.bf16.mxu0 0
  %1357 = vmatpush1.bf16.msra.mxu0 %v927
  %1358 = vmatprep.subr.bf16.mxu0 0
  %1359 = vmatpush1.bf16.msra.mxu0 %v928
  %1360 = vmatprep.subr.bf16.mxu0 0
  %1361 = vmatpush1.bf16.msra.mxu0 %v1053
  %1362 = vmatprep.subr.bf16.mxu0 0
  %1363 = vmatpush1.bf16.msra.mxu0 0
  %1364 = vmatprep.subr.bf16.mxu0 0
  %1365 = vmatpush1.bf16.msra.mxu0 0
  %1366 = vmatprep.subr.bf16.mxu0 0
  %1367 = vmatpush1.bf16.msra.mxu0 0
  %1368 = vmatprep.subr.bf16.mxu0 0
  %1369 = vmatpush1.bf16.msra.mxu0 0
  %1370 = vmatprep.subr.bf16.mxu0 0
  %1371 = vmatpush1.bf16.msra.mxu0 0
  %1372 = vmatprep.subr.bf16.mxu0 0
  %1373 = vmatpush1.bf16.msra.mxu0 0
  %1374 = vmatprep.subr.bf16.mxu0 0
  %1375 = vmatpush1.bf16.msra.mxu0 0
  %1376 = vmatprep.mubr.bf16.mxu0 %v956
  %1377 = vmatmul.mubr.bf16.gmra.mrb[0].mxu0 %v585
  %v1378 = vpop.f32.mrb[0].mxu0
  %v1379 = vadd.f32 %v1090, %v1378
  %v1380 = vpop.f32.mrb[0].mxu0
  %v1381 = vpop.f32.mrb[0].mxu0
  %v1382 = vadd.f32 %v1093, %v1381
  %v1383 = vpop.f32.mrb[0].mxu0
  %1384 = vmatprep.mubr.bf16.mxu0 %v959
  %1385 = vmatmul.mubr.bf16.gmra.mrb[0].mxu0 %v589
  %v1386 = vpop.f32.mrb[0].mxu0
  %v1387 = vadd.f32 %v1098, %v1386
  %v1388 = vpop.f32.mrb[0].mxu0
  %v1389 = vpop.f32.mrb[0].mxu0
  %v1390 = vadd.f32 %v1101, %v1389
  %v1391 = vpop.f32.mrb[0].mxu0
  %1392 = vmatprep.mubr.bf16.mxu0 %v962
  %1393 = vmatmul.mubr.bf16.gmra.mrb[0].mxu0 %v593
  %v1394 = vpop.f32.mrb[0].mxu0
  %v1395 = vadd.f32 %v1106, %v1394
  %v1396 = vpop.f32.mrb[0].mxu0
  %v1397 = vpop.f32.mrb[0].mxu0
  %v1398 = vadd.f32 %v1109, %v1397
  %v1399 = vpop.f32.mrb[0].mxu0
  %1400 = vmatprep.mubr.bf16.mxu0 %v965
  %1401 = vmatmul.mubr.bf16.gmra.mrb[0].mxu0 %v597
  %v1402 = vpop.f32.mrb[0].mxu0
  %v1403 = vadd.f32 %v1114, %v1402
  %v1404 = vpop.f32.mrb[0].mxu0
  %v1405 = vpop.f32.mrb[0].mxu0
  %v1406 = vadd.f32 %v1117, %v1405
  %v1407 = vpop.f32.mrb[0].mxu0
  %1408 = vmatprep.mubr.bf16.mxu0 %v968
  %1409 = vmatmul.mubr.bf16.gmra.mrb[0].mxu0 %v601
  %v1410 = vpop.f32.mrb[0].mxu0
  %v1411 = vadd.f32 %v1122, %v1410
  %v1412 = vpop.f32.mrb[0].mxu0
  %v1413 = vpop.f32.mrb[0].mxu0
  %v1414 = vadd.f32 %v1125, %v1413
  %v1415 = vpop.f32.mrb[0].mxu0
  %1416 = vmatprep.mubr.bf16.mxu0 %v971
  %1417 = vmatmul.mubr.bf16.gmra.mrb[0].mxu0 %v605
  %v1418 = vpop.f32.mrb[0].mxu0
  %v1419 = vadd.f32 %v1130, %v1418
  %v1420 = vpop.f32.mrb[0].mxu0
  %v1421 = vpop.f32.mrb[0].mxu0
  %v1422 = vadd.f32 %v1133, %v1421
  %v1423 = vpop.f32.mrb[0].mxu0
  %1424 = vmatprep.mubr.bf16.mxu0 %v974
  %1425 = vmatmul.mubr.bf16.gmra.mrb[0].mxu0 %v609
  %v1426 = vpop.f32.mrb[0].mxu0
  %v1427 = vadd.f32 %v1138, %v1426
  %v1428 = vpop.f32.mrb[0].mxu0
  %v1429 = vpop.f32.mrb[0].mxu0
  %v1430 = vadd.f32 %v1141, %v1429
  %v1431 = vpop.f32.mrb[0].mxu0
  %1432 = vmatprep.mubr.bf16.mxu0 %v977
  %1433 = vmatmul.mubr.bf16.gmra.mrb[0].mxu0 %v613
  %v1434 = vpop.f32.mrb[0].mxu0
  %v1435 = vadd.f32 %v1146, %v1434
  %v1436 = vpop.f32.mrb[0].mxu0
  %v1437 = vpop.f32.mrb[0].mxu0
  %v1438 = vadd.f32 %v1149, %v1437
  %v1439 = vpop.f32.mrb[0].mxu0
  %1440 = vmatprep.mubr.bf16.mxu0 %v980
  %1441 = vmatmul.mubr.bf16.gmra.mrb[0].mxu0 %v617
  %v1442 = vpop.f32.mrb[0].mxu0
  %v1443 = vadd.f32 %v1154, %v1442
  %v1444 = vpop.f32.mrb[0].mxu0
  %v1445 = vpop.f32.mrb[0].mxu0
  %v1446 = vadd.f32 %v1157, %v1445
  %v1447 = vpop.f32.mrb[0].mxu0
  %1448 = vmatprep.mubr.bf16.mxu0 %v983
  %1449 = vmatmul.mubr.bf16.gmra.mrb[0].mxu0 %v621
  %v1450 = vpop.f32.mrb[0].mxu0
  %v1451 = vadd.f32 %v1162, %v1450
  %v1452 = vpop.f32.mrb[0].mxu0
  %v1453 = vpop.f32.mrb[0].mxu0
  %v1454 = vadd.f32 %v1165, %v1453
  %v1455 = vpop.f32.mrb[0].mxu0
  %1456 = vmatprep.mubr.bf16.mxu0 %v986
  %1457 = vmatmul.mubr.bf16.gmra.mrb[0].mxu0 %v625
  %v1458 = vpop.f32.mrb[0].mxu0
  %v1459 = vadd.f32 %v1170, %v1458
  %v1460 = vpop.f32.mrb[0].mxu0
  %v1461 = vpop.f32.mrb[0].mxu0
  %v1462 = vadd.f32 %v1173, %v1461
  %v1463 = vpop.f32.mrb[0].mxu0
  %1464 = vmatprep.mubr.bf16.mxu0 %v989
  %1465 = vmatmul.mubr.bf16.gmra.mrb[0].mxu0 %v629
  %v1466 = vpop.f32.mrb[0].mxu0
  %v1467 = vadd.f32 %v1178, %v1466
  %v1468 = vpop.f32.mrb[0].mxu0
  %v1469 = vpop.f32.mrb[0].mxu0
  %v1470 = vadd.f32 %v1181, %v1469
  %v1471 = vpop.f32.mrb[0].mxu0
  %1472 = vmatprep.mubr.bf16.mxu0 %v992
  %1473 = vmatmul.mubr.bf16.gmra.mrb[0].mxu0 %v633
  %v1474 = vpop.f32.mrb[0].mxu0
  %v1475 = vadd.f32 %v1186, %v1474
  %v1476 = vpop.f32.mrb[0].mxu0
  %v1477 = vpop.f32.mrb[0].mxu0
  %v1478 = vadd.f32 %v1189, %v1477
  %v1479 = vpop.f32.mrb[0].mxu0
  %1480 = vmatprep.mubr.bf16.mxu0 %v995
  %1481 = vmatmul.mubr.bf16.gmra.mrb[0].mxu0 %v637
  %v1482 = vpop.f32.mrb[0].mxu0
  %v1483 = vadd.f32 %v1194, %v1482
  %v1484 = vpop.f32.mrb[0].mxu0
  %v1485 = vpop.f32.mrb[0].mxu0
  %v1486 = vadd.f32 %v1197, %v1485
  %v1487 = vpop.f32.mrb[0].mxu0
  %1488 = vmatprep.mubr.bf16.mxu0 %v998
  %1489 = vmatmul.mubr.bf16.gmra.mrb[0].mxu0 %v641
  %v1490 = vpop.f32.mrb[0].mxu0
  %v1491 = vadd.f32 %v1202, %v1490
  %v1492 = vpop.f32.mrb[0].mxu0
  %v1493 = vpop.f32.mrb[0].mxu0
  %v1494 = vadd.f32 %v1205, %v1493
  %v1495 = vpop.f32.mrb[0].mxu0
  %1496 = vmatprep.mubr.bf16.mxu0 %v1001
  %1497 = vmatmul.mubr.bf16.gmra.mrb[0].mxu0 %v645
  %v1498 = vpop.f32.mrb[0].mxu0
  %v1499 = vadd.f32 %v1210, %v1498
  %v1500 = vpop.f32.mrb[0].mxu0
  %v1501 = vpop.f32.mrb[0].mxu0
  %v1502 = vadd.f32 %v1213, %v1501
  %v1503 = vpop.f32.mrb[0].mxu0
  %1504 = vmatprep.mubr.bf16.mxu0 %v1004
  %1505 = vmatmul.mubr.bf16.gmra.mrb[0].mxu0 %v649
  %v1506 = vpop.f32.mrb[0].mxu0
  %v1507 = vadd.f32 %v1218, %v1506
  %v1508 = vpop.f32.mrb[0].mxu0
  %v1509 = vpop.f32.mrb[0].mxu0
  %v1510 = vadd.f32 %v1221, %v1509
  %v1511 = vpop.f32.mrb[0].mxu0
  %1512 = vmatprep.mubr.bf16.mxu0 %v1007
  %1513 = vmatmul.mubr.bf16.gmra.mrb[0].mxu0 %v653
  %v1514 = vpop.f32.mrb[0].mxu0
  %v1515 = vadd.f32 %v1226, %v1514
  %v1516 = vpop.f32.mrb[0].mxu0
  %v1517 = vpop.f32.mrb[0].mxu0
  %v1518 = vadd.f32 %v1229, %v1517
  %v1519 = vpop.f32.mrb[0].mxu0
  %1520 = vmatprep.mubr.bf16.mxu0 %v1010
  %1521 = vmatmul.mubr.bf16.gmra.mrb[0].mxu0 %v657
  %v1522 = vpop.f32.mrb[0].mxu0
  %v1523 = vadd.f32 %v1234, %v1522
  %v1524 = vpop.f32.mrb[0].mxu0
  %v1525 = vpop.f32.mrb[0].mxu0
  %v1526 = vadd.f32 %v1237, %v1525
  %v1527 = vpop.f32.mrb[0].mxu0
  %1528 = vmatprep.mubr.bf16.mxu0 %v1013
  %1529 = vmatmul.mubr.bf16.gmra.mrb[0].mxu0 %v661
  %v1530 = vpop.f32.mrb[0].mxu0
  %v1531 = vadd.f32 %v1242, %v1530
  %v1532 = vpop.f32.mrb[0].mxu0
  %v1533 = vpop.f32.mrb[0].mxu0
  %v1534 = vadd.f32 %v1245, %v1533
  %v1535 = vpop.f32.mrb[0].mxu0
  %1536 = vmatprep.mubr.bf16.mxu0 %v1016
  %1537 = vmatmul.mubr.bf16.gmra.mrb[0].mxu0 %v665
  %v1538 = vpop.f32.mrb[0].mxu0
  %v1539 = vadd.f32 %v1250, %v1538
  %v1540 = vpop.f32.mrb[0].mxu0
  %v1541 = vpop.f32.mrb[0].mxu0
  %v1542 = vadd.f32 %v1253, %v1541
  %v1543 = vpop.f32.mrb[0].mxu0
  %1544 = vmatprep.mubr.bf16.mxu0 %v1019
  %1545 = vmatmul.mubr.bf16.gmra.mrb[0].mxu0 %v669
  %v1546 = vpop.f32.mrb[0].mxu0
  %v1547 = vadd.f32 %v1258, %v1546
  %v1548 = vpop.f32.mrb[0].mxu0
  %v1549 = vpop.f32.mrb[0].mxu0
  %v1550 = vadd.f32 %v1261, %v1549
  %v1551 = vpop.f32.mrb[0].mxu0
  %1552 = vmatprep.mubr.bf16.mxu0 %v1022
  %1553 = vmatmul.mubr.bf16.gmra.mrb[0].mxu0 %v673
  %v1554 = vpop.f32.mrb[0].mxu0
  %v1555 = vadd.f32 %v1266, %v1554
  %v1556 = vpop.f32.mrb[0].mxu0
  %v1557 = vpop.f32.mrb[0].mxu0
  %v1558 = vadd.f32 %v1269, %v1557
  %v1559 = vpop.f32.mrb[0].mxu0
  %1560 = vmatprep.mubr.bf16.mxu0 %v1025
  %1561 = vmatmul.mubr.bf16.gmra.mrb[0].mxu0 %v677
  %v1562 = vpop.f32.mrb[0].mxu0
  %v1563 = vadd.f32 %v1274, %v1562
  %v1564 = vpop.f32.mrb[0].mxu0
  %v1565 = vpop.f32.mrb[0].mxu0
  %v1566 = vadd.f32 %v1277, %v1565
  %v1567 = vpop.f32.mrb[0].mxu0
  %1568 = vmatprep.mubr.bf16.mxu0 %v1028
  %1569 = vmatmul.mubr.bf16.gmra.mrb[0].mxu0 %v681
  %v1570 = vpop.f32.mrb[0].mxu0
  %v1571 = vadd.f32 %v1282, %v1570
  %v1572 = vpop.f32.mrb[0].mxu0
  %v1573 = vpop.f32.mrb[0].mxu0
  %v1574 = vadd.f32 %v1285, %v1573
  %v1575 = vpop.f32.mrb[0].mxu0
  %1576 = vmatprep.mubr.bf16.mxu0 %v1031
  %1577 = vmatmul.mubr.bf16.gmra.mrb[0].mxu0 %v685
  %v1578 = vpop.f32.mrb[0].mxu0
  %v1579 = vadd.f32 %v1290, %v1578
  %v1580 = vpop.f32.mrb[0].mxu0
  %v1581 = vpop.f32.mrb[0].mxu0
  %v1582 = vadd.f32 %v1293, %v1581
  %v1583 = vpop.f32.mrb[0].mxu0
  %1584 = vmatprep.mubr.bf16.mxu0 %v1034
  %1585 = vmatmul.mubr.bf16.gmra.mrb[0].mxu0 %v689
  %v1586 = vpop.f32.mrb[0].mxu0
  %v1587 = vadd.f32 %v1298, %v1586
  %v1588 = vpop.f32.mrb[0].mxu0
  %v1589 = vpop.f32.mrb[0].mxu0
  %v1590 = vadd.f32 %v1301, %v1589
  %v1591 = vpop.f32.mrb[0].mxu0
  %1592 = vmatprep.mubr.bf16.mxu0 %v1037
  %1593 = vmatmul.mubr.bf16.gmra.mrb[0].mxu0 %v693
  %v1594 = vpop.f32.mrb[0].mxu0
  %v1595 = vadd.f32 %v1306, %v1594
  %v1596 = vpop.f32.mrb[0].mxu0
  %v1597 = vpop.f32.mrb[0].mxu0
  %v1598 = vadd.f32 %v1309, %v1597
  %v1599 = vpop.f32.mrb[0].mxu0
  %1600 = vmatprep.mubr.bf16.mxu0 %v1040
  %1601 = vmatmul.mubr.bf16.gmra.mrb[0].mxu0 %v697
  %v1602 = vpop.f32.mrb[0].mxu0
  %v1603 = vadd.f32 %v1314, %v1602
  %v1604 = vpop.f32.mrb[0].mxu0
  %v1605 = vpop.f32.mrb[0].mxu0
  %v1606 = vadd.f32 %v1317, %v1605
  %v1607 = vpop.f32.mrb[0].mxu0
  %1608 = vmatprep.mubr.bf16.mxu0 %v1043
  %1609 = vmatmul.mubr.bf16.gmra.mrb[0].mxu0 %v701
  %v1610 = vpop.f32.mrb[0].mxu0
  %v1611 = vadd.f32 %v1322, %v1610
  %v1612 = vpop.f32.mrb[0].mxu0
  %v1613 = vpop.f32.mrb[0].mxu0
  %v1614 = vadd.f32 %v1325, %v1613
  %v1615 = vpop.f32.mrb[0].mxu0
  %1616 = vmatprep.mubr.bf16.mxu0 %v1046
  %1617 = vmatmul.mubr.bf16.gmra.mrb[0].mxu0 %v705
  %v1618 = vpop.f32.mrb[0].mxu0
  %v1619 = vadd.f32 %v1330, %v1618
  %v1620 = vpop.f32.mrb[0].mxu0
  %v1621 = vpop.f32.mrb[0].mxu0
  %v1622 = vadd.f32 %v1333, %v1621
  %v1623 = vpop.f32.mrb[0].mxu0
  %1624 = vmatprep.mubr.bf16.mxu0 %v1049
  %1625 = vmatmul.mubr.bf16.gmra.mrb[0].mxu0 %v709
  %v1626 = vpop.f32.mrb[0].mxu0
  %v1627 = vadd.f32 %v1338, %v1626
  %v1628 = vpop.f32.mrb[0].mxu0
  %v1629 = vpop.f32.mrb[0].mxu0
  %v1630 = vadd.f32 %v1341, %v1629
  %v1631 = vpop.f32.mrb[0].mxu0
  %1632 = vdwg.mxu0
  %v1633 = vtanh.pop %v1379
  %v1634 = vtanh.pop %v1382
  %v1635 = vtanh.pop %v1387
  %v1636 = vtanh.pop %v1390
  %v1637 = vtanh.pop %v1395
  %v1638 = vtanh.pop %v1398
  %v1639 = vtanh.pop %v1403
  %v1640 = vtanh.pop %v1406
  %v1641 = vtanh.pop %v1411
  %v1642 = vtanh.pop %v1414
  %v1643 = vtanh.pop %v1419
  %v1644 = vtanh.pop %v1422
  %v1645 = vtanh.pop %v1427
  %v1646 = vtanh.pop %v1430
  %v1647 = vtanh.pop %v1435
  %v1648 = vtanh.pop %v1438
  %v1649 = vtanh.pop %v1443
  %v1650 = vtanh.pop %v1446
  %v1651 = vtanh.pop %v1451
  %v1652 = vtanh.pop %v1454
  %v1653 = vtanh.pop %v1459
  %v1654 = vtanh.pop %v1462
  %v1655 = vtanh.pop %v1467
  %v1656 = vtanh.pop %v1470
  %v1657 = vtanh.pop %v1475
  %v1658 = vtanh.pop %v1478
  %v1659 = vtanh.pop %v1483
  %v1660 = vtanh.pop %v1486
  %v1661 = vtanh.pop %v1491
  %v1662 = vtanh.pop %v1494
  %v1663 = vtanh.pop %v1499
  %v1664 = vtanh.pop %v1502
  %v1665 = vtanh.pop %v1507
  %v1666 = vtanh.pop %v1510
  %v1667 = vtanh.pop %v1515
  %v1668 = vtanh.pop %v1518
  %v1669 = vtanh.pop %v1523
  %v1670 = vtanh.pop %v1526
  %v1671 = vtanh.pop %v1531
  %v1672 = vtanh.pop %v1534
  %v1673 = vtanh.pop %v1539
  %v1674 = vtanh.pop %v1542
  %v1675 = vtanh.pop %v1547
  %v1676 = vtanh.pop %v1550
  %v1677 = vtanh.pop %v1555
  %v1678 = vtanh.pop %v1558
  %v1679 = vtanh.pop %v1563
  %v1680 = vtanh.pop %v1566
  %v1681 = vtanh.pop %v1571
  %v1682 = vtanh.pop %v1574
  %v1683 = vtanh.pop %v1579
  %v1684 = vtanh.pop %v1582
  %v1685 = vtanh.pop %v1587
  %v1686 = vtanh.pop %v1590
  %v1687 = vtanh.pop %v1595
  %v1688 = vtanh.pop %v1598
  %v1689 = vtanh.pop %v1603
  %v1690 = vtanh.pop %v1606
  %v1691 = vtanh.pop %v1611
  %v1692 = vtanh.pop %v1614
  %v1693 = vtanh.pop %v1619
  %v1694 = vtanh.pop %v1622
  %v1695 = vtanh.pop %v1627
  %v1696 = vtanh.pop %v1630
  %vm1697 = vcmask 23552
  %1698 = vst.msk [vmem:[%s3] sm:$0xff] %vm1697, %v1633
  %1699 = vst.msk [vmem:[%s3 + $0x8] sm:$0xff] %vm1697, %v1634
  %1700 = vst.msk [vmem:[%s3 + $0x10] sm:$0xff] %vm1697, %v1635
  %1701 = vst.msk [vmem:[%s3 + $0x18] sm:$0xff] %vm1697, %v1636
  %1702 = vst.msk [vmem:[%s3 + $0x20] sm:$0xff] %vm1697, %v1637
  %1703 = vst.msk [vmem:[%s3 + $0x28] sm:$0xff] %vm1697, %v1638
  %1704 = vst.msk [vmem:[%s3 + $0x30] sm:$0xff] %vm1697, %v1639
  %1705 = vst.msk [vmem:[%s3 + $0x38] sm:$0xff] %vm1697, %v1640
  %1706 = vst.msk [vmem:[%s3 + $0x40] sm:$0xff] %vm1697, %v1641
  %1707 = vst.msk [vmem:[%s3 + $0x48] sm:$0xff] %vm1697, %v1642
  %1708 = vst.msk [vmem:[%s3 + $0x50] sm:$0xff] %vm1697, %v1643
  %1709 = vst.msk [vmem:[%s3 + $0x58] sm:$0xff] %vm1697, %v1644
  %1710 = vst.msk [vmem:[%s3 + $0x60] sm:$0xff] %vm1697, %v1645
  %1711 = vst.msk [vmem:[%s3 + $0x68] sm:$0xff] %vm1697, %v1646
  %1712 = vst.msk [vmem:[%s3 + $0x70] sm:$0xff] %vm1697, %v1647
  %1713 = vst.msk [vmem:[%s3 + $0x78] sm:$0xff] %vm1697, %v1648
  %1714 = vst.msk [vmem:[%s3 + $0x80] sm:$0xff] %vm1697, %v1649
  %1715 = vst.msk [vmem:[%s3 + $0x88] sm:$0xff] %vm1697, %v1650
  %1716 = vst.msk [vmem:[%s3 + $0x90] sm:$0xff] %vm1697, %v1651
  %1717 = vst.msk [vmem:[%s3 + $0x98] sm:$0xff] %vm1697, %v1652
  %1718 = vst.msk [vmem:[%s3 + $0xa0] sm:$0xff] %vm1697, %v1653
  %1719 = vst.msk [vmem:[%s3 + $0xa8] sm:$0xff] %vm1697, %v1654
  %1720 = vst.msk [vmem:[%s3 + $0xb0] sm:$0xff] %vm1697, %v1655
  %1721 = vst.msk [vmem:[%s3 + $0xb8] sm:$0xff] %vm1697, %v1656
  %1722 = vst.msk [vmem:[%s3 + $0xc0] sm:$0xff] %vm1697, %v1657
  %1723 = vst.msk [vmem:[%s3 + $0xc8] sm:$0xff] %vm1697, %v1658
  %1724 = vst.msk [vmem:[%s3 + $0xd0] sm:$0xff] %vm1697, %v1659
  %1725 = vst.msk [vmem:[%s3 + $0xd8] sm:$0xff] %vm1697, %v1660
  %1726 = vst.msk [vmem:[%s3 + $0xe0] sm:$0xff] %vm1697, %v1661
  %1727 = vst.msk [vmem:[%s3 + $0xe8] sm:$0xff] %vm1697, %v1662
  %1728 = vst.msk [vmem:[%s3 + $0xf0] sm:$0xff] %vm1697, %v1663
  %1729 = vst.msk [vmem:[%s3 + $0xf8] sm:$0xff] %vm1697, %v1664
  %1730 = vst.msk [vmem:[%s3 + $0x100] sm:$0xff] %vm1697, %v1665
  %1731 = vst.msk [vmem:[%s3 + $0x108] sm:$0xff] %vm1697, %v1666
  %1732 = vst.msk [vmem:[%s3 + $0x110] sm:$0xff] %vm1697, %v1667
  %1733 = vst.msk [vmem:[%s3 + $0x118] sm:$0xff] %vm1697, %v1668
  %1734 = vst.msk [vmem:[%s3 + $0x120] sm:$0xff] %vm1697, %v1669
  %1735 = vst.msk [vmem:[%s3 + $0x128] sm:$0xff] %vm1697, %v1670
  %1736 = vst.msk [vmem:[%s3 + $0x130] sm:$0xff] %vm1697, %v1671
  %1737 = vst.msk [vmem:[%s3 + $0x138] sm:$0xff] %vm1697, %v1672
  %1738 = vst.msk [vmem:[%s3 + $0x140] sm:$0xff] %vm1697, %v1673
  %1739 = vst.msk [vmem:[%s3 + $0x148] sm:$0xff] %vm1697, %v1674
  %1740 = vst.msk [vmem:[%s3 + $0x150] sm:$0xff] %vm1697, %v1675
  %1741 = vst.msk [vmem:[%s3 + $0x158] sm:$0xff] %vm1697, %v1676
  %1742 = vst.msk [vmem:[%s3 + $0x160] sm:$0xff] %vm1697, %v1677
  %1743 = vst.msk [vmem:[%s3 + $0x168] sm:$0xff] %vm1697, %v1678
  %1744 = vst.msk [vmem:[%s3 + $0x170] sm:$0xff] %vm1697, %v1679
  %1745 = vst.msk [vmem:[%s3 + $0x178] sm:$0xff] %vm1697, %v1680
  %1746 = vst.msk [vmem:[%s3 + $0x180] sm:$0xff] %vm1697, %v1681
  %1747 = vst.msk [vmem:[%s3 + $0x188] sm:$0xff] %vm1697, %v1682
  %1748 = vst.msk [vmem:[%s3 + $0x190] sm:$0xff] %vm1697, %v1683
  %1749 = vst.msk [vmem:[%s3 + $0x198] sm:$0xff] %vm1697, %v1684
  %1750 = vst.msk [vmem:[%s3 + $0x1a0] sm:$0xff] %vm1697, %v1685
  %1751 = vst.msk [vmem:[%s3 + $0x1a8] sm:$0xff] %vm1697, %v1686
  %1752 = vst.msk [vmem:[%s3 + $0x1b0] sm:$0xff] %vm1697, %v1687
  %1753 = vst.msk [vmem:[%s3 + $0x1b8] sm:$0xff] %vm1697, %v1688
  %1754 = vst.msk [vmem:[%s3 + $0x1c0] sm:$0xff] %vm1697, %v1689
  %1755 = vst.msk [vmem:[%s3 + $0x1c8] sm:$0xff] %vm1697, %v1690
  %1756 = vst.msk [vmem:[%s3 + $0x1d0] sm:$0xff] %vm1697, %v1691
  %1757 = vst.msk [vmem:[%s3 + $0x1d8] sm:$0xff] %vm1697, %v1692
  %1758 = vst.msk [vmem:[%s3 + $0x1e0] sm:$0xff] %vm1697, %v1693
  %1759 = vst.msk [vmem:[%s3 + $0x1e8] sm:$0xff] %vm1697, %v1694
  %1760 = vst.msk [vmem:[%s3 + $0x1f0] sm:$0xff] %vm1697, %v1695
  %1761 = vst.msk [vmem:[%s3 + $0x1f8] sm:$0xff] %vm1697, %v1696
  // Predicated region
  $region14: #{global_generator_forward.23} parent=0 // pred_check
    _
  $region15: #{global_generator_forward.23} parent=0 // pred_check_branch
    %1763 = sbr.rel (0) target = $region17
  $region16: #{global_generator_forward.23} parent=0 // pred_region
    _
  $region17: #{global_generator_forward.23} parent=0 // pred_fallthru
    _
  // Predicated region
  $region18: #{global_generator_forward.23} parent=0 // pred_check
    _
  $region19: #{global_generator_forward.23} parent=0 // pred_check_branch
    %1765 = sbr.rel (0) target = $region21
  $region20: #{global_generator_forward.23} parent=0 // pred_region
    _
  $region21: #{global_generator_forward.23} parent=0 // pred_fallthru
    _

</llo_original>
